<compile_context>
chip_gen: v7x
topology: tpu7x:2x2x1
jax: 0.10.0
libtpu: 0.0.40
codegen_flags: <defaults>
</compile_context>

<pallas_src>
import math
from functools import partial

import jax
import jax.numpy as jnp
from jax import lax
from jax.experimental import pallas as pl
from jax.experimental.pallas import tpu as pltpu

# ----------------------------- model config ---------------------------------
NUM_HIDDENS = 32            # D
N_HEADS = 4                 # H
HEAD_DIM = NUM_HIDDENS // N_HEADS
FFN_DIM = 2 * NUM_HIDDENS   # ffn_dim_multiplier = 2
DEC_LAYERS = 2
LN_EPS = 1e-5               # PyTorch nn.LayerNorm default

# vec slab rows (9, D): [b2, bo_self, bo_cross, ln1_g, ln1_b, ln2_g, ln2_b, ln3_g, ln3_b]


# ----------------------------- kernel helpers --------------------------------
def _layer_norm(x, gamma, beta):
    mu = jnp.mean(x, axis=-1, keepdims=True)
    var = jnp.mean((x - mu) ** 2, axis=-1, keepdims=True)
    return (x - mu) * lax.rsqrt(var + LN_EPS) * gamma + beta


def _softmax_last(s):
    m = jnp.max(s, axis=-1, keepdims=True)
    e = jnp.exp(s - m)
    return e * pl.reciprocal(jnp.sum(e, axis=-1, keepdims=True), approx=True)


# ----------------------------- decoder-stack kernel --------------------------
def decoder_stack_kernel(vl_ref,                 # (B, 1) int32 enc_valid_len
                         h_ref,                  # (B*T, D)  decoder hidden (embed*sqrt(D)+PE)
                         enc_ref,                # (B*S, D)  encoder outputs
                         wx_ref,                 # (L, D, 4D)  [Wq_self|Wk_self|Wv_self|Wq_cross] bf16
                         bx_ref,                 # (L, 1, 4D)
                         we_ref,                 # (L, D, 2D)  [Wk_cross|Wv_cross] bf16
                         be_ref,                 # (L, 1, 2D)
                         wo_ref,                 # (L, 2, D, D) [Wo_self, Wo_cross] bf16
                         w1_ref,                 # (L, D, Dff) bf16
                         b1_ref,                 # (L, 1, Dff)
                         w2_ref,                 # (L, Dff, D) bf16
                         vec_ref,                # (L, 9, D)
                         out_ref,                # (B*T, D)
                         *, B, T, S):
    D = NUM_HIDDENS
    H = N_HEADS
    hd = HEAD_DIM
    scale = 1.0 / math.sqrt(hd)

    def to_heads(x, rows):
        # (B*rows, D) -> (H*B, rows, hd); single 3-D transpose for the whole batch.
        return x.reshape(B * rows, H, hd).transpose(1, 0, 2).reshape(H * B, rows, hd)

    def from_heads(x, rows):
        # (H*B, rows, hd) -> (B*rows, D)
        return x.reshape(H, B * rows, hd).transpose(1, 0, 2).reshape(B * rows, D)

    h = h_ref[...]                                   # (B*T, D) f32
    enc_bf = enc_ref[...].astype(jnp.bfloat16)       # hoisted: constant across layers

    # ---- masks hoisted out of the layer loop ----
    q_ids = lax.broadcasted_iota(jnp.int32, (T, T), 0)
    k_ids = lax.broadcasted_iota(jnp.int32, (T, T), 1)
    causal_ok = (k_ids <= q_ids)[None]               # (1, T, T); dec_valid_lens = arange(1,T+1)

    # cross-attn key mask ordered to match the (h*B + b) batch layout of to_heads()
    vl_hb = jnp.broadcast_to(vl_ref[...].reshape(1, B, 1, 1),
                             (H, B, 1, 1)).reshape(H * B, 1, 1)          # int32
    ek_ids = lax.broadcasted_iota(jnp.int32, (H * B, 1, S), 2)
    cross_ok = ek_ids < vl_hb                        # (H*B, 1, S)

    for l in range(DEC_LAYERS):                      # both layers fused in one call
        vec = vec_ref[l]                             # (9, D)

        # Fused projections (bf16 operands, f32 accumulation).
        xp = jnp.dot(h.astype(jnp.bfloat16), wx_ref[l],
                     preferred_element_type=jnp.float32) + bx_ref[l]     # (B*T, 4D)
        ekv = jnp.dot(enc_bf, we_ref[l],
                      preferred_element_type=jnp.float32) + be_ref[l]    # (B*S, 2D)

        q1 = to_heads(xp[:, 0 * D:1 * D], T)
        k1 = to_heads(xp[:, 1 * D:2 * D], T)
        v1 = to_heads(xp[:, 2 * D:3 * D], T)
        q2 = to_heads(xp[:, 3 * D:4 * D], T)         # cross-attn query comes from x (per spec)
        k2 = to_heads(ekv[:, 0 * D:1 * D], S)
        v2 = to_heads(ekv[:, 1 * D:2 * D], S)

        # --- masked (causal) self-attention: all batches & heads in one einsum ---
        s1 = jnp.einsum('bqd,bkd->bqk', q1, k1,
                        preferred_element_type=jnp.float32) * scale       # (H*B, T, T)
        p1 = _softmax_last(jnp.where(causal_ok, s1, -1e6))                # d2l fill convention
        attn1 = from_heads(jnp.einsum('bqk,bkd->bqd', p1, v1,
                                      preferred_element_type=jnp.float32), T)

        # --- cross-attention over encoder outputs, key mask from enc_valid_len ---
        s2 = jnp.einsum('bqd,bkd->bqk', q2, k2,
                        preferred_element_type=jnp.float32) * scale       # (H*B, T, S)
        p2 = _softmax_last(jnp.where(cross_ok, s2, -1e6))
        attn2 = from_heads(jnp.einsum('bqk,bkd->bqd', p2, v2,
                                      preferred_element_type=jnp.float32), T)

        # Output projections (leading-dim indexed weight stack: no lane slicing).
        attn1 = jnp.dot(attn1.astype(jnp.bfloat16), wo_ref[l, 0],
                        preferred_element_type=jnp.float32) + vec[1:2]
        attn2 = jnp.dot(attn2.astype(jnp.bfloat16), wo_ref[l, 1],
                        preferred_element_type=jnp.float32) + vec[2:3]

        h1 = _layer_norm(h + attn1, vec[3:4], vec[4:5])                   # AddNorm 1
        h2 = _layer_norm(h1 + attn2, vec[5:6], vec[6:7])                  # AddNorm 2
        hid = jnp.maximum(
            jnp.dot(h2.astype(jnp.bfloat16), w1_ref[l],
                    preferred_element_type=jnp.float32) + b1_ref[l], 0.0)
        ff = jnp.dot(hid.astype(jnp.bfloat16), w2_ref[l],
                     preferred_element_type=jnp.float32) + vec[0:1]
        h = _layer_norm(h2 + ff, vec[7:8], vec[8:9])                      # AddNorm 3

    out_ref[...] = h


# ----------------------------- vocab-head kernel (V-tiled) -------------------
def vocab_head_kernel(h_ref, wout_ref, bout_ref, out_ref):
    out_ref[...] = jnp.dot(h_ref[...].astype(jnp.bfloat16), wout_ref[...],
                           preferred_element_type=jnp.float32) + bout_ref[...]


# ----------------------------- wrapper ---------------------------------------
def decoder_forward(tokens, enc_out, enc_valid_len, params):
    """tokens: (B, T) int32, enc_out: (B, S, D) f32, enc_valid_len: (B,) int32."""
    B, T = tokens.shape
    S = enc_out.shape[1]
    D = NUM_HIDDENS
    V = params["wout"].shape[1]
    BT, BS, BH = B * T, B * S, B * N_HEADS

    # Embedding + positional encoding (glue; dropout = identity).
    h = params["embedding"][tokens] * math.sqrt(D) + positional_encoding(T, D)
    h_flat = h.reshape(BT, D).astype(jnp.float32)
    enc_flat = enc_out.reshape(BS, D).astype(jnp.float32)
    vl = enc_valid_len.astype(jnp.int32).reshape(B, 1)

    vmem = pl.BlockSpec(memory_space=pltpu.MemorySpace.VMEM)

    # --- decoder stack: one gridless fused call (both layers) ---
    flops_layer = (2 * BT * D * 4 * D + 2 * BS * D * 2 * D
                   + 4 * BH * T * T * HEAD_DIM + 4 * BH * T * S * HEAD_DIM
                   + 4 * BT * D * D + 4 * BT * D * FFN_DIM)
    dec_cost = pl.CostEstimate(
        flops=DEC_LAYERS * flops_layer,
        transcendentals=DEC_LAYERS * (BH * T * (T + S) + 3 * BT),
        bytes_accessed=(2 * BT * D * 4 + BS * D * 4
                        + DEC_LAYERS * (D * 4 * D + D * 2 * D + 2 * D * D
                                        + 2 * D * FFN_DIM) * 2
                        + DEC_LAYERS * (4 * D + 2 * D + FFN_DIM + 9 * D) * 4))

    hidden = pl.pallas_call(
        partial(decoder_stack_kernel, B=B, T=T, S=S),
        out_shape=jax.ShapeDtypeStruct((BT, D), jnp.float32),
        in_specs=[vmem] * 12,
        out_specs=vmem,
        cost_estimate=dec_cost,
    )(vl, h_flat, enc_flat,
      params["wx"], params["bx"], params["we"], params["be"], params["wo"],
      params["w1"], params["b1"], params["w2"], params["vec"])

    # --- vocab head: grid over V tiles (parallel -> both TCs on v7x, streams wout) ---
    TILE_V = 256 if V % 256 == 0 else V   # TODO(synk): pad V to a 128 multiple for odd vocab sizes
    head_cost = pl.CostEstimate(
        flops=2 * BT * D * V, transcendentals=0,
        bytes_accessed=BT * D * 4 + D * V * 2 + V * 4 + BT * V * 4)
    logits = pl.pallas_call(
        vocab_head_kernel,
        out_shape=jax.ShapeDtypeStruct((BT, V), jnp.float32),
        grid=(V // TILE_V,),
        in_specs=[pl.BlockSpec((BT, D), lambda j: (0, 0)),
                  pl.BlockSpec((D, TILE_V), lambda j: (0, j)),
                  pl.BlockSpec((1, TILE_V), lambda j: (0, j))],
        out_specs=pl.BlockSpec((BT, TILE_V), lambda j: (0, j)),
        compiler_params=pltpu.CompilerParams(dimension_semantics=("parallel",)),
        cost_estimate=head_cost,
    )(hidden, params["wout"], params["bout"])

    return logits.reshape(B, T, V)


# ----------------------------- glue (plain JAX) -------------------------------
def positional_encoding(T, D):
    pos = jnp.arange(T, dtype=jnp.float32).reshape(-1, 1)
    i = jnp.power(10000.0, jnp.arange(0, D, 2, dtype=jnp.float32) / D)
    pos_i = pos / i                                      # (T, D//2)
    P = jnp.zeros((T, D), jnp.float32)
    P = P.at[:, 0::2].set(jnp.sin(pos_i))
    P = P.at[:, 1::2].set(jnp.cos(pos_i))
    return P[None]                                       # (1, T, D)


def init_params(key, vocab_size):
    D, Dff = NUM_HIDDENS, FFN_DIM
    kit = iter(jax.random.split(key, 64))

    def dense(shape, scale):
        return scale * jax.random.normal(next(kit), shape, jnp.float32)

    s = 1.0 / math.sqrt(D)
    params = {
        "embedding": 0.02 * jax.random.normal(next(kit), (vocab_size, D), jnp.float32),
        "wout": (s * jax.random.normal(next(kit), (D, vocab_size),
                                       jnp.float32)).astype(jnp.bfloat16),
        "bout": dense((1, vocab_size), 0.01),
    }

    wx, bx, we, be, wo, w1s, b1s, w2s, vecs = ([] for _ in range(9))
    for _ in range(DEC_LAYERS):
        wq1, wk1, wv1, wo1 = (dense((D, D), s) for _ in range(4))
        wq2, wk2, wv2, wo2 = (dense((D, D), s) for _ in range(4))
        w1 = dense((D, Dff), s)
        w2 = dense((Dff, D), 1.0 / math.sqrt(Dff))
        bq1, bk1, bv1, bo1 = (dense((D,), 0.01) for _ in range(4))
        bq2, bk2, bv2, bo2 = (dense((D,), 0.01) for _ in range(4))
        b1 = dense((Dff,), 0.01)
        b2 = dense((D,), 0.01)
        ln1_g = jnp.ones((D,), jnp.float32); ln1_b = jnp.zeros((D,), jnp.float32)
        ln2_g = jnp.ones((D,), jnp.float32); ln2_b = jnp.zeros((D,), jnp.float32)
        ln3_g = jnp.ones((D,), jnp.float32); ln3_b = jnp.zeros((D,), jnp.float32)

        wx.append(jnp.concatenate([wq1, wk1, wv1, wq2], axis=1))     # (D, 4D)
        bx.append(jnp.concatenate([bq1, bk1, bv1, bq2])[None, :])    # (1, 4D)
        we.append(jnp.concatenate([wk2, wv2], axis=1))               # (D, 2D)
        be.append(jnp.concatenate([bk2, bv2])[None, :])              # (1, 2D)
        wo.append(jnp.stack([wo1, wo2], axis=0))                     # (2, D, D)
        w1s.append(w1)
        b1s.append(b1[None, :])
        w2s.append(w2)
        vecs.append(jnp.stack([b2, bo1, bo2, ln1_g, ln1_b,
                               ln2_g, ln2_b, ln3_g, ln3_b], axis=0))  # (9, D)

    params["wx"] = jnp.stack(wx).astype(jnp.bfloat16)    # (L, D, 4D)
    params["bx"] = jnp.stack(bx)                         # (L, 1, 4D)
    params["we"] = jnp.stack(we).astype(jnp.bfloat16)    # (L, D, 2D)
    params["be"] = jnp.stack(be)                         # (L, 1, 2D)
    params["wo"] = jnp.stack(wo).astype(jnp.bfloat16)    # (L, 2, D, D)
    params["w1"] = jnp.stack(w1s).astype(jnp.bfloat16)   # (L, D, Dff)
    params["b1"] = jnp.stack(b1s)                        # (L, 1, Dff)
    params["w2"] = jnp.stack(w2s).astype(jnp.bfloat16)   # (L, Dff, D)
    params["vec"] = jnp.stack(vecs)                      # (L, 9, D)
    return params


# --------------------------------- main ---------------------------------------
if __name__ == "__main__":
    key = jax.random.PRNGKey(0)
    k_tok, k_enc, k_par = jax.random.split(key, 3)

    B, T, S, VOCAB = 2, 8, 8, 1024
    tokens = jax.random.randint(k_tok, (B, T), 0, VOCAB, dtype=jnp.int32)
    enc_out = jax.random.normal(k_enc, (B, S, NUM_HIDDENS), jnp.float32)
    enc_valid_len = jnp.array([5, 8], dtype=jnp.int32)

    params = init_params(k_par, VOCAB)

    logits = decoder_forward(tokens, enc_out, enc_valid_len, params)
    logits = jax.block_until_ready(logits)

    assert logits.shape == (B, T, VOCAB)
    assert bool(jnp.all(jnp.isfinite(logits)))
    print("KERNEL_OK")
</pallas_src>

<mosaic_0001>
module attributes {stable_mosaic.version = 11 : i64} {
  func.func @decoder_stack_kernel(%arg0: memref<2x1xi32, #tpu.memory_space<vmem>>, %arg1: memref<16x32xf32, #tpu.memory_space<vmem>>, %arg2: memref<16x32xf32, #tpu.memory_space<vmem>>, %arg3: memref<2x32x128xbf16, #tpu.memory_space<vmem>>, %arg4: memref<2x1x128xf32, #tpu.memory_space<vmem>>, %arg5: memref<2x32x64xbf16, #tpu.memory_space<vmem>>, %arg6: memref<2x1x64xf32, #tpu.memory_space<vmem>>, %arg7: memref<2x2x32x32xbf16, #tpu.memory_space<vmem>>, %arg8: memref<2x32x64xbf16, #tpu.memory_space<vmem>>, %arg9: memref<2x1x64xf32, #tpu.memory_space<vmem>>, %arg10: memref<2x64x32xbf16, #tpu.memory_space<vmem>>, %arg11: memref<2x9x32xf32, #tpu.memory_space<vmem>>, %arg12: memref<16x32xf32, #tpu.memory_space<vmem>>) attributes {dimension_semantics = [], scalar_prefetch = 0 : i64, scratch_operands = 0 : i64, tpu.core_type = #tpu.core_type<tc>} {
    %c0 = arith.constant 0 : index
    %c0_0 = arith.constant 0 : index
    %0 = vector.load %arg1[%c0, %c0_0] : memref<16x32xf32, #tpu.memory_space<vmem>>, vector<16x32xf32>
    %c0_1 = arith.constant 0 : index
    %c0_2 = arith.constant 0 : index
    %1 = vector.load %arg2[%c0_1, %c0_2] : memref<16x32xf32, #tpu.memory_space<vmem>>, vector<16x32xf32>
    %2 = arith.truncf %1 : vector<16x32xf32> to vector<16x32xbf16>
    %3 = tpu.iota {dimensions = array<i32: 0>} : vector<8x8xi32>
    %4 = tpu.iota {dimensions = array<i32: 1>} : vector<8x8xi32>
    %5 = arith.cmpi sle, %4, %3 : vector<8x8xi32>
    %6 = vector.shape_cast %5 : vector<8x8xi1> to vector<1x8x8xi1>
    %c0_3 = arith.constant 0 : index
    %c0_4 = arith.constant 0 : index
    %7 = vector.load %arg0[%c0_3, %c0_4] : memref<2x1xi32, #tpu.memory_space<vmem>>, vector<2x1xi32>
    %8 = vector.shape_cast %7 : vector<2x1xi32> to vector<1x2x1x1xi32>
    %9 = vector.shape_cast %8 : vector<1x2x1x1xi32> to vector<1x2x1x1xi32>
    %10 = vector.broadcast %9 : vector<1x2x1x1xi32> to vector<4x2x1x1xi32>
    %11 = vector.shape_cast %10 : vector<4x2x1x1xi32> to vector<8x1x1xi32>
    %12 = tpu.iota {dimensions = array<i32: 2>} : vector<8x1x8xi32>
    %13 = vector.broadcast %11 : vector<8x1x1xi32> to vector<8x1x8xi32>
    %14 = arith.cmpi slt, %12, %13 : vector<8x1x8xi32>
    %c0_5 = arith.constant 0 : index
    %c0_6 = arith.constant 0 : index
    %c0_7 = arith.constant 0 : index
    %15 = vector.load %arg11[%c0_5, %c0_6, %c0_7] : memref<2x9x32xf32, #tpu.memory_space<vmem>>, vector<1x9x32xf32>
    %16 = vector.shape_cast %15 : vector<1x9x32xf32> to vector<9x32xf32>
    %17 = arith.truncf %0 : vector<16x32xf32> to vector<16x32xbf16>
    %c0_8 = arith.constant 0 : index
    %c0_9 = arith.constant 0 : index
    %c0_10 = arith.constant 0 : index
    %18 = vector.load %arg3[%c0_8, %c0_9, %c0_10] : memref<2x32x128xbf16, #tpu.memory_space<vmem>>, vector<1x32x128xbf16>
    %19 = vector.shape_cast %18 : vector<1x32x128xbf16> to vector<32x128xbf16>
    %cst = arith.constant dense<0.000000e+00> : vector<16x128xf32>
    %20 = tpu.matmul %17, %19, %cst {dimension_numbers = #tpu.dot_dimension_numbers<[1], [0], [0], [1], [0, 0, 1, 1], [], []>} : vector<16x32xbf16>, vector<32x128xbf16>, vector<16x128xf32> -> vector<16x128xf32>
    %c0_11 = arith.constant 0 : index
    %c0_12 = arith.constant 0 : index
    %c0_13 = arith.constant 0 : index
    %21 = vector.load %arg4[%c0_11, %c0_12, %c0_13] : memref<2x1x128xf32, #tpu.memory_space<vmem>>, vector<1x1x128xf32>
    %22 = vector.shape_cast %21 : vector<1x1x128xf32> to vector<1x128xf32>
    %23 = vector.broadcast %22 : vector<1x128xf32> to vector<16x128xf32>
    %24 = arith.addf %20, %23 : vector<16x128xf32>
    %c0_14 = arith.constant 0 : index
    %c0_15 = arith.constant 0 : index
    %c0_16 = arith.constant 0 : index
    %25 = vector.load %arg5[%c0_14, %c0_15, %c0_16] : memref<2x32x64xbf16, #tpu.memory_space<vmem>>, vector<1x32x64xbf16>
    %26 = vector.shape_cast %25 : vector<1x32x64xbf16> to vector<32x64xbf16>
    %cst_17 = arith.constant dense<0.000000e+00> : vector<16x64xf32>
    %27 = tpu.matmul %2, %26, %cst_17 {dimension_numbers = #tpu.dot_dimension_numbers<[1], [0], [0], [1], [0, 0, 1, 1], [], []>} : vector<16x32xbf16>, vector<32x64xbf16>, vector<16x64xf32> -> vector<16x64xf32>
    %c0_18 = arith.constant 0 : index
    %c0_19 = arith.constant 0 : index
    %c0_20 = arith.constant 0 : index
    %28 = vector.load %arg6[%c0_18, %c0_19, %c0_20] : memref<2x1x64xf32, #tpu.memory_space<vmem>>, vector<1x1x64xf32>
    %29 = vector.shape_cast %28 : vector<1x1x64xf32> to vector<1x64xf32>
    %30 = vector.broadcast %29 : vector<1x64xf32> to vector<16x64xf32>
    %31 = arith.addf %27, %30 : vector<16x64xf32>
    %32 = vector.extract_strided_slice %24 {offsets = [0, 0], sizes = [16, 32], strides = [1, 1]} : vector<16x128xf32> to vector<16x32xf32>
    %33 = vector.shape_cast %32 : vector<16x32xf32> to vector<16x4x8xf32>
    %34 = tpu.transpose %33, [1, 0, 2] : vector<16x4x8xf32> -> vector<4x16x8xf32>
    %35 = vector.shape_cast %34 : vector<4x16x8xf32> to vector<8x8x8xf32>
    %36 = vector.extract_strided_slice %24 {offsets = [0, 32], sizes = [16, 32], strides = [1, 1]} : vector<16x128xf32> to vector<16x32xf32>
    %37 = vector.shape_cast %36 : vector<16x32xf32> to vector<16x4x8xf32>
    %38 = tpu.transpose %37, [1, 0, 2] : vector<16x4x8xf32> -> vector<4x16x8xf32>
    %39 = vector.shape_cast %38 : vector<4x16x8xf32> to vector<8x8x8xf32>
    %40 = vector.extract_strided_slice %24 {offsets = [0, 64], sizes = [16, 32], strides = [1, 1]} : vector<16x128xf32> to vector<16x32xf32>
    %41 = vector.shape_cast %40 : vector<16x32xf32> to vector<16x4x8xf32>
    %42 = tpu.transpose %41, [1, 0, 2] : vector<16x4x8xf32> -> vector<4x16x8xf32>
    %43 = vector.shape_cast %42 : vector<4x16x8xf32> to vector<8x8x8xf32>
    %44 = vector.extract_strided_slice %24 {offsets = [0, 96], sizes = [16, 32], strides = [1, 1]} : vector<16x128xf32> to vector<16x32xf32>
    %45 = vector.shape_cast %44 : vector<16x32xf32> to vector<16x4x8xf32>
    %46 = tpu.transpose %45, [1, 0, 2] : vector<16x4x8xf32> -> vector<4x16x8xf32>
    %47 = vector.shape_cast %46 : vector<4x16x8xf32> to vector<8x8x8xf32>
    %48 = vector.extract_strided_slice %31 {offsets = [0, 0], sizes = [16, 32], strides = [1, 1]} : vector<16x64xf32> to vector<16x32xf32>
    %49 = vector.shape_cast %48 : vector<16x32xf32> to vector<16x4x8xf32>
    %50 = tpu.transpose %49, [1, 0, 2] : vector<16x4x8xf32> -> vector<4x16x8xf32>
    %51 = vector.shape_cast %50 : vector<4x16x8xf32> to vector<8x8x8xf32>
    %52 = vector.extract_strided_slice %31 {offsets = [0, 32], sizes = [16, 32], strides = [1, 1]} : vector<16x64xf32> to vector<16x32xf32>
    %53 = vector.shape_cast %52 : vector<16x32xf32> to vector<16x4x8xf32>
    %54 = tpu.transpose %53, [1, 0, 2] : vector<16x4x8xf32> -> vector<4x16x8xf32>
    %55 = vector.shape_cast %54 : vector<4x16x8xf32> to vector<8x8x8xf32>
    "tpu.trace_start"() <{level = 10 : i32, message = "bqd,bkd->bqk"}> : () -> ()
    %cst_21 = arith.constant dense<0.000000e+00> : vector<8x8x8xf32>
    %56 = tpu.matmul %35, %39, %cst_21 {dimension_numbers = #tpu.dot_dimension_numbers<[2], [2], [1], [1], [0, 0, 0, 1, 1, 1], [0], [0]>} : vector<8x8x8xf32>, vector<8x8x8xf32>, vector<8x8x8xf32> -> vector<8x8x8xf32>
    "tpu.trace_stop"() : () -> ()
    %cst_22 = arith.constant 0.353553385 : f32
    %57 = vector.broadcast %cst_22 : f32 to vector<8x8x8xf32>
    %58 = arith.mulf %56, %57 : vector<8x8x8xf32>
    %cst_23 = arith.constant -1.000000e+06 : f32
    %59 = vector.shape_cast %6 : vector<1x8x8xi1> to vector<1x8x8xi1>
    %60 = vector.broadcast %59 : vector<1x8x8xi1> to vector<8x8x8xi1>
    %61 = vector.broadcast %cst_23 : f32 to vector<8x8x8xf32>
    %62 = arith.select %60, %58, %61 : vector<8x8x8xi1>, vector<8x8x8xf32>
    %cst_24 = arith.constant dense<0xFF800000> : vector<8x8xf32>
    %63 = vector.multi_reduction <maximumf>, %62, %cst_24 [2] : vector<8x8x8xf32> to vector<8x8xf32>
    %64 = vector.shape_cast %63 : vector<8x8xf32> to vector<8x8x1xf32>
    %65 = vector.broadcast %64 : vector<8x8x1xf32> to vector<8x8x8xf32>
    %66 = arith.subf %62, %65 : vector<8x8x8xf32>
    %67 = math.exp %66 : vector<8x8x8xf32>
    %cst_25 = arith.constant dense<0.000000e+00> : vector<8x8xf32>
    %68 = vector.multi_reduction <add>, %67, %cst_25 [2] : vector<8x8x8xf32> to vector<8x8xf32>
    %69 = vector.shape_cast %68 : vector<8x8xf32> to vector<8x8x1xf32>
    %70 = tpu.reciprocal %69 {approx = true} : vector<8x8x1xf32> -> vector<8x8x1xf32>
    %71 = vector.broadcast %70 : vector<8x8x1xf32> to vector<8x8x8xf32>
    %72 = arith.mulf %67, %71 : vector<8x8x8xf32>
    "tpu.trace_start"() <{level = 10 : i32, message = "bqk,bkd->bqd"}> : () -> ()
    %cst_26 = arith.constant dense<0.000000e+00> : vector<8x8x8xf32>
    %73 = tpu.matmul %72, %43, %cst_26 {dimension_numbers = #tpu.dot_dimension_numbers<[2], [1], [1], [2], [0, 0, 0, 1, 1, 2], [0], [0]>} : vector<8x8x8xf32>, vector<8x8x8xf32>, vector<8x8x8xf32> -> vector<8x8x8xf32>
    "tpu.trace_stop"() : () -> ()
    %74 = vector.shape_cast %73 : vector<8x8x8xf32> to vector<4x16x8xf32>
    %75 = tpu.transpose %74, [1, 0, 2] : vector<4x16x8xf32> -> vector<16x4x8xf32>
    %76 = vector.shape_cast %75 : vector<16x4x8xf32> to vector<16x32xf32>
    "tpu.trace_start"() <{level = 10 : i32, message = "bqd,bkd->bqk"}> : () -> ()
    %cst_27 = arith.constant dense<0.000000e+00> : vector<8x8x8xf32>
    %77 = tpu.matmul %47, %51, %cst_27 {dimension_numbers = #tpu.dot_dimension_numbers<[2], [2], [1], [1], [0, 0, 0, 1, 1, 1], [0], [0]>} : vector<8x8x8xf32>, vector<8x8x8xf32>, vector<8x8x8xf32> -> vector<8x8x8xf32>
    "tpu.trace_stop"() : () -> ()
    %cst_28 = arith.constant 0.353553385 : f32
    %78 = vector.broadcast %cst_28 : f32 to vector<8x8x8xf32>
    %79 = arith.mulf %77, %78 : vector<8x8x8xf32>
    %cst_29 = arith.constant -1.000000e+06 : f32
    %80 = vector.shape_cast %14 : vector<8x1x8xi1> to vector<8x1x8xi1>
    %81 = vector.broadcast %80 : vector<8x1x8xi1> to vector<8x8x8xi1>
    %82 = vector.broadcast %cst_29 : f32 to vector<8x8x8xf32>
    %83 = arith.select %81, %79, %82 : vector<8x8x8xi1>, vector<8x8x8xf32>
    %cst_30 = arith.constant dense<0xFF800000> : vector<8x8xf32>
    %84 = vector.multi_reduction <maximumf>, %83, %cst_30 [2] : vector<8x8x8xf32> to vector<8x8xf32>
    %85 = vector.shape_cast %84 : vector<8x8xf32> to vector<8x8x1xf32>
    %86 = vector.broadcast %85 : vector<8x8x1xf32> to vector<8x8x8xf32>
    %87 = arith.subf %83, %86 : vector<8x8x8xf32>
    %88 = math.exp %87 : vector<8x8x8xf32>
    %cst_31 = arith.constant dense<0.000000e+00> : vector<8x8xf32>
    %89 = vector.multi_reduction <add>, %88, %cst_31 [2] : vector<8x8x8xf32> to vector<8x8xf32>
    %90 = vector.shape_cast %89 : vector<8x8xf32> to vector<8x8x1xf32>
    %91 = tpu.reciprocal %90 {approx = true} : vector<8x8x1xf32> -> vector<8x8x1xf32>
    %92 = vector.broadcast %91 : vector<8x8x1xf32> to vector<8x8x8xf32>
    %93 = arith.mulf %88, %92 : vector<8x8x8xf32>
    "tpu.trace_start"() <{level = 10 : i32, message = "bqk,bkd->bqd"}> : () -> ()
    %cst_32 = arith.constant dense<0.000000e+00> : vector<8x8x8xf32>
    %94 = tpu.matmul %93, %55, %cst_32 {dimension_numbers = #tpu.dot_dimension_numbers<[2], [1], [1], [2], [0, 0, 0, 1, 1, 2], [0], [0]>} : vector<8x8x8xf32>, vector<8x8x8xf32>, vector<8x8x8xf32> -> vector<8x8x8xf32>
    "tpu.trace_stop"() : () -> ()
    %95 = vector.shape_cast %94 : vector<8x8x8xf32> to vector<4x16x8xf32>
    %96 = tpu.transpose %95, [1, 0, 2] : vector<4x16x8xf32> -> vector<16x4x8xf32>
    %97 = vector.shape_cast %96 : vector<16x4x8xf32> to vector<16x32xf32>
    %98 = arith.truncf %76 : vector<16x32xf32> to vector<16x32xbf16>
    %c0_33 = arith.constant 0 : index
    %c0_34 = arith.constant 0 : index
    %c0_35 = arith.constant 0 : index
    %c0_36 = arith.constant 0 : index
    %99 = vector.load %arg7[%c0_33, %c0_34, %c0_35, %c0_36] : memref<2x2x32x32xbf16, #tpu.memory_space<vmem>>, vector<1x1x32x32xbf16>
    %100 = vector.shape_cast %99 : vector<1x1x32x32xbf16> to vector<32x32xbf16>
    %cst_37 = arith.constant dense<0.000000e+00> : vector<16x32xf32>
    %101 = tpu.matmul %98, %100, %cst_37 {dimension_numbers = #tpu.dot_dimension_numbers<[1], [0], [0], [1], [0, 0, 1, 1], [], []>} : vector<16x32xbf16>, vector<32x32xbf16>, vector<16x32xf32> -> vector<16x32xf32>
    %102 = vector.extract_strided_slice %16 {offsets = [1, 0], sizes = [1, 32], strides = [1, 1]} : vector<9x32xf32> to vector<1x32xf32>
    %103 = vector.broadcast %102 : vector<1x32xf32> to vector<16x32xf32>
    %104 = arith.addf %101, %103 : vector<16x32xf32>
    %105 = arith.truncf %97 : vector<16x32xf32> to vector<16x32xbf16>
    %c0_38 = arith.constant 0 : index
    %c1 = arith.constant 1 : index
    %c0_39 = arith.constant 0 : index
    %c0_40 = arith.constant 0 : index
    %106 = vector.load %arg7[%c0_38, %c1, %c0_39, %c0_40] : memref<2x2x32x32xbf16, #tpu.memory_space<vmem>>, vector<1x1x32x32xbf16>
    %107 = vector.shape_cast %106 : vector<1x1x32x32xbf16> to vector<32x32xbf16>
    %cst_41 = arith.constant dense<0.000000e+00> : vector<16x32xf32>
    %108 = tpu.matmul %105, %107, %cst_41 {dimension_numbers = #tpu.dot_dimension_numbers<[1], [0], [0], [1], [0, 0, 1, 1], [], []>} : vector<16x32xbf16>, vector<32x32xbf16>, vector<16x32xf32> -> vector<16x32xf32>
    %109 = vector.extract_strided_slice %16 {offsets = [2, 0], sizes = [1, 32], strides = [1, 1]} : vector<9x32xf32> to vector<1x32xf32>
    %110 = vector.broadcast %109 : vector<1x32xf32> to vector<16x32xf32>
    %111 = arith.addf %108, %110 : vector<16x32xf32>
    %112 = arith.addf %0, %104 : vector<16x32xf32>
    %113 = vector.extract_strided_slice %16 {offsets = [3, 0], sizes = [1, 32], strides = [1, 1]} : vector<9x32xf32> to vector<1x32xf32>
    %114 = vector.extract_strided_slice %16 {offsets = [4, 0], sizes = [1, 32], strides = [1, 1]} : vector<9x32xf32> to vector<1x32xf32>
    %cst_42 = arith.constant dense<0.000000e+00> : vector<16xf32>
    %115 = vector.multi_reduction <add>, %112, %cst_42 [1] : vector<16x32xf32> to vector<16xf32>
    %116 = vector.shape_cast %115 : vector<16xf32> to vector<16x1xf32>
    %cst_43 = arith.constant 3.200000e+01 : f32
    %117 = vector.broadcast %cst_43 : f32 to vector<16x1xf32>
    %118 = arith.divf %116, %117 : vector<16x1xf32>
    %119 = vector.broadcast %118 : vector<16x1xf32> to vector<16x32xf32>
    %120 = arith.subf %112, %119 : vector<16x32xf32>
    %121 = arith.mulf %120, %120 : vector<16x32xf32>
    %cst_44 = arith.constant dense<0.000000e+00> : vector<16xf32>
    %122 = vector.multi_reduction <add>, %121, %cst_44 [1] : vector<16x32xf32> to vector<16xf32>
    %123 = vector.shape_cast %122 : vector<16xf32> to vector<16x1xf32>
    %cst_45 = arith.constant 3.200000e+01 : f32
    %124 = vector.broadcast %cst_45 : f32 to vector<16x1xf32>
    %125 = arith.divf %123, %124 : vector<16x1xf32>
    %126 = vector.broadcast %118 : vector<16x1xf32> to vector<16x32xf32>
    %127 = arith.subf %112, %126 : vector<16x32xf32>
    %cst_46 = arith.constant 9.99999974E-6 : f32
    %128 = vector.broadcast %cst_46 : f32 to vector<16x1xf32>
    %129 = arith.addf %125, %128 : vector<16x1xf32>
    %130 = math.rsqrt %129 : vector<16x1xf32>
    %131 = vector.broadcast %130 : vector<16x1xf32> to vector<16x32xf32>
    %132 = arith.mulf %127, %131 : vector<16x32xf32>
    %133 = vector.broadcast %113 : vector<1x32xf32> to vector<16x32xf32>
    %134 = arith.mulf %132, %133 : vector<16x32xf32>
    %135 = vector.broadcast %114 : vector<1x32xf32> to vector<16x32xf32>
    %136 = arith.addf %134, %135 : vector<16x32xf32>
    %137 = arith.addf %136, %111 : vector<16x32xf32>
    %138 = vector.extract_strided_slice %16 {offsets = [5, 0], sizes = [1, 32], strides = [1, 1]} : vector<9x32xf32> to vector<1x32xf32>
    %139 = vector.extract_strided_slice %16 {offsets = [6, 0], sizes = [1, 32], strides = [1, 1]} : vector<9x32xf32> to vector<1x32xf32>
    %cst_47 = arith.constant dense<0.000000e+00> : vector<16xf32>
    %140 = vector.multi_reduction <add>, %137, %cst_47 [1] : vector<16x32xf32> to vector<16xf32>
    %141 = vector.shape_cast %140 : vector<16xf32> to vector<16x1xf32>
    %cst_48 = arith.constant 3.200000e+01 : f32
    %142 = vector.broadcast %cst_48 : f32 to vector<16x1xf32>
    %143 = arith.divf %141, %142 : vector<16x1xf32>
    %144 = vector.broadcast %143 : vector<16x1xf32> to vector<16x32xf32>
    %145 = arith.subf %137, %144 : vector<16x32xf32>
    %146 = arith.mulf %145, %145 : vector<16x32xf32>
    %cst_49 = arith.constant dense<0.000000e+00> : vector<16xf32>
    %147 = vector.multi_reduction <add>, %146, %cst_49 [1] : vector<16x32xf32> to vector<16xf32>
    %148 = vector.shape_cast %147 : vector<16xf32> to vector<16x1xf32>
    %cst_50 = arith.constant 3.200000e+01 : f32
    %149 = vector.broadcast %cst_50 : f32 to vector<16x1xf32>
    %150 = arith.divf %148, %149 : vector<16x1xf32>
    %151 = vector.broadcast %143 : vector<16x1xf32> to vector<16x32xf32>
    %152 = arith.subf %137, %151 : vector<16x32xf32>
    %cst_51 = arith.constant 9.99999974E-6 : f32
    %153 = vector.broadcast %cst_51 : f32 to vector<16x1xf32>
    %154 = arith.addf %150, %153 : vector<16x1xf32>
    %155 = math.rsqrt %154 : vector<16x1xf32>
    %156 = vector.broadcast %155 : vector<16x1xf32> to vector<16x32xf32>
    %157 = arith.mulf %152, %156 : vector<16x32xf32>
    %158 = vector.broadcast %138 : vector<1x32xf32> to vector<16x32xf32>
    %159 = arith.mulf %157, %158 : vector<16x32xf32>
    %160 = vector.broadcast %139 : vector<1x32xf32> to vector<16x32xf32>
    %161 = arith.addf %159, %160 : vector<16x32xf32>
    %162 = arith.truncf %161 : vector<16x32xf32> to vector<16x32xbf16>
    %c0_52 = arith.constant 0 : index
    %c0_53 = arith.constant 0 : index
    %c0_54 = arith.constant 0 : index
    %163 = vector.load %arg8[%c0_52, %c0_53, %c0_54] : memref<2x32x64xbf16, #tpu.memory_space<vmem>>, vector<1x32x64xbf16>
    %164 = vector.shape_cast %163 : vector<1x32x64xbf16> to vector<32x64xbf16>
    %cst_55 = arith.constant dense<0.000000e+00> : vector<16x64xf32>
    %165 = tpu.matmul %162, %164, %cst_55 {dimension_numbers = #tpu.dot_dimension_numbers<[1], [0], [0], [1], [0, 0, 1, 1], [], []>} : vector<16x32xbf16>, vector<32x64xbf16>, vector<16x64xf32> -> vector<16x64xf32>
    %c0_56 = arith.constant 0 : index
    %c0_57 = arith.constant 0 : index
    %c0_58 = arith.constant 0 : index
    %166 = vector.load %arg9[%c0_56, %c0_57, %c0_58] : memref<2x1x64xf32, #tpu.memory_space<vmem>>, vector<1x1x64xf32>
    %167 = vector.shape_cast %166 : vector<1x1x64xf32> to vector<1x64xf32>
    %168 = vector.broadcast %167 : vector<1x64xf32> to vector<16x64xf32>
    %169 = arith.addf %165, %168 : vector<16x64xf32>
    %cst_59 = arith.constant 0.000000e+00 : f32
    %170 = vector.broadcast %cst_59 : f32 to vector<16x64xf32>
    %171 = arith.maximumf %169, %170 : vector<16x64xf32>
    %172 = arith.truncf %171 : vector<16x64xf32> to vector<16x64xbf16>
    %c0_60 = arith.constant 0 : index
    %c0_61 = arith.constant 0 : index
    %c0_62 = arith.constant 0 : index
    %173 = vector.load %arg10[%c0_60, %c0_61, %c0_62] : memref<2x64x32xbf16, #tpu.memory_space<vmem>>, vector<1x64x32xbf16>
    %174 = vector.shape_cast %173 : vector<1x64x32xbf16> to vector<64x32xbf16>
    %cst_63 = arith.constant dense<0.000000e+00> : vector<16x32xf32>
    %175 = tpu.matmul %172, %174, %cst_63 {dimension_numbers = #tpu.dot_dimension_numbers<[1], [0], [0], [1], [0, 0, 1, 1], [], []>} : vector<16x64xbf16>, vector<64x32xbf16>, vector<16x32xf32> -> vector<16x32xf32>
    %176 = vector.extract_strided_slice %16 {offsets = [0, 0], sizes = [1, 32], strides = [1, 1]} : vector<9x32xf32> to vector<1x32xf32>
    %177 = vector.broadcast %176 : vector<1x32xf32> to vector<16x32xf32>
    %178 = arith.addf %175, %177 : vector<16x32xf32>
    %179 = arith.addf %161, %178 : vector<16x32xf32>
    %180 = vector.extract_strided_slice %16 {offsets = [7, 0], sizes = [1, 32], strides = [1, 1]} : vector<9x32xf32> to vector<1x32xf32>
    %181 = vector.extract_strided_slice %16 {offsets = [8, 0], sizes = [1, 32], strides = [1, 1]} : vector<9x32xf32> to vector<1x32xf32>
    %cst_64 = arith.constant dense<0.000000e+00> : vector<16xf32>
    %182 = vector.multi_reduction <add>, %179, %cst_64 [1] : vector<16x32xf32> to vector<16xf32>
    %183 = vector.shape_cast %182 : vector<16xf32> to vector<16x1xf32>
    %cst_65 = arith.constant 3.200000e+01 : f32
    %184 = vector.broadcast %cst_65 : f32 to vector<16x1xf32>
    %185 = arith.divf %183, %184 : vector<16x1xf32>
    %186 = vector.broadcast %185 : vector<16x1xf32> to vector<16x32xf32>
    %187 = arith.subf %179, %186 : vector<16x32xf32>
    %188 = arith.mulf %187, %187 : vector<16x32xf32>
    %cst_66 = arith.constant dense<0.000000e+00> : vector<16xf32>
    %189 = vector.multi_reduction <add>, %188, %cst_66 [1] : vector<16x32xf32> to vector<16xf32>
    %190 = vector.shape_cast %189 : vector<16xf32> to vector<16x1xf32>
    %cst_67 = arith.constant 3.200000e+01 : f32
    %191 = vector.broadcast %cst_67 : f32 to vector<16x1xf32>
    %192 = arith.divf %190, %191 : vector<16x1xf32>
    %193 = vector.broadcast %185 : vector<16x1xf32> to vector<16x32xf32>
    %194 = arith.subf %179, %193 : vector<16x32xf32>
    %cst_68 = arith.constant 9.99999974E-6 : f32
    %195 = vector.broadcast %cst_68 : f32 to vector<16x1xf32>
    %196 = arith.addf %192, %195 : vector<16x1xf32>
    %197 = math.rsqrt %196 : vector<16x1xf32>
    %198 = vector.broadcast %197 : vector<16x1xf32> to vector<16x32xf32>
    %199 = arith.mulf %194, %198 : vector<16x32xf32>
    %200 = vector.broadcast %180 : vector<1x32xf32> to vector<16x32xf32>
    %201 = arith.mulf %199, %200 : vector<16x32xf32>
    %202 = vector.broadcast %181 : vector<1x32xf32> to vector<16x32xf32>
    %203 = arith.addf %201, %202 : vector<16x32xf32>
    %c1_69 = arith.constant 1 : index
    %c0_70 = arith.constant 0 : index
    %c0_71 = arith.constant 0 : index
    %204 = vector.load %arg11[%c1_69, %c0_70, %c0_71] : memref<2x9x32xf32, #tpu.memory_space<vmem>>, vector<1x9x32xf32>
    %205 = vector.shape_cast %204 : vector<1x9x32xf32> to vector<9x32xf32>
    %206 = arith.truncf %203 : vector<16x32xf32> to vector<16x32xbf16>
    %c1_72 = arith.constant 1 : index
    %c0_73 = arith.constant 0 : index
    %c0_74 = arith.constant 0 : index
    %207 = vector.load %arg3[%c1_72, %c0_73, %c0_74] : memref<2x32x128xbf16, #tpu.memory_space<vmem>>, vector<1x32x128xbf16>
    %208 = vector.shape_cast %207 : vector<1x32x128xbf16> to vector<32x128xbf16>
    %cst_75 = arith.constant dense<0.000000e+00> : vector<16x128xf32>
    %209 = tpu.matmul %206, %208, %cst_75 {dimension_numbers = #tpu.dot_dimension_numbers<[1], [0], [0], [1], [0, 0, 1, 1], [], []>} : vector<16x32xbf16>, vector<32x128xbf16>, vector<16x128xf32> -> vector<16x128xf32>
    %c1_76 = arith.constant 1 : index
    %c0_77 = arith.constant 0 : index
    %c0_78 = arith.constant 0 : index
    %210 = vector.load %arg4[%c1_76, %c0_77, %c0_78] : memref<2x1x128xf32, #tpu.memory_space<vmem>>, vector<1x1x128xf32>
    %211 = vector.shape_cast %210 : vector<1x1x128xf32> to vector<1x128xf32>
    %212 = vector.broadcast %211 : vector<1x128xf32> to vector<16x128xf32>
    %213 = arith.addf %209, %212 : vector<16x128xf32>
    %c1_79 = arith.constant 1 : index
    %c0_80 = arith.constant 0 : index
    %c0_81 = arith.constant 0 : index
    %214 = vector.load %arg5[%c1_79, %c0_80, %c0_81] : memref<2x32x64xbf16, #tpu.memory_space<vmem>>, vector<1x32x64xbf16>
    %215 = vector.shape_cast %214 : vector<1x32x64xbf16> to vector<32x64xbf16>
    %cst_82 = arith.constant dense<0.000000e+00> : vector<16x64xf32>
    %216 = tpu.matmul %2, %215, %cst_82 {dimension_numbers = #tpu.dot_dimension_numbers<[1], [0], [0], [1], [0, 0, 1, 1], [], []>} : vector<16x32xbf16>, vector<32x64xbf16>, vector<16x64xf32> -> vector<16x64xf32>
    %c1_83 = arith.constant 1 : index
    %c0_84 = arith.constant 0 : index
    %c0_85 = arith.constant 0 : index
    %217 = vector.load %arg6[%c1_83, %c0_84, %c0_85] : memref<2x1x64xf32, #tpu.memory_space<vmem>>, vector<1x1x64xf32>
    %218 = vector.shape_cast %217 : vector<1x1x64xf32> to vector<1x64xf32>
    %219 = vector.broadcast %218 : vector<1x64xf32> to vector<16x64xf32>
    %220 = arith.addf %216, %219 : vector<16x64xf32>
    %221 = vector.extract_strided_slice %213 {offsets = [0, 0], sizes = [16, 32], strides = [1, 1]} : vector<16x128xf32> to vector<16x32xf32>
    %222 = vector.shape_cast %221 : vector<16x32xf32> to vector<16x4x8xf32>
    %223 = tpu.transpose %222, [1, 0, 2] : vector<16x4x8xf32> -> vector<4x16x8xf32>
    %224 = vector.shape_cast %223 : vector<4x16x8xf32> to vector<8x8x8xf32>
    %225 = vector.extract_strided_slice %213 {offsets = [0, 32], sizes = [16, 32], strides = [1, 1]} : vector<16x128xf32> to vector<16x32xf32>
    %226 = vector.shape_cast %225 : vector<16x32xf32> to vector<16x4x8xf32>
    %227 = tpu.transpose %226, [1, 0, 2] : vector<16x4x8xf32> -> vector<4x16x8xf32>
    %228 = vector.shape_cast %227 : vector<4x16x8xf32> to vector<8x8x8xf32>
    %229 = vector.extract_strided_slice %213 {offsets = [0, 64], sizes = [16, 32], strides = [1, 1]} : vector<16x128xf32> to vector<16x32xf32>
    %230 = vector.shape_cast %229 : vector<16x32xf32> to vector<16x4x8xf32>
    %231 = tpu.transpose %230, [1, 0, 2] : vector<16x4x8xf32> -> vector<4x16x8xf32>
    %232 = vector.shape_cast %231 : vector<4x16x8xf32> to vector<8x8x8xf32>
    %233 = vector.extract_strided_slice %213 {offsets = [0, 96], sizes = [16, 32], strides = [1, 1]} : vector<16x128xf32> to vector<16x32xf32>
    %234 = vector.shape_cast %233 : vector<16x32xf32> to vector<16x4x8xf32>
    %235 = tpu.transpose %234, [1, 0, 2] : vector<16x4x8xf32> -> vector<4x16x8xf32>
    %236 = vector.shape_cast %235 : vector<4x16x8xf32> to vector<8x8x8xf32>
    %237 = vector.extract_strided_slice %220 {offsets = [0, 0], sizes = [16, 32], strides = [1, 1]} : vector<16x64xf32> to vector<16x32xf32>
    %238 = vector.shape_cast %237 : vector<16x32xf32> to vector<16x4x8xf32>
    %239 = tpu.transpose %238, [1, 0, 2] : vector<16x4x8xf32> -> vector<4x16x8xf32>
    %240 = vector.shape_cast %239 : vector<4x16x8xf32> to vector<8x8x8xf32>
    %241 = vector.extract_strided_slice %220 {offsets = [0, 32], sizes = [16, 32], strides = [1, 1]} : vector<16x64xf32> to vector<16x32xf32>
    %242 = vector.shape_cast %241 : vector<16x32xf32> to vector<16x4x8xf32>
    %243 = tpu.transpose %242, [1, 0, 2] : vector<16x4x8xf32> -> vector<4x16x8xf32>
    %244 = vector.shape_cast %243 : vector<4x16x8xf32> to vector<8x8x8xf32>
    "tpu.trace_start"() <{level = 10 : i32, message = "bqd,bkd->bqk"}> : () -> ()
    %cst_86 = arith.constant dense<0.000000e+00> : vector<8x8x8xf32>
    %245 = tpu.matmul %224, %228, %cst_86 {dimension_numbers = #tpu.dot_dimension_numbers<[2], [2], [1], [1], [0, 0, 0, 1, 1, 1], [0], [0]>} : vector<8x8x8xf32>, vector<8x8x8xf32>, vector<8x8x8xf32> -> vector<8x8x8xf32>
    "tpu.trace_stop"() : () -> ()
    %cst_87 = arith.constant 0.353553385 : f32
    %246 = vector.broadcast %cst_87 : f32 to vector<8x8x8xf32>
    %247 = arith.mulf %245, %246 : vector<8x8x8xf32>
    %cst_88 = arith.constant -1.000000e+06 : f32
    %248 = vector.shape_cast %6 : vector<1x8x8xi1> to vector<1x8x8xi1>
    %249 = vector.broadcast %248 : vector<1x8x8xi1> to vector<8x8x8xi1>
    %250 = vector.broadcast %cst_88 : f32 to vector<8x8x8xf32>
    %251 = arith.select %249, %247, %250 : vector<8x8x8xi1>, vector<8x8x8xf32>
    %cst_89 = arith.constant dense<0xFF800000> : vector<8x8xf32>
    %252 = vector.multi_reduction <maximumf>, %251, %cst_89 [2] : vector<8x8x8xf32> to vector<8x8xf32>
    %253 = vector.shape_cast %252 : vector<8x8xf32> to vector<8x8x1xf32>
    %254 = vector.broadcast %253 : vector<8x8x1xf32> to vector<8x8x8xf32>
    %255 = arith.subf %251, %254 : vector<8x8x8xf32>
    %256 = math.exp %255 : vector<8x8x8xf32>
    %cst_90 = arith.constant dense<0.000000e+00> : vector<8x8xf32>
    %257 = vector.multi_reduction <add>, %256, %cst_90 [2] : vector<8x8x8xf32> to vector<8x8xf32>
    %258 = vector.shape_cast %257 : vector<8x8xf32> to vector<8x8x1xf32>
    %259 = tpu.reciprocal %258 {approx = true} : vector<8x8x1xf32> -> vector<8x8x1xf32>
    %260 = vector.broadcast %259 : vector<8x8x1xf32> to vector<8x8x8xf32>
    %261 = arith.mulf %256, %260 : vector<8x8x8xf32>
    "tpu.trace_start"() <{level = 10 : i32, message = "bqk,bkd->bqd"}> : () -> ()
    %cst_91 = arith.constant dense<0.000000e+00> : vector<8x8x8xf32>
    %262 = tpu.matmul %261, %232, %cst_91 {dimension_numbers = #tpu.dot_dimension_numbers<[2], [1], [1], [2], [0, 0, 0, 1, 1, 2], [0], [0]>} : vector<8x8x8xf32>, vector<8x8x8xf32>, vector<8x8x8xf32> -> vector<8x8x8xf32>
    "tpu.trace_stop"() : () -> ()
    %263 = vector.shape_cast %262 : vector<8x8x8xf32> to vector<4x16x8xf32>
    %264 = tpu.transpose %263, [1, 0, 2] : vector<4x16x8xf32> -> vector<16x4x8xf32>
    %265 = vector.shape_cast %264 : vector<16x4x8xf32> to vector<16x32xf32>
    "tpu.trace_start"() <{level = 10 : i32, message = "bqd,bkd->bqk"}> : () -> ()
    %cst_92 = arith.constant dense<0.000000e+00> : vector<8x8x8xf32>
    %266 = tpu.matmul %236, %240, %cst_92 {dimension_numbers = #tpu.dot_dimension_numbers<[2], [2], [1], [1], [0, 0, 0, 1, 1, 1], [0], [0]>} : vector<8x8x8xf32>, vector<8x8x8xf32>, vector<8x8x8xf32> -> vector<8x8x8xf32>
    "tpu.trace_stop"() : () -> ()
    %cst_93 = arith.constant 0.353553385 : f32
    %267 = vector.broadcast %cst_93 : f32 to vector<8x8x8xf32>
    %268 = arith.mulf %266, %267 : vector<8x8x8xf32>
    %cst_94 = arith.constant -1.000000e+06 : f32
    %269 = vector.shape_cast %14 : vector<8x1x8xi1> to vector<8x1x8xi1>
    %270 = vector.broadcast %269 : vector<8x1x8xi1> to vector<8x8x8xi1>
    %271 = vector.broadcast %cst_94 : f32 to vector<8x8x8xf32>
    %272 = arith.select %270, %268, %271 : vector<8x8x8xi1>, vector<8x8x8xf32>
    %cst_95 = arith.constant dense<0xFF800000> : vector<8x8xf32>
    %273 = vector.multi_reduction <maximumf>, %272, %cst_95 [2] : vector<8x8x8xf32> to vector<8x8xf32>
    %274 = vector.shape_cast %273 : vector<8x8xf32> to vector<8x8x1xf32>
    %275 = vector.broadcast %274 : vector<8x8x1xf32> to vector<8x8x8xf32>
    %276 = arith.subf %272, %275 : vector<8x8x8xf32>
    %277 = math.exp %276 : vector<8x8x8xf32>
    %cst_96 = arith.constant dense<0.000000e+00> : vector<8x8xf32>
    %278 = vector.multi_reduction <add>, %277, %cst_96 [2] : vector<8x8x8xf32> to vector<8x8xf32>
    %279 = vector.shape_cast %278 : vector<8x8xf32> to vector<8x8x1xf32>
    %280 = tpu.reciprocal %279 {approx = true} : vector<8x8x1xf32> -> vector<8x8x1xf32>
    %281 = vector.broadcast %280 : vector<8x8x1xf32> to vector<8x8x8xf32>
    %282 = arith.mulf %277, %281 : vector<8x8x8xf32>
    "tpu.trace_start"() <{level = 10 : i32, message = "bqk,bkd->bqd"}> : () -> ()
    %cst_97 = arith.constant dense<0.000000e+00> : vector<8x8x8xf32>
    %283 = tpu.matmul %282, %244, %cst_97 {dimension_numbers = #tpu.dot_dimension_numbers<[2], [1], [1], [2], [0, 0, 0, 1, 1, 2], [0], [0]>} : vector<8x8x8xf32>, vector<8x8x8xf32>, vector<8x8x8xf32> -> vector<8x8x8xf32>
    "tpu.trace_stop"() : () -> ()
    %284 = vector.shape_cast %283 : vector<8x8x8xf32> to vector<4x16x8xf32>
    %285 = tpu.transpose %284, [1, 0, 2] : vector<4x16x8xf32> -> vector<16x4x8xf32>
    %286 = vector.shape_cast %285 : vector<16x4x8xf32> to vector<16x32xf32>
    %287 = arith.truncf %265 : vector<16x32xf32> to vector<16x32xbf16>
    %c1_98 = arith.constant 1 : index
    %c0_99 = arith.constant 0 : index
    %c0_100 = arith.constant 0 : index
    %c0_101 = arith.constant 0 : index
    %288 = vector.load %arg7[%c1_98, %c0_99, %c0_100, %c0_101] : memref<2x2x32x32xbf16, #tpu.memory_space<vmem>>, vector<1x1x32x32xbf16>
    %289 = vector.shape_cast %288 : vector<1x1x32x32xbf16> to vector<32x32xbf16>
    %cst_102 = arith.constant dense<0.000000e+00> : vector<16x32xf32>
    %290 = tpu.matmul %287, %289, %cst_102 {dimension_numbers = #tpu.dot_dimension_numbers<[1], [0], [0], [1], [0, 0, 1, 1], [], []>} : vector<16x32xbf16>, vector<32x32xbf16>, vector<16x32xf32> -> vector<16x32xf32>
    %291 = vector.extract_strided_slice %205 {offsets = [1, 0], sizes = [1, 32], strides = [1, 1]} : vector<9x32xf32> to vector<1x32xf32>
    %292 = vector.broadcast %291 : vector<1x32xf32> to vector<16x32xf32>
    %293 = arith.addf %290, %292 : vector<16x32xf32>
    %294 = arith.truncf %286 : vector<16x32xf32> to vector<16x32xbf16>
    %c1_103 = arith.constant 1 : index
    %c1_104 = arith.constant 1 : index
    %c0_105 = arith.constant 0 : index
    %c0_106 = arith.constant 0 : index
    %295 = vector.load %arg7[%c1_103, %c1_104, %c0_105, %c0_106] : memref<2x2x32x32xbf16, #tpu.memory_space<vmem>>, vector<1x1x32x32xbf16>
    %296 = vector.shape_cast %295 : vector<1x1x32x32xbf16> to vector<32x32xbf16>
    %cst_107 = arith.constant dense<0.000000e+00> : vector<16x32xf32>
    %297 = tpu.matmul %294, %296, %cst_107 {dimension_numbers = #tpu.dot_dimension_numbers<[1], [0], [0], [1], [0, 0, 1, 1], [], []>} : vector<16x32xbf16>, vector<32x32xbf16>, vector<16x32xf32> -> vector<16x32xf32>
    %298 = vector.extract_strided_slice %205 {offsets = [2, 0], sizes = [1, 32], strides = [1, 1]} : vector<9x32xf32> to vector<1x32xf32>
    %299 = vector.broadcast %298 : vector<1x32xf32> to vector<16x32xf32>
    %300 = arith.addf %297, %299 : vector<16x32xf32>
    %301 = arith.addf %203, %293 : vector<16x32xf32>
    %302 = vector.extract_strided_slice %205 {offsets = [3, 0], sizes = [1, 32], strides = [1, 1]} : vector<9x32xf32> to vector<1x32xf32>
    %303 = vector.extract_strided_slice %205 {offsets = [4, 0], sizes = [1, 32], strides = [1, 1]} : vector<9x32xf32> to vector<1x32xf32>
    %cst_108 = arith.constant dense<0.000000e+00> : vector<16xf32>
    %304 = vector.multi_reduction <add>, %301, %cst_108 [1] : vector<16x32xf32> to vector<16xf32>
    %305 = vector.shape_cast %304 : vector<16xf32> to vector<16x1xf32>
    %cst_109 = arith.constant 3.200000e+01 : f32
    %306 = vector.broadcast %cst_109 : f32 to vector<16x1xf32>
    %307 = arith.divf %305, %306 : vector<16x1xf32>
    %308 = vector.broadcast %307 : vector<16x1xf32> to vector<16x32xf32>
    %309 = arith.subf %301, %308 : vector<16x32xf32>
    %310 = arith.mulf %309, %309 : vector<16x32xf32>
    %cst_110 = arith.constant dense<0.000000e+00> : vector<16xf32>
    %311 = vector.multi_reduction <add>, %310, %cst_110 [1] : vector<16x32xf32> to vector<16xf32>
    %312 = vector.shape_cast %311 : vector<16xf32> to vector<16x1xf32>
    %cst_111 = arith.constant 3.200000e+01 : f32
    %313 = vector.broadcast %cst_111 : f32 to vector<16x1xf32>
    %314 = arith.divf %312, %313 : vector<16x1xf32>
    %315 = vector.broadcast %307 : vector<16x1xf32> to vector<16x32xf32>
    %316 = arith.subf %301, %315 : vector<16x32xf32>
    %cst_112 = arith.constant 9.99999974E-6 : f32
    %317 = vector.broadcast %cst_112 : f32 to vector<16x1xf32>
    %318 = arith.addf %314, %317 : vector<16x1xf32>
    %319 = math.rsqrt %318 : vector<16x1xf32>
    %320 = vector.broadcast %319 : vector<16x1xf32> to vector<16x32xf32>
    %321 = arith.mulf %316, %320 : vector<16x32xf32>
    %322 = vector.broadcast %302 : vector<1x32xf32> to vector<16x32xf32>
    %323 = arith.mulf %321, %322 : vector<16x32xf32>
    %324 = vector.broadcast %303 : vector<1x32xf32> to vector<16x32xf32>
    %325 = arith.addf %323, %324 : vector<16x32xf32>
    %326 = arith.addf %325, %300 : vector<16x32xf32>
    %327 = vector.extract_strided_slice %205 {offsets = [5, 0], sizes = [1, 32], strides = [1, 1]} : vector<9x32xf32> to vector<1x32xf32>
    %328 = vector.extract_strided_slice %205 {offsets = [6, 0], sizes = [1, 32], strides = [1, 1]} : vector<9x32xf32> to vector<1x32xf32>
    %cst_113 = arith.constant dense<0.000000e+00> : vector<16xf32>
    %329 = vector.multi_reduction <add>, %326, %cst_113 [1] : vector<16x32xf32> to vector<16xf32>
    %330 = vector.shape_cast %329 : vector<16xf32> to vector<16x1xf32>
    %cst_114 = arith.constant 3.200000e+01 : f32
    %331 = vector.broadcast %cst_114 : f32 to vector<16x1xf32>
    %332 = arith.divf %330, %331 : vector<16x1xf32>
    %333 = vector.broadcast %332 : vector<16x1xf32> to vector<16x32xf32>
    %334 = arith.subf %326, %333 : vector<16x32xf32>
    %335 = arith.mulf %334, %334 : vector<16x32xf32>
    %cst_115 = arith.constant dense<0.000000e+00> : vector<16xf32>
    %336 = vector.multi_reduction <add>, %335, %cst_115 [1] : vector<16x32xf32> to vector<16xf32>
    %337 = vector.shape_cast %336 : vector<16xf32> to vector<16x1xf32>
    %cst_116 = arith.constant 3.200000e+01 : f32
    %338 = vector.broadcast %cst_116 : f32 to vector<16x1xf32>
    %339 = arith.divf %337, %338 : vector<16x1xf32>
    %340 = vector.broadcast %332 : vector<16x1xf32> to vector<16x32xf32>
    %341 = arith.subf %326, %340 : vector<16x32xf32>
    %cst_117 = arith.constant 9.99999974E-6 : f32
    %342 = vector.broadcast %cst_117 : f32 to vector<16x1xf32>
    %343 = arith.addf %339, %342 : vector<16x1xf32>
    %344 = math.rsqrt %343 : vector<16x1xf32>
    %345 = vector.broadcast %344 : vector<16x1xf32> to vector<16x32xf32>
    %346 = arith.mulf %341, %345 : vector<16x32xf32>
    %347 = vector.broadcast %327 : vector<1x32xf32> to vector<16x32xf32>
    %348 = arith.mulf %346, %347 : vector<16x32xf32>
    %349 = vector.broadcast %328 : vector<1x32xf32> to vector<16x32xf32>
    %350 = arith.addf %348, %349 : vector<16x32xf32>
    %351 = arith.truncf %350 : vector<16x32xf32> to vector<16x32xbf16>
    %c1_118 = arith.constant 1 : index
    %c0_119 = arith.constant 0 : index
    %c0_120 = arith.constant 0 : index
    %352 = vector.load %arg8[%c1_118, %c0_119, %c0_120] : memref<2x32x64xbf16, #tpu.memory_space<vmem>>, vector<1x32x64xbf16>
    %353 = vector.shape_cast %352 : vector<1x32x64xbf16> to vector<32x64xbf16>
    %cst_121 = arith.constant dense<0.000000e+00> : vector<16x64xf32>
    %354 = tpu.matmul %351, %353, %cst_121 {dimension_numbers = #tpu.dot_dimension_numbers<[1], [0], [0], [1], [0, 0, 1, 1], [], []>} : vector<16x32xbf16>, vector<32x64xbf16>, vector<16x64xf32> -> vector<16x64xf32>
    %c1_122 = arith.constant 1 : index
    %c0_123 = arith.constant 0 : index
    %c0_124 = arith.constant 0 : index
    %355 = vector.load %arg9[%c1_122, %c0_123, %c0_124] : memref<2x1x64xf32, #tpu.memory_space<vmem>>, vector<1x1x64xf32>
    %356 = vector.shape_cast %355 : vector<1x1x64xf32> to vector<1x64xf32>
    %357 = vector.broadcast %356 : vector<1x64xf32> to vector<16x64xf32>
    %358 = arith.addf %354, %357 : vector<16x64xf32>
    %cst_125 = arith.constant 0.000000e+00 : f32
    %359 = vector.broadcast %cst_125 : f32 to vector<16x64xf32>
    %360 = arith.maximumf %358, %359 : vector<16x64xf32>
    %361 = arith.truncf %360 : vector<16x64xf32> to vector<16x64xbf16>
    %c1_126 = arith.constant 1 : index
    %c0_127 = arith.constant 0 : index
    %c0_128 = arith.constant 0 : index
    %362 = vector.load %arg10[%c1_126, %c0_127, %c0_128] : memref<2x64x32xbf16, #tpu.memory_space<vmem>>, vector<1x64x32xbf16>
    %363 = vector.shape_cast %362 : vector<1x64x32xbf16> to vector<64x32xbf16>
    %cst_129 = arith.constant dense<0.000000e+00> : vector<16x32xf32>
    %364 = tpu.matmul %361, %363, %cst_129 {dimension_numbers = #tpu.dot_dimension_numbers<[1], [0], [0], [1], [0, 0, 1, 1], [], []>} : vector<16x64xbf16>, vector<64x32xbf16>, vector<16x32xf32> -> vector<16x32xf32>
    %365 = vector.extract_strided_slice %205 {offsets = [0, 0], sizes = [1, 32], strides = [1, 1]} : vector<9x32xf32> to vector<1x32xf32>
    %366 = vector.broadcast %365 : vector<1x32xf32> to vector<16x32xf32>
    %367 = arith.addf %364, %366 : vector<16x32xf32>
    %368 = arith.addf %350, %367 : vector<16x32xf32>
    %369 = vector.extract_strided_slice %205 {offsets = [7, 0], sizes = [1, 32], strides = [1, 1]} : vector<9x32xf32> to vector<1x32xf32>
    %370 = vector.extract_strided_slice %205 {offsets = [8, 0], sizes = [1, 32], strides = [1, 1]} : vector<9x32xf32> to vector<1x32xf32>
    %cst_130 = arith.constant dense<0.000000e+00> : vector<16xf32>
    %371 = vector.multi_reduction <add>, %368, %cst_130 [1] : vector<16x32xf32> to vector<16xf32>
    %372 = vector.shape_cast %371 : vector<16xf32> to vector<16x1xf32>
    %cst_131 = arith.constant 3.200000e+01 : f32
    %373 = vector.broadcast %cst_131 : f32 to vector<16x1xf32>
    %374 = arith.divf %372, %373 : vector<16x1xf32>
    %375 = vector.broadcast %374 : vector<16x1xf32> to vector<16x32xf32>
    %376 = arith.subf %368, %375 : vector<16x32xf32>
    %377 = arith.mulf %376, %376 : vector<16x32xf32>
    %cst_132 = arith.constant dense<0.000000e+00> : vector<16xf32>
    %378 = vector.multi_reduction <add>, %377, %cst_132 [1] : vector<16x32xf32> to vector<16xf32>
    %379 = vector.shape_cast %378 : vector<16xf32> to vector<16x1xf32>
    %cst_133 = arith.constant 3.200000e+01 : f32
    %380 = vector.broadcast %cst_133 : f32 to vector<16x1xf32>
    %381 = arith.divf %379, %380 : vector<16x1xf32>
    %382 = vector.broadcast %374 : vector<16x1xf32> to vector<16x32xf32>
    %383 = arith.subf %368, %382 : vector<16x32xf32>
    %cst_134 = arith.constant 9.99999974E-6 : f32
    %384 = vector.broadcast %cst_134 : f32 to vector<16x1xf32>
    %385 = arith.addf %381, %384 : vector<16x1xf32>
    %386 = math.rsqrt %385 : vector<16x1xf32>
    %387 = vector.broadcast %386 : vector<16x1xf32> to vector<16x32xf32>
    %388 = arith.mulf %383, %387 : vector<16x32xf32>
    %389 = vector.broadcast %369 : vector<1x32xf32> to vector<16x32xf32>
    %390 = arith.mulf %388, %389 : vector<16x32xf32>
    %391 = vector.broadcast %370 : vector<1x32xf32> to vector<16x32xf32>
    %392 = arith.addf %390, %391 : vector<16x32xf32>
    %c0_135 = arith.constant 0 : index
    %c0_136 = arith.constant 0 : index
    %393 = vector.load %arg12[%c0_135, %c0_136] : memref<16x32xf32, #tpu.memory_space<vmem>>, vector<16x32xf32>
    tpu.vector_store %arg12[%c0_135, %c0_136], %392 {strides = array<i32>} : memref<16x32xf32, #tpu.memory_space<vmem>>, vector<16x32xf32>,
    return
  }
}

</mosaic_0001>

<llo_original>
// kernel: tpu_custom_call.1
$region0: #{tpu_custom_call.1}
  #allocation0 [shape = 'u32[]', space=smem, size = 0x4, offset = 0x4, fixed_abs, tag = 'smem constant byte address 0x4 - core index']
  #allocation1 [shape = 'u32[144,128]{1,0:T(1,128)}', space=vmem, size = 0x12000, scoped, tag = 'internal scratch']
  %s0 = inlined_call_operand.vmem [shape: s32[2,1], index: 0, kind: input, shape index: {}]
  %s1 = inlined_call_operand.hbm [shape: f32[16,32], index: 1, kind: input, shape index: {}]
  %s2 = inlined_call_operand.hbm [shape: f32[16,32], index: 2, kind: input, shape index: {}]
  %s3 = inlined_call_operand.vmem [shape: bf16[2,32,128], index: 3, kind: input, shape index: {}]
  %s4 = inlined_call_operand.vmem [shape: f32[2,1,128], index: 4, kind: input, shape index: {}]
  %s5 = inlined_call_operand.vmem [shape: bf16[2,32,64], index: 5, kind: input, shape index: {}]
  %s6 = inlined_call_operand.vmem [shape: f32[2,1,64], index: 6, kind: input, shape index: {}]
  %s7 = inlined_call_operand.vmem [shape: bf16[2,2,32,32], index: 7, kind: input, shape index: {}]
  %s8 = inlined_call_operand.hbm [shape: bf16[2,32,64], index: 8, kind: input, shape index: {}]
  %s9 = inlined_call_operand.hbm [shape: f32[2,1,64], index: 9, kind: input, shape index: {}]
  %s10 = inlined_call_operand.vmem [shape: bf16[2,64,32], index: 10, kind: input, shape index: {}]
  %s11 = inlined_call_operand.vmem [shape: f32[2,9,32], index: 11, kind: input, shape index: {}]
  %s12 = inlined_call_operand.hbm [shape: f32[16,32], index: 12, kind: output, shape index: {}]
  %s13 = sld [smem:[#allocation0]]
  $region74: #{tpu_custom_call.1} parent=0
    _
  %s15 = ssub.s32 1, %s13
  %s16 = scalar_select 0, %s15, %s13
  $region1: #{tpu_custom_call.1} parent=0
    #allocation2 [shape = 'u8[8192]{0}', space=vmem, size = 0x2000, scoped, tag = 'input window, operand 1, single buffered']
    #allocation3 [shape = 's32[1]{0}', space=sflag, size = 0x4, scoped, tag = 'scoped memory for tpu_custom_call.1']
    #allocation4 [shape = 's32[1]{0}', space=sflag, size = 0x4, scoped, tag = 'scoped memory for tpu_custom_call.1']
    #allocation5 [shape = 'u8[8192]{0}', space=vmem, size = 0x2000, scoped, tag = 'input window, operand 2, single buffered']
    #allocation6 [shape = 's32[1]{0}', space=sflag, size = 0x4, scoped, tag = 'scoped memory for tpu_custom_call.1']
    #allocation7 [shape = 'u8[16384]{0}', space=vmem, size = 0x4000, scoped, tag = 'input window, operand 8, single buffered']
    #allocation8 [shape = 'u8[1024]{0}', space=vmem, size = 0x400, scoped, tag = 'input window, operand 9, single buffered']
    #allocation9 [shape = 's32[1]{0}', space=sflag, size = 0x4, scoped, tag = 'scoped memory for tpu_custom_call.1']
    #allocation10 [shape = 'u8[8192]{0}', space=vmem, size = 0x2000, scoped, tag = 'output window, operand 0, single buffered']
    %17 = vsyncpa [#allocation3], 0
    %18 = vsyncpa [#allocation6], 0
    %19 = vsyncpa [#allocation9], 0
    %20 = vsyncpa [#allocation4], 0
    // Predicated region
    $region2: #{tpu_custom_call.1} parent=1 // pred_check
      _
    $region3: #{tpu_custom_call.1} parent=1 // pred_check_branch
      %22 = sbr.rel (0) target = $region5
    $region4: #{tpu_custom_call.1} parent=1 // pred_region
      _
    $region5: #{tpu_custom_call.1} parent=1 // pred_fallthru
      _
    // Predicated region
    $region6: #{tpu_custom_call.1} parent=1 // pred_check
      _
    $region7: #{tpu_custom_call.1} parent=1 // pred_check_branch
      %24 = sbr.rel (0) target = $region9
    $region8: #{tpu_custom_call.1} parent=1 // pred_region
      %s26 = ssub.s32 256, 256
      %27 = vsyncadd [#allocation3], %s26
      %s28 = sshll.u32 [#allocation2], 4
      %s29 = int_to_ptr.vmem [resolvable:$true] %s28
      %34 = dma.hbm_to_vmem [thread:$0]  %s1, 256, %s29, [#allocation3], 128, 128, 8
    $region9: #{tpu_custom_call.1} parent=1 // pred_fallthru
      _
    // Predicated region
    $region10: #{tpu_custom_call.1} parent=1 // pred_check
      _
    $region11: #{tpu_custom_call.1} parent=1 // pred_check_branch
      %36 = sbr.rel (0) target = $region13
    $region12: #{tpu_custom_call.1} parent=1 // pred_region
      %s38 = ssub.s32 256, 256
      %39 = vsyncadd [#allocation6], %s38
      %s40 = sshll.u32 [#allocation5], 4
      %s41 = int_to_ptr.vmem [resolvable:$true] %s40
      %46 = dma.hbm_to_vmem [thread:$0]  %s2, 256, %s41, [#allocation6], 128, 128, 8
    $region13: #{tpu_custom_call.1} parent=1 // pred_fallthru
      _
    // Predicated region
    $region14: #{tpu_custom_call.1} parent=1 // pred_check
      _
    $region15: #{tpu_custom_call.1} parent=1 // pred_check_branch
      %48 = sbr.rel (0) target = $region17
    $region16: #{tpu_custom_call.1} parent=1 // pred_region
      _
    $region17: #{tpu_custom_call.1} parent=1 // pred_fallthru
      _
    // Predicated region
    $region18: #{tpu_custom_call.1} parent=1 // pred_check
      _
    $region19: #{tpu_custom_call.1} parent=1 // pred_check_branch
      %50 = sbr.rel (0) target = $region21
    $region20: #{tpu_custom_call.1} parent=1 // pred_region
      _
    $region21: #{tpu_custom_call.1} parent=1 // pred_fallthru
      _
    // Predicated region
    $region22: #{tpu_custom_call.1} parent=1 // pred_check
      _
    $region23: #{tpu_custom_call.1} parent=1 // pred_check_branch
      %52 = sbr.rel (0) target = $region25
    $region24: #{tpu_custom_call.1} parent=1 // pred_region
      _
    $region25: #{tpu_custom_call.1} parent=1 // pred_fallthru
      _
    // Predicated region
    $region26: #{tpu_custom_call.1} parent=1 // pred_check
      _
    $region27: #{tpu_custom_call.1} parent=1 // pred_check_branch
      %54 = sbr.rel (0) target = $region29
    $region28: #{tpu_custom_call.1} parent=1 // pred_region
      _
    $region29: #{tpu_custom_call.1} parent=1 // pred_fallthru
      _
    // Predicated region
    $region30: #{tpu_custom_call.1} parent=1 // pred_check
      _
    $region31: #{tpu_custom_call.1} parent=1 // pred_check_branch
      %56 = sbr.rel (0) target = $region33
    $region32: #{tpu_custom_call.1} parent=1 // pred_region
      _
    $region33: #{tpu_custom_call.1} parent=1 // pred_fallthru
      _
    // Predicated region
    $region34: #{tpu_custom_call.1} parent=1 // pred_check
      _
    $region35: #{tpu_custom_call.1} parent=1 // pred_check_branch
      %58 = sbr.rel (0) target = $region37
    $region36: #{tpu_custom_call.1} parent=1 // pred_region
      %s60 = ssub.s32 512, 512
      %61 = vsyncadd [#allocation6], %s60
      %s62 = sshll.u32 [#allocation7], 4
      %s63 = int_to_ptr.vmem [resolvable:$true] %s62
      %68 = dma.hbm_to_vmem [thread:$0]  %s8, 512, %s63, [#allocation6], 64, 64, 4
    $region37: #{tpu_custom_call.1} parent=1 // pred_fallthru
      _
    // Predicated region
    $region38: #{tpu_custom_call.1} parent=1 // pred_check
      _
    $region39: #{tpu_custom_call.1} parent=1 // pred_check_branch
      %70 = sbr.rel (0) target = $region41
    $region40: #{tpu_custom_call.1} parent=1 // pred_region
      %s72 = ssub.s32 32, 32
      %73 = vsyncadd [#allocation9], %s72
      %s74 = sshll.u32 [#allocation8], 4
      %s75 = int_to_ptr.vmem [resolvable:$true] %s74
      %80 = dma.hbm_to_vmem [thread:$0]  %s9, 32, %s75, [#allocation9], 16, 16, 1
    $region41: #{tpu_custom_call.1} parent=1 // pred_fallthru
      _
    // Predicated region
    $region42: #{tpu_custom_call.1} parent=1 // pred_check
      _
    $region43: #{tpu_custom_call.1} parent=1 // pred_check_branch
      %82 = sbr.rel (0) target = $region45
    $region44: #{tpu_custom_call.1} parent=1 // pred_region
      _
    $region45: #{tpu_custom_call.1} parent=1 // pred_fallthru
      _
    // Predicated region
    $region46: #{tpu_custom_call.1} parent=1 // pred_check
      _
    $region47: #{tpu_custom_call.1} parent=1 // pred_check_branch
      %84 = sbr.rel (0) target = $region49
    $region48: #{tpu_custom_call.1} parent=1 // pred_region
      _
    $region49: #{tpu_custom_call.1} parent=1 // pred_fallthru
      _
    // Predicated region
    $region50: #{tpu_custom_call.1} parent=1 // pred_check
      _
    $region51: #{tpu_custom_call.1} parent=1 // pred_check_branch
      %86 = sbr.rel (0) target = $region53
    $region52: #{tpu_custom_call.1} parent=1 // pred_region
      %87 = dma.done [#allocation3], 256
    $region53: #{tpu_custom_call.1} parent=1 // pred_fallthru
      _
    // Predicated region
    $region54: #{tpu_custom_call.1} parent=1 // pred_check
      _
    $region55: #{tpu_custom_call.1} parent=1 // pred_check_branch
      %89 = sbr.rel (0) target = $region57
    $region56: #{tpu_custom_call.1} parent=1 // pred_region
      %90 = dma.done [#allocation6], 256
    $region57: #{tpu_custom_call.1} parent=1 // pred_fallthru
      _
    // Predicated region
    $region58: #{tpu_custom_call.1} parent=1 // pred_check
      _
    $region59: #{tpu_custom_call.1} parent=1 // pred_check_branch
      %92 = sbr.rel (0) target = $region61
    $region60: #{tpu_custom_call.1} parent=1 // pred_region
      %93 = dma.done [#allocation6], 512
    $region61: #{tpu_custom_call.1} parent=1 // pred_fallthru
      _
    // Predicated region
    $region62: #{tpu_custom_call.1} parent=1 // pred_check
      _
    $region63: #{tpu_custom_call.1} parent=1 // pred_check_branch
      %95 = sbr.rel (0) target = $region65
    $region64: #{tpu_custom_call.1} parent=1 // pred_region
      %96 = dma.done [#allocation9], 32
    $region65: #{tpu_custom_call.1} parent=1 // pred_fallthru
      _
    %v98 = vld [vmem:[#allocation2] sm:$0xff]
    %v99 = vld [vmem:[#allocation2 + $0x8] sm:$0xff]
    %v100 = vld [vmem:[#allocation5] sm:$0xff]
    %v101 = vld [vmem:[#allocation5 + $0x8] sm:$0xff]
    %v102 = vpack.c.bf16 %v101, %v100
    %v103 = vlaneseq
    %v104 = vshrl.u32 %v103, 7
    %v105 = vlaneseq
    %v106 = vand.u32 %v105, 127
    %vm107 = vcmp.le.s32.totalorder %v106, %v104
    %v108 = vld [vmem:[%s0] sm:$0x3]
    %v110 = vunpack.c.l.s4 1966171168
    %v111 = vunpack.c.0.s8 %v110
    %v112 = vlaneseq
    %v113 = vshrl.u32 %v112, 7
    %v114 = vsub.s32 %v111, %v113
    %v115 = vrot.slane %v108, %v114
    %v116 = vcombine.high %v115, %v115
    %v118 = vunpack.c.l.s4 1966171168
    %v119 = vunpack.c.0.s8 %v118
    %v120 = vlaneseq
    %v121 = vshrl.u32 %v120, 7
    %v122 = vsub.s32 %v119, %v121
    %v123 = vrot.slane %v115, %v122
    %v125 = vunpack.c.l.s4 1966171168
    %v126 = vunpack.c.0.s8 %v125
    %v127 = vlaneseq
    %v128 = vshrl.u32 %v127, 7
    %v129 = vsub.s32 %v126, %v128
    %v130 = vrot.slane %v116, %v129
    %131 = vset.pattern.permute.xlu0 0
    %132 = vperm.xlu0 %131, %v123
    %v133 = vpop.permute.xlu0 %132
    %v134 = vlaneseq
    %v135 = vshrl.u32 %v134, 7
    %v136 = vsub.s32 0, %v135
    %v137 = vrot.slane %v133, %v136
    %138 = vset.pattern.permute.xlu0 0
    %139 = vperm.xlu0 %138, %v130
    %v140 = vpop.permute.xlu0 %139
    %v141 = vlaneseq
    %v142 = vshrl.u32 %v141, 7
    %v143 = vsub.s32 0, %v142
    %v144 = vrot.slane %v140, %v143
    %vm145 = vcmp.lt.s32.totalorder %v106, %v137
    %vm146 = vcmp.lt.s32.totalorder %v106, %v144
    %v147 = vld [vmem:[%s11] sm:$0xff]
    %v148 = vld [vmem:[%s11 + $0x8] sm:$0x1]
    %v149 = vpack.c.bf16 %v99, %v98
    %v150 = vld [vmem:[%s3] sm:$0xf]
    %v151 = vld [vmem:[%s3 + $0x4] sm:$0xf]
    %v152 = vld [vmem:[%s3 + $0x8] sm:$0xf]
    %v153 = vld [vmem:[%s3 + $0xc] sm:$0xf]
    %v154 = vld [vmem:[%s4] sm:$0x1]
    %v156 = vlaneseq
    %v157 = vshrl.u32 %v156, 7
    %v158 = vsub.s32 0, %v157
    %v159 = vrot.slane %v154, %v158
    %v165 = vunpack.c.l.b16 %v150
    %v166 = vunpack.c.l.b16 %v151
    %v167 = vunpack.c.l.b16 %v152
    %v168 = vunpack.c.l.b16 %v153
    %v169 = vpack.c.b16 %v166, %v165
    %v170 = vpack.c.b16 %v168, %v167
    %vm173 = vcmask 261120
    %v175 = vsel %vm173, %v149, 0
    %177 = vmatprep.subr.bf16.mxu0 0
    %178 = vmatpush1.bf16.msra.mxu0 %v169
    %179 = vmatprep.subr.bf16.mxu0 0
    %180 = vmatpush1.bf16.msra.mxu0 %v170
    %181 = vmatprep.subr.bf16.mxu0 0
    %182 = vmatpush1.bf16.msra.mxu0 0
    %183 = vmatprep.subr.bf16.mxu0 0
    %184 = vmatpush1.bf16.msra.mxu0 0
    %185 = vmatprep.subr.bf16.mxu0 0
    %186 = vmatpush1.bf16.msra.mxu0 0
    %187 = vmatprep.subr.bf16.mxu0 0
    %188 = vmatpush1.bf16.msra.mxu0 0
    %189 = vmatprep.subr.bf16.mxu0 0
    %190 = vmatpush1.bf16.msra.mxu0 0
    %191 = vmatprep.subr.bf16.mxu0 0
    %192 = vmatpush1.bf16.msra.mxu0 0
    %193 = vmatprep.subr.bf16.mxu0 0
    %194 = vmatpush1.bf16.msra.mxu0 0
    %195 = vmatprep.subr.bf16.mxu0 0
    %196 = vmatpush1.bf16.msra.mxu0 0
    %197 = vmatprep.subr.bf16.mxu0 0
    %198 = vmatpush1.bf16.msra.mxu0 0
    %199 = vmatprep.subr.bf16.mxu0 0
    %200 = vmatpush1.bf16.msra.mxu0 0
    %201 = vmatprep.subr.bf16.mxu0 0
    %202 = vmatpush1.bf16.msra.mxu0 0
    %203 = vmatprep.subr.bf16.mxu0 0
    %204 = vmatpush1.bf16.msra.mxu0 0
    %205 = vmatprep.subr.bf16.mxu0 0
    %206 = vmatpush1.bf16.msra.mxu0 0
    %207 = vmatprep.subr.bf16.mxu0 0
    %208 = vmatpush1.bf16.msra.mxu0 0
    %209 = vmatprep.mubr.bf16.mxu0 0
    %210 = vmatmul.mubr.bf16.gmra.mrb[0].mxu0 %v175
    %v211 = vpop.f32.mrb[0].mxu0
    %v212 = vadd.f32 %v159, %v211
    %v213 = vpop.f32.mrb[0].mxu0
    %v214 = vpop.f32.mrb[0].mxu0
    %v215 = vadd.f32 %v159, %v214
    %v216 = vpop.f32.mrb[0].mxu0
    %217 = vdwg.mxu0
    %v218 = vld [vmem:[%s5] sm:$0xf]
    %v219 = vld [vmem:[%s5 + $0x4] sm:$0xf]
    %v220 = vld [vmem:[%s5 + $0x8] sm:$0xf]
    %v221 = vld [vmem:[%s5 + $0xc] sm:$0xf]
    %v222 = vld [vmem:[%s6] sm:$0x1]
    %v224 = vlaneseq
    %v225 = vshrl.u32 %v224, 7
    %v226 = vsub.s32 0, %v225
    %v227 = vrot.slane %v222, %v226
    %v233 = vunpack.c.l.b16 %v218
    %v234 = vunpack.c.l.b16 %v219
    %v235 = vunpack.c.l.b16 %v220
    %v236 = vunpack.c.l.b16 %v221
    %v237 = vpack.c.b16 %v234, %v233
    %v238 = vpack.c.b16 %v236, %v235
    %v242 = vsel %vm173, %v102, 0
    %244 = vmatprep.subr.bf16.mxu0 0
    %245 = vmatpush1.bf16.msra.mxu0 %v237
    %246 = vmatprep.subr.bf16.mxu0 0
    %247 = vmatpush1.bf16.msra.mxu0 %v238
    %248 = vmatprep.subr.bf16.mxu0 0
    %249 = vmatpush1.bf16.msra.mxu0 0
    %250 = vmatprep.subr.bf16.mxu0 0
    %251 = vmatpush1.bf16.msra.mxu0 0
    %252 = vmatprep.subr.bf16.mxu0 0
    %253 = vmatpush1.bf16.msra.mxu0 0
    %254 = vmatprep.subr.bf16.mxu0 0
    %255 = vmatpush1.bf16.msra.mxu0 0
    %256 = vmatprep.subr.bf16.mxu0 0
    %257 = vmatpush1.bf16.msra.mxu0 0
    %258 = vmatprep.subr.bf16.mxu0 0
    %259 = vmatpush1.bf16.msra.mxu0 0
    %260 = vmatprep.subr.bf16.mxu0 0
    %261 = vmatpush1.bf16.msra.mxu0 0
    %262 = vmatprep.subr.bf16.mxu0 0
    %263 = vmatpush1.bf16.msra.mxu0 0
    %264 = vmatprep.subr.bf16.mxu0 0
    %265 = vmatpush1.bf16.msra.mxu0 0
    %266 = vmatprep.subr.bf16.mxu0 0
    %267 = vmatpush1.bf16.msra.mxu0 0
    %268 = vmatprep.subr.bf16.mxu0 0
    %269 = vmatpush1.bf16.msra.mxu0 0
    %270 = vmatprep.subr.bf16.mxu0 0
    %271 = vmatpush1.bf16.msra.mxu0 0
    %272 = vmatprep.subr.bf16.mxu0 0
    %273 = vmatpush1.bf16.msra.mxu0 0
    %274 = vmatprep.subr.bf16.mxu0 0
    %275 = vmatpush1.bf16.msra.mxu0 0
    %276 = vmatprep.mubr.bf16.mxu0 0
    %277 = vmatmul.mubr.bf16.gmra.mrb[0].mxu0 %v242
    %v278 = vpop.f32.mrb[0].mxu0
    %v279 = vadd.f32 %v227, %v278
    %v280 = vpop.f32.mrb[0].mxu0
    %v281 = vpop.f32.mrb[0].mxu0
    %v282 = vadd.f32 %v227, %v281
    %v283 = vpop.f32.mrb[0].mxu0
    %284 = vdwg.mxu0
    %287 = vrot.lane.b32.xlu0 %v212, 120
    %v288 = vpop.permute.xlu0 %287
    %289 = vrot.lane.b32.xlu0 %v215, 120
    %v290 = vpop.permute.xlu0 %289
    %293 = vrot.lane.b32.xlu0 %v212, 112
    %v294 = vpop.permute.xlu0 %293
    %295 = vrot.lane.b32.xlu0 %v215, 112
    %v296 = vpop.permute.xlu0 %295
    %299 = vrot.lane.b32.xlu0 %v212, 104
    %v300 = vpop.permute.xlu0 %299
    %301 = vrot.lane.b32.xlu0 %v215, 104
    %v302 = vpop.permute.xlu0 %301
    %v305 = vcombine.low %v212, %v294
    %v306 = vcombine.high %v212, %v294
    %v308 = vunpack.c.l.s4 1983009808
    %v309 = vunpack.c.0.s8 %v308
    %v310 = vlaneseq
    %v311 = vshrl.u32 %v310, 7
    %v312 = vsub.s32 %v309, %v311
    %v313 = vrot.slane %v305, %v312
    %v315 = vunpack.c.l.s4 1983009808
    %v316 = vunpack.c.0.s8 %v315
    %v317 = vlaneseq
    %v318 = vshrl.u32 %v317, 7
    %v319 = vsub.s32 %v316, %v318
    %v320 = vrot.slane %v306, %v319
    %v321 = vcombine.low %v288, %v300
    %v322 = vcombine.high %v288, %v300
    %v324 = vunpack.c.l.s4 1983009808
    %v325 = vunpack.c.0.s8 %v324
    %v326 = vlaneseq
    %v327 = vshrl.u32 %v326, 7
    %v328 = vsub.s32 %v325, %v327
    %v329 = vrot.slane %v321, %v328
    %v331 = vunpack.c.l.s4 1983009808
    %v332 = vunpack.c.0.s8 %v331
    %v333 = vlaneseq
    %v334 = vshrl.u32 %v333, 7
    %v335 = vsub.s32 %v332, %v334
    %v336 = vrot.slane %v322, %v335
    %v337 = vcombine.low %v313, %v329
    %v338 = vcombine.high %v313, %v329
    %v340 = vunpack.c.l.s4 1934713408
    %v341 = vunpack.c.0.s8 %v340
    %v342 = vlaneseq
    %v343 = vshrl.u32 %v342, 7
    %v344 = vsub.s32 %v341, %v343
    %v345 = vrot.slane %v337, %v344
    %v347 = vunpack.c.l.s4 1934713408
    %v348 = vunpack.c.0.s8 %v347
    %v349 = vlaneseq
    %v350 = vshrl.u32 %v349, 7
    %v351 = vsub.s32 %v348, %v350
    %v352 = vrot.slane %v338, %v351
    %v353 = vcombine.low %v320, %v336
    %v354 = vcombine.high %v320, %v336
    %v356 = vunpack.c.l.s4 1934713408
    %v357 = vunpack.c.0.s8 %v356
    %v358 = vlaneseq
    %v359 = vshrl.u32 %v358, 7
    %v360 = vsub.s32 %v357, %v359
    %v361 = vrot.slane %v353, %v360
    %v363 = vunpack.c.l.s4 1934713408
    %v364 = vunpack.c.0.s8 %v363
    %v365 = vlaneseq
    %v366 = vshrl.u32 %v365, 7
    %v367 = vsub.s32 %v364, %v366
    %v368 = vrot.slane %v354, %v367
    %v369 = vcombine.high %v345, 0.0
    %v370 = vcombine.high %v352, 0.0
    %v371 = vcombine.high %v361, 0.0
    %v372 = vcombine.high %v368, 0.0
    %v373 = vcombine.low %v215, %v296
    %v374 = vcombine.high %v215, %v296
    %v376 = vunpack.c.l.s4 1983009808
    %v377 = vunpack.c.0.s8 %v376
    %v378 = vlaneseq
    %v379 = vshrl.u32 %v378, 7
    %v380 = vsub.s32 %v377, %v379
    %v381 = vrot.slane %v373, %v380
    %v383 = vunpack.c.l.s4 1983009808
    %v384 = vunpack.c.0.s8 %v383
    %v385 = vlaneseq
    %v386 = vshrl.u32 %v385, 7
    %v387 = vsub.s32 %v384, %v386
    %v388 = vrot.slane %v374, %v387
    %v389 = vcombine.low %v290, %v302
    %v390 = vcombine.high %v290, %v302
    %v392 = vunpack.c.l.s4 1983009808
    %v393 = vunpack.c.0.s8 %v392
    %v394 = vlaneseq
    %v395 = vshrl.u32 %v394, 7
    %v396 = vsub.s32 %v393, %v395
    %v397 = vrot.slane %v389, %v396
    %v399 = vunpack.c.l.s4 1983009808
    %v400 = vunpack.c.0.s8 %v399
    %v401 = vlaneseq
    %v402 = vshrl.u32 %v401, 7
    %v403 = vsub.s32 %v400, %v402
    %v404 = vrot.slane %v390, %v403
    %v405 = vcombine.low %v381, %v397
    %v406 = vcombine.high %v381, %v397
    %v408 = vunpack.c.l.s4 1934713408
    %v409 = vunpack.c.0.s8 %v408
    %v410 = vlaneseq
    %v411 = vshrl.u32 %v410, 7
    %v412 = vsub.s32 %v409, %v411
    %v413 = vrot.slane %v405, %v412
    %v415 = vunpack.c.l.s4 1934713408
    %v416 = vunpack.c.0.s8 %v415
    %v417 = vlaneseq
    %v418 = vshrl.u32 %v417, 7
    %v419 = vsub.s32 %v416, %v418
    %v420 = vrot.slane %v406, %v419
    %v421 = vcombine.low %v388, %v404
    %v422 = vcombine.high %v388, %v404
    %v424 = vunpack.c.l.s4 1934713408
    %v425 = vunpack.c.0.s8 %v424
    %v426 = vlaneseq
    %v427 = vshrl.u32 %v426, 7
    %v428 = vsub.s32 %v425, %v427
    %v429 = vrot.slane %v421, %v428
    %v431 = vunpack.c.l.s4 1934713408
    %v432 = vunpack.c.0.s8 %v431
    %v433 = vlaneseq
    %v434 = vshrl.u32 %v433, 7
    %v435 = vsub.s32 %v432, %v434
    %v436 = vrot.slane %v422, %v435
    %v437 = vcombine.high %v413, 0.0
    %v438 = vcombine.high %v420, 0.0
    %v439 = vcombine.high %v429, 0.0
    %v440 = vcombine.high %v436, 0.0
    %v441 = vcombine.low %v345, %v352
    %v443 = vunpack.c.l.s4 1983009808
    %v444 = vunpack.c.0.s8 %v443
    %v445 = vlaneseq
    %v446 = vshrl.u32 %v445, 7
    %v447 = vsub.s32 %v444, %v446
    %v448 = vrot.slane %v441, %v447
    %v449 = vcombine.low %v369, %v370
    %v451 = vunpack.c.l.s4 1983009808
    %v452 = vunpack.c.0.s8 %v451
    %v453 = vlaneseq
    %v454 = vshrl.u32 %v453, 7
    %v455 = vsub.s32 %v452, %v454
    %v456 = vrot.slane %v449, %v455
    %v457 = vcombine.low %v361, %v368
    %v459 = vunpack.c.l.s4 1983009808
    %v460 = vunpack.c.0.s8 %v459
    %v461 = vlaneseq
    %v462 = vshrl.u32 %v461, 7
    %v463 = vsub.s32 %v460, %v462
    %v464 = vrot.slane %v457, %v463
    %v465 = vcombine.low %v371, %v372
    %v467 = vunpack.c.l.s4 1983009808
    %v468 = vunpack.c.0.s8 %v467
    %v469 = vlaneseq
    %v470 = vshrl.u32 %v469, 7
    %v471 = vsub.s32 %v468, %v470
    %v472 = vrot.slane %v465, %v471
    %v473 = vcombine.low %v448, %v456
    %v474 = vcombine.high %v448, %v456
    %v476 = vunpack.c.l.s4 1934713408
    %v477 = vunpack.c.0.s8 %v476
    %v478 = vlaneseq
    %v479 = vshrl.u32 %v478, 7
    %v480 = vsub.s32 %v477, %v479
    %v481 = vrot.slane %v473, %v480
    %v483 = vunpack.c.l.s4 1934713408
    %v484 = vunpack.c.0.s8 %v483
    %v485 = vlaneseq
    %v486 = vshrl.u32 %v485, 7
    %v487 = vsub.s32 %v484, %v486
    %v488 = vrot.slane %v474, %v487
    %v489 = vcombine.low %v464, %v472
    %v490 = vcombine.high %v464, %v472
    %v492 = vunpack.c.l.s4 1934713408
    %v493 = vunpack.c.0.s8 %v492
    %v494 = vlaneseq
    %v495 = vshrl.u32 %v494, 7
    %v496 = vsub.s32 %v493, %v495
    %v497 = vrot.slane %v489, %v496
    %v499 = vunpack.c.l.s4 1934713408
    %v500 = vunpack.c.0.s8 %v499
    %v501 = vlaneseq
    %v502 = vshrl.u32 %v501, 7
    %v503 = vsub.s32 %v500, %v502
    %v504 = vrot.slane %v490, %v503
    %v505 = vcombine.low %v481, %v497
    %v506 = vcombine.high %v481, %v497
    %v507 = vcombine.low %v488, %v504
    %v508 = vcombine.high %v488, %v504
    %v509 = vcombine.low %v413, %v420
    %v511 = vunpack.c.l.s4 1983009808
    %v512 = vunpack.c.0.s8 %v511
    %v513 = vlaneseq
    %v514 = vshrl.u32 %v513, 7
    %v515 = vsub.s32 %v512, %v514
    %v516 = vrot.slane %v509, %v515
    %v517 = vcombine.low %v437, %v438
    %v519 = vunpack.c.l.s4 1983009808
    %v520 = vunpack.c.0.s8 %v519
    %v521 = vlaneseq
    %v522 = vshrl.u32 %v521, 7
    %v523 = vsub.s32 %v520, %v522
    %v524 = vrot.slane %v517, %v523
    %v525 = vcombine.low %v429, %v436
    %v527 = vunpack.c.l.s4 1983009808
    %v528 = vunpack.c.0.s8 %v527
    %v529 = vlaneseq
    %v530 = vshrl.u32 %v529, 7
    %v531 = vsub.s32 %v528, %v530
    %v532 = vrot.slane %v525, %v531
    %v533 = vcombine.low %v439, %v440
    %v535 = vunpack.c.l.s4 1983009808
    %v536 = vunpack.c.0.s8 %v535
    %v537 = vlaneseq
    %v538 = vshrl.u32 %v537, 7
    %v539 = vsub.s32 %v536, %v538
    %v540 = vrot.slane %v533, %v539
    %v541 = vcombine.low %v516, %v524
    %v542 = vcombine.high %v516, %v524
    %v544 = vunpack.c.l.s4 1934713408
    %v545 = vunpack.c.0.s8 %v544
    %v546 = vlaneseq
    %v547 = vshrl.u32 %v546, 7
    %v548 = vsub.s32 %v545, %v547
    %v549 = vrot.slane %v541, %v548
    %v551 = vunpack.c.l.s4 1934713408
    %v552 = vunpack.c.0.s8 %v551
    %v553 = vlaneseq
    %v554 = vshrl.u32 %v553, 7
    %v555 = vsub.s32 %v552, %v554
    %v556 = vrot.slane %v542, %v555
    %v557 = vcombine.low %v532, %v540
    %v558 = vcombine.high %v532, %v540
    %v560 = vunpack.c.l.s4 1934713408
    %v561 = vunpack.c.0.s8 %v560
    %v562 = vlaneseq
    %v563 = vshrl.u32 %v562, 7
    %v564 = vsub.s32 %v561, %v563
    %v565 = vrot.slane %v557, %v564
    %v567 = vunpack.c.l.s4 1934713408
    %v568 = vunpack.c.0.s8 %v567
    %v569 = vlaneseq
    %v570 = vshrl.u32 %v569, 7
    %v571 = vsub.s32 %v568, %v570
    %v572 = vrot.slane %v558, %v571
    %v573 = vcombine.low %v549, %v565
    %v574 = vcombine.high %v549, %v565
    %v575 = vcombine.low %v556, %v572
    %v576 = vcombine.high %v556, %v572
    %577 = vrot.lane.b32.xlu0 %v212, 96
    %v578 = vpop.permute.xlu0 %577
    %579 = vrot.lane.b32.xlu0 %v215, 96
    %v580 = vpop.permute.xlu0 %579
    %581 = vrot.lane.b32.xlu0 %v288, 96
    %v582 = vpop.permute.xlu0 %581
    %583 = vrot.lane.b32.xlu0 %v290, 96
    %v584 = vpop.permute.xlu0 %583
    %585 = vrot.lane.b32.xlu0 %v294, 96
    %v586 = vpop.permute.xlu0 %585
    %587 = vrot.lane.b32.xlu0 %v296, 96
    %v588 = vpop.permute.xlu0 %587
    %589 = vrot.lane.b32.xlu0 %v300, 96
    %v590 = vpop.permute.xlu0 %589
    %591 = vrot.lane.b32.xlu0 %v302, 96
    %v592 = vpop.permute.xlu0 %591
    %v601 = vcombine.low %v578, %v586
    %v602 = vcombine.high %v578, %v586
    %v604 = vunpack.c.l.s4 1983009808
    %v605 = vunpack.c.0.s8 %v604
    %v606 = vlaneseq
    %v607 = vshrl.u32 %v606, 7
    %v608 = vsub.s32 %v605, %v607
    %v609 = vrot.slane %v601, %v608
    %v611 = vunpack.c.l.s4 1983009808
    %v612 = vunpack.c.0.s8 %v611
    %v613 = vlaneseq
    %v614 = vshrl.u32 %v613, 7
    %v615 = vsub.s32 %v612, %v614
    %v616 = vrot.slane %v602, %v615
    %v617 = vcombine.low %v582, %v590
    %v618 = vcombine.high %v582, %v590
    %v620 = vunpack.c.l.s4 1983009808
    %v621 = vunpack.c.0.s8 %v620
    %v622 = vlaneseq
    %v623 = vshrl.u32 %v622, 7
    %v624 = vsub.s32 %v621, %v623
    %v625 = vrot.slane %v617, %v624
    %v627 = vunpack.c.l.s4 1983009808
    %v628 = vunpack.c.0.s8 %v627
    %v629 = vlaneseq
    %v630 = vshrl.u32 %v629, 7
    %v631 = vsub.s32 %v628, %v630
    %v632 = vrot.slane %v618, %v631
    %v633 = vcombine.low %v609, %v625
    %v634 = vcombine.high %v609, %v625
    %v636 = vunpack.c.l.s4 1934713408
    %v637 = vunpack.c.0.s8 %v636
    %v638 = vlaneseq
    %v639 = vshrl.u32 %v638, 7
    %v640 = vsub.s32 %v637, %v639
    %v641 = vrot.slane %v633, %v640
    %v643 = vunpack.c.l.s4 1934713408
    %v644 = vunpack.c.0.s8 %v643
    %v645 = vlaneseq
    %v646 = vshrl.u32 %v645, 7
    %v647 = vsub.s32 %v644, %v646
    %v648 = vrot.slane %v634, %v647
    %v649 = vcombine.low %v616, %v632
    %v650 = vcombine.high %v616, %v632
    %v652 = vunpack.c.l.s4 1934713408
    %v653 = vunpack.c.0.s8 %v652
    %v654 = vlaneseq
    %v655 = vshrl.u32 %v654, 7
    %v656 = vsub.s32 %v653, %v655
    %v657 = vrot.slane %v649, %v656
    %v659 = vunpack.c.l.s4 1934713408
    %v660 = vunpack.c.0.s8 %v659
    %v661 = vlaneseq
    %v662 = vshrl.u32 %v661, 7
    %v663 = vsub.s32 %v660, %v662
    %v664 = vrot.slane %v650, %v663
    %v665 = vcombine.high %v641, 0.0
    %v666 = vcombine.high %v648, 0.0
    %v667 = vcombine.high %v657, 0.0
    %v668 = vcombine.high %v664, 0.0
    %v669 = vcombine.low %v580, %v588
    %v670 = vcombine.high %v580, %v588
    %v672 = vunpack.c.l.s4 1983009808
    %v673 = vunpack.c.0.s8 %v672
    %v674 = vlaneseq
    %v675 = vshrl.u32 %v674, 7
    %v676 = vsub.s32 %v673, %v675
    %v677 = vrot.slane %v669, %v676
    %v679 = vunpack.c.l.s4 1983009808
    %v680 = vunpack.c.0.s8 %v679
    %v681 = vlaneseq
    %v682 = vshrl.u32 %v681, 7
    %v683 = vsub.s32 %v680, %v682
    %v684 = vrot.slane %v670, %v683
    %v685 = vcombine.low %v584, %v592
    %v686 = vcombine.high %v584, %v592
    %v688 = vunpack.c.l.s4 1983009808
    %v689 = vunpack.c.0.s8 %v688
    %v690 = vlaneseq
    %v691 = vshrl.u32 %v690, 7
    %v692 = vsub.s32 %v689, %v691
    %v693 = vrot.slane %v685, %v692
    %v695 = vunpack.c.l.s4 1983009808
    %v696 = vunpack.c.0.s8 %v695
    %v697 = vlaneseq
    %v698 = vshrl.u32 %v697, 7
    %v699 = vsub.s32 %v696, %v698
    %v700 = vrot.slane %v686, %v699
    %v701 = vcombine.low %v677, %v693
    %v702 = vcombine.high %v677, %v693
    %v704 = vunpack.c.l.s4 1934713408
    %v705 = vunpack.c.0.s8 %v704
    %v706 = vlaneseq
    %v707 = vshrl.u32 %v706, 7
    %v708 = vsub.s32 %v705, %v707
    %v709 = vrot.slane %v701, %v708
    %v711 = vunpack.c.l.s4 1934713408
    %v712 = vunpack.c.0.s8 %v711
    %v713 = vlaneseq
    %v714 = vshrl.u32 %v713, 7
    %v715 = vsub.s32 %v712, %v714
    %v716 = vrot.slane %v702, %v715
    %v717 = vcombine.low %v684, %v700
    %v718 = vcombine.high %v684, %v700
    %v720 = vunpack.c.l.s4 1934713408
    %v721 = vunpack.c.0.s8 %v720
    %v722 = vlaneseq
    %v723 = vshrl.u32 %v722, 7
    %v724 = vsub.s32 %v721, %v723
    %v725 = vrot.slane %v717, %v724
    %v727 = vunpack.c.l.s4 1934713408
    %v728 = vunpack.c.0.s8 %v727
    %v729 = vlaneseq
    %v730 = vshrl.u32 %v729, 7
    %v731 = vsub.s32 %v728, %v730
    %v732 = vrot.slane %v718, %v731
    %v733 = vcombine.high %v709, 0.0
    %v734 = vcombine.high %v716, 0.0
    %v735 = vcombine.high %v725, 0.0
    %v736 = vcombine.high %v732, 0.0
    %v737 = vcombine.low %v641, %v648
    %v739 = vunpack.c.l.s4 1983009808
    %v740 = vunpack.c.0.s8 %v739
    %v741 = vlaneseq
    %v742 = vshrl.u32 %v741, 7
    %v743 = vsub.s32 %v740, %v742
    %v744 = vrot.slane %v737, %v743
    %v745 = vcombine.low %v665, %v666
    %v747 = vunpack.c.l.s4 1983009808
    %v748 = vunpack.c.0.s8 %v747
    %v749 = vlaneseq
    %v750 = vshrl.u32 %v749, 7
    %v751 = vsub.s32 %v748, %v750
    %v752 = vrot.slane %v745, %v751
    %v753 = vcombine.low %v657, %v664
    %v755 = vunpack.c.l.s4 1983009808
    %v756 = vunpack.c.0.s8 %v755
    %v757 = vlaneseq
    %v758 = vshrl.u32 %v757, 7
    %v759 = vsub.s32 %v756, %v758
    %v760 = vrot.slane %v753, %v759
    %v761 = vcombine.low %v667, %v668
    %v763 = vunpack.c.l.s4 1983009808
    %v764 = vunpack.c.0.s8 %v763
    %v765 = vlaneseq
    %v766 = vshrl.u32 %v765, 7
    %v767 = vsub.s32 %v764, %v766
    %v768 = vrot.slane %v761, %v767
    %v769 = vcombine.low %v744, %v752
    %v770 = vcombine.high %v744, %v752
    %v772 = vunpack.c.l.s4 1934713408
    %v773 = vunpack.c.0.s8 %v772
    %v774 = vlaneseq
    %v775 = vshrl.u32 %v774, 7
    %v776 = vsub.s32 %v773, %v775
    %v777 = vrot.slane %v769, %v776
    %v779 = vunpack.c.l.s4 1934713408
    %v780 = vunpack.c.0.s8 %v779
    %v781 = vlaneseq
    %v782 = vshrl.u32 %v781, 7
    %v783 = vsub.s32 %v780, %v782
    %v784 = vrot.slane %v770, %v783
    %v785 = vcombine.low %v760, %v768
    %v786 = vcombine.high %v760, %v768
    %v788 = vunpack.c.l.s4 1934713408
    %v789 = vunpack.c.0.s8 %v788
    %v790 = vlaneseq
    %v791 = vshrl.u32 %v790, 7
    %v792 = vsub.s32 %v789, %v791
    %v793 = vrot.slane %v785, %v792
    %v795 = vunpack.c.l.s4 1934713408
    %v796 = vunpack.c.0.s8 %v795
    %v797 = vlaneseq
    %v798 = vshrl.u32 %v797, 7
    %v799 = vsub.s32 %v796, %v798
    %v800 = vrot.slane %v786, %v799
    %v801 = vcombine.low %v777, %v793
    %v802 = vcombine.high %v777, %v793
    %v803 = vcombine.low %v784, %v800
    %v804 = vcombine.high %v784, %v800
    %v805 = vcombine.low %v709, %v716
    %v807 = vunpack.c.l.s4 1983009808
    %v808 = vunpack.c.0.s8 %v807
    %v809 = vlaneseq
    %v810 = vshrl.u32 %v809, 7
    %v811 = vsub.s32 %v808, %v810
    %v812 = vrot.slane %v805, %v811
    %v813 = vcombine.low %v733, %v734
    %v815 = vunpack.c.l.s4 1983009808
    %v816 = vunpack.c.0.s8 %v815
    %v817 = vlaneseq
    %v818 = vshrl.u32 %v817, 7
    %v819 = vsub.s32 %v816, %v818
    %v820 = vrot.slane %v813, %v819
    %v821 = vcombine.low %v725, %v732
    %v823 = vunpack.c.l.s4 1983009808
    %v824 = vunpack.c.0.s8 %v823
    %v825 = vlaneseq
    %v826 = vshrl.u32 %v825, 7
    %v827 = vsub.s32 %v824, %v826
    %v828 = vrot.slane %v821, %v827
    %v829 = vcombine.low %v735, %v736
    %v831 = vunpack.c.l.s4 1983009808
    %v832 = vunpack.c.0.s8 %v831
    %v833 = vlaneseq
    %v834 = vshrl.u32 %v833, 7
    %v835 = vsub.s32 %v832, %v834
    %v836 = vrot.slane %v829, %v835
    %v837 = vcombine.low %v812, %v820
    %v838 = vcombine.high %v812, %v820
    %v840 = vunpack.c.l.s4 1934713408
    %v841 = vunpack.c.0.s8 %v840
    %v842 = vlaneseq
    %v843 = vshrl.u32 %v842, 7
    %v844 = vsub.s32 %v841, %v843
    %v845 = vrot.slane %v837, %v844
    %v847 = vunpack.c.l.s4 1934713408
    %v848 = vunpack.c.0.s8 %v847
    %v849 = vlaneseq
    %v850 = vshrl.u32 %v849, 7
    %v851 = vsub.s32 %v848, %v850
    %v852 = vrot.slane %v838, %v851
    %v853 = vcombine.low %v828, %v836
    %v854 = vcombine.high %v828, %v836
    %v856 = vunpack.c.l.s4 1934713408
    %v857 = vunpack.c.0.s8 %v856
    %v858 = vlaneseq
    %v859 = vshrl.u32 %v858, 7
    %v860 = vsub.s32 %v857, %v859
    %v861 = vrot.slane %v853, %v860
    %v863 = vunpack.c.l.s4 1934713408
    %v864 = vunpack.c.0.s8 %v863
    %v865 = vlaneseq
    %v866 = vshrl.u32 %v865, 7
    %v867 = vsub.s32 %v864, %v866
    %v868 = vrot.slane %v854, %v867
    %v869 = vcombine.low %v845, %v861
    %v870 = vcombine.high %v845, %v861
    %v871 = vcombine.low %v852, %v868
    %v872 = vcombine.high %v852, %v868
    %873 = vrot.lane.b32.xlu0 %v212, 64
    %v874 = vpop.permute.xlu0 %873
    %875 = vrot.lane.b32.xlu0 %v215, 64
    %v876 = vpop.permute.xlu0 %875
    %877 = vrot.lane.b32.xlu0 %v288, 64
    %v878 = vpop.permute.xlu0 %877
    %879 = vrot.lane.b32.xlu0 %v290, 64
    %v880 = vpop.permute.xlu0 %879
    %881 = vrot.lane.b32.xlu0 %v294, 64
    %v882 = vpop.permute.xlu0 %881
    %883 = vrot.lane.b32.xlu0 %v296, 64
    %v884 = vpop.permute.xlu0 %883
    %885 = vrot.lane.b32.xlu0 %v300, 64
    %v886 = vpop.permute.xlu0 %885
    %887 = vrot.lane.b32.xlu0 %v302, 64
    %v888 = vpop.permute.xlu0 %887
    %v897 = vcombine.low %v874, %v882
    %v898 = vcombine.high %v874, %v882
    %v900 = vunpack.c.l.s4 1983009808
    %v901 = vunpack.c.0.s8 %v900
    %v902 = vlaneseq
    %v903 = vshrl.u32 %v902, 7
    %v904 = vsub.s32 %v901, %v903
    %v905 = vrot.slane %v897, %v904
    %v907 = vunpack.c.l.s4 1983009808
    %v908 = vunpack.c.0.s8 %v907
    %v909 = vlaneseq
    %v910 = vshrl.u32 %v909, 7
    %v911 = vsub.s32 %v908, %v910
    %v912 = vrot.slane %v898, %v911
    %v913 = vcombine.low %v878, %v886
    %v914 = vcombine.high %v878, %v886
    %v916 = vunpack.c.l.s4 1983009808
    %v917 = vunpack.c.0.s8 %v916
    %v918 = vlaneseq
    %v919 = vshrl.u32 %v918, 7
    %v920 = vsub.s32 %v917, %v919
    %v921 = vrot.slane %v913, %v920
    %v923 = vunpack.c.l.s4 1983009808
    %v924 = vunpack.c.0.s8 %v923
    %v925 = vlaneseq
    %v926 = vshrl.u32 %v925, 7
    %v927 = vsub.s32 %v924, %v926
    %v928 = vrot.slane %v914, %v927
    %v929 = vcombine.low %v905, %v921
    %v930 = vcombine.high %v905, %v921
    %v932 = vunpack.c.l.s4 1934713408
    %v933 = vunpack.c.0.s8 %v932
    %v934 = vlaneseq
    %v935 = vshrl.u32 %v934, 7
    %v936 = vsub.s32 %v933, %v935
    %v937 = vrot.slane %v929, %v936
    %v939 = vunpack.c.l.s4 1934713408
    %v940 = vunpack.c.0.s8 %v939
    %v941 = vlaneseq
    %v942 = vshrl.u32 %v941, 7
    %v943 = vsub.s32 %v940, %v942
    %v944 = vrot.slane %v930, %v943
    %v945 = vcombine.low %v912, %v928
    %v946 = vcombine.high %v912, %v928
    %v948 = vunpack.c.l.s4 1934713408
    %v949 = vunpack.c.0.s8 %v948
    %v950 = vlaneseq
    %v951 = vshrl.u32 %v950, 7
    %v952 = vsub.s32 %v949, %v951
    %v953 = vrot.slane %v945, %v952
    %v955 = vunpack.c.l.s4 1934713408
    %v956 = vunpack.c.0.s8 %v955
    %v957 = vlaneseq
    %v958 = vshrl.u32 %v957, 7
    %v959 = vsub.s32 %v956, %v958
    %v960 = vrot.slane %v946, %v959
    %v961 = vcombine.high %v937, 0.0
    %v962 = vcombine.high %v944, 0.0
    %v963 = vcombine.high %v953, 0.0
    %v964 = vcombine.high %v960, 0.0
    %v965 = vcombine.low %v876, %v884
    %v966 = vcombine.high %v876, %v884
    %v968 = vunpack.c.l.s4 1983009808
    %v969 = vunpack.c.0.s8 %v968
    %v970 = vlaneseq
    %v971 = vshrl.u32 %v970, 7
    %v972 = vsub.s32 %v969, %v971
    %v973 = vrot.slane %v965, %v972
    %v975 = vunpack.c.l.s4 1983009808
    %v976 = vunpack.c.0.s8 %v975
    %v977 = vlaneseq
    %v978 = vshrl.u32 %v977, 7
    %v979 = vsub.s32 %v976, %v978
    %v980 = vrot.slane %v966, %v979
    %v981 = vcombine.low %v880, %v888
    %v982 = vcombine.high %v880, %v888
    %v984 = vunpack.c.l.s4 1983009808
    %v985 = vunpack.c.0.s8 %v984
    %v986 = vlaneseq
    %v987 = vshrl.u32 %v986, 7
    %v988 = vsub.s32 %v985, %v987
    %v989 = vrot.slane %v981, %v988
    %v991 = vunpack.c.l.s4 1983009808
    %v992 = vunpack.c.0.s8 %v991
    %v993 = vlaneseq
    %v994 = vshrl.u32 %v993, 7
    %v995 = vsub.s32 %v992, %v994
    %v996 = vrot.slane %v982, %v995
    %v997 = vcombine.low %v973, %v989
    %v998 = vcombine.high %v973, %v989
    %v1000 = vunpack.c.l.s4 1934713408
    %v1001 = vunpack.c.0.s8 %v1000
    %v1002 = vlaneseq
    %v1003 = vshrl.u32 %v1002, 7
    %v1004 = vsub.s32 %v1001, %v1003
    %v1005 = vrot.slane %v997, %v1004
    %v1007 = vunpack.c.l.s4 1934713408
    %v1008 = vunpack.c.0.s8 %v1007
    %v1009 = vlaneseq
    %v1010 = vshrl.u32 %v1009, 7
    %v1011 = vsub.s32 %v1008, %v1010
    %v1012 = vrot.slane %v998, %v1011
    %v1013 = vcombine.low %v980, %v996
    %v1014 = vcombine.high %v980, %v996
    %v1016 = vunpack.c.l.s4 1934713408
    %v1017 = vunpack.c.0.s8 %v1016
    %v1018 = vlaneseq
    %v1019 = vshrl.u32 %v1018, 7
    %v1020 = vsub.s32 %v1017, %v1019
    %v1021 = vrot.slane %v1013, %v1020
    %v1023 = vunpack.c.l.s4 1934713408
    %v1024 = vunpack.c.0.s8 %v1023
    %v1025 = vlaneseq
    %v1026 = vshrl.u32 %v1025, 7
    %v1027 = vsub.s32 %v1024, %v1026
    %v1028 = vrot.slane %v1014, %v1027
    %v1029 = vcombine.high %v1005, 0.0
    %v1030 = vcombine.high %v1012, 0.0
    %v1031 = vcombine.high %v1021, 0.0
    %v1032 = vcombine.high %v1028, 0.0
    %v1033 = vcombine.low %v937, %v944
    %v1035 = vunpack.c.l.s4 1983009808
    %v1036 = vunpack.c.0.s8 %v1035
    %v1037 = vlaneseq
    %v1038 = vshrl.u32 %v1037, 7
    %v1039 = vsub.s32 %v1036, %v1038
    %v1040 = vrot.slane %v1033, %v1039
    %v1041 = vcombine.low %v961, %v962
    %v1043 = vunpack.c.l.s4 1983009808
    %v1044 = vunpack.c.0.s8 %v1043
    %v1045 = vlaneseq
    %v1046 = vshrl.u32 %v1045, 7
    %v1047 = vsub.s32 %v1044, %v1046
    %v1048 = vrot.slane %v1041, %v1047
    %v1049 = vcombine.low %v953, %v960
    %v1051 = vunpack.c.l.s4 1983009808
    %v1052 = vunpack.c.0.s8 %v1051
    %v1053 = vlaneseq
    %v1054 = vshrl.u32 %v1053, 7
    %v1055 = vsub.s32 %v1052, %v1054
    %v1056 = vrot.slane %v1049, %v1055
    %v1057 = vcombine.low %v963, %v964
    %v1059 = vunpack.c.l.s4 1983009808
    %v1060 = vunpack.c.0.s8 %v1059
    %v1061 = vlaneseq
    %v1062 = vshrl.u32 %v1061, 7
    %v1063 = vsub.s32 %v1060, %v1062
    %v1064 = vrot.slane %v1057, %v1063
    %v1065 = vcombine.low %v1040, %v1048
    %v1066 = vcombine.high %v1040, %v1048
    %v1068 = vunpack.c.l.s4 1934713408
    %v1069 = vunpack.c.0.s8 %v1068
    %v1070 = vlaneseq
    %v1071 = vshrl.u32 %v1070, 7
    %v1072 = vsub.s32 %v1069, %v1071
    %v1073 = vrot.slane %v1065, %v1072
    %v1075 = vunpack.c.l.s4 1934713408
    %v1076 = vunpack.c.0.s8 %v1075
    %v1077 = vlaneseq
    %v1078 = vshrl.u32 %v1077, 7
    %v1079 = vsub.s32 %v1076, %v1078
    %v1080 = vrot.slane %v1066, %v1079
    %v1081 = vcombine.low %v1056, %v1064
    %v1082 = vcombine.high %v1056, %v1064
    %v1084 = vunpack.c.l.s4 1934713408
    %v1085 = vunpack.c.0.s8 %v1084
    %v1086 = vlaneseq
    %v1087 = vshrl.u32 %v1086, 7
    %v1088 = vsub.s32 %v1085, %v1087
    %v1089 = vrot.slane %v1081, %v1088
    %v1091 = vunpack.c.l.s4 1934713408
    %v1092 = vunpack.c.0.s8 %v1091
    %v1093 = vlaneseq
    %v1094 = vshrl.u32 %v1093, 7
    %v1095 = vsub.s32 %v1092, %v1094
    %v1096 = vrot.slane %v1082, %v1095
    %v1097 = vcombine.low %v1073, %v1089
    %v1098 = vcombine.high %v1073, %v1089
    %v1099 = vcombine.low %v1080, %v1096
    %v1100 = vcombine.high %v1080, %v1096
    %v1101 = vcombine.low %v1005, %v1012
    %v1103 = vunpack.c.l.s4 1983009808
    %v1104 = vunpack.c.0.s8 %v1103
    %v1105 = vlaneseq
    %v1106 = vshrl.u32 %v1105, 7
    %v1107 = vsub.s32 %v1104, %v1106
    %v1108 = vrot.slane %v1101, %v1107
    %v1109 = vcombine.low %v1029, %v1030
    %v1111 = vunpack.c.l.s4 1983009808
    %v1112 = vunpack.c.0.s8 %v1111
    %v1113 = vlaneseq
    %v1114 = vshrl.u32 %v1113, 7
    %v1115 = vsub.s32 %v1112, %v1114
    %v1116 = vrot.slane %v1109, %v1115
    %v1117 = vcombine.low %v1021, %v1028
    %v1119 = vunpack.c.l.s4 1983009808
    %v1120 = vunpack.c.0.s8 %v1119
    %v1121 = vlaneseq
    %v1122 = vshrl.u32 %v1121, 7
    %v1123 = vsub.s32 %v1120, %v1122
    %v1124 = vrot.slane %v1117, %v1123
    %v1125 = vcombine.low %v1031, %v1032
    %v1127 = vunpack.c.l.s4 1983009808
    %v1128 = vunpack.c.0.s8 %v1127
    %v1129 = vlaneseq
    %v1130 = vshrl.u32 %v1129, 7
    %v1131 = vsub.s32 %v1128, %v1130
    %v1132 = vrot.slane %v1125, %v1131
    %v1133 = vcombine.low %v1108, %v1116
    %v1134 = vcombine.high %v1108, %v1116
    %v1136 = vunpack.c.l.s4 1934713408
    %v1137 = vunpack.c.0.s8 %v1136
    %v1138 = vlaneseq
    %v1139 = vshrl.u32 %v1138, 7
    %v1140 = vsub.s32 %v1137, %v1139
    %v1141 = vrot.slane %v1133, %v1140
    %v1143 = vunpack.c.l.s4 1934713408
    %v1144 = vunpack.c.0.s8 %v1143
    %v1145 = vlaneseq
    %v1146 = vshrl.u32 %v1145, 7
    %v1147 = vsub.s32 %v1144, %v1146
    %v1148 = vrot.slane %v1134, %v1147
    %v1149 = vcombine.low %v1124, %v1132
    %v1150 = vcombine.high %v1124, %v1132
    %v1152 = vunpack.c.l.s4 1934713408
    %v1153 = vunpack.c.0.s8 %v1152
    %v1154 = vlaneseq
    %v1155 = vshrl.u32 %v1154, 7
    %v1156 = vsub.s32 %v1153, %v1155
    %v1157 = vrot.slane %v1149, %v1156
    %v1159 = vunpack.c.l.s4 1934713408
    %v1160 = vunpack.c.0.s8 %v1159
    %v1161 = vlaneseq
    %v1162 = vshrl.u32 %v1161, 7
    %v1163 = vsub.s32 %v1160, %v1162
    %v1164 = vrot.slane %v1150, %v1163
    %v1165 = vcombine.low %v1141, %v1157
    %v1166 = vcombine.high %v1141, %v1157
    %v1167 = vcombine.low %v1148, %v1164
    %v1168 = vcombine.high %v1148, %v1164
    %1169 = vrot.lane.b32.xlu0 %v212, 32
    %v1170 = vpop.permute.xlu0 %1169
    %1171 = vrot.lane.b32.xlu0 %v215, 32
    %v1172 = vpop.permute.xlu0 %1171
    %1173 = vrot.lane.b32.xlu0 %v288, 32
    %v1174 = vpop.permute.xlu0 %1173
    %1175 = vrot.lane.b32.xlu0 %v290, 32
    %v1176 = vpop.permute.xlu0 %1175
    %1177 = vrot.lane.b32.xlu0 %v294, 32
    %v1178 = vpop.permute.xlu0 %1177
    %1179 = vrot.lane.b32.xlu0 %v296, 32
    %v1180 = vpop.permute.xlu0 %1179
    %1181 = vrot.lane.b32.xlu0 %v300, 32
    %v1182 = vpop.permute.xlu0 %1181
    %1183 = vrot.lane.b32.xlu0 %v302, 32
    %v1184 = vpop.permute.xlu0 %1183
    %v1193 = vcombine.low %v1170, %v1178
    %v1194 = vcombine.high %v1170, %v1178
    %v1196 = vunpack.c.l.s4 1983009808
    %v1197 = vunpack.c.0.s8 %v1196
    %v1198 = vlaneseq
    %v1199 = vshrl.u32 %v1198, 7
    %v1200 = vsub.s32 %v1197, %v1199
    %v1201 = vrot.slane %v1193, %v1200
    %v1203 = vunpack.c.l.s4 1983009808
    %v1204 = vunpack.c.0.s8 %v1203
    %v1205 = vlaneseq
    %v1206 = vshrl.u32 %v1205, 7
    %v1207 = vsub.s32 %v1204, %v1206
    %v1208 = vrot.slane %v1194, %v1207
    %v1209 = vcombine.low %v1174, %v1182
    %v1210 = vcombine.high %v1174, %v1182
    %v1212 = vunpack.c.l.s4 1983009808
    %v1213 = vunpack.c.0.s8 %v1212
    %v1214 = vlaneseq
    %v1215 = vshrl.u32 %v1214, 7
    %v1216 = vsub.s32 %v1213, %v1215
    %v1217 = vrot.slane %v1209, %v1216
    %v1219 = vunpack.c.l.s4 1983009808
    %v1220 = vunpack.c.0.s8 %v1219
    %v1221 = vlaneseq
    %v1222 = vshrl.u32 %v1221, 7
    %v1223 = vsub.s32 %v1220, %v1222
    %v1224 = vrot.slane %v1210, %v1223
    %v1225 = vcombine.low %v1201, %v1217
    %v1226 = vcombine.high %v1201, %v1217
    %v1228 = vunpack.c.l.s4 1934713408
    %v1229 = vunpack.c.0.s8 %v1228
    %v1230 = vlaneseq
    %v1231 = vshrl.u32 %v1230, 7
    %v1232 = vsub.s32 %v1229, %v1231
    %v1233 = vrot.slane %v1225, %v1232
    %v1235 = vunpack.c.l.s4 1934713408
    %v1236 = vunpack.c.0.s8 %v1235
    %v1237 = vlaneseq
    %v1238 = vshrl.u32 %v1237, 7
    %v1239 = vsub.s32 %v1236, %v1238
    %v1240 = vrot.slane %v1226, %v1239
    %v1241 = vcombine.low %v1208, %v1224
    %v1242 = vcombine.high %v1208, %v1224
    %v1244 = vunpack.c.l.s4 1934713408
    %v1245 = vunpack.c.0.s8 %v1244
    %v1246 = vlaneseq
    %v1247 = vshrl.u32 %v1246, 7
    %v1248 = vsub.s32 %v1245, %v1247
    %v1249 = vrot.slane %v1241, %v1248
    %v1251 = vunpack.c.l.s4 1934713408
    %v1252 = vunpack.c.0.s8 %v1251
    %v1253 = vlaneseq
    %v1254 = vshrl.u32 %v1253, 7
    %v1255 = vsub.s32 %v1252, %v1254
    %v1256 = vrot.slane %v1242, %v1255
    %v1257 = vcombine.high %v1233, 0.0
    %v1258 = vcombine.high %v1240, 0.0
    %v1259 = vcombine.high %v1249, 0.0
    %v1260 = vcombine.high %v1256, 0.0
    %v1261 = vcombine.low %v1172, %v1180
    %v1262 = vcombine.high %v1172, %v1180
    %v1264 = vunpack.c.l.s4 1983009808
    %v1265 = vunpack.c.0.s8 %v1264
    %v1266 = vlaneseq
    %v1267 = vshrl.u32 %v1266, 7
    %v1268 = vsub.s32 %v1265, %v1267
    %v1269 = vrot.slane %v1261, %v1268
    %v1271 = vunpack.c.l.s4 1983009808
    %v1272 = vunpack.c.0.s8 %v1271
    %v1273 = vlaneseq
    %v1274 = vshrl.u32 %v1273, 7
    %v1275 = vsub.s32 %v1272, %v1274
    %v1276 = vrot.slane %v1262, %v1275
    %v1277 = vcombine.low %v1176, %v1184
    %v1278 = vcombine.high %v1176, %v1184
    %v1280 = vunpack.c.l.s4 1983009808
    %v1281 = vunpack.c.0.s8 %v1280
    %v1282 = vlaneseq
    %v1283 = vshrl.u32 %v1282, 7
    %v1284 = vsub.s32 %v1281, %v1283
    %v1285 = vrot.slane %v1277, %v1284
    %v1287 = vunpack.c.l.s4 1983009808
    %v1288 = vunpack.c.0.s8 %v1287
    %v1289 = vlaneseq
    %v1290 = vshrl.u32 %v1289, 7
    %v1291 = vsub.s32 %v1288, %v1290
    %v1292 = vrot.slane %v1278, %v1291
    %v1293 = vcombine.low %v1269, %v1285
    %v1294 = vcombine.high %v1269, %v1285
    %v1296 = vunpack.c.l.s4 1934713408
    %v1297 = vunpack.c.0.s8 %v1296
    %v1298 = vlaneseq
    %v1299 = vshrl.u32 %v1298, 7
    %v1300 = vsub.s32 %v1297, %v1299
    %v1301 = vrot.slane %v1293, %v1300
    %v1303 = vunpack.c.l.s4 1934713408
    %v1304 = vunpack.c.0.s8 %v1303
    %v1305 = vlaneseq
    %v1306 = vshrl.u32 %v1305, 7
    %v1307 = vsub.s32 %v1304, %v1306
    %v1308 = vrot.slane %v1294, %v1307
    %v1309 = vcombine.low %v1276, %v1292
    %v1310 = vcombine.high %v1276, %v1292
    %v1312 = vunpack.c.l.s4 1934713408
    %v1313 = vunpack.c.0.s8 %v1312
    %v1314 = vlaneseq
    %v1315 = vshrl.u32 %v1314, 7
    %v1316 = vsub.s32 %v1313, %v1315
    %v1317 = vrot.slane %v1309, %v1316
    %v1319 = vunpack.c.l.s4 1934713408
    %v1320 = vunpack.c.0.s8 %v1319
    %v1321 = vlaneseq
    %v1322 = vshrl.u32 %v1321, 7
    %v1323 = vsub.s32 %v1320, %v1322
    %v1324 = vrot.slane %v1310, %v1323
    %v1325 = vcombine.high %v1301, 0.0
    %v1326 = vcombine.high %v1308, 0.0
    %v1327 = vcombine.high %v1317, 0.0
    %v1328 = vcombine.high %v1324, 0.0
    %v1329 = vcombine.low %v1233, %v1240
    %v1331 = vunpack.c.l.s4 1983009808
    %v1332 = vunpack.c.0.s8 %v1331
    %v1333 = vlaneseq
    %v1334 = vshrl.u32 %v1333, 7
    %v1335 = vsub.s32 %v1332, %v1334
    %v1336 = vrot.slane %v1329, %v1335
    %v1337 = vcombine.low %v1257, %v1258
    %v1339 = vunpack.c.l.s4 1983009808
    %v1340 = vunpack.c.0.s8 %v1339
    %v1341 = vlaneseq
    %v1342 = vshrl.u32 %v1341, 7
    %v1343 = vsub.s32 %v1340, %v1342
    %v1344 = vrot.slane %v1337, %v1343
    %v1345 = vcombine.low %v1249, %v1256
    %v1347 = vunpack.c.l.s4 1983009808
    %v1348 = vunpack.c.0.s8 %v1347
    %v1349 = vlaneseq
    %v1350 = vshrl.u32 %v1349, 7
    %v1351 = vsub.s32 %v1348, %v1350
    %v1352 = vrot.slane %v1345, %v1351
    %v1353 = vcombine.low %v1259, %v1260
    %v1355 = vunpack.c.l.s4 1983009808
    %v1356 = vunpack.c.0.s8 %v1355
    %v1357 = vlaneseq
    %v1358 = vshrl.u32 %v1357, 7
    %v1359 = vsub.s32 %v1356, %v1358
    %v1360 = vrot.slane %v1353, %v1359
    %v1361 = vcombine.low %v1336, %v1344
    %v1362 = vcombine.high %v1336, %v1344
    %v1364 = vunpack.c.l.s4 1934713408
    %v1365 = vunpack.c.0.s8 %v1364
    %v1366 = vlaneseq
    %v1367 = vshrl.u32 %v1366, 7
    %v1368 = vsub.s32 %v1365, %v1367
    %v1369 = vrot.slane %v1361, %v1368
    %v1371 = vunpack.c.l.s4 1934713408
    %v1372 = vunpack.c.0.s8 %v1371
    %v1373 = vlaneseq
    %v1374 = vshrl.u32 %v1373, 7
    %v1375 = vsub.s32 %v1372, %v1374
    %v1376 = vrot.slane %v1362, %v1375
    %v1377 = vcombine.low %v1352, %v1360
    %v1378 = vcombine.high %v1352, %v1360
    %v1380 = vunpack.c.l.s4 1934713408
    %v1381 = vunpack.c.0.s8 %v1380
    %v1382 = vlaneseq
    %v1383 = vshrl.u32 %v1382, 7
    %v1384 = vsub.s32 %v1381, %v1383
    %v1385 = vrot.slane %v1377, %v1384
    %v1387 = vunpack.c.l.s4 1934713408
    %v1388 = vunpack.c.0.s8 %v1387
    %v1389 = vlaneseq
    %v1390 = vshrl.u32 %v1389, 7
    %v1391 = vsub.s32 %v1388, %v1390
    %v1392 = vrot.slane %v1378, %v1391
    %v1393 = vcombine.low %v1369, %v1385
    %v1394 = vcombine.high %v1369, %v1385
    %v1395 = vcombine.low %v1376, %v1392
    %v1396 = vcombine.high %v1376, %v1392
    %v1397 = vcombine.low %v1301, %v1308
    %v1399 = vunpack.c.l.s4 1983009808
    %v1400 = vunpack.c.0.s8 %v1399
    %v1401 = vlaneseq
    %v1402 = vshrl.u32 %v1401, 7
    %v1403 = vsub.s32 %v1400, %v1402
    %v1404 = vrot.slane %v1397, %v1403
    %v1405 = vcombine.low %v1325, %v1326
    %v1407 = vunpack.c.l.s4 1983009808
    %v1408 = vunpack.c.0.s8 %v1407
    %v1409 = vlaneseq
    %v1410 = vshrl.u32 %v1409, 7
    %v1411 = vsub.s32 %v1408, %v1410
    %v1412 = vrot.slane %v1405, %v1411
    %v1413 = vcombine.low %v1317, %v1324
    %v1415 = vunpack.c.l.s4 1983009808
    %v1416 = vunpack.c.0.s8 %v1415
    %v1417 = vlaneseq
    %v1418 = vshrl.u32 %v1417, 7
    %v1419 = vsub.s32 %v1416, %v1418
    %v1420 = vrot.slane %v1413, %v1419
    %v1421 = vcombine.low %v1327, %v1328
    %v1423 = vunpack.c.l.s4 1983009808
    %v1424 = vunpack.c.0.s8 %v1423
    %v1425 = vlaneseq
    %v1426 = vshrl.u32 %v1425, 7
    %v1427 = vsub.s32 %v1424, %v1426
    %v1428 = vrot.slane %v1421, %v1427
    %v1429 = vcombine.low %v1404, %v1412
    %v1430 = vcombine.high %v1404, %v1412
    %v1432 = vunpack.c.l.s4 1934713408
    %v1433 = vunpack.c.0.s8 %v1432
    %v1434 = vlaneseq
    %v1435 = vshrl.u32 %v1434, 7
    %v1436 = vsub.s32 %v1433, %v1435
    %v1437 = vrot.slane %v1429, %v1436
    %v1439 = vunpack.c.l.s4 1934713408
    %v1440 = vunpack.c.0.s8 %v1439
    %v1441 = vlaneseq
    %v1442 = vshrl.u32 %v1441, 7
    %v1443 = vsub.s32 %v1440, %v1442
    %v1444 = vrot.slane %v1430, %v1443
    %v1445 = vcombine.low %v1420, %v1428
    %v1446 = vcombine.high %v1420, %v1428
    %v1448 = vunpack.c.l.s4 1934713408
    %v1449 = vunpack.c.0.s8 %v1448
    %v1450 = vlaneseq
    %v1451 = vshrl.u32 %v1450, 7
    %v1452 = vsub.s32 %v1449, %v1451
    %v1453 = vrot.slane %v1445, %v1452
    %v1455 = vunpack.c.l.s4 1934713408
    %v1456 = vunpack.c.0.s8 %v1455
    %v1457 = vlaneseq
    %v1458 = vshrl.u32 %v1457, 7
    %v1459 = vsub.s32 %v1456, %v1458
    %v1460 = vrot.slane %v1446, %v1459
    %v1461 = vcombine.low %v1437, %v1453
    %v1462 = vcombine.high %v1437, %v1453
    %v1463 = vcombine.low %v1444, %v1460
    %v1464 = vcombine.high %v1444, %v1460
    %1467 = vrot.lane.b32.xlu0 %v279, 120
    %v1468 = vpop.permute.xlu0 %1467
    %1469 = vrot.lane.b32.xlu0 %v282, 120
    %v1470 = vpop.permute.xlu0 %1469
    %1473 = vrot.lane.b32.xlu0 %v279, 112
    %v1474 = vpop.permute.xlu0 %1473
    %1475 = vrot.lane.b32.xlu0 %v282, 112
    %v1476 = vpop.permute.xlu0 %1475
    %1479 = vrot.lane.b32.xlu0 %v279, 104
    %v1480 = vpop.permute.xlu0 %1479
    %1481 = vrot.lane.b32.xlu0 %v282, 104
    %v1482 = vpop.permute.xlu0 %1481
    %v1485 = vcombine.low %v279, %v1474
    %v1486 = vcombine.high %v279, %v1474
    %v1488 = vunpack.c.l.s4 1983009808
    %v1489 = vunpack.c.0.s8 %v1488
    %v1490 = vlaneseq
    %v1491 = vshrl.u32 %v1490, 7
    %v1492 = vsub.s32 %v1489, %v1491
    %v1493 = vrot.slane %v1485, %v1492
    %v1495 = vunpack.c.l.s4 1983009808
    %v1496 = vunpack.c.0.s8 %v1495
    %v1497 = vlaneseq
    %v1498 = vshrl.u32 %v1497, 7
    %v1499 = vsub.s32 %v1496, %v1498
    %v1500 = vrot.slane %v1486, %v1499
    %v1501 = vcombine.low %v1468, %v1480
    %v1502 = vcombine.high %v1468, %v1480
    %v1504 = vunpack.c.l.s4 1983009808
    %v1505 = vunpack.c.0.s8 %v1504
    %v1506 = vlaneseq
    %v1507 = vshrl.u32 %v1506, 7
    %v1508 = vsub.s32 %v1505, %v1507
    %v1509 = vrot.slane %v1501, %v1508
    %v1511 = vunpack.c.l.s4 1983009808
    %v1512 = vunpack.c.0.s8 %v1511
    %v1513 = vlaneseq
    %v1514 = vshrl.u32 %v1513, 7
    %v1515 = vsub.s32 %v1512, %v1514
    %v1516 = vrot.slane %v1502, %v1515
    %v1517 = vcombine.low %v1493, %v1509
    %v1518 = vcombine.high %v1493, %v1509
    %v1520 = vunpack.c.l.s4 1934713408
    %v1521 = vunpack.c.0.s8 %v1520
    %v1522 = vlaneseq
    %v1523 = vshrl.u32 %v1522, 7
    %v1524 = vsub.s32 %v1521, %v1523
    %v1525 = vrot.slane %v1517, %v1524
    %v1527 = vunpack.c.l.s4 1934713408
    %v1528 = vunpack.c.0.s8 %v1527
    %v1529 = vlaneseq
    %v1530 = vshrl.u32 %v1529, 7
    %v1531 = vsub.s32 %v1528, %v1530
    %v1532 = vrot.slane %v1518, %v1531
    %v1533 = vcombine.low %v1500, %v1516
    %v1534 = vcombine.high %v1500, %v1516
    %v1536 = vunpack.c.l.s4 1934713408
    %v1537 = vunpack.c.0.s8 %v1536
    %v1538 = vlaneseq
    %v1539 = vshrl.u32 %v1538, 7
    %v1540 = vsub.s32 %v1537, %v1539
    %v1541 = vrot.slane %v1533, %v1540
    %v1543 = vunpack.c.l.s4 1934713408
    %v1544 = vunpack.c.0.s8 %v1543
    %v1545 = vlaneseq
    %v1546 = vshrl.u32 %v1545, 7
    %v1547 = vsub.s32 %v1544, %v1546
    %v1548 = vrot.slane %v1534, %v1547
    %v1549 = vcombine.high %v1525, 0.0
    %v1550 = vcombine.high %v1532, 0.0
    %v1551 = vcombine.high %v1541, 0.0
    %v1552 = vcombine.high %v1548, 0.0
    %v1553 = vcombine.low %v282, %v1476
    %v1554 = vcombine.high %v282, %v1476
    %v1556 = vunpack.c.l.s4 1983009808
    %v1557 = vunpack.c.0.s8 %v1556
    %v1558 = vlaneseq
    %v1559 = vshrl.u32 %v1558, 7
    %v1560 = vsub.s32 %v1557, %v1559
    %v1561 = vrot.slane %v1553, %v1560
    %v1563 = vunpack.c.l.s4 1983009808
    %v1564 = vunpack.c.0.s8 %v1563
    %v1565 = vlaneseq
    %v1566 = vshrl.u32 %v1565, 7
    %v1567 = vsub.s32 %v1564, %v1566
    %v1568 = vrot.slane %v1554, %v1567
    %v1569 = vcombine.low %v1470, %v1482
    %v1570 = vcombine.high %v1470, %v1482
    %v1572 = vunpack.c.l.s4 1983009808
    %v1573 = vunpack.c.0.s8 %v1572
    %v1574 = vlaneseq
    %v1575 = vshrl.u32 %v1574, 7
    %v1576 = vsub.s32 %v1573, %v1575
    %v1577 = vrot.slane %v1569, %v1576
    %v1579 = vunpack.c.l.s4 1983009808
    %v1580 = vunpack.c.0.s8 %v1579
    %v1581 = vlaneseq
    %v1582 = vshrl.u32 %v1581, 7
    %v1583 = vsub.s32 %v1580, %v1582
    %v1584 = vrot.slane %v1570, %v1583
    %v1585 = vcombine.low %v1561, %v1577
    %v1586 = vcombine.high %v1561, %v1577
    %v1588 = vunpack.c.l.s4 1934713408
    %v1589 = vunpack.c.0.s8 %v1588
    %v1590 = vlaneseq
    %v1591 = vshrl.u32 %v1590, 7
    %v1592 = vsub.s32 %v1589, %v1591
    %v1593 = vrot.slane %v1585, %v1592
    %v1595 = vunpack.c.l.s4 1934713408
    %v1596 = vunpack.c.0.s8 %v1595
    %v1597 = vlaneseq
    %v1598 = vshrl.u32 %v1597, 7
    %v1599 = vsub.s32 %v1596, %v1598
    %v1600 = vrot.slane %v1586, %v1599
    %v1601 = vcombine.low %v1568, %v1584
    %v1602 = vcombine.high %v1568, %v1584
    %v1604 = vunpack.c.l.s4 1934713408
    %v1605 = vunpack.c.0.s8 %v1604
    %v1606 = vlaneseq
    %v1607 = vshrl.u32 %v1606, 7
    %v1608 = vsub.s32 %v1605, %v1607
    %v1609 = vrot.slane %v1601, %v1608
    %v1611 = vunpack.c.l.s4 1934713408
    %v1612 = vunpack.c.0.s8 %v1611
    %v1613 = vlaneseq
    %v1614 = vshrl.u32 %v1613, 7
    %v1615 = vsub.s32 %v1612, %v1614
    %v1616 = vrot.slane %v1602, %v1615
    %v1617 = vcombine.high %v1593, 0.0
    %v1618 = vcombine.high %v1600, 0.0
    %v1619 = vcombine.high %v1609, 0.0
    %v1620 = vcombine.high %v1616, 0.0
    %v1621 = vcombine.low %v1525, %v1532
    %v1623 = vunpack.c.l.s4 1983009808
    %v1624 = vunpack.c.0.s8 %v1623
    %v1625 = vlaneseq
    %v1626 = vshrl.u32 %v1625, 7
    %v1627 = vsub.s32 %v1624, %v1626
    %v1628 = vrot.slane %v1621, %v1627
    %v1629 = vcombine.low %v1549, %v1550
    %v1631 = vunpack.c.l.s4 1983009808
    %v1632 = vunpack.c.0.s8 %v1631
    %v1633 = vlaneseq
    %v1634 = vshrl.u32 %v1633, 7
    %v1635 = vsub.s32 %v1632, %v1634
    %v1636 = vrot.slane %v1629, %v1635
    %v1637 = vcombine.low %v1541, %v1548
    %v1639 = vunpack.c.l.s4 1983009808
    %v1640 = vunpack.c.0.s8 %v1639
    %v1641 = vlaneseq
    %v1642 = vshrl.u32 %v1641, 7
    %v1643 = vsub.s32 %v1640, %v1642
    %v1644 = vrot.slane %v1637, %v1643
    %v1645 = vcombine.low %v1551, %v1552
    %v1647 = vunpack.c.l.s4 1983009808
    %v1648 = vunpack.c.0.s8 %v1647
    %v1649 = vlaneseq
    %v1650 = vshrl.u32 %v1649, 7
    %v1651 = vsub.s32 %v1648, %v1650
    %v1652 = vrot.slane %v1645, %v1651
    %v1653 = vcombine.low %v1628, %v1636
    %v1654 = vcombine.high %v1628, %v1636
    %v1656 = vunpack.c.l.s4 1934713408
    %v1657 = vunpack.c.0.s8 %v1656
    %v1658 = vlaneseq
    %v1659 = vshrl.u32 %v1658, 7
    %v1660 = vsub.s32 %v1657, %v1659
    %v1661 = vrot.slane %v1653, %v1660
    %v1663 = vunpack.c.l.s4 1934713408
    %v1664 = vunpack.c.0.s8 %v1663
    %v1665 = vlaneseq
    %v1666 = vshrl.u32 %v1665, 7
    %v1667 = vsub.s32 %v1664, %v1666
    %v1668 = vrot.slane %v1654, %v1667
    %v1669 = vcombine.low %v1644, %v1652
    %v1670 = vcombine.high %v1644, %v1652
    %v1672 = vunpack.c.l.s4 1934713408
    %v1673 = vunpack.c.0.s8 %v1672
    %v1674 = vlaneseq
    %v1675 = vshrl.u32 %v1674, 7
    %v1676 = vsub.s32 %v1673, %v1675
    %v1677 = vrot.slane %v1669, %v1676
    %v1679 = vunpack.c.l.s4 1934713408
    %v1680 = vunpack.c.0.s8 %v1679
    %v1681 = vlaneseq
    %v1682 = vshrl.u32 %v1681, 7
    %v1683 = vsub.s32 %v1680, %v1682
    %v1684 = vrot.slane %v1670, %v1683
    %v1685 = vcombine.low %v1661, %v1677
    %v1686 = vcombine.high %v1661, %v1677
    %v1687 = vcombine.low %v1668, %v1684
    %v1688 = vcombine.high %v1668, %v1684
    %v1689 = vcombine.low %v1593, %v1600
    %v1691 = vunpack.c.l.s4 1983009808
    %v1692 = vunpack.c.0.s8 %v1691
    %v1693 = vlaneseq
    %v1694 = vshrl.u32 %v1693, 7
    %v1695 = vsub.s32 %v1692, %v1694
    %v1696 = vrot.slane %v1689, %v1695
    %v1697 = vcombine.low %v1617, %v1618
    %v1699 = vunpack.c.l.s4 1983009808
    %v1700 = vunpack.c.0.s8 %v1699
    %v1701 = vlaneseq
    %v1702 = vshrl.u32 %v1701, 7
    %v1703 = vsub.s32 %v1700, %v1702
    %v1704 = vrot.slane %v1697, %v1703
    %v1705 = vcombine.low %v1609, %v1616
    %v1707 = vunpack.c.l.s4 1983009808
    %v1708 = vunpack.c.0.s8 %v1707
    %v1709 = vlaneseq
    %v1710 = vshrl.u32 %v1709, 7
    %v1711 = vsub.s32 %v1708, %v1710
    %v1712 = vrot.slane %v1705, %v1711
    %v1713 = vcombine.low %v1619, %v1620
    %v1715 = vunpack.c.l.s4 1983009808
    %v1716 = vunpack.c.0.s8 %v1715
    %v1717 = vlaneseq
    %v1718 = vshrl.u32 %v1717, 7
    %v1719 = vsub.s32 %v1716, %v1718
    %v1720 = vrot.slane %v1713, %v1719
    %v1721 = vcombine.low %v1696, %v1704
    %v1722 = vcombine.high %v1696, %v1704
    %v1724 = vunpack.c.l.s4 1934713408
    %v1725 = vunpack.c.0.s8 %v1724
    %v1726 = vlaneseq
    %v1727 = vshrl.u32 %v1726, 7
    %v1728 = vsub.s32 %v1725, %v1727
    %v1729 = vrot.slane %v1721, %v1728
    %v1731 = vunpack.c.l.s4 1934713408
    %v1732 = vunpack.c.0.s8 %v1731
    %v1733 = vlaneseq
    %v1734 = vshrl.u32 %v1733, 7
    %v1735 = vsub.s32 %v1732, %v1734
    %v1736 = vrot.slane %v1722, %v1735
    %v1737 = vcombine.low %v1712, %v1720
    %v1738 = vcombine.high %v1712, %v1720
    %v1740 = vunpack.c.l.s4 1934713408
    %v1741 = vunpack.c.0.s8 %v1740
    %v1742 = vlaneseq
    %v1743 = vshrl.u32 %v1742, 7
    %v1744 = vsub.s32 %v1741, %v1743
    %v1745 = vrot.slane %v1737, %v1744
    %v1747 = vunpack.c.l.s4 1934713408
    %v1748 = vunpack.c.0.s8 %v1747
    %v1749 = vlaneseq
    %v1750 = vshrl.u32 %v1749, 7
    %v1751 = vsub.s32 %v1748, %v1750
    %v1752 = vrot.slane %v1738, %v1751
    %v1753 = vcombine.low %v1729, %v1745
    %v1754 = vcombine.high %v1729, %v1745
    %v1755 = vcombine.low %v1736, %v1752
    %v1756 = vcombine.high %v1736, %v1752
    %1757 = vrot.lane.b32.xlu0 %v279, 96
    %v1758 = vpop.permute.xlu0 %1757
    %1759 = vrot.lane.b32.xlu0 %v282, 96
    %v1760 = vpop.permute.xlu0 %1759
    %1761 = vrot.lane.b32.xlu0 %v1468, 96
    %v1762 = vpop.permute.xlu0 %1761
    %1763 = vrot.lane.b32.xlu0 %v1470, 96
    %v1764 = vpop.permute.xlu0 %1763
    %1765 = vrot.lane.b32.xlu0 %v1474, 96
    %v1766 = vpop.permute.xlu0 %1765
    %1767 = vrot.lane.b32.xlu0 %v1476, 96
    %v1768 = vpop.permute.xlu0 %1767
    %1769 = vrot.lane.b32.xlu0 %v1480, 96
    %v1770 = vpop.permute.xlu0 %1769
    %1771 = vrot.lane.b32.xlu0 %v1482, 96
    %v1772 = vpop.permute.xlu0 %1771
    %v1781 = vcombine.low %v1758, %v1766
    %v1782 = vcombine.high %v1758, %v1766
    %v1784 = vunpack.c.l.s4 1983009808
    %v1785 = vunpack.c.0.s8 %v1784
    %v1786 = vlaneseq
    %v1787 = vshrl.u32 %v1786, 7
    %v1788 = vsub.s32 %v1785, %v1787
    %v1789 = vrot.slane %v1781, %v1788
    %v1791 = vunpack.c.l.s4 1983009808
    %v1792 = vunpack.c.0.s8 %v1791
    %v1793 = vlaneseq
    %v1794 = vshrl.u32 %v1793, 7
    %v1795 = vsub.s32 %v1792, %v1794
    %v1796 = vrot.slane %v1782, %v1795
    %v1797 = vcombine.low %v1762, %v1770
    %v1798 = vcombine.high %v1762, %v1770
    %v1800 = vunpack.c.l.s4 1983009808
    %v1801 = vunpack.c.0.s8 %v1800
    %v1802 = vlaneseq
    %v1803 = vshrl.u32 %v1802, 7
    %v1804 = vsub.s32 %v1801, %v1803
    %v1805 = vrot.slane %v1797, %v1804
    %v1807 = vunpack.c.l.s4 1983009808
    %v1808 = vunpack.c.0.s8 %v1807
    %v1809 = vlaneseq
    %v1810 = vshrl.u32 %v1809, 7
    %v1811 = vsub.s32 %v1808, %v1810
    %v1812 = vrot.slane %v1798, %v1811
    %v1813 = vcombine.low %v1789, %v1805
    %v1814 = vcombine.high %v1789, %v1805
    %v1816 = vunpack.c.l.s4 1934713408
    %v1817 = vunpack.c.0.s8 %v1816
    %v1818 = vlaneseq
    %v1819 = vshrl.u32 %v1818, 7
    %v1820 = vsub.s32 %v1817, %v1819
    %v1821 = vrot.slane %v1813, %v1820
    %v1823 = vunpack.c.l.s4 1934713408
    %v1824 = vunpack.c.0.s8 %v1823
    %v1825 = vlaneseq
    %v1826 = vshrl.u32 %v1825, 7
    %v1827 = vsub.s32 %v1824, %v1826
    %v1828 = vrot.slane %v1814, %v1827
    %v1829 = vcombine.low %v1796, %v1812
    %v1830 = vcombine.high %v1796, %v1812
    %v1832 = vunpack.c.l.s4 1934713408
    %v1833 = vunpack.c.0.s8 %v1832
    %v1834 = vlaneseq
    %v1835 = vshrl.u32 %v1834, 7
    %v1836 = vsub.s32 %v1833, %v1835
    %v1837 = vrot.slane %v1829, %v1836
    %v1839 = vunpack.c.l.s4 1934713408
    %v1840 = vunpack.c.0.s8 %v1839
    %v1841 = vlaneseq
    %v1842 = vshrl.u32 %v1841, 7
    %v1843 = vsub.s32 %v1840, %v1842
    %v1844 = vrot.slane %v1830, %v1843
    %v1845 = vcombine.high %v1821, 0.0
    %v1846 = vcombine.high %v1828, 0.0
    %v1847 = vcombine.high %v1837, 0.0
    %v1848 = vcombine.high %v1844, 0.0
    %v1849 = vcombine.low %v1760, %v1768
    %v1850 = vcombine.high %v1760, %v1768
    %v1852 = vunpack.c.l.s4 1983009808
    %v1853 = vunpack.c.0.s8 %v1852
    %v1854 = vlaneseq
    %v1855 = vshrl.u32 %v1854, 7
    %v1856 = vsub.s32 %v1853, %v1855
    %v1857 = vrot.slane %v1849, %v1856
    %v1859 = vunpack.c.l.s4 1983009808
    %v1860 = vunpack.c.0.s8 %v1859
    %v1861 = vlaneseq
    %v1862 = vshrl.u32 %v1861, 7
    %v1863 = vsub.s32 %v1860, %v1862
    %v1864 = vrot.slane %v1850, %v1863
    %v1865 = vcombine.low %v1764, %v1772
    %v1866 = vcombine.high %v1764, %v1772
    %v1868 = vunpack.c.l.s4 1983009808
    %v1869 = vunpack.c.0.s8 %v1868
    %v1870 = vlaneseq
    %v1871 = vshrl.u32 %v1870, 7
    %v1872 = vsub.s32 %v1869, %v1871
    %v1873 = vrot.slane %v1865, %v1872
    %v1875 = vunpack.c.l.s4 1983009808
    %v1876 = vunpack.c.0.s8 %v1875
    %v1877 = vlaneseq
    %v1878 = vshrl.u32 %v1877, 7
    %v1879 = vsub.s32 %v1876, %v1878
    %v1880 = vrot.slane %v1866, %v1879
    %v1881 = vcombine.low %v1857, %v1873
    %v1882 = vcombine.high %v1857, %v1873
    %v1884 = vunpack.c.l.s4 1934713408
    %v1885 = vunpack.c.0.s8 %v1884
    %v1886 = vlaneseq
    %v1887 = vshrl.u32 %v1886, 7
    %v1888 = vsub.s32 %v1885, %v1887
    %v1889 = vrot.slane %v1881, %v1888
    %v1891 = vunpack.c.l.s4 1934713408
    %v1892 = vunpack.c.0.s8 %v1891
    %v1893 = vlaneseq
    %v1894 = vshrl.u32 %v1893, 7
    %v1895 = vsub.s32 %v1892, %v1894
    %v1896 = vrot.slane %v1882, %v1895
    %v1897 = vcombine.low %v1864, %v1880
    %v1898 = vcombine.high %v1864, %v1880
    %v1900 = vunpack.c.l.s4 1934713408
    %v1901 = vunpack.c.0.s8 %v1900
    %v1902 = vlaneseq
    %v1903 = vshrl.u32 %v1902, 7
    %v1904 = vsub.s32 %v1901, %v1903
    %v1905 = vrot.slane %v1897, %v1904
    %v1907 = vunpack.c.l.s4 1934713408
    %v1908 = vunpack.c.0.s8 %v1907
    %v1909 = vlaneseq
    %v1910 = vshrl.u32 %v1909, 7
    %v1911 = vsub.s32 %v1908, %v1910
    %v1912 = vrot.slane %v1898, %v1911
    %v1913 = vcombine.high %v1889, 0.0
    %v1914 = vcombine.high %v1896, 0.0
    %v1915 = vcombine.high %v1905, 0.0
    %v1916 = vcombine.high %v1912, 0.0
    %v1917 = vcombine.low %v1821, %v1828
    %v1919 = vunpack.c.l.s4 1983009808
    %v1920 = vunpack.c.0.s8 %v1919
    %v1921 = vlaneseq
    %v1922 = vshrl.u32 %v1921, 7
    %v1923 = vsub.s32 %v1920, %v1922
    %v1924 = vrot.slane %v1917, %v1923
    %v1925 = vcombine.low %v1845, %v1846
    %v1927 = vunpack.c.l.s4 1983009808
    %v1928 = vunpack.c.0.s8 %v1927
    %v1929 = vlaneseq
    %v1930 = vshrl.u32 %v1929, 7
    %v1931 = vsub.s32 %v1928, %v1930
    %v1932 = vrot.slane %v1925, %v1931
    %v1933 = vcombine.low %v1837, %v1844
    %v1935 = vunpack.c.l.s4 1983009808
    %v1936 = vunpack.c.0.s8 %v1935
    %v1937 = vlaneseq
    %v1938 = vshrl.u32 %v1937, 7
    %v1939 = vsub.s32 %v1936, %v1938
    %v1940 = vrot.slane %v1933, %v1939
    %v1941 = vcombine.low %v1847, %v1848
    %v1943 = vunpack.c.l.s4 1983009808
    %v1944 = vunpack.c.0.s8 %v1943
    %v1945 = vlaneseq
    %v1946 = vshrl.u32 %v1945, 7
    %v1947 = vsub.s32 %v1944, %v1946
    %v1948 = vrot.slane %v1941, %v1947
    %v1949 = vcombine.low %v1924, %v1932
    %v1950 = vcombine.high %v1924, %v1932
    %v1952 = vunpack.c.l.s4 1934713408
    %v1953 = vunpack.c.0.s8 %v1952
    %v1954 = vlaneseq
    %v1955 = vshrl.u32 %v1954, 7
    %v1956 = vsub.s32 %v1953, %v1955
    %v1957 = vrot.slane %v1949, %v1956
    %v1959 = vunpack.c.l.s4 1934713408
    %v1960 = vunpack.c.0.s8 %v1959
    %v1961 = vlaneseq
    %v1962 = vshrl.u32 %v1961, 7
    %v1963 = vsub.s32 %v1960, %v1962
    %v1964 = vrot.slane %v1950, %v1963
    %v1965 = vcombine.low %v1940, %v1948
    %v1966 = vcombine.high %v1940, %v1948
    %v1968 = vunpack.c.l.s4 1934713408
    %v1969 = vunpack.c.0.s8 %v1968
    %v1970 = vlaneseq
    %v1971 = vshrl.u32 %v1970, 7
    %v1972 = vsub.s32 %v1969, %v1971
    %v1973 = vrot.slane %v1965, %v1972
    %v1975 = vunpack.c.l.s4 1934713408
    %v1976 = vunpack.c.0.s8 %v1975
    %v1977 = vlaneseq
    %v1978 = vshrl.u32 %v1977, 7
    %v1979 = vsub.s32 %v1976, %v1978
    %v1980 = vrot.slane %v1966, %v1979
    %v1981 = vcombine.low %v1957, %v1973
    %v1982 = vcombine.high %v1957, %v1973
    %v1983 = vcombine.low %v1964, %v1980
    %v1984 = vcombine.high %v1964, %v1980
    %v1985 = vcombine.low %v1889, %v1896
    %v1987 = vunpack.c.l.s4 1983009808
    %v1988 = vunpack.c.0.s8 %v1987
    %v1989 = vlaneseq
    %v1990 = vshrl.u32 %v1989, 7
    %v1991 = vsub.s32 %v1988, %v1990
    %v1992 = vrot.slane %v1985, %v1991
    %v1993 = vcombine.low %v1913, %v1914
    %v1995 = vunpack.c.l.s4 1983009808
    %v1996 = vunpack.c.0.s8 %v1995
    %v1997 = vlaneseq
    %v1998 = vshrl.u32 %v1997, 7
    %v1999 = vsub.s32 %v1996, %v1998
    %v2000 = vrot.slane %v1993, %v1999
    %v2001 = vcombine.low %v1905, %v1912
    %v2003 = vunpack.c.l.s4 1983009808
    %v2004 = vunpack.c.0.s8 %v2003
    %v2005 = vlaneseq
    %v2006 = vshrl.u32 %v2005, 7
    %v2007 = vsub.s32 %v2004, %v2006
    %v2008 = vrot.slane %v2001, %v2007
    %v2009 = vcombine.low %v1915, %v1916
    %v2011 = vunpack.c.l.s4 1983009808
    %v2012 = vunpack.c.0.s8 %v2011
    %v2013 = vlaneseq
    %v2014 = vshrl.u32 %v2013, 7
    %v2015 = vsub.s32 %v2012, %v2014
    %v2016 = vrot.slane %v2009, %v2015
    %v2017 = vcombine.low %v1992, %v2000
    %v2018 = vcombine.high %v1992, %v2000
    %v2020 = vunpack.c.l.s4 1934713408
    %v2021 = vunpack.c.0.s8 %v2020
    %v2022 = vlaneseq
    %v2023 = vshrl.u32 %v2022, 7
    %v2024 = vsub.s32 %v2021, %v2023
    %v2025 = vrot.slane %v2017, %v2024
    %v2027 = vunpack.c.l.s4 1934713408
    %v2028 = vunpack.c.0.s8 %v2027
    %v2029 = vlaneseq
    %v2030 = vshrl.u32 %v2029, 7
    %v2031 = vsub.s32 %v2028, %v2030
    %v2032 = vrot.slane %v2018, %v2031
    %v2033 = vcombine.low %v2008, %v2016
    %v2034 = vcombine.high %v2008, %v2016
    %v2036 = vunpack.c.l.s4 1934713408
    %v2037 = vunpack.c.0.s8 %v2036
    %v2038 = vlaneseq
    %v2039 = vshrl.u32 %v2038, 7
    %v2040 = vsub.s32 %v2037, %v2039
    %v2041 = vrot.slane %v2033, %v2040
    %v2043 = vunpack.c.l.s4 1934713408
    %v2044 = vunpack.c.0.s8 %v2043
    %v2045 = vlaneseq
    %v2046 = vshrl.u32 %v2045, 7
    %v2047 = vsub.s32 %v2044, %v2046
    %v2048 = vrot.slane %v2034, %v2047
    %v2049 = vcombine.low %v2025, %v2041
    %v2050 = vcombine.high %v2025, %v2041
    %v2051 = vcombine.low %v2032, %v2048
    %v2052 = vcombine.high %v2032, %v2048
    %vm2053 = vcmask 64512
    %v2055 = vsel %vm2053, %v505, 0
    %v2058 = vsel %vm2053, %v801, 0
    %2060 = vmatprep.subr.mxu0 0.0
    %2061 = vmatpush1.xpose.msra.mxu0 %v2058
    %2062 = vmatprep.subr.mxu0 0.0
    %2063 = vmatpush1.xpose.msra.mxu0 0.0
    %2064 = vmatprep.subr.mxu0 0.0
    %2065 = vmatpush1.xpose.msra.mxu0 0.0
    %2066 = vmatprep.subr.mxu0 0.0
    %2067 = vmatpush1.xpose.msra.mxu0 0.0
    %2068 = vmatprep.subr.mxu0 0.0
    %2069 = vmatpush1.xpose.msra.mxu0 0.0
    %2070 = vmatprep.subr.mxu0 0.0
    %2071 = vmatpush1.xpose.msra.mxu0 0.0
    %2072 = vmatprep.subr.mxu0 0.0
    %2073 = vmatpush1.xpose.msra.mxu0 0.0
    %2074 = vmatprep.subr.mxu0 0.0
    %2075 = vmatpush1.xpose.msra.mxu0 0.0
    %2076 = vmatprep.subr.mxu0 0.0
    %2077 = vmatpush1.xpose.msra.mxu0 0.0
    %2078 = vmatprep.subr.mxu0 0.0
    %2079 = vmatpush1.xpose.msra.mxu0 0.0
    %2080 = vmatprep.subr.mxu0 0.0
    %2081 = vmatpush1.xpose.msra.mxu0 0.0
    %2082 = vmatprep.subr.mxu0 0.0
    %2083 = vmatpush1.xpose.msra.mxu0 0.0
    %2084 = vmatprep.subr.mxu0 0.0
    %2085 = vmatpush1.xpose.msra.mxu0 0.0
    %2086 = vmatprep.subr.mxu0 0.0
    %2087 = vmatpush1.xpose.msra.mxu0 0.0
    %2088 = vmatprep.subr.mxu0 0.0
    %2089 = vmatpush1.xpose.msra.mxu0 0.0
    %2090 = vmatprep.subr.mxu0 0.0
    %2091 = vmatpush1.xpose.msra.mxu0 0.0
    %2092 = vmatprep.subr.mxu0 0.0
    %2093 = vmatpush1.xpose.msra.mxu0 0.0
    %2094 = vmatprep.subr.mxu0 0.0
    %2095 = vmatpush1.xpose.msra.mxu0 0.0
    %2096 = vmatprep.subr.mxu0 0.0
    %2097 = vmatpush1.xpose.msra.mxu0 0.0
    %2098 = vmatprep.subr.mxu0 0.0
    %2099 = vmatpush1.xpose.msra.mxu0 0.0
    %2100 = vmatprep.subr.mxu0 0.0
    %2101 = vmatpush1.xpose.msra.mxu0 0.0
    %2102 = vmatprep.subr.mxu0 0.0
    %2103 = vmatpush1.xpose.msra.mxu0 0.0
    %2104 = vmatprep.subr.mxu0 0.0
    %2105 = vmatpush1.xpose.msra.mxu0 0.0
    %2106 = vmatprep.subr.mxu0 0.0
    %2107 = vmatpush1.xpose.msra.mxu0 0.0
    %2108 = vmatprep.subr.mxu0 0.0
    %2109 = vmatpush1.xpose.msra.mxu0 0.0
    %2110 = vmatprep.subr.mxu0 0.0
    %2111 = vmatpush1.xpose.msra.mxu0 0.0
    %2112 = vmatprep.subr.mxu0 0.0
    %2113 = vmatpush1.xpose.msra.mxu0 0.0
    %2114 = vmatprep.subr.mxu0 0.0
    %2115 = vmatpush1.xpose.msra.mxu0 0.0
    %2116 = vmatprep.subr.mxu0 0.0
    %2117 = vmatpush1.xpose.msra.mxu0 0.0
    %2118 = vmatprep.subr.mxu0 0.0
    %2119 = vmatpush1.xpose.msra.mxu0 0.0
    %2120 = vmatprep.subr.mxu0 0.0
    %2121 = vmatpush1.xpose.msra.mxu0 0.0
    %2122 = vmatprep.subr.mxu0 0.0
    %2123 = vmatpush1.xpose.msra.mxu0 0.0
    %2124 = vmatprep.mubr.f32.mxu0 0.0
    %2125 = vmatmul.mubr.f32.gmra.mrb[0].mxu0 %v2055
    %v2126 = vpop.f32.mrb[0].mxu0
    %v2127 = vadd.f32 0.0, %v2126
    %v2128 = vpop.f32.mrb[0].mxu0
    %2129 = vdwg.mxu0
    %v2131 = vsel %vm2053, %v573, 0
    %v2134 = vsel %vm2053, %v869, 0
    %2136 = vmatprep.subr.mxu0 0.0
    %2137 = vmatpush1.xpose.msra.mxu0 %v2134
    %2138 = vmatprep.subr.mxu0 0.0
    %2139 = vmatpush1.xpose.msra.mxu0 0.0
    %2140 = vmatprep.subr.mxu0 0.0
    %2141 = vmatpush1.xpose.msra.mxu0 0.0
    %2142 = vmatprep.subr.mxu0 0.0
    %2143 = vmatpush1.xpose.msra.mxu0 0.0
    %2144 = vmatprep.subr.mxu0 0.0
    %2145 = vmatpush1.xpose.msra.mxu0 0.0
    %2146 = vmatprep.subr.mxu0 0.0
    %2147 = vmatpush1.xpose.msra.mxu0 0.0
    %2148 = vmatprep.subr.mxu0 0.0
    %2149 = vmatpush1.xpose.msra.mxu0 0.0
    %2150 = vmatprep.subr.mxu0 0.0
    %2151 = vmatpush1.xpose.msra.mxu0 0.0
    %2152 = vmatprep.subr.mxu0 0.0
    %2153 = vmatpush1.xpose.msra.mxu0 0.0
    %2154 = vmatprep.subr.mxu0 0.0
    %2155 = vmatpush1.xpose.msra.mxu0 0.0
    %2156 = vmatprep.subr.mxu0 0.0
    %2157 = vmatpush1.xpose.msra.mxu0 0.0
    %2158 = vmatprep.subr.mxu0 0.0
    %2159 = vmatpush1.xpose.msra.mxu0 0.0
    %2160 = vmatprep.subr.mxu0 0.0
    %2161 = vmatpush1.xpose.msra.mxu0 0.0
    %2162 = vmatprep.subr.mxu0 0.0
    %2163 = vmatpush1.xpose.msra.mxu0 0.0
    %2164 = vmatprep.subr.mxu0 0.0
    %2165 = vmatpush1.xpose.msra.mxu0 0.0
    %2166 = vmatprep.subr.mxu0 0.0
    %2167 = vmatpush1.xpose.msra.mxu0 0.0
    %2168 = vmatprep.subr.mxu0 0.0
    %2169 = vmatpush1.xpose.msra.mxu0 0.0
    %2170 = vmatprep.subr.mxu0 0.0
    %2171 = vmatpush1.xpose.msra.mxu0 0.0
    %2172 = vmatprep.subr.mxu0 0.0
    %2173 = vmatpush1.xpose.msra.mxu0 0.0
    %2174 = vmatprep.subr.mxu0 0.0
    %2175 = vmatpush1.xpose.msra.mxu0 0.0
    %2176 = vmatprep.subr.mxu0 0.0
    %2177 = vmatpush1.xpose.msra.mxu0 0.0
    %2178 = vmatprep.subr.mxu0 0.0
    %2179 = vmatpush1.xpose.msra.mxu0 0.0
    %2180 = vmatprep.subr.mxu0 0.0
    %2181 = vmatpush1.xpose.msra.mxu0 0.0
    %2182 = vmatprep.subr.mxu0 0.0
    %2183 = vmatpush1.xpose.msra.mxu0 0.0
    %2184 = vmatprep.subr.mxu0 0.0
    %2185 = vmatpush1.xpose.msra.mxu0 0.0
    %2186 = vmatprep.subr.mxu0 0.0
    %2187 = vmatpush1.xpose.msra.mxu0 0.0
    %2188 = vmatprep.subr.mxu0 0.0
    %2189 = vmatpush1.xpose.msra.mxu0 0.0
    %2190 = vmatprep.subr.mxu0 0.0
    %2191 = vmatpush1.xpose.msra.mxu0 0.0
    %2192 = vmatprep.subr.mxu0 0.0
    %2193 = vmatpush1.xpose.msra.mxu0 0.0
    %2194 = vmatprep.subr.mxu0 0.0
    %2195 = vmatpush1.xpose.msra.mxu0 0.0
    %2196 = vmatprep.subr.mxu0 0.0
    %2197 = vmatpush1.xpose.msra.mxu0 0.0
    %2198 = vmatprep.subr.mxu0 0.0
    %2199 = vmatpush1.xpose.msra.mxu0 0.0
    %2200 = vmatprep.mubr.f32.mxu0 0.0
    %2201 = vmatmul.mubr.f32.gmra.mrb[0].mxu0 %v2131
    %v2202 = vpop.f32.mrb[0].mxu0
    %v2203 = vadd.f32 0.0, %v2202
    %v2204 = vpop.f32.mrb[0].mxu0
    %2205 = vdwg.mxu0
    %v2207 = vsel %vm2053, %v506, 0
    %v2210 = vsel %vm2053, %v802, 0
    %2212 = vmatprep.subr.mxu0 0.0
    %2213 = vmatpush1.xpose.msra.mxu0 %v2210
    %2214 = vmatprep.subr.mxu0 0.0
    %2215 = vmatpush1.xpose.msra.mxu0 0.0
    %2216 = vmatprep.subr.mxu0 0.0
    %2217 = vmatpush1.xpose.msra.mxu0 0.0
    %2218 = vmatprep.subr.mxu0 0.0
    %2219 = vmatpush1.xpose.msra.mxu0 0.0
    %2220 = vmatprep.subr.mxu0 0.0
    %2221 = vmatpush1.xpose.msra.mxu0 0.0
    %2222 = vmatprep.subr.mxu0 0.0
    %2223 = vmatpush1.xpose.msra.mxu0 0.0
    %2224 = vmatprep.subr.mxu0 0.0
    %2225 = vmatpush1.xpose.msra.mxu0 0.0
    %2226 = vmatprep.subr.mxu0 0.0
    %2227 = vmatpush1.xpose.msra.mxu0 0.0
    %2228 = vmatprep.subr.mxu0 0.0
    %2229 = vmatpush1.xpose.msra.mxu0 0.0
    %2230 = vmatprep.subr.mxu0 0.0
    %2231 = vmatpush1.xpose.msra.mxu0 0.0
    %2232 = vmatprep.subr.mxu0 0.0
    %2233 = vmatpush1.xpose.msra.mxu0 0.0
    %2234 = vmatprep.subr.mxu0 0.0
    %2235 = vmatpush1.xpose.msra.mxu0 0.0
    %2236 = vmatprep.subr.mxu0 0.0
    %2237 = vmatpush1.xpose.msra.mxu0 0.0
    %2238 = vmatprep.subr.mxu0 0.0
    %2239 = vmatpush1.xpose.msra.mxu0 0.0
    %2240 = vmatprep.subr.mxu0 0.0
    %2241 = vmatpush1.xpose.msra.mxu0 0.0
    %2242 = vmatprep.subr.mxu0 0.0
    %2243 = vmatpush1.xpose.msra.mxu0 0.0
    %2244 = vmatprep.subr.mxu0 0.0
    %2245 = vmatpush1.xpose.msra.mxu0 0.0
    %2246 = vmatprep.subr.mxu0 0.0
    %2247 = vmatpush1.xpose.msra.mxu0 0.0
    %2248 = vmatprep.subr.mxu0 0.0
    %2249 = vmatpush1.xpose.msra.mxu0 0.0
    %2250 = vmatprep.subr.mxu0 0.0
    %2251 = vmatpush1.xpose.msra.mxu0 0.0
    %2252 = vmatprep.subr.mxu0 0.0
    %2253 = vmatpush1.xpose.msra.mxu0 0.0
    %2254 = vmatprep.subr.mxu0 0.0
    %2255 = vmatpush1.xpose.msra.mxu0 0.0
    %2256 = vmatprep.subr.mxu0 0.0
    %2257 = vmatpush1.xpose.msra.mxu0 0.0
    %2258 = vmatprep.subr.mxu0 0.0
    %2259 = vmatpush1.xpose.msra.mxu0 0.0
    %2260 = vmatprep.subr.mxu0 0.0
    %2261 = vmatpush1.xpose.msra.mxu0 0.0
    %2262 = vmatprep.subr.mxu0 0.0
    %2263 = vmatpush1.xpose.msra.mxu0 0.0
    %2264 = vmatprep.subr.mxu0 0.0
    %2265 = vmatpush1.xpose.msra.mxu0 0.0
    %2266 = vmatprep.subr.mxu0 0.0
    %2267 = vmatpush1.xpose.msra.mxu0 0.0
    %2268 = vmatprep.subr.mxu0 0.0
    %2269 = vmatpush1.xpose.msra.mxu0 0.0
    %2270 = vmatprep.subr.mxu0 0.0
    %2271 = vmatpush1.xpose.msra.mxu0 0.0
    %2272 = vmatprep.subr.mxu0 0.0
    %2273 = vmatpush1.xpose.msra.mxu0 0.0
    %2274 = vmatprep.subr.mxu0 0.0
    %2275 = vmatpush1.xpose.msra.mxu0 0.0
    %2276 = vmatprep.mubr.f32.mxu0 0.0
    %2277 = vmatmul.mubr.f32.gmra.mrb[0].mxu0 %v2207
    %v2278 = vpop.f32.mrb[0].mxu0
    %v2279 = vadd.f32 0.0, %v2278
    %v2280 = vpop.f32.mrb[0].mxu0
    %2281 = vdwg.mxu0
    %v2283 = vsel %vm2053, %v574, 0
    %v2286 = vsel %vm2053, %v870, 0
    %2288 = vmatprep.subr.mxu0 0.0
    %2289 = vmatpush1.xpose.msra.mxu0 %v2286
    %2290 = vmatprep.subr.mxu0 0.0
    %2291 = vmatpush1.xpose.msra.mxu0 0.0
    %2292 = vmatprep.subr.mxu0 0.0
    %2293 = vmatpush1.xpose.msra.mxu0 0.0
    %2294 = vmatprep.subr.mxu0 0.0
    %2295 = vmatpush1.xpose.msra.mxu0 0.0
    %2296 = vmatprep.subr.mxu0 0.0
    %2297 = vmatpush1.xpose.msra.mxu0 0.0
    %2298 = vmatprep.subr.mxu0 0.0
    %2299 = vmatpush1.xpose.msra.mxu0 0.0
    %2300 = vmatprep.subr.mxu0 0.0
    %2301 = vmatpush1.xpose.msra.mxu0 0.0
    %2302 = vmatprep.subr.mxu0 0.0
    %2303 = vmatpush1.xpose.msra.mxu0 0.0
    %2304 = vmatprep.subr.mxu0 0.0
    %2305 = vmatpush1.xpose.msra.mxu0 0.0
    %2306 = vmatprep.subr.mxu0 0.0
    %2307 = vmatpush1.xpose.msra.mxu0 0.0
    %2308 = vmatprep.subr.mxu0 0.0
    %2309 = vmatpush1.xpose.msra.mxu0 0.0
    %2310 = vmatprep.subr.mxu0 0.0
    %2311 = vmatpush1.xpose.msra.mxu0 0.0
    %2312 = vmatprep.subr.mxu0 0.0
    %2313 = vmatpush1.xpose.msra.mxu0 0.0
    %2314 = vmatprep.subr.mxu0 0.0
    %2315 = vmatpush1.xpose.msra.mxu0 0.0
    %2316 = vmatprep.subr.mxu0 0.0
    %2317 = vmatpush1.xpose.msra.mxu0 0.0
    %2318 = vmatprep.subr.mxu0 0.0
    %2319 = vmatpush1.xpose.msra.mxu0 0.0
    %2320 = vmatprep.subr.mxu0 0.0
    %2321 = vmatpush1.xpose.msra.mxu0 0.0
    %2322 = vmatprep.subr.mxu0 0.0
    %2323 = vmatpush1.xpose.msra.mxu0 0.0
    %2324 = vmatprep.subr.mxu0 0.0
    %2325 = vmatpush1.xpose.msra.mxu0 0.0
    %2326 = vmatprep.subr.mxu0 0.0
    %2327 = vmatpush1.xpose.msra.mxu0 0.0
    %2328 = vmatprep.subr.mxu0 0.0
    %2329 = vmatpush1.xpose.msra.mxu0 0.0
    %2330 = vmatprep.subr.mxu0 0.0
    %2331 = vmatpush1.xpose.msra.mxu0 0.0
    %2332 = vmatprep.subr.mxu0 0.0
    %2333 = vmatpush1.xpose.msra.mxu0 0.0
    %2334 = vmatprep.subr.mxu0 0.0
    %2335 = vmatpush1.xpose.msra.mxu0 0.0
    %2336 = vmatprep.subr.mxu0 0.0
    %2337 = vmatpush1.xpose.msra.mxu0 0.0
    %2338 = vmatprep.subr.mxu0 0.0
    %2339 = vmatpush1.xpose.msra.mxu0 0.0
    %2340 = vmatprep.subr.mxu0 0.0
    %2341 = vmatpush1.xpose.msra.mxu0 0.0
    %2342 = vmatprep.subr.mxu0 0.0
    %2343 = vmatpush1.xpose.msra.mxu0 0.0
    %2344 = vmatprep.subr.mxu0 0.0
    %2345 = vmatpush1.xpose.msra.mxu0 0.0
    %2346 = vmatprep.subr.mxu0 0.0
    %2347 = vmatpush1.xpose.msra.mxu0 0.0
    %2348 = vmatprep.subr.mxu0 0.0
    %2349 = vmatpush1.xpose.msra.mxu0 0.0
    %2350 = vmatprep.subr.mxu0 0.0
    %2351 = vmatpush1.xpose.msra.mxu0 0.0
    %2352 = vmatprep.mubr.f32.mxu0 0.0
    %2353 = vmatmul.mubr.f32.gmra.mrb[0].mxu0 %v2283
    %v2354 = vpop.f32.mrb[0].mxu0
    %v2355 = vadd.f32 0.0, %v2354
    %v2356 = vpop.f32.mrb[0].mxu0
    %2357 = vdwg.mxu0
    %v2359 = vsel %vm2053, %v507, 0
    %v2362 = vsel %vm2053, %v803, 0
    %2364 = vmatprep.subr.mxu0 0.0
    %2365 = vmatpush1.xpose.msra.mxu0 %v2362
    %2366 = vmatprep.subr.mxu0 0.0
    %2367 = vmatpush1.xpose.msra.mxu0 0.0
    %2368 = vmatprep.subr.mxu0 0.0
    %2369 = vmatpush1.xpose.msra.mxu0 0.0
    %2370 = vmatprep.subr.mxu0 0.0
    %2371 = vmatpush1.xpose.msra.mxu0 0.0
    %2372 = vmatprep.subr.mxu0 0.0
    %2373 = vmatpush1.xpose.msra.mxu0 0.0
    %2374 = vmatprep.subr.mxu0 0.0
    %2375 = vmatpush1.xpose.msra.mxu0 0.0
    %2376 = vmatprep.subr.mxu0 0.0
    %2377 = vmatpush1.xpose.msra.mxu0 0.0
    %2378 = vmatprep.subr.mxu0 0.0
    %2379 = vmatpush1.xpose.msra.mxu0 0.0
    %2380 = vmatprep.subr.mxu0 0.0
    %2381 = vmatpush1.xpose.msra.mxu0 0.0
    %2382 = vmatprep.subr.mxu0 0.0
    %2383 = vmatpush1.xpose.msra.mxu0 0.0
    %2384 = vmatprep.subr.mxu0 0.0
    %2385 = vmatpush1.xpose.msra.mxu0 0.0
    %2386 = vmatprep.subr.mxu0 0.0
    %2387 = vmatpush1.xpose.msra.mxu0 0.0
    %2388 = vmatprep.subr.mxu0 0.0
    %2389 = vmatpush1.xpose.msra.mxu0 0.0
    %2390 = vmatprep.subr.mxu0 0.0
    %2391 = vmatpush1.xpose.msra.mxu0 0.0
    %2392 = vmatprep.subr.mxu0 0.0
    %2393 = vmatpush1.xpose.msra.mxu0 0.0
    %2394 = vmatprep.subr.mxu0 0.0
    %2395 = vmatpush1.xpose.msra.mxu0 0.0
    %2396 = vmatprep.subr.mxu0 0.0
    %2397 = vmatpush1.xpose.msra.mxu0 0.0
    %2398 = vmatprep.subr.mxu0 0.0
    %2399 = vmatpush1.xpose.msra.mxu0 0.0
    %2400 = vmatprep.subr.mxu0 0.0
    %2401 = vmatpush1.xpose.msra.mxu0 0.0
    %2402 = vmatprep.subr.mxu0 0.0
    %2403 = vmatpush1.xpose.msra.mxu0 0.0
    %2404 = vmatprep.subr.mxu0 0.0
    %2405 = vmatpush1.xpose.msra.mxu0 0.0
    %2406 = vmatprep.subr.mxu0 0.0
    %2407 = vmatpush1.xpose.msra.mxu0 0.0
    %2408 = vmatprep.subr.mxu0 0.0
    %2409 = vmatpush1.xpose.msra.mxu0 0.0
    %2410 = vmatprep.subr.mxu0 0.0
    %2411 = vmatpush1.xpose.msra.mxu0 0.0
    %2412 = vmatprep.subr.mxu0 0.0
    %2413 = vmatpush1.xpose.msra.mxu0 0.0
    %2414 = vmatprep.subr.mxu0 0.0
    %2415 = vmatpush1.xpose.msra.mxu0 0.0
    %2416 = vmatprep.subr.mxu0 0.0
    %2417 = vmatpush1.xpose.msra.mxu0 0.0
    %2418 = vmatprep.subr.mxu0 0.0
    %2419 = vmatpush1.xpose.msra.mxu0 0.0
    %2420 = vmatprep.subr.mxu0 0.0
    %2421 = vmatpush1.xpose.msra.mxu0 0.0
    %2422 = vmatprep.subr.mxu0 0.0
    %2423 = vmatpush1.xpose.msra.mxu0 0.0
    %2424 = vmatprep.subr.mxu0 0.0
    %2425 = vmatpush1.xpose.msra.mxu0 0.0
    %2426 = vmatprep.subr.mxu0 0.0
    %2427 = vmatpush1.xpose.msra.mxu0 0.0
    %2428 = vmatprep.mubr.f32.mxu0 0.0
    %2429 = vmatmul.mubr.f32.gmra.mrb[0].mxu0 %v2359
    %v2430 = vpop.f32.mrb[0].mxu0
    %v2431 = vadd.f32 0.0, %v2430
    %v2432 = vpop.f32.mrb[0].mxu0
    %2433 = vdwg.mxu0
    %v2435 = vsel %vm2053, %v575, 0
    %v2438 = vsel %vm2053, %v871, 0
    %2440 = vmatprep.subr.mxu0 0.0
    %2441 = vmatpush1.xpose.msra.mxu0 %v2438
    %2442 = vmatprep.subr.mxu0 0.0
    %2443 = vmatpush1.xpose.msra.mxu0 0.0
    %2444 = vmatprep.subr.mxu0 0.0
    %2445 = vmatpush1.xpose.msra.mxu0 0.0
    %2446 = vmatprep.subr.mxu0 0.0
    %2447 = vmatpush1.xpose.msra.mxu0 0.0
    %2448 = vmatprep.subr.mxu0 0.0
    %2449 = vmatpush1.xpose.msra.mxu0 0.0
    %2450 = vmatprep.subr.mxu0 0.0
    %2451 = vmatpush1.xpose.msra.mxu0 0.0
    %2452 = vmatprep.subr.mxu0 0.0
    %2453 = vmatpush1.xpose.msra.mxu0 0.0
    %2454 = vmatprep.subr.mxu0 0.0
    %2455 = vmatpush1.xpose.msra.mxu0 0.0
    %2456 = vmatprep.subr.mxu0 0.0
    %2457 = vmatpush1.xpose.msra.mxu0 0.0
    %2458 = vmatprep.subr.mxu0 0.0
    %2459 = vmatpush1.xpose.msra.mxu0 0.0
    %2460 = vmatprep.subr.mxu0 0.0
    %2461 = vmatpush1.xpose.msra.mxu0 0.0
    %2462 = vmatprep.subr.mxu0 0.0
    %2463 = vmatpush1.xpose.msra.mxu0 0.0
    %2464 = vmatprep.subr.mxu0 0.0
    %2465 = vmatpush1.xpose.msra.mxu0 0.0
    %2466 = vmatprep.subr.mxu0 0.0
    %2467 = vmatpush1.xpose.msra.mxu0 0.0
    %2468 = vmatprep.subr.mxu0 0.0
    %2469 = vmatpush1.xpose.msra.mxu0 0.0
    %2470 = vmatprep.subr.mxu0 0.0
    %2471 = vmatpush1.xpose.msra.mxu0 0.0
    %2472 = vmatprep.subr.mxu0 0.0
    %2473 = vmatpush1.xpose.msra.mxu0 0.0
    %2474 = vmatprep.subr.mxu0 0.0
    %2475 = vmatpush1.xpose.msra.mxu0 0.0
    %2476 = vmatprep.subr.mxu0 0.0
    %2477 = vmatpush1.xpose.msra.mxu0 0.0
    %2478 = vmatprep.subr.mxu0 0.0
    %2479 = vmatpush1.xpose.msra.mxu0 0.0
    %2480 = vmatprep.subr.mxu0 0.0
    %2481 = vmatpush1.xpose.msra.mxu0 0.0
    %2482 = vmatprep.subr.mxu0 0.0
    %2483 = vmatpush1.xpose.msra.mxu0 0.0
    %2484 = vmatprep.subr.mxu0 0.0
    %2485 = vmatpush1.xpose.msra.mxu0 0.0
    %2486 = vmatprep.subr.mxu0 0.0
    %2487 = vmatpush1.xpose.msra.mxu0 0.0
    %2488 = vmatprep.subr.mxu0 0.0
    %2489 = vmatpush1.xpose.msra.mxu0 0.0
    %2490 = vmatprep.subr.mxu0 0.0
    %2491 = vmatpush1.xpose.msra.mxu0 0.0
    %2492 = vmatprep.subr.mxu0 0.0
    %2493 = vmatpush1.xpose.msra.mxu0 0.0
    %2494 = vmatprep.subr.mxu0 0.0
    %2495 = vmatpush1.xpose.msra.mxu0 0.0
    %2496 = vmatprep.subr.mxu0 0.0
    %2497 = vmatpush1.xpose.msra.mxu0 0.0
    %2498 = vmatprep.subr.mxu0 0.0
    %2499 = vmatpush1.xpose.msra.mxu0 0.0
    %2500 = vmatprep.subr.mxu0 0.0
    %2501 = vmatpush1.xpose.msra.mxu0 0.0
    %2502 = vmatprep.subr.mxu0 0.0
    %2503 = vmatpush1.xpose.msra.mxu0 0.0
    %2504 = vmatprep.mubr.f32.mxu0 0.0
    %2505 = vmatmul.mubr.f32.gmra.mrb[0].mxu0 %v2435
    %v2506 = vpop.f32.mrb[0].mxu0
    %v2507 = vadd.f32 0.0, %v2506
    %v2508 = vpop.f32.mrb[0].mxu0
    %2509 = vdwg.mxu0
    %v2511 = vsel %vm2053, %v508, 0
    %v2514 = vsel %vm2053, %v804, 0
    %2516 = vmatprep.subr.mxu0 0.0
    %2517 = vmatpush1.xpose.msra.mxu0 %v2514
    %2518 = vmatprep.subr.mxu0 0.0
    %2519 = vmatpush1.xpose.msra.mxu0 0.0
    %2520 = vmatprep.subr.mxu0 0.0
    %2521 = vmatpush1.xpose.msra.mxu0 0.0
    %2522 = vmatprep.subr.mxu0 0.0
    %2523 = vmatpush1.xpose.msra.mxu0 0.0
    %2524 = vmatprep.subr.mxu0 0.0
    %2525 = vmatpush1.xpose.msra.mxu0 0.0
    %2526 = vmatprep.subr.mxu0 0.0
    %2527 = vmatpush1.xpose.msra.mxu0 0.0
    %2528 = vmatprep.subr.mxu0 0.0
    %2529 = vmatpush1.xpose.msra.mxu0 0.0
    %2530 = vmatprep.subr.mxu0 0.0
    %2531 = vmatpush1.xpose.msra.mxu0 0.0
    %2532 = vmatprep.subr.mxu0 0.0
    %2533 = vmatpush1.xpose.msra.mxu0 0.0
    %2534 = vmatprep.subr.mxu0 0.0
    %2535 = vmatpush1.xpose.msra.mxu0 0.0
    %2536 = vmatprep.subr.mxu0 0.0
    %2537 = vmatpush1.xpose.msra.mxu0 0.0
    %2538 = vmatprep.subr.mxu0 0.0
    %2539 = vmatpush1.xpose.msra.mxu0 0.0
    %2540 = vmatprep.subr.mxu0 0.0
    %2541 = vmatpush1.xpose.msra.mxu0 0.0
    %2542 = vmatprep.subr.mxu0 0.0
    %2543 = vmatpush1.xpose.msra.mxu0 0.0
    %2544 = vmatprep.subr.mxu0 0.0
    %2545 = vmatpush1.xpose.msra.mxu0 0.0
    %2546 = vmatprep.subr.mxu0 0.0
    %2547 = vmatpush1.xpose.msra.mxu0 0.0
    %2548 = vmatprep.subr.mxu0 0.0
    %2549 = vmatpush1.xpose.msra.mxu0 0.0
    %2550 = vmatprep.subr.mxu0 0.0
    %2551 = vmatpush1.xpose.msra.mxu0 0.0
    %2552 = vmatprep.subr.mxu0 0.0
    %2553 = vmatpush1.xpose.msra.mxu0 0.0
    %2554 = vmatprep.subr.mxu0 0.0
    %2555 = vmatpush1.xpose.msra.mxu0 0.0
    %2556 = vmatprep.subr.mxu0 0.0
    %2557 = vmatpush1.xpose.msra.mxu0 0.0
    %2558 = vmatprep.subr.mxu0 0.0
    %2559 = vmatpush1.xpose.msra.mxu0 0.0
    %2560 = vmatprep.subr.mxu0 0.0
    %2561 = vmatpush1.xpose.msra.mxu0 0.0
    %2562 = vmatprep.subr.mxu0 0.0
    %2563 = vmatpush1.xpose.msra.mxu0 0.0
    %2564 = vmatprep.subr.mxu0 0.0
    %2565 = vmatpush1.xpose.msra.mxu0 0.0
    %2566 = vmatprep.subr.mxu0 0.0
    %2567 = vmatpush1.xpose.msra.mxu0 0.0
    %2568 = vmatprep.subr.mxu0 0.0
    %2569 = vmatpush1.xpose.msra.mxu0 0.0
    %2570 = vmatprep.subr.mxu0 0.0
    %2571 = vmatpush1.xpose.msra.mxu0 0.0
    %2572 = vmatprep.subr.mxu0 0.0
    %2573 = vmatpush1.xpose.msra.mxu0 0.0
    %2574 = vmatprep.subr.mxu0 0.0
    %2575 = vmatpush1.xpose.msra.mxu0 0.0
    %2576 = vmatprep.subr.mxu0 0.0
    %2577 = vmatpush1.xpose.msra.mxu0 0.0
    %2578 = vmatprep.subr.mxu0 0.0
    %2579 = vmatpush1.xpose.msra.mxu0 0.0
    %2580 = vmatprep.mubr.f32.mxu0 0.0
    %2581 = vmatmul.mubr.f32.gmra.mrb[0].mxu0 %v2511
    %v2582 = vpop.f32.mrb[0].mxu0
    %v2583 = vadd.f32 0.0, %v2582
    %v2584 = vpop.f32.mrb[0].mxu0
    %2585 = vdwg.mxu0
    %v2587 = vsel %vm2053, %v576, 0
    %v2590 = vsel %vm2053, %v872, 0
    %2592 = vmatprep.subr.mxu0 0.0
    %2593 = vmatpush1.xpose.msra.mxu0 %v2590
    %2594 = vmatprep.subr.mxu0 0.0
    %2595 = vmatpush1.xpose.msra.mxu0 0.0
    %2596 = vmatprep.subr.mxu0 0.0
    %2597 = vmatpush1.xpose.msra.mxu0 0.0
    %2598 = vmatprep.subr.mxu0 0.0
    %2599 = vmatpush1.xpose.msra.mxu0 0.0
    %2600 = vmatprep.subr.mxu0 0.0
    %2601 = vmatpush1.xpose.msra.mxu0 0.0
    %2602 = vmatprep.subr.mxu0 0.0
    %2603 = vmatpush1.xpose.msra.mxu0 0.0
    %2604 = vmatprep.subr.mxu0 0.0
    %2605 = vmatpush1.xpose.msra.mxu0 0.0
    %2606 = vmatprep.subr.mxu0 0.0
    %2607 = vmatpush1.xpose.msra.mxu0 0.0
    %2608 = vmatprep.subr.mxu0 0.0
    %2609 = vmatpush1.xpose.msra.mxu0 0.0
    %2610 = vmatprep.subr.mxu0 0.0
    %2611 = vmatpush1.xpose.msra.mxu0 0.0
    %2612 = vmatprep.subr.mxu0 0.0
    %2613 = vmatpush1.xpose.msra.mxu0 0.0
    %2614 = vmatprep.subr.mxu0 0.0
    %2615 = vmatpush1.xpose.msra.mxu0 0.0
    %2616 = vmatprep.subr.mxu0 0.0
    %2617 = vmatpush1.xpose.msra.mxu0 0.0
    %2618 = vmatprep.subr.mxu0 0.0
    %2619 = vmatpush1.xpose.msra.mxu0 0.0
    %2620 = vmatprep.subr.mxu0 0.0
    %2621 = vmatpush1.xpose.msra.mxu0 0.0
    %2622 = vmatprep.subr.mxu0 0.0
    %2623 = vmatpush1.xpose.msra.mxu0 0.0
    %2624 = vmatprep.subr.mxu0 0.0
    %2625 = vmatpush1.xpose.msra.mxu0 0.0
    %2626 = vmatprep.subr.mxu0 0.0
    %2627 = vmatpush1.xpose.msra.mxu0 0.0
    %2628 = vmatprep.subr.mxu0 0.0
    %2629 = vmatpush1.xpose.msra.mxu0 0.0
    %2630 = vmatprep.subr.mxu0 0.0
    %2631 = vmatpush1.xpose.msra.mxu0 0.0
    %2632 = vmatprep.subr.mxu0 0.0
    %2633 = vmatpush1.xpose.msra.mxu0 0.0
    %2634 = vmatprep.subr.mxu0 0.0
    %2635 = vmatpush1.xpose.msra.mxu0 0.0
    %2636 = vmatprep.subr.mxu0 0.0
    %2637 = vmatpush1.xpose.msra.mxu0 0.0
    %2638 = vmatprep.subr.mxu0 0.0
    %2639 = vmatpush1.xpose.msra.mxu0 0.0
    %2640 = vmatprep.subr.mxu0 0.0
    %2641 = vmatpush1.xpose.msra.mxu0 0.0
    %2642 = vmatprep.subr.mxu0 0.0
    %2643 = vmatpush1.xpose.msra.mxu0 0.0
    %2644 = vmatprep.subr.mxu0 0.0
    %2645 = vmatpush1.xpose.msra.mxu0 0.0
    %2646 = vmatprep.subr.mxu0 0.0
    %2647 = vmatpush1.xpose.msra.mxu0 0.0
    %2648 = vmatprep.subr.mxu0 0.0
    %2649 = vmatpush1.xpose.msra.mxu0 0.0
    %2650 = vmatprep.subr.mxu0 0.0
    %2651 = vmatpush1.xpose.msra.mxu0 0.0
    %2652 = vmatprep.subr.mxu0 0.0
    %2653 = vmatpush1.xpose.msra.mxu0 0.0
    %2654 = vmatprep.subr.mxu0 0.0
    %2655 = vmatpush1.xpose.msra.mxu0 0.0
    %2656 = vmatprep.mubr.f32.mxu0 0.0
    %2657 = vmatmul.mubr.f32.gmra.mrb[0].mxu0 %v2587
    %v2658 = vpop.f32.mrb[0].mxu0
    %v2659 = vadd.f32 0.0, %v2658
    %v2660 = vpop.f32.mrb[0].mxu0
    %2661 = vdwg.mxu0
    %v2662 = vmul.f32 %v2127, 0.35355338
    %v2663 = vmul.f32 %v2203, 0.35355338
    %v2664 = vmul.f32 %v2279, 0.35355338
    %v2665 = vmul.f32 %v2355, 0.35355338
    %v2666 = vmul.f32 %v2431, 0.35355338
    %v2667 = vmul.f32 %v2507, 0.35355338
    %v2668 = vmul.f32 %v2583, 0.35355338
    %v2669 = vmul.f32 %v2659, 0.35355338
    %v2670 = vsel %vm107, 1, 0
    %vm2671 = vcmp.eq.s32.totalorder %v2670, 1
    %v2672 = vsel %vm2671, %v2662, -1000000.0
    %v2673 = vsel %vm2671, %v2663, -1000000.0
    %v2674 = vsel %vm2671, %v2664, -1000000.0
    %v2675 = vsel %vm2671, %v2665, -1000000.0
    %v2676 = vsel %vm2671, %v2666, -1000000.0
    %v2677 = vsel %vm2671, %v2667, -1000000.0
    %v2678 = vsel %vm2671, %v2668, -1000000.0
    %v2679 = vsel %vm2671, %v2669, -1000000.0
    %v2680 = vsel %vm2053, %v2672, -inf
    %2681 = vmax.xlane.f32.xlu0 %v2680
    %v2682 = vpop.xlane.xlu0 %2681
    %v2683 = vsel %vm2053, %v2673, -inf
    %2684 = vmax.xlane.f32.xlu0 %v2683
    %v2685 = vpop.xlane.xlu0 %2684
    %v2686 = vsel %vm2053, %v2674, -inf
    %2687 = vmax.xlane.f32.xlu0 %v2686
    %v2688 = vpop.xlane.xlu0 %2687
    %v2689 = vsel %vm2053, %v2675, -inf
    %2690 = vmax.xlane.f32.xlu0 %v2689
    %v2691 = vpop.xlane.xlu0 %2690
    %v2692 = vsel %vm2053, %v2676, -inf
    %2693 = vmax.xlane.f32.xlu0 %v2692
    %v2694 = vpop.xlane.xlu0 %2693
    %v2695 = vsel %vm2053, %v2677, -inf
    %2696 = vmax.xlane.f32.xlu0 %v2695
    %v2697 = vpop.xlane.xlu0 %2696
    %v2698 = vsel %vm2053, %v2678, -inf
    %2699 = vmax.xlane.f32.xlu0 %v2698
    %v2700 = vpop.xlane.xlu0 %2699
    %v2701 = vsel %vm2053, %v2679, -inf
    %2702 = vmax.xlane.f32.xlu0 %v2701
    %v2703 = vpop.xlane.xlu0 %2702
    %v2704 = vsub.f32 %v2672, %v2682
    %v2705 = vsub.f32 %v2673, %v2685
    %v2706 = vsub.f32 %v2674, %v2688
    %v2707 = vsub.f32 %v2675, %v2691
    %v2708 = vsub.f32 %v2676, %v2694
    %v2709 = vsub.f32 %v2677, %v2697
    %v2710 = vsub.f32 %v2678, %v2700
    %v2711 = vsub.f32 %v2679, %v2703
    %v2712 = vmul.f32 %v2704, 1.442695
    %v2713 = vpow.pop %v2712
    %v2714 = vmul.f32 %v2705, 1.442695
    %v2715 = vpow.pop %v2714
    %v2716 = vmul.f32 %v2706, 1.442695
    %v2717 = vpow.pop %v2716
    %v2718 = vmul.f32 %v2707, 1.442695
    %v2719 = vpow.pop %v2718
    %v2720 = vmul.f32 %v2708, 1.442695
    %v2721 = vpow.pop %v2720
    %v2722 = vmul.f32 %v2709, 1.442695
    %v2723 = vpow.pop %v2722
    %v2724 = vmul.f32 %v2710, 1.442695
    %v2725 = vpow.pop %v2724
    %v2726 = vmul.f32 %v2711, 1.442695
    %v2727 = vpow.pop %v2726
    %v2728 = vsel %vm2053, %v2713, 0.0
    %2729 = vadd.xlane.f32.xlu0 %v2728
    %v2730 = vpop.xlane.xlu0 %2729
    %v2731 = vsel %vm2053, %v2715, 0.0
    %2732 = vadd.xlane.f32.xlu0 %v2731
    %v2733 = vpop.xlane.xlu0 %2732
    %v2734 = vsel %vm2053, %v2717, 0.0
    %2735 = vadd.xlane.f32.xlu0 %v2734
    %v2736 = vpop.xlane.xlu0 %2735
    %v2737 = vsel %vm2053, %v2719, 0.0
    %2738 = vadd.xlane.f32.xlu0 %v2737
    %v2739 = vpop.xlane.xlu0 %2738
    %v2740 = vsel %vm2053, %v2721, 0.0
    %2741 = vadd.xlane.f32.xlu0 %v2740
    %v2742 = vpop.xlane.xlu0 %2741
    %v2743 = vsel %vm2053, %v2723, 0.0
    %2744 = vadd.xlane.f32.xlu0 %v2743
    %v2745 = vpop.xlane.xlu0 %2744
    %v2746 = vsel %vm2053, %v2725, 0.0
    %2747 = vadd.xlane.f32.xlu0 %v2746
    %v2748 = vpop.xlane.xlu0 %2747
    %v2749 = vsel %vm2053, %v2727, 0.0
    %2750 = vadd.xlane.f32.xlu0 %v2749
    %v2751 = vpop.xlane.xlu0 %2750
    %v2752 = vrcp.pop %v2730
    %v2753 = vrcp.pop %v2733
    %v2754 = vrcp.pop %v2736
    %v2755 = vrcp.pop %v2739
    %v2756 = vrcp.pop %v2742
    %v2757 = vrcp.pop %v2745
    %v2758 = vrcp.pop %v2748
    %v2759 = vrcp.pop %v2751
    %v2760 = vmul.f32 %v2713, %v2752
    %v2761 = vmul.f32 %v2715, %v2753
    %v2762 = vmul.f32 %v2717, %v2754
    %v2763 = vmul.f32 %v2719, %v2755
    %v2764 = vmul.f32 %v2721, %v2756
    %v2765 = vmul.f32 %v2723, %v2757
    %v2766 = vmul.f32 %v2725, %v2758
    %v2767 = vmul.f32 %v2727, %v2759
    %v2769 = vsel %vm2053, %v2760, 0
    %2771 = vmatprep.subr.mxu0 0.0
    %2772 = vmatpush1.msra.mxu0 %v1097
    %2773 = vmatprep.subr.mxu0 0.0
    %2774 = vmatpush1.msra.mxu0 0.0
    %2775 = vmatprep.subr.mxu0 0.0
    %2776 = vmatpush1.msra.mxu0 0.0
    %2777 = vmatprep.subr.mxu0 0.0
    %2778 = vmatpush1.msra.mxu0 0.0
    %2779 = vmatprep.subr.mxu0 0.0
    %2780 = vmatpush1.msra.mxu0 0.0
    %2781 = vmatprep.subr.mxu0 0.0
    %2782 = vmatpush1.msra.mxu0 0.0
    %2783 = vmatprep.subr.mxu0 0.0
    %2784 = vmatpush1.msra.mxu0 0.0
    %2785 = vmatprep.subr.mxu0 0.0
    %2786 = vmatpush1.msra.mxu0 0.0
    %2787 = vmatprep.subr.mxu0 0.0
    %2788 = vmatpush1.msra.mxu0 0.0
    %2789 = vmatprep.subr.mxu0 0.0
    %2790 = vmatpush1.msra.mxu0 0.0
    %2791 = vmatprep.subr.mxu0 0.0
    %2792 = vmatpush1.msra.mxu0 0.0
    %2793 = vmatprep.subr.mxu0 0.0
    %2794 = vmatpush1.msra.mxu0 0.0
    %2795 = vmatprep.subr.mxu0 0.0
    %2796 = vmatpush1.msra.mxu0 0.0
    %2797 = vmatprep.subr.mxu0 0.0
    %2798 = vmatpush1.msra.mxu0 0.0
    %2799 = vmatprep.subr.mxu0 0.0
    %2800 = vmatpush1.msra.mxu0 0.0
    %2801 = vmatprep.subr.mxu0 0.0
    %2802 = vmatpush1.msra.mxu0 0.0
    %2803 = vmatprep.subr.mxu0 0.0
    %2804 = vmatpush1.msra.mxu0 0.0
    %2805 = vmatprep.subr.mxu0 0.0
    %2806 = vmatpush1.msra.mxu0 0.0
    %2807 = vmatprep.subr.mxu0 0.0
    %2808 = vmatpush1.msra.mxu0 0.0
    %2809 = vmatprep.subr.mxu0 0.0
    %2810 = vmatpush1.msra.mxu0 0.0
    %2811 = vmatprep.subr.mxu0 0.0
    %2812 = vmatpush1.msra.mxu0 0.0
    %2813 = vmatprep.subr.mxu0 0.0
    %2814 = vmatpush1.msra.mxu0 0.0
    %2815 = vmatprep.subr.mxu0 0.0
    %2816 = vmatpush1.msra.mxu0 0.0
    %2817 = vmatprep.subr.mxu0 0.0
    %2818 = vmatpush1.msra.mxu0 0.0
    %2819 = vmatprep.subr.mxu0 0.0
    %2820 = vmatpush1.msra.mxu0 0.0
    %2821 = vmatprep.subr.mxu0 0.0
    %2822 = vmatpush1.msra.mxu0 0.0
    %2823 = vmatprep.subr.mxu0 0.0
    %2824 = vmatpush1.msra.mxu0 0.0
    %2825 = vmatprep.subr.mxu0 0.0
    %2826 = vmatpush1.msra.mxu0 0.0
    %2827 = vmatprep.subr.mxu0 0.0
    %2828 = vmatpush1.msra.mxu0 0.0
    %2829 = vmatprep.subr.mxu0 0.0
    %2830 = vmatpush1.msra.mxu0 0.0
    %2831 = vmatprep.subr.mxu0 0.0
    %2832 = vmatpush1.msra.mxu0 0.0
    %2833 = vmatprep.subr.mxu0 0.0
    %2834 = vmatpush1.msra.mxu0 0.0
    %2835 = vmatprep.mubr.f32.mxu0 0.0
    %2836 = vmatmul.mubr.f32.gmra.mrb[0].mxu0 %v2769
    %v2837 = vpop.f32.mrb[0].mxu0
    %v2838 = vadd.f32 0.0, %v2837
    %v2839 = vpop.f32.mrb[0].mxu0
    %2840 = vdwg.mxu0
    %v2842 = vsel %vm2053, %v2761, 0
    %2844 = vmatprep.subr.mxu0 0.0
    %2845 = vmatpush1.msra.mxu0 %v1165
    %2846 = vmatprep.subr.mxu0 0.0
    %2847 = vmatpush1.msra.mxu0 0.0
    %2848 = vmatprep.subr.mxu0 0.0
    %2849 = vmatpush1.msra.mxu0 0.0
    %2850 = vmatprep.subr.mxu0 0.0
    %2851 = vmatpush1.msra.mxu0 0.0
    %2852 = vmatprep.subr.mxu0 0.0
    %2853 = vmatpush1.msra.mxu0 0.0
    %2854 = vmatprep.subr.mxu0 0.0
    %2855 = vmatpush1.msra.mxu0 0.0
    %2856 = vmatprep.subr.mxu0 0.0
    %2857 = vmatpush1.msra.mxu0 0.0
    %2858 = vmatprep.subr.mxu0 0.0
    %2859 = vmatpush1.msra.mxu0 0.0
    %2860 = vmatprep.subr.mxu0 0.0
    %2861 = vmatpush1.msra.mxu0 0.0
    %2862 = vmatprep.subr.mxu0 0.0
    %2863 = vmatpush1.msra.mxu0 0.0
    %2864 = vmatprep.subr.mxu0 0.0
    %2865 = vmatpush1.msra.mxu0 0.0
    %2866 = vmatprep.subr.mxu0 0.0
    %2867 = vmatpush1.msra.mxu0 0.0
    %2868 = vmatprep.subr.mxu0 0.0
    %2869 = vmatpush1.msra.mxu0 0.0
    %2870 = vmatprep.subr.mxu0 0.0
    %2871 = vmatpush1.msra.mxu0 0.0
    %2872 = vmatprep.subr.mxu0 0.0
    %2873 = vmatpush1.msra.mxu0 0.0
    %2874 = vmatprep.subr.mxu0 0.0
    %2875 = vmatpush1.msra.mxu0 0.0
    %2876 = vmatprep.subr.mxu0 0.0
    %2877 = vmatpush1.msra.mxu0 0.0
    %2878 = vmatprep.subr.mxu0 0.0
    %2879 = vmatpush1.msra.mxu0 0.0
    %2880 = vmatprep.subr.mxu0 0.0
    %2881 = vmatpush1.msra.mxu0 0.0
    %2882 = vmatprep.subr.mxu0 0.0
    %2883 = vmatpush1.msra.mxu0 0.0
    %2884 = vmatprep.subr.mxu0 0.0
    %2885 = vmatpush1.msra.mxu0 0.0
    %2886 = vmatprep.subr.mxu0 0.0
    %2887 = vmatpush1.msra.mxu0 0.0
    %2888 = vmatprep.subr.mxu0 0.0
    %2889 = vmatpush1.msra.mxu0 0.0
    %2890 = vmatprep.subr.mxu0 0.0
    %2891 = vmatpush1.msra.mxu0 0.0
    %2892 = vmatprep.subr.mxu0 0.0
    %2893 = vmatpush1.msra.mxu0 0.0
    %2894 = vmatprep.subr.mxu0 0.0
    %2895 = vmatpush1.msra.mxu0 0.0
    %2896 = vmatprep.subr.mxu0 0.0
    %2897 = vmatpush1.msra.mxu0 0.0
    %2898 = vmatprep.subr.mxu0 0.0
    %2899 = vmatpush1.msra.mxu0 0.0
    %2900 = vmatprep.subr.mxu0 0.0
    %2901 = vmatpush1.msra.mxu0 0.0
    %2902 = vmatprep.subr.mxu0 0.0
    %2903 = vmatpush1.msra.mxu0 0.0
    %2904 = vmatprep.subr.mxu0 0.0
    %2905 = vmatpush1.msra.mxu0 0.0
    %2906 = vmatprep.subr.mxu0 0.0
    %2907 = vmatpush1.msra.mxu0 0.0
    %2908 = vmatprep.mubr.f32.mxu0 0.0
    %2909 = vmatmul.mubr.f32.gmra.mrb[0].mxu0 %v2842
    %v2910 = vpop.f32.mrb[0].mxu0
    %v2911 = vadd.f32 0.0, %v2910
    %v2912 = vpop.f32.mrb[0].mxu0
    %2913 = vdwg.mxu0
    %v2915 = vsel %vm2053, %v2762, 0
    %2917 = vmatprep.subr.mxu0 0.0
    %2918 = vmatpush1.msra.mxu0 %v1098
    %2919 = vmatprep.subr.mxu0 0.0
    %2920 = vmatpush1.msra.mxu0 0.0
    %2921 = vmatprep.subr.mxu0 0.0
    %2922 = vmatpush1.msra.mxu0 0.0
    %2923 = vmatprep.subr.mxu0 0.0
    %2924 = vmatpush1.msra.mxu0 0.0
    %2925 = vmatprep.subr.mxu0 0.0
    %2926 = vmatpush1.msra.mxu0 0.0
    %2927 = vmatprep.subr.mxu0 0.0
    %2928 = vmatpush1.msra.mxu0 0.0
    %2929 = vmatprep.subr.mxu0 0.0
    %2930 = vmatpush1.msra.mxu0 0.0
    %2931 = vmatprep.subr.mxu0 0.0
    %2932 = vmatpush1.msra.mxu0 0.0
    %2933 = vmatprep.subr.mxu0 0.0
    %2934 = vmatpush1.msra.mxu0 0.0
    %2935 = vmatprep.subr.mxu0 0.0
    %2936 = vmatpush1.msra.mxu0 0.0
    %2937 = vmatprep.subr.mxu0 0.0
    %2938 = vmatpush1.msra.mxu0 0.0
    %2939 = vmatprep.subr.mxu0 0.0
    %2940 = vmatpush1.msra.mxu0 0.0
    %2941 = vmatprep.subr.mxu0 0.0
    %2942 = vmatpush1.msra.mxu0 0.0
    %2943 = vmatprep.subr.mxu0 0.0
    %2944 = vmatpush1.msra.mxu0 0.0
    %2945 = vmatprep.subr.mxu0 0.0
    %2946 = vmatpush1.msra.mxu0 0.0
    %2947 = vmatprep.subr.mxu0 0.0
    %2948 = vmatpush1.msra.mxu0 0.0
    %2949 = vmatprep.subr.mxu0 0.0
    %2950 = vmatpush1.msra.mxu0 0.0
    %2951 = vmatprep.subr.mxu0 0.0
    %2952 = vmatpush1.msra.mxu0 0.0
    %2953 = vmatprep.subr.mxu0 0.0
    %2954 = vmatpush1.msra.mxu0 0.0
    %2955 = vmatprep.subr.mxu0 0.0
    %2956 = vmatpush1.msra.mxu0 0.0
    %2957 = vmatprep.subr.mxu0 0.0
    %2958 = vmatpush1.msra.mxu0 0.0
    %2959 = vmatprep.subr.mxu0 0.0
    %2960 = vmatpush1.msra.mxu0 0.0
    %2961 = vmatprep.subr.mxu0 0.0
    %2962 = vmatpush1.msra.mxu0 0.0
    %2963 = vmatprep.subr.mxu0 0.0
    %2964 = vmatpush1.msra.mxu0 0.0
    %2965 = vmatprep.subr.mxu0 0.0
    %2966 = vmatpush1.msra.mxu0 0.0
    %2967 = vmatprep.subr.mxu0 0.0
    %2968 = vmatpush1.msra.mxu0 0.0
    %2969 = vmatprep.subr.mxu0 0.0
    %2970 = vmatpush1.msra.mxu0 0.0
    %2971 = vmatprep.subr.mxu0 0.0
    %2972 = vmatpush1.msra.mxu0 0.0
    %2973 = vmatprep.subr.mxu0 0.0
    %2974 = vmatpush1.msra.mxu0 0.0
    %2975 = vmatprep.subr.mxu0 0.0
    %2976 = vmatpush1.msra.mxu0 0.0
    %2977 = vmatprep.subr.mxu0 0.0
    %2978 = vmatpush1.msra.mxu0 0.0
    %2979 = vmatprep.subr.mxu0 0.0
    %2980 = vmatpush1.msra.mxu0 0.0
    %2981 = vmatprep.mubr.f32.mxu0 0.0
    %2982 = vmatmul.mubr.f32.gmra.mrb[0].mxu0 %v2915
    %v2983 = vpop.f32.mrb[0].mxu0
    %v2984 = vadd.f32 0.0, %v2983
    %v2985 = vpop.f32.mrb[0].mxu0
    %2986 = vdwg.mxu0
    %v2988 = vsel %vm2053, %v2763, 0
    %2990 = vmatprep.subr.mxu0 0.0
    %2991 = vmatpush1.msra.mxu0 %v1166
    %2992 = vmatprep.subr.mxu0 0.0
    %2993 = vmatpush1.msra.mxu0 0.0
    %2994 = vmatprep.subr.mxu0 0.0
    %2995 = vmatpush1.msra.mxu0 0.0
    %2996 = vmatprep.subr.mxu0 0.0
    %2997 = vmatpush1.msra.mxu0 0.0
    %2998 = vmatprep.subr.mxu0 0.0
    %2999 = vmatpush1.msra.mxu0 0.0
    %3000 = vmatprep.subr.mxu0 0.0
    %3001 = vmatpush1.msra.mxu0 0.0
    %3002 = vmatprep.subr.mxu0 0.0
    %3003 = vmatpush1.msra.mxu0 0.0
    %3004 = vmatprep.subr.mxu0 0.0
    %3005 = vmatpush1.msra.mxu0 0.0
    %3006 = vmatprep.subr.mxu0 0.0
    %3007 = vmatpush1.msra.mxu0 0.0
    %3008 = vmatprep.subr.mxu0 0.0
    %3009 = vmatpush1.msra.mxu0 0.0
    %3010 = vmatprep.subr.mxu0 0.0
    %3011 = vmatpush1.msra.mxu0 0.0
    %3012 = vmatprep.subr.mxu0 0.0
    %3013 = vmatpush1.msra.mxu0 0.0
    %3014 = vmatprep.subr.mxu0 0.0
    %3015 = vmatpush1.msra.mxu0 0.0
    %3016 = vmatprep.subr.mxu0 0.0
    %3017 = vmatpush1.msra.mxu0 0.0
    %3018 = vmatprep.subr.mxu0 0.0
    %3019 = vmatpush1.msra.mxu0 0.0
    %3020 = vmatprep.subr.mxu0 0.0
    %3021 = vmatpush1.msra.mxu0 0.0
    %3022 = vmatprep.subr.mxu0 0.0
    %3023 = vmatpush1.msra.mxu0 0.0
    %3024 = vmatprep.subr.mxu0 0.0
    %3025 = vmatpush1.msra.mxu0 0.0
    %3026 = vmatprep.subr.mxu0 0.0
    %3027 = vmatpush1.msra.mxu0 0.0
    %3028 = vmatprep.subr.mxu0 0.0
    %3029 = vmatpush1.msra.mxu0 0.0
    %3030 = vmatprep.subr.mxu0 0.0
    %3031 = vmatpush1.msra.mxu0 0.0
    %3032 = vmatprep.subr.mxu0 0.0
    %3033 = vmatpush1.msra.mxu0 0.0
    %3034 = vmatprep.subr.mxu0 0.0
    %3035 = vmatpush1.msra.mxu0 0.0
    %3036 = vmatprep.subr.mxu0 0.0
    %3037 = vmatpush1.msra.mxu0 0.0
    %3038 = vmatprep.subr.mxu0 0.0
    %3039 = vmatpush1.msra.mxu0 0.0
    %3040 = vmatprep.subr.mxu0 0.0
    %3041 = vmatpush1.msra.mxu0 0.0
    %3042 = vmatprep.subr.mxu0 0.0
    %3043 = vmatpush1.msra.mxu0 0.0
    %3044 = vmatprep.subr.mxu0 0.0
    %3045 = vmatpush1.msra.mxu0 0.0
    %3046 = vmatprep.subr.mxu0 0.0
    %3047 = vmatpush1.msra.mxu0 0.0
    %3048 = vmatprep.subr.mxu0 0.0
    %3049 = vmatpush1.msra.mxu0 0.0
    %3050 = vmatprep.subr.mxu0 0.0
    %3051 = vmatpush1.msra.mxu0 0.0
    %3052 = vmatprep.subr.mxu0 0.0
    %3053 = vmatpush1.msra.mxu0 0.0
    %3054 = vmatprep.mubr.f32.mxu0 0.0
    %3055 = vmatmul.mubr.f32.gmra.mrb[0].mxu0 %v2988
    %v3056 = vpop.f32.mrb[0].mxu0
    %v3057 = vadd.f32 0.0, %v3056
    %v3058 = vpop.f32.mrb[0].mxu0
    %3059 = vdwg.mxu0
    %v3061 = vsel %vm2053, %v2764, 0
    %3063 = vmatprep.subr.mxu0 0.0
    %3064 = vmatpush1.msra.mxu0 %v1099
    %3065 = vmatprep.subr.mxu0 0.0
    %3066 = vmatpush1.msra.mxu0 0.0
    %3067 = vmatprep.subr.mxu0 0.0
    %3068 = vmatpush1.msra.mxu0 0.0
    %3069 = vmatprep.subr.mxu0 0.0
    %3070 = vmatpush1.msra.mxu0 0.0
    %3071 = vmatprep.subr.mxu0 0.0
    %3072 = vmatpush1.msra.mxu0 0.0
    %3073 = vmatprep.subr.mxu0 0.0
    %3074 = vmatpush1.msra.mxu0 0.0
    %3075 = vmatprep.subr.mxu0 0.0
    %3076 = vmatpush1.msra.mxu0 0.0
    %3077 = vmatprep.subr.mxu0 0.0
    %3078 = vmatpush1.msra.mxu0 0.0
    %3079 = vmatprep.subr.mxu0 0.0
    %3080 = vmatpush1.msra.mxu0 0.0
    %3081 = vmatprep.subr.mxu0 0.0
    %3082 = vmatpush1.msra.mxu0 0.0
    %3083 = vmatprep.subr.mxu0 0.0
    %3084 = vmatpush1.msra.mxu0 0.0
    %3085 = vmatprep.subr.mxu0 0.0
    %3086 = vmatpush1.msra.mxu0 0.0
    %3087 = vmatprep.subr.mxu0 0.0
    %3088 = vmatpush1.msra.mxu0 0.0
    %3089 = vmatprep.subr.mxu0 0.0
    %3090 = vmatpush1.msra.mxu0 0.0
    %3091 = vmatprep.subr.mxu0 0.0
    %3092 = vmatpush1.msra.mxu0 0.0
    %3093 = vmatprep.subr.mxu0 0.0
    %3094 = vmatpush1.msra.mxu0 0.0
    %3095 = vmatprep.subr.mxu0 0.0
    %3096 = vmatpush1.msra.mxu0 0.0
    %3097 = vmatprep.subr.mxu0 0.0
    %3098 = vmatpush1.msra.mxu0 0.0
    %3099 = vmatprep.subr.mxu0 0.0
    %3100 = vmatpush1.msra.mxu0 0.0
    %3101 = vmatprep.subr.mxu0 0.0
    %3102 = vmatpush1.msra.mxu0 0.0
    %3103 = vmatprep.subr.mxu0 0.0
    %3104 = vmatpush1.msra.mxu0 0.0
    %3105 = vmatprep.subr.mxu0 0.0
    %3106 = vmatpush1.msra.mxu0 0.0
    %3107 = vmatprep.subr.mxu0 0.0
    %3108 = vmatpush1.msra.mxu0 0.0
    %3109 = vmatprep.subr.mxu0 0.0
    %3110 = vmatpush1.msra.mxu0 0.0
    %3111 = vmatprep.subr.mxu0 0.0
    %3112 = vmatpush1.msra.mxu0 0.0
    %3113 = vmatprep.subr.mxu0 0.0
    %3114 = vmatpush1.msra.mxu0 0.0
    %3115 = vmatprep.subr.mxu0 0.0
    %3116 = vmatpush1.msra.mxu0 0.0
    %3117 = vmatprep.subr.mxu0 0.0
    %3118 = vmatpush1.msra.mxu0 0.0
    %3119 = vmatprep.subr.mxu0 0.0
    %3120 = vmatpush1.msra.mxu0 0.0
    %3121 = vmatprep.subr.mxu0 0.0
    %3122 = vmatpush1.msra.mxu0 0.0
    %3123 = vmatprep.subr.mxu0 0.0
    %3124 = vmatpush1.msra.mxu0 0.0
    %3125 = vmatprep.subr.mxu0 0.0
    %3126 = vmatpush1.msra.mxu0 0.0
    %3127 = vmatprep.mubr.f32.mxu0 0.0
    %3128 = vmatmul.mubr.f32.gmra.mrb[0].mxu0 %v3061
    %v3129 = vpop.f32.mrb[0].mxu0
    %v3130 = vadd.f32 0.0, %v3129
    %v3131 = vpop.f32.mrb[0].mxu0
    %3132 = vdwg.mxu0
    %v3134 = vsel %vm2053, %v2765, 0
    %3136 = vmatprep.subr.mxu0 0.0
    %3137 = vmatpush1.msra.mxu0 %v1167
    %3138 = vmatprep.subr.mxu0 0.0
    %3139 = vmatpush1.msra.mxu0 0.0
    %3140 = vmatprep.subr.mxu0 0.0
    %3141 = vmatpush1.msra.mxu0 0.0
    %3142 = vmatprep.subr.mxu0 0.0
    %3143 = vmatpush1.msra.mxu0 0.0
    %3144 = vmatprep.subr.mxu0 0.0
    %3145 = vmatpush1.msra.mxu0 0.0
    %3146 = vmatprep.subr.mxu0 0.0
    %3147 = vmatpush1.msra.mxu0 0.0
    %3148 = vmatprep.subr.mxu0 0.0
    %3149 = vmatpush1.msra.mxu0 0.0
    %3150 = vmatprep.subr.mxu0 0.0
    %3151 = vmatpush1.msra.mxu0 0.0
    %3152 = vmatprep.subr.mxu0 0.0
    %3153 = vmatpush1.msra.mxu0 0.0
    %3154 = vmatprep.subr.mxu0 0.0
    %3155 = vmatpush1.msra.mxu0 0.0
    %3156 = vmatprep.subr.mxu0 0.0
    %3157 = vmatpush1.msra.mxu0 0.0
    %3158 = vmatprep.subr.mxu0 0.0
    %3159 = vmatpush1.msra.mxu0 0.0
    %3160 = vmatprep.subr.mxu0 0.0
    %3161 = vmatpush1.msra.mxu0 0.0
    %3162 = vmatprep.subr.mxu0 0.0
    %3163 = vmatpush1.msra.mxu0 0.0
    %3164 = vmatprep.subr.mxu0 0.0
    %3165 = vmatpush1.msra.mxu0 0.0
    %3166 = vmatprep.subr.mxu0 0.0
    %3167 = vmatpush1.msra.mxu0 0.0
    %3168 = vmatprep.subr.mxu0 0.0
    %3169 = vmatpush1.msra.mxu0 0.0
    %3170 = vmatprep.subr.mxu0 0.0
    %3171 = vmatpush1.msra.mxu0 0.0
    %3172 = vmatprep.subr.mxu0 0.0
    %3173 = vmatpush1.msra.mxu0 0.0
    %3174 = vmatprep.subr.mxu0 0.0
    %3175 = vmatpush1.msra.mxu0 0.0
    %3176 = vmatprep.subr.mxu0 0.0
    %3177 = vmatpush1.msra.mxu0 0.0
    %3178 = vmatprep.subr.mxu0 0.0
    %3179 = vmatpush1.msra.mxu0 0.0
    %3180 = vmatprep.subr.mxu0 0.0
    %3181 = vmatpush1.msra.mxu0 0.0
    %3182 = vmatprep.subr.mxu0 0.0
    %3183 = vmatpush1.msra.mxu0 0.0
    %3184 = vmatprep.subr.mxu0 0.0
    %3185 = vmatpush1.msra.mxu0 0.0
    %3186 = vmatprep.subr.mxu0 0.0
    %3187 = vmatpush1.msra.mxu0 0.0
    %3188 = vmatprep.subr.mxu0 0.0
    %3189 = vmatpush1.msra.mxu0 0.0
    %3190 = vmatprep.subr.mxu0 0.0
    %3191 = vmatpush1.msra.mxu0 0.0
    %3192 = vmatprep.subr.mxu0 0.0
    %3193 = vmatpush1.msra.mxu0 0.0
    %3194 = vmatprep.subr.mxu0 0.0
    %3195 = vmatpush1.msra.mxu0 0.0
    %3196 = vmatprep.subr.mxu0 0.0
    %3197 = vmatpush1.msra.mxu0 0.0
    %3198 = vmatprep.subr.mxu0 0.0
    %3199 = vmatpush1.msra.mxu0 0.0
    %3200 = vmatprep.mubr.f32.mxu0 0.0
    %3201 = vmatmul.mubr.f32.gmra.mrb[0].mxu0 %v3134
    %v3202 = vpop.f32.mrb[0].mxu0
    %v3203 = vadd.f32 0.0, %v3202
    %v3204 = vpop.f32.mrb[0].mxu0
    %3205 = vdwg.mxu0
    %v3207 = vsel %vm2053, %v2766, 0
    %3209 = vmatprep.subr.mxu0 0.0
    %3210 = vmatpush1.msra.mxu0 %v1100
    %3211 = vmatprep.subr.mxu0 0.0
    %3212 = vmatpush1.msra.mxu0 0.0
    %3213 = vmatprep.subr.mxu0 0.0
    %3214 = vmatpush1.msra.mxu0 0.0
    %3215 = vmatprep.subr.mxu0 0.0
    %3216 = vmatpush1.msra.mxu0 0.0
    %3217 = vmatprep.subr.mxu0 0.0
    %3218 = vmatpush1.msra.mxu0 0.0
    %3219 = vmatprep.subr.mxu0 0.0
    %3220 = vmatpush1.msra.mxu0 0.0
    %3221 = vmatprep.subr.mxu0 0.0
    %3222 = vmatpush1.msra.mxu0 0.0
    %3223 = vmatprep.subr.mxu0 0.0
    %3224 = vmatpush1.msra.mxu0 0.0
    %3225 = vmatprep.subr.mxu0 0.0
    %3226 = vmatpush1.msra.mxu0 0.0
    %3227 = vmatprep.subr.mxu0 0.0
    %3228 = vmatpush1.msra.mxu0 0.0
    %3229 = vmatprep.subr.mxu0 0.0
    %3230 = vmatpush1.msra.mxu0 0.0
    %3231 = vmatprep.subr.mxu0 0.0
    %3232 = vmatpush1.msra.mxu0 0.0
    %3233 = vmatprep.subr.mxu0 0.0
    %3234 = vmatpush1.msra.mxu0 0.0
    %3235 = vmatprep.subr.mxu0 0.0
    %3236 = vmatpush1.msra.mxu0 0.0
    %3237 = vmatprep.subr.mxu0 0.0
    %3238 = vmatpush1.msra.mxu0 0.0
    %3239 = vmatprep.subr.mxu0 0.0
    %3240 = vmatpush1.msra.mxu0 0.0
    %3241 = vmatprep.subr.mxu0 0.0
    %3242 = vmatpush1.msra.mxu0 0.0
    %3243 = vmatprep.subr.mxu0 0.0
    %3244 = vmatpush1.msra.mxu0 0.0
    %3245 = vmatprep.subr.mxu0 0.0
    %3246 = vmatpush1.msra.mxu0 0.0
    %3247 = vmatprep.subr.mxu0 0.0
    %3248 = vmatpush1.msra.mxu0 0.0
    %3249 = vmatprep.subr.mxu0 0.0
    %3250 = vmatpush1.msra.mxu0 0.0
    %3251 = vmatprep.subr.mxu0 0.0
    %3252 = vmatpush1.msra.mxu0 0.0
    %3253 = vmatprep.subr.mxu0 0.0
    %3254 = vmatpush1.msra.mxu0 0.0
    %3255 = vmatprep.subr.mxu0 0.0
    %3256 = vmatpush1.msra.mxu0 0.0
    %3257 = vmatprep.subr.mxu0 0.0
    %3258 = vmatpush1.msra.mxu0 0.0
    %3259 = vmatprep.subr.mxu0 0.0
    %3260 = vmatpush1.msra.mxu0 0.0
    %3261 = vmatprep.subr.mxu0 0.0
    %3262 = vmatpush1.msra.mxu0 0.0
    %3263 = vmatprep.subr.mxu0 0.0
    %3264 = vmatpush1.msra.mxu0 0.0
    %3265 = vmatprep.subr.mxu0 0.0
    %3266 = vmatpush1.msra.mxu0 0.0
    %3267 = vmatprep.subr.mxu0 0.0
    %3268 = vmatpush1.msra.mxu0 0.0
    %3269 = vmatprep.subr.mxu0 0.0
    %3270 = vmatpush1.msra.mxu0 0.0
    %3271 = vmatprep.subr.mxu0 0.0
    %3272 = vmatpush1.msra.mxu0 0.0
    %3273 = vmatprep.mubr.f32.mxu0 0.0
    %3274 = vmatmul.mubr.f32.gmra.mrb[0].mxu0 %v3207
    %v3275 = vpop.f32.mrb[0].mxu0
    %v3276 = vadd.f32 0.0, %v3275
    %v3277 = vpop.f32.mrb[0].mxu0
    %3278 = vdwg.mxu0
    %v3280 = vsel %vm2053, %v2767, 0
    %3282 = vmatprep.subr.mxu0 0.0
    %3283 = vmatpush1.msra.mxu0 %v1168
    %3284 = vmatprep.subr.mxu0 0.0
    %3285 = vmatpush1.msra.mxu0 0.0
    %3286 = vmatprep.subr.mxu0 0.0
    %3287 = vmatpush1.msra.mxu0 0.0
    %3288 = vmatprep.subr.mxu0 0.0
    %3289 = vmatpush1.msra.mxu0 0.0
    %3290 = vmatprep.subr.mxu0 0.0
    %3291 = vmatpush1.msra.mxu0 0.0
    %3292 = vmatprep.subr.mxu0 0.0
    %3293 = vmatpush1.msra.mxu0 0.0
    %3294 = vmatprep.subr.mxu0 0.0
    %3295 = vmatpush1.msra.mxu0 0.0
    %3296 = vmatprep.subr.mxu0 0.0
    %3297 = vmatpush1.msra.mxu0 0.0
    %3298 = vmatprep.subr.mxu0 0.0
    %3299 = vmatpush1.msra.mxu0 0.0
    %3300 = vmatprep.subr.mxu0 0.0
    %3301 = vmatpush1.msra.mxu0 0.0
    %3302 = vmatprep.subr.mxu0 0.0
    %3303 = vmatpush1.msra.mxu0 0.0
    %3304 = vmatprep.subr.mxu0 0.0
    %3305 = vmatpush1.msra.mxu0 0.0
    %3306 = vmatprep.subr.mxu0 0.0
    %3307 = vmatpush1.msra.mxu0 0.0
    %3308 = vmatprep.subr.mxu0 0.0
    %3309 = vmatpush1.msra.mxu0 0.0
    %3310 = vmatprep.subr.mxu0 0.0
    %3311 = vmatpush1.msra.mxu0 0.0
    %3312 = vmatprep.subr.mxu0 0.0
    %3313 = vmatpush1.msra.mxu0 0.0
    %3314 = vmatprep.subr.mxu0 0.0
    %3315 = vmatpush1.msra.mxu0 0.0
    %3316 = vmatprep.subr.mxu0 0.0
    %3317 = vmatpush1.msra.mxu0 0.0
    %3318 = vmatprep.subr.mxu0 0.0
    %3319 = vmatpush1.msra.mxu0 0.0
    %3320 = vmatprep.subr.mxu0 0.0
    %3321 = vmatpush1.msra.mxu0 0.0
    %3322 = vmatprep.subr.mxu0 0.0
    %3323 = vmatpush1.msra.mxu0 0.0
    %3324 = vmatprep.subr.mxu0 0.0
    %3325 = vmatpush1.msra.mxu0 0.0
    %3326 = vmatprep.subr.mxu0 0.0
    %3327 = vmatpush1.msra.mxu0 0.0
    %3328 = vmatprep.subr.mxu0 0.0
    %3329 = vmatpush1.msra.mxu0 0.0
    %3330 = vmatprep.subr.mxu0 0.0
    %3331 = vmatpush1.msra.mxu0 0.0
    %3332 = vmatprep.subr.mxu0 0.0
    %3333 = vmatpush1.msra.mxu0 0.0
    %3334 = vmatprep.subr.mxu0 0.0
    %3335 = vmatpush1.msra.mxu0 0.0
    %3336 = vmatprep.subr.mxu0 0.0
    %3337 = vmatpush1.msra.mxu0 0.0
    %3338 = vmatprep.subr.mxu0 0.0
    %3339 = vmatpush1.msra.mxu0 0.0
    %3340 = vmatprep.subr.mxu0 0.0
    %3341 = vmatpush1.msra.mxu0 0.0
    %3342 = vmatprep.subr.mxu0 0.0
    %3343 = vmatpush1.msra.mxu0 0.0
    %3344 = vmatprep.subr.mxu0 0.0
    %3345 = vmatpush1.msra.mxu0 0.0
    %3346 = vmatprep.mubr.f32.mxu0 0.0
    %3347 = vmatmul.mubr.f32.gmra.mrb[0].mxu0 %v3280
    %v3348 = vpop.f32.mrb[0].mxu0
    %v3349 = vadd.f32 0.0, %v3348
    %v3350 = vpop.f32.mrb[0].mxu0
    %3351 = vdwg.mxu0
    %v3352 = vcombine.low %v2838, %v3130
    %v3353 = vcombine.high %v2838, %v3130
    %v3355 = vunpack.c.l.s4 1983009808
    %v3356 = vunpack.c.0.s8 %v3355
    %v3357 = vlaneseq
    %v3358 = vshrl.u32 %v3357, 7
    %v3359 = vsub.s32 %v3356, %v3358
    %v3360 = vrot.slane %v3352, %v3359
    %v3362 = vunpack.c.l.s4 1983009808
    %v3363 = vunpack.c.0.s8 %v3362
    %v3364 = vlaneseq
    %v3365 = vshrl.u32 %v3364, 7
    %v3366 = vsub.s32 %v3363, %v3365
    %v3367 = vrot.slane %v3353, %v3366
    %v3368 = vcombine.low %v2984, %v3276
    %v3369 = vcombine.high %v2984, %v3276
    %v3371 = vunpack.c.l.s4 1983009808
    %v3372 = vunpack.c.0.s8 %v3371
    %v3373 = vlaneseq
    %v3374 = vshrl.u32 %v3373, 7
    %v3375 = vsub.s32 %v3372, %v3374
    %v3376 = vrot.slane %v3368, %v3375
    %v3378 = vunpack.c.l.s4 1983009808
    %v3379 = vunpack.c.0.s8 %v3378
    %v3380 = vlaneseq
    %v3381 = vshrl.u32 %v3380, 7
    %v3382 = vsub.s32 %v3379, %v3381
    %v3383 = vrot.slane %v3369, %v3382
    %v3384 = vcombine.low %v3360, %v3376
    %v3385 = vcombine.high %v3360, %v3376
    %v3387 = vunpack.c.l.s4 1934713408
    %v3388 = vunpack.c.0.s8 %v3387
    %v3389 = vlaneseq
    %v3390 = vshrl.u32 %v3389, 7
    %v3391 = vsub.s32 %v3388, %v3390
    %v3392 = vrot.slane %v3384, %v3391
    %v3394 = vunpack.c.l.s4 1934713408
    %v3395 = vunpack.c.0.s8 %v3394
    %v3396 = vlaneseq
    %v3397 = vshrl.u32 %v3396, 7
    %v3398 = vsub.s32 %v3395, %v3397
    %v3399 = vrot.slane %v3385, %v3398
    %v3400 = vcombine.low %v3367, %v3383
    %v3401 = vcombine.high %v3367, %v3383
    %v3403 = vunpack.c.l.s4 1934713408
    %v3404 = vunpack.c.0.s8 %v3403
    %v3405 = vlaneseq
    %v3406 = vshrl.u32 %v3405, 7
    %v3407 = vsub.s32 %v3404, %v3406
    %v3408 = vrot.slane %v3400, %v3407
    %v3410 = vunpack.c.l.s4 1934713408
    %v3411 = vunpack.c.0.s8 %v3410
    %v3412 = vlaneseq
    %v3413 = vshrl.u32 %v3412, 7
    %v3414 = vsub.s32 %v3411, %v3413
    %v3415 = vrot.slane %v3401, %v3414
    %v3416 = vcombine.high %v3392, 0.0
    %v3417 = vcombine.high %v3399, 0.0
    %v3418 = vcombine.high %v3408, 0.0
    %v3419 = vcombine.high %v3415, 0.0
    %v3420 = vcombine.low %v2911, %v3203
    %v3421 = vcombine.high %v2911, %v3203
    %v3423 = vunpack.c.l.s4 1983009808
    %v3424 = vunpack.c.0.s8 %v3423
    %v3425 = vlaneseq
    %v3426 = vshrl.u32 %v3425, 7
    %v3427 = vsub.s32 %v3424, %v3426
    %v3428 = vrot.slane %v3420, %v3427
    %v3430 = vunpack.c.l.s4 1983009808
    %v3431 = vunpack.c.0.s8 %v3430
    %v3432 = vlaneseq
    %v3433 = vshrl.u32 %v3432, 7
    %v3434 = vsub.s32 %v3431, %v3433
    %v3435 = vrot.slane %v3421, %v3434
    %v3436 = vcombine.low %v3057, %v3349
    %v3437 = vcombine.high %v3057, %v3349
    %v3439 = vunpack.c.l.s4 1983009808
    %v3440 = vunpack.c.0.s8 %v3439
    %v3441 = vlaneseq
    %v3442 = vshrl.u32 %v3441, 7
    %v3443 = vsub.s32 %v3440, %v3442
    %v3444 = vrot.slane %v3436, %v3443
    %v3446 = vunpack.c.l.s4 1983009808
    %v3447 = vunpack.c.0.s8 %v3446
    %v3448 = vlaneseq
    %v3449 = vshrl.u32 %v3448, 7
    %v3450 = vsub.s32 %v3447, %v3449
    %v3451 = vrot.slane %v3437, %v3450
    %v3452 = vcombine.low %v3428, %v3444
    %v3453 = vcombine.high %v3428, %v3444
    %v3455 = vunpack.c.l.s4 1934713408
    %v3456 = vunpack.c.0.s8 %v3455
    %v3457 = vlaneseq
    %v3458 = vshrl.u32 %v3457, 7
    %v3459 = vsub.s32 %v3456, %v3458
    %v3460 = vrot.slane %v3452, %v3459
    %v3462 = vunpack.c.l.s4 1934713408
    %v3463 = vunpack.c.0.s8 %v3462
    %v3464 = vlaneseq
    %v3465 = vshrl.u32 %v3464, 7
    %v3466 = vsub.s32 %v3463, %v3465
    %v3467 = vrot.slane %v3453, %v3466
    %v3468 = vcombine.low %v3435, %v3451
    %v3469 = vcombine.high %v3435, %v3451
    %v3471 = vunpack.c.l.s4 1934713408
    %v3472 = vunpack.c.0.s8 %v3471
    %v3473 = vlaneseq
    %v3474 = vshrl.u32 %v3473, 7
    %v3475 = vsub.s32 %v3472, %v3474
    %v3476 = vrot.slane %v3468, %v3475
    %v3478 = vunpack.c.l.s4 1934713408
    %v3479 = vunpack.c.0.s8 %v3478
    %v3480 = vlaneseq
    %v3481 = vshrl.u32 %v3480, 7
    %v3482 = vsub.s32 %v3479, %v3481
    %v3483 = vrot.slane %v3469, %v3482
    %v3484 = vcombine.high %v3460, 0.0
    %v3485 = vcombine.high %v3467, 0.0
    %v3486 = vcombine.high %v3476, 0.0
    %v3487 = vcombine.high %v3483, 0.0
    %v3488 = vcombine.low %v3392, %v3399
    %v3490 = vunpack.c.l.s4 1983009808
    %v3491 = vunpack.c.0.s8 %v3490
    %v3492 = vlaneseq
    %v3493 = vshrl.u32 %v3492, 7
    %v3494 = vsub.s32 %v3491, %v3493
    %v3495 = vrot.slane %v3488, %v3494
    %v3496 = vcombine.low %v3416, %v3417
    %v3498 = vunpack.c.l.s4 1983009808
    %v3499 = vunpack.c.0.s8 %v3498
    %v3500 = vlaneseq
    %v3501 = vshrl.u32 %v3500, 7
    %v3502 = vsub.s32 %v3499, %v3501
    %v3503 = vrot.slane %v3496, %v3502
    %v3504 = vcombine.low %v3408, %v3415
    %v3506 = vunpack.c.l.s4 1983009808
    %v3507 = vunpack.c.0.s8 %v3506
    %v3508 = vlaneseq
    %v3509 = vshrl.u32 %v3508, 7
    %v3510 = vsub.s32 %v3507, %v3509
    %v3511 = vrot.slane %v3504, %v3510
    %v3512 = vcombine.low %v3418, %v3419
    %v3514 = vunpack.c.l.s4 1983009808
    %v3515 = vunpack.c.0.s8 %v3514
    %v3516 = vlaneseq
    %v3517 = vshrl.u32 %v3516, 7
    %v3518 = vsub.s32 %v3515, %v3517
    %v3519 = vrot.slane %v3512, %v3518
    %v3520 = vcombine.low %v3495, %v3503
    %v3521 = vcombine.high %v3495, %v3503
    %v3523 = vunpack.c.l.s4 1934713408
    %v3524 = vunpack.c.0.s8 %v3523
    %v3525 = vlaneseq
    %v3526 = vshrl.u32 %v3525, 7
    %v3527 = vsub.s32 %v3524, %v3526
    %v3528 = vrot.slane %v3520, %v3527
    %v3530 = vunpack.c.l.s4 1934713408
    %v3531 = vunpack.c.0.s8 %v3530
    %v3532 = vlaneseq
    %v3533 = vshrl.u32 %v3532, 7
    %v3534 = vsub.s32 %v3531, %v3533
    %v3535 = vrot.slane %v3521, %v3534
    %v3536 = vcombine.low %v3511, %v3519
    %v3537 = vcombine.high %v3511, %v3519
    %v3539 = vunpack.c.l.s4 1934713408
    %v3540 = vunpack.c.0.s8 %v3539
    %v3541 = vlaneseq
    %v3542 = vshrl.u32 %v3541, 7
    %v3543 = vsub.s32 %v3540, %v3542
    %v3544 = vrot.slane %v3536, %v3543
    %v3546 = vunpack.c.l.s4 1934713408
    %v3547 = vunpack.c.0.s8 %v3546
    %v3548 = vlaneseq
    %v3549 = vshrl.u32 %v3548, 7
    %v3550 = vsub.s32 %v3547, %v3549
    %v3551 = vrot.slane %v3537, %v3550
    %v3552 = vcombine.low %v3528, %v3544
    %v3553 = vcombine.high %v3528, %v3544
    %v3554 = vcombine.low %v3535, %v3551
    %v3555 = vcombine.high %v3535, %v3551
    %v3556 = vcombine.low %v3460, %v3467
    %v3558 = vunpack.c.l.s4 1983009808
    %v3559 = vunpack.c.0.s8 %v3558
    %v3560 = vlaneseq
    %v3561 = vshrl.u32 %v3560, 7
    %v3562 = vsub.s32 %v3559, %v3561
    %v3563 = vrot.slane %v3556, %v3562
    %v3564 = vcombine.low %v3484, %v3485
    %v3566 = vunpack.c.l.s4 1983009808
    %v3567 = vunpack.c.0.s8 %v3566
    %v3568 = vlaneseq
    %v3569 = vshrl.u32 %v3568, 7
    %v3570 = vsub.s32 %v3567, %v3569
    %v3571 = vrot.slane %v3564, %v3570
    %v3572 = vcombine.low %v3476, %v3483
    %v3574 = vunpack.c.l.s4 1983009808
    %v3575 = vunpack.c.0.s8 %v3574
    %v3576 = vlaneseq
    %v3577 = vshrl.u32 %v3576, 7
    %v3578 = vsub.s32 %v3575, %v3577
    %v3579 = vrot.slane %v3572, %v3578
    %v3580 = vcombine.low %v3486, %v3487
    %v3582 = vunpack.c.l.s4 1983009808
    %v3583 = vunpack.c.0.s8 %v3582
    %v3584 = vlaneseq
    %v3585 = vshrl.u32 %v3584, 7
    %v3586 = vsub.s32 %v3583, %v3585
    %v3587 = vrot.slane %v3580, %v3586
    %v3588 = vcombine.low %v3563, %v3571
    %v3589 = vcombine.high %v3563, %v3571
    %v3591 = vunpack.c.l.s4 1934713408
    %v3592 = vunpack.c.0.s8 %v3591
    %v3593 = vlaneseq
    %v3594 = vshrl.u32 %v3593, 7
    %v3595 = vsub.s32 %v3592, %v3594
    %v3596 = vrot.slane %v3588, %v3595
    %v3598 = vunpack.c.l.s4 1934713408
    %v3599 = vunpack.c.0.s8 %v3598
    %v3600 = vlaneseq
    %v3601 = vshrl.u32 %v3600, 7
    %v3602 = vsub.s32 %v3599, %v3601
    %v3603 = vrot.slane %v3589, %v3602
    %v3604 = vcombine.low %v3579, %v3587
    %v3605 = vcombine.high %v3579, %v3587
    %v3607 = vunpack.c.l.s4 1934713408
    %v3608 = vunpack.c.0.s8 %v3607
    %v3609 = vlaneseq
    %v3610 = vshrl.u32 %v3609, 7
    %v3611 = vsub.s32 %v3608, %v3610
    %v3612 = vrot.slane %v3604, %v3611
    %v3614 = vunpack.c.l.s4 1934713408
    %v3615 = vunpack.c.0.s8 %v3614
    %v3616 = vlaneseq
    %v3617 = vshrl.u32 %v3616, 7
    %v3618 = vsub.s32 %v3615, %v3617
    %v3619 = vrot.slane %v3605, %v3618
    %v3620 = vcombine.low %v3596, %v3612
    %v3621 = vcombine.high %v3596, %v3612
    %v3622 = vcombine.low %v3603, %v3619
    %v3623 = vcombine.high %v3603, %v3619
    %3626 = vrot.lane.b32.xlu0 %v3553, 8
    %v3627 = vpop.permute.xlu0 %3626
    %3628 = vrot.lane.b32.xlu0 %v3621, 8
    %v3629 = vpop.permute.xlu0 %3628
    %3634 = vrot.lane.b32.xlu0 %v3554, 16
    %v3635 = vpop.permute.xlu0 %3634
    %3636 = vrot.lane.b32.xlu0 %v3622, 16
    %v3637 = vpop.permute.xlu0 %3636
    %3642 = vrot.lane.b32.xlu0 %v3555, 24
    %v3643 = vpop.permute.xlu0 %3642
    %3644 = vrot.lane.b32.xlu0 %v3623, 24
    %v3645 = vpop.permute.xlu0 %3644
    %v3648 = vsel %vm2053, %v3552, %v3627
    %v3649 = vsel %vm2053, %v3620, %v3629
    %vm3650 = vcmask 130048
    %v3651 = vsel %vm3650, %v3648, %v3635
    %v3652 = vsel %vm3650, %v3649, %v3637
    %vm3653 = vcmask 195584
    %v3654 = vsel %vm3653, %v3651, %v3643
    %v3655 = vsel %vm3653, %v3652, %v3645
    %v3657 = vsel %vm2053, %v1393, 0
    %v3660 = vsel %vm2053, %v1685, 0
    %3662 = vmatprep.subr.mxu0 0.0
    %3663 = vmatpush1.xpose.msra.mxu0 %v3660
    %3664 = vmatprep.subr.mxu0 0.0
    %3665 = vmatpush1.xpose.msra.mxu0 0.0
    %3666 = vmatprep.subr.mxu0 0.0
    %3667 = vmatpush1.xpose.msra.mxu0 0.0
    %3668 = vmatprep.subr.mxu0 0.0
    %3669 = vmatpush1.xpose.msra.mxu0 0.0
    %3670 = vmatprep.subr.mxu0 0.0
    %3671 = vmatpush1.xpose.msra.mxu0 0.0
    %3672 = vmatprep.subr.mxu0 0.0
    %3673 = vmatpush1.xpose.msra.mxu0 0.0
    %3674 = vmatprep.subr.mxu0 0.0
    %3675 = vmatpush1.xpose.msra.mxu0 0.0
    %3676 = vmatprep.subr.mxu0 0.0
    %3677 = vmatpush1.xpose.msra.mxu0 0.0
    %3678 = vmatprep.subr.mxu0 0.0
    %3679 = vmatpush1.xpose.msra.mxu0 0.0
    %3680 = vmatprep.subr.mxu0 0.0
    %3681 = vmatpush1.xpose.msra.mxu0 0.0
    %3682 = vmatprep.subr.mxu0 0.0
    %3683 = vmatpush1.xpose.msra.mxu0 0.0
    %3684 = vmatprep.subr.mxu0 0.0
    %3685 = vmatpush1.xpose.msra.mxu0 0.0
    %3686 = vmatprep.subr.mxu0 0.0
    %3687 = vmatpush1.xpose.msra.mxu0 0.0
    %3688 = vmatprep.subr.mxu0 0.0
    %3689 = vmatpush1.xpose.msra.mxu0 0.0
    %3690 = vmatprep.subr.mxu0 0.0
    %3691 = vmatpush1.xpose.msra.mxu0 0.0
    %3692 = vmatprep.subr.mxu0 0.0
    %3693 = vmatpush1.xpose.msra.mxu0 0.0
    %3694 = vmatprep.subr.mxu0 0.0
    %3695 = vmatpush1.xpose.msra.mxu0 0.0
    %3696 = vmatprep.subr.mxu0 0.0
    %3697 = vmatpush1.xpose.msra.mxu0 0.0
    %3698 = vmatprep.subr.mxu0 0.0
    %3699 = vmatpush1.xpose.msra.mxu0 0.0
    %3700 = vmatprep.subr.mxu0 0.0
    %3701 = vmatpush1.xpose.msra.mxu0 0.0
    %3702 = vmatprep.subr.mxu0 0.0
    %3703 = vmatpush1.xpose.msra.mxu0 0.0
    %3704 = vmatprep.subr.mxu0 0.0
    %3705 = vmatpush1.xpose.msra.mxu0 0.0
    %3706 = vmatprep.subr.mxu0 0.0
    %3707 = vmatpush1.xpose.msra.mxu0 0.0
    %3708 = vmatprep.subr.mxu0 0.0
    %3709 = vmatpush1.xpose.msra.mxu0 0.0
    %3710 = vmatprep.subr.mxu0 0.0
    %3711 = vmatpush1.xpose.msra.mxu0 0.0
    %3712 = vmatprep.subr.mxu0 0.0
    %3713 = vmatpush1.xpose.msra.mxu0 0.0
    %3714 = vmatprep.subr.mxu0 0.0
    %3715 = vmatpush1.xpose.msra.mxu0 0.0
    %3716 = vmatprep.subr.mxu0 0.0
    %3717 = vmatpush1.xpose.msra.mxu0 0.0
    %3718 = vmatprep.subr.mxu0 0.0
    %3719 = vmatpush1.xpose.msra.mxu0 0.0
    %3720 = vmatprep.subr.mxu0 0.0
    %3721 = vmatpush1.xpose.msra.mxu0 0.0
    %3722 = vmatprep.subr.mxu0 0.0
    %3723 = vmatpush1.xpose.msra.mxu0 0.0
    %3724 = vmatprep.subr.mxu0 0.0
    %3725 = vmatpush1.xpose.msra.mxu0 0.0
    %3726 = vmatprep.mubr.f32.mxu0 0.0
    %3727 = vmatmul.mubr.f32.gmra.mrb[0].mxu0 %v3657
    %v3728 = vpop.f32.mrb[0].mxu0
    %v3729 = vadd.f32 0.0, %v3728
    %v3730 = vpop.f32.mrb[0].mxu0
    %3731 = vdwg.mxu0
    %v3733 = vsel %vm2053, %v1461, 0
    %v3736 = vsel %vm2053, %v1753, 0
    %3738 = vmatprep.subr.mxu0 0.0
    %3739 = vmatpush1.xpose.msra.mxu0 %v3736
    %3740 = vmatprep.subr.mxu0 0.0
    %3741 = vmatpush1.xpose.msra.mxu0 0.0
    %3742 = vmatprep.subr.mxu0 0.0
    %3743 = vmatpush1.xpose.msra.mxu0 0.0
    %3744 = vmatprep.subr.mxu0 0.0
    %3745 = vmatpush1.xpose.msra.mxu0 0.0
    %3746 = vmatprep.subr.mxu0 0.0
    %3747 = vmatpush1.xpose.msra.mxu0 0.0
    %3748 = vmatprep.subr.mxu0 0.0
    %3749 = vmatpush1.xpose.msra.mxu0 0.0
    %3750 = vmatprep.subr.mxu0 0.0
    %3751 = vmatpush1.xpose.msra.mxu0 0.0
    %3752 = vmatprep.subr.mxu0 0.0
    %3753 = vmatpush1.xpose.msra.mxu0 0.0
    %3754 = vmatprep.subr.mxu0 0.0
    %3755 = vmatpush1.xpose.msra.mxu0 0.0
    %3756 = vmatprep.subr.mxu0 0.0
    %3757 = vmatpush1.xpose.msra.mxu0 0.0
    %3758 = vmatprep.subr.mxu0 0.0
    %3759 = vmatpush1.xpose.msra.mxu0 0.0
    %3760 = vmatprep.subr.mxu0 0.0
    %3761 = vmatpush1.xpose.msra.mxu0 0.0
    %3762 = vmatprep.subr.mxu0 0.0
    %3763 = vmatpush1.xpose.msra.mxu0 0.0
    %3764 = vmatprep.subr.mxu0 0.0
    %3765 = vmatpush1.xpose.msra.mxu0 0.0
    %3766 = vmatprep.subr.mxu0 0.0
    %3767 = vmatpush1.xpose.msra.mxu0 0.0
    %3768 = vmatprep.subr.mxu0 0.0
    %3769 = vmatpush1.xpose.msra.mxu0 0.0
    %3770 = vmatprep.subr.mxu0 0.0
    %3771 = vmatpush1.xpose.msra.mxu0 0.0
    %3772 = vmatprep.subr.mxu0 0.0
    %3773 = vmatpush1.xpose.msra.mxu0 0.0
    %3774 = vmatprep.subr.mxu0 0.0
    %3775 = vmatpush1.xpose.msra.mxu0 0.0
    %3776 = vmatprep.subr.mxu0 0.0
    %3777 = vmatpush1.xpose.msra.mxu0 0.0
    %3778 = vmatprep.subr.mxu0 0.0
    %3779 = vmatpush1.xpose.msra.mxu0 0.0
    %3780 = vmatprep.subr.mxu0 0.0
    %3781 = vmatpush1.xpose.msra.mxu0 0.0
    %3782 = vmatprep.subr.mxu0 0.0
    %3783 = vmatpush1.xpose.msra.mxu0 0.0
    %3784 = vmatprep.subr.mxu0 0.0
    %3785 = vmatpush1.xpose.msra.mxu0 0.0
    %3786 = vmatprep.subr.mxu0 0.0
    %3787 = vmatpush1.xpose.msra.mxu0 0.0
    %3788 = vmatprep.subr.mxu0 0.0
    %3789 = vmatpush1.xpose.msra.mxu0 0.0
    %3790 = vmatprep.subr.mxu0 0.0
    %3791 = vmatpush1.xpose.msra.mxu0 0.0
    %3792 = vmatprep.subr.mxu0 0.0
    %3793 = vmatpush1.xpose.msra.mxu0 0.0
    %3794 = vmatprep.subr.mxu0 0.0
    %3795 = vmatpush1.xpose.msra.mxu0 0.0
    %3796 = vmatprep.subr.mxu0 0.0
    %3797 = vmatpush1.xpose.msra.mxu0 0.0
    %3798 = vmatprep.subr.mxu0 0.0
    %3799 = vmatpush1.xpose.msra.mxu0 0.0
    %3800 = vmatprep.subr.mxu0 0.0
    %3801 = vmatpush1.xpose.msra.mxu0 0.0
    %3802 = vmatprep.mubr.f32.mxu0 0.0
    %3803 = vmatmul.mubr.f32.gmra.mrb[0].mxu0 %v3733
    %v3804 = vpop.f32.mrb[0].mxu0
    %v3805 = vadd.f32 0.0, %v3804
    %v3806 = vpop.f32.mrb[0].mxu0
    %3807 = vdwg.mxu0
    %v3809 = vsel %vm2053, %v1394, 0
    %v3812 = vsel %vm2053, %v1686, 0
    %3814 = vmatprep.subr.mxu0 0.0
    %3815 = vmatpush1.xpose.msra.mxu0 %v3812
    %3816 = vmatprep.subr.mxu0 0.0
    %3817 = vmatpush1.xpose.msra.mxu0 0.0
    %3818 = vmatprep.subr.mxu0 0.0
    %3819 = vmatpush1.xpose.msra.mxu0 0.0
    %3820 = vmatprep.subr.mxu0 0.0
    %3821 = vmatpush1.xpose.msra.mxu0 0.0
    %3822 = vmatprep.subr.mxu0 0.0
    %3823 = vmatpush1.xpose.msra.mxu0 0.0
    %3824 = vmatprep.subr.mxu0 0.0
    %3825 = vmatpush1.xpose.msra.mxu0 0.0
    %3826 = vmatprep.subr.mxu0 0.0
    %3827 = vmatpush1.xpose.msra.mxu0 0.0
    %3828 = vmatprep.subr.mxu0 0.0
    %3829 = vmatpush1.xpose.msra.mxu0 0.0
    %3830 = vmatprep.subr.mxu0 0.0
    %3831 = vmatpush1.xpose.msra.mxu0 0.0
    %3832 = vmatprep.subr.mxu0 0.0
    %3833 = vmatpush1.xpose.msra.mxu0 0.0
    %3834 = vmatprep.subr.mxu0 0.0
    %3835 = vmatpush1.xpose.msra.mxu0 0.0
    %3836 = vmatprep.subr.mxu0 0.0
    %3837 = vmatpush1.xpose.msra.mxu0 0.0
    %3838 = vmatprep.subr.mxu0 0.0
    %3839 = vmatpush1.xpose.msra.mxu0 0.0
    %3840 = vmatprep.subr.mxu0 0.0
    %3841 = vmatpush1.xpose.msra.mxu0 0.0
    %3842 = vmatprep.subr.mxu0 0.0
    %3843 = vmatpush1.xpose.msra.mxu0 0.0
    %3844 = vmatprep.subr.mxu0 0.0
    %3845 = vmatpush1.xpose.msra.mxu0 0.0
    %3846 = vmatprep.subr.mxu0 0.0
    %3847 = vmatpush1.xpose.msra.mxu0 0.0
    %3848 = vmatprep.subr.mxu0 0.0
    %3849 = vmatpush1.xpose.msra.mxu0 0.0
    %3850 = vmatprep.subr.mxu0 0.0
    %3851 = vmatpush1.xpose.msra.mxu0 0.0
    %3852 = vmatprep.subr.mxu0 0.0
    %3853 = vmatpush1.xpose.msra.mxu0 0.0
    %3854 = vmatprep.subr.mxu0 0.0
    %3855 = vmatpush1.xpose.msra.mxu0 0.0
    %3856 = vmatprep.subr.mxu0 0.0
    %3857 = vmatpush1.xpose.msra.mxu0 0.0
    %3858 = vmatprep.subr.mxu0 0.0
    %3859 = vmatpush1.xpose.msra.mxu0 0.0
    %3860 = vmatprep.subr.mxu0 0.0
    %3861 = vmatpush1.xpose.msra.mxu0 0.0
    %3862 = vmatprep.subr.mxu0 0.0
    %3863 = vmatpush1.xpose.msra.mxu0 0.0
    %3864 = vmatprep.subr.mxu0 0.0
    %3865 = vmatpush1.xpose.msra.mxu0 0.0
    %3866 = vmatprep.subr.mxu0 0.0
    %3867 = vmatpush1.xpose.msra.mxu0 0.0
    %3868 = vmatprep.subr.mxu0 0.0
    %3869 = vmatpush1.xpose.msra.mxu0 0.0
    %3870 = vmatprep.subr.mxu0 0.0
    %3871 = vmatpush1.xpose.msra.mxu0 0.0
    %3872 = vmatprep.subr.mxu0 0.0
    %3873 = vmatpush1.xpose.msra.mxu0 0.0
    %3874 = vmatprep.subr.mxu0 0.0
    %3875 = vmatpush1.xpose.msra.mxu0 0.0
    %3876 = vmatprep.subr.mxu0 0.0
    %3877 = vmatpush1.xpose.msra.mxu0 0.0
    %3878 = vmatprep.mubr.f32.mxu0 0.0
    %3879 = vmatmul.mubr.f32.gmra.mrb[0].mxu0 %v3809
    %v3880 = vpop.f32.mrb[0].mxu0
    %v3881 = vadd.f32 0.0, %v3880
    %v3882 = vpop.f32.mrb[0].mxu0
    %3883 = vdwg.mxu0
    %v3885 = vsel %vm2053, %v1462, 0
    %v3888 = vsel %vm2053, %v1754, 0
    %3890 = vmatprep.subr.mxu0 0.0
    %3891 = vmatpush1.xpose.msra.mxu0 %v3888
    %3892 = vmatprep.subr.mxu0 0.0
    %3893 = vmatpush1.xpose.msra.mxu0 0.0
    %3894 = vmatprep.subr.mxu0 0.0
    %3895 = vmatpush1.xpose.msra.mxu0 0.0
    %3896 = vmatprep.subr.mxu0 0.0
    %3897 = vmatpush1.xpose.msra.mxu0 0.0
    %3898 = vmatprep.subr.mxu0 0.0
    %3899 = vmatpush1.xpose.msra.mxu0 0.0
    %3900 = vmatprep.subr.mxu0 0.0
    %3901 = vmatpush1.xpose.msra.mxu0 0.0
    %3902 = vmatprep.subr.mxu0 0.0
    %3903 = vmatpush1.xpose.msra.mxu0 0.0
    %3904 = vmatprep.subr.mxu0 0.0
    %3905 = vmatpush1.xpose.msra.mxu0 0.0
    %3906 = vmatprep.subr.mxu0 0.0
    %3907 = vmatpush1.xpose.msra.mxu0 0.0
    %3908 = vmatprep.subr.mxu0 0.0
    %3909 = vmatpush1.xpose.msra.mxu0 0.0
    %3910 = vmatprep.subr.mxu0 0.0
    %3911 = vmatpush1.xpose.msra.mxu0 0.0
    %3912 = vmatprep.subr.mxu0 0.0
    %3913 = vmatpush1.xpose.msra.mxu0 0.0
    %3914 = vmatprep.subr.mxu0 0.0
    %3915 = vmatpush1.xpose.msra.mxu0 0.0
    %3916 = vmatprep.subr.mxu0 0.0
    %3917 = vmatpush1.xpose.msra.mxu0 0.0
    %3918 = vmatprep.subr.mxu0 0.0
    %3919 = vmatpush1.xpose.msra.mxu0 0.0
    %3920 = vmatprep.subr.mxu0 0.0
    %3921 = vmatpush1.xpose.msra.mxu0 0.0
    %3922 = vmatprep.subr.mxu0 0.0
    %3923 = vmatpush1.xpose.msra.mxu0 0.0
    %3924 = vmatprep.subr.mxu0 0.0
    %3925 = vmatpush1.xpose.msra.mxu0 0.0
    %3926 = vmatprep.subr.mxu0 0.0
    %3927 = vmatpush1.xpose.msra.mxu0 0.0
    %3928 = vmatprep.subr.mxu0 0.0
    %3929 = vmatpush1.xpose.msra.mxu0 0.0
    %3930 = vmatprep.subr.mxu0 0.0
    %3931 = vmatpush1.xpose.msra.mxu0 0.0
    %3932 = vmatprep.subr.mxu0 0.0
    %3933 = vmatpush1.xpose.msra.mxu0 0.0
    %3934 = vmatprep.subr.mxu0 0.0
    %3935 = vmatpush1.xpose.msra.mxu0 0.0
    %3936 = vmatprep.subr.mxu0 0.0
    %3937 = vmatpush1.xpose.msra.mxu0 0.0
    %3938 = vmatprep.subr.mxu0 0.0
    %3939 = vmatpush1.xpose.msra.mxu0 0.0
    %3940 = vmatprep.subr.mxu0 0.0
    %3941 = vmatpush1.xpose.msra.mxu0 0.0
    %3942 = vmatprep.subr.mxu0 0.0
    %3943 = vmatpush1.xpose.msra.mxu0 0.0
    %3944 = vmatprep.subr.mxu0 0.0
    %3945 = vmatpush1.xpose.msra.mxu0 0.0
    %3946 = vmatprep.subr.mxu0 0.0
    %3947 = vmatpush1.xpose.msra.mxu0 0.0
    %3948 = vmatprep.subr.mxu0 0.0
    %3949 = vmatpush1.xpose.msra.mxu0 0.0
    %3950 = vmatprep.subr.mxu0 0.0
    %3951 = vmatpush1.xpose.msra.mxu0 0.0
    %3952 = vmatprep.subr.mxu0 0.0
    %3953 = vmatpush1.xpose.msra.mxu0 0.0
    %3954 = vmatprep.mubr.f32.mxu0 0.0
    %3955 = vmatmul.mubr.f32.gmra.mrb[0].mxu0 %v3885
    %v3956 = vpop.f32.mrb[0].mxu0
    %v3957 = vadd.f32 0.0, %v3956
    %v3958 = vpop.f32.mrb[0].mxu0
    %3959 = vdwg.mxu0
    %v3961 = vsel %vm2053, %v1395, 0
    %v3964 = vsel %vm2053, %v1687, 0
    %3966 = vmatprep.subr.mxu0 0.0
    %3967 = vmatpush1.xpose.msra.mxu0 %v3964
    %3968 = vmatprep.subr.mxu0 0.0
    %3969 = vmatpush1.xpose.msra.mxu0 0.0
    %3970 = vmatprep.subr.mxu0 0.0
    %3971 = vmatpush1.xpose.msra.mxu0 0.0
    %3972 = vmatprep.subr.mxu0 0.0
    %3973 = vmatpush1.xpose.msra.mxu0 0.0
    %3974 = vmatprep.subr.mxu0 0.0
    %3975 = vmatpush1.xpose.msra.mxu0 0.0
    %3976 = vmatprep.subr.mxu0 0.0
    %3977 = vmatpush1.xpose.msra.mxu0 0.0
    %3978 = vmatprep.subr.mxu0 0.0
    %3979 = vmatpush1.xpose.msra.mxu0 0.0
    %3980 = vmatprep.subr.mxu0 0.0
    %3981 = vmatpush1.xpose.msra.mxu0 0.0
    %3982 = vmatprep.subr.mxu0 0.0
    %3983 = vmatpush1.xpose.msra.mxu0 0.0
    %3984 = vmatprep.subr.mxu0 0.0
    %3985 = vmatpush1.xpose.msra.mxu0 0.0
    %3986 = vmatprep.subr.mxu0 0.0
    %3987 = vmatpush1.xpose.msra.mxu0 0.0
    %3988 = vmatprep.subr.mxu0 0.0
    %3989 = vmatpush1.xpose.msra.mxu0 0.0
    %3990 = vmatprep.subr.mxu0 0.0
    %3991 = vmatpush1.xpose.msra.mxu0 0.0
    %3992 = vmatprep.subr.mxu0 0.0
    %3993 = vmatpush1.xpose.msra.mxu0 0.0
    %3994 = vmatprep.subr.mxu0 0.0
    %3995 = vmatpush1.xpose.msra.mxu0 0.0
    %3996 = vmatprep.subr.mxu0 0.0
    %3997 = vmatpush1.xpose.msra.mxu0 0.0
    %3998 = vmatprep.subr.mxu0 0.0
    %3999 = vmatpush1.xpose.msra.mxu0 0.0
    %4000 = vmatprep.subr.mxu0 0.0
    %4001 = vmatpush1.xpose.msra.mxu0 0.0
    %4002 = vmatprep.subr.mxu0 0.0
    %4003 = vmatpush1.xpose.msra.mxu0 0.0
    %4004 = vmatprep.subr.mxu0 0.0
    %4005 = vmatpush1.xpose.msra.mxu0 0.0
    %4006 = vmatprep.subr.mxu0 0.0
    %4007 = vmatpush1.xpose.msra.mxu0 0.0
    %4008 = vmatprep.subr.mxu0 0.0
    %4009 = vmatpush1.xpose.msra.mxu0 0.0
    %4010 = vmatprep.subr.mxu0 0.0
    %4011 = vmatpush1.xpose.msra.mxu0 0.0
    %4012 = vmatprep.subr.mxu0 0.0
    %4013 = vmatpush1.xpose.msra.mxu0 0.0
    %4014 = vmatprep.subr.mxu0 0.0
    %4015 = vmatpush1.xpose.msra.mxu0 0.0
    %4016 = vmatprep.subr.mxu0 0.0
    %4017 = vmatpush1.xpose.msra.mxu0 0.0
    %4018 = vmatprep.subr.mxu0 0.0
    %4019 = vmatpush1.xpose.msra.mxu0 0.0
    %4020 = vmatprep.subr.mxu0 0.0
    %4021 = vmatpush1.xpose.msra.mxu0 0.0
    %4022 = vmatprep.subr.mxu0 0.0
    %4023 = vmatpush1.xpose.msra.mxu0 0.0
    %4024 = vmatprep.subr.mxu0 0.0
    %4025 = vmatpush1.xpose.msra.mxu0 0.0
    %4026 = vmatprep.subr.mxu0 0.0
    %4027 = vmatpush1.xpose.msra.mxu0 0.0
    %4028 = vmatprep.subr.mxu0 0.0
    %4029 = vmatpush1.xpose.msra.mxu0 0.0
    %4030 = vmatprep.mubr.f32.mxu0 0.0
    %4031 = vmatmul.mubr.f32.gmra.mrb[0].mxu0 %v3961
    %v4032 = vpop.f32.mrb[0].mxu0
    %v4033 = vadd.f32 0.0, %v4032
    %v4034 = vpop.f32.mrb[0].mxu0
    %4035 = vdwg.mxu0
    %v4037 = vsel %vm2053, %v1463, 0
    %v4040 = vsel %vm2053, %v1755, 0
    %4042 = vmatprep.subr.mxu0 0.0
    %4043 = vmatpush1.xpose.msra.mxu0 %v4040
    %4044 = vmatprep.subr.mxu0 0.0
    %4045 = vmatpush1.xpose.msra.mxu0 0.0
    %4046 = vmatprep.subr.mxu0 0.0
    %4047 = vmatpush1.xpose.msra.mxu0 0.0
    %4048 = vmatprep.subr.mxu0 0.0
    %4049 = vmatpush1.xpose.msra.mxu0 0.0
    %4050 = vmatprep.subr.mxu0 0.0
    %4051 = vmatpush1.xpose.msra.mxu0 0.0
    %4052 = vmatprep.subr.mxu0 0.0
    %4053 = vmatpush1.xpose.msra.mxu0 0.0
    %4054 = vmatprep.subr.mxu0 0.0
    %4055 = vmatpush1.xpose.msra.mxu0 0.0
    %4056 = vmatprep.subr.mxu0 0.0
    %4057 = vmatpush1.xpose.msra.mxu0 0.0
    %4058 = vmatprep.subr.mxu0 0.0
    %4059 = vmatpush1.xpose.msra.mxu0 0.0
    %4060 = vmatprep.subr.mxu0 0.0
    %4061 = vmatpush1.xpose.msra.mxu0 0.0
    %4062 = vmatprep.subr.mxu0 0.0
    %4063 = vmatpush1.xpose.msra.mxu0 0.0
    %4064 = vmatprep.subr.mxu0 0.0
    %4065 = vmatpush1.xpose.msra.mxu0 0.0
    %4066 = vmatprep.subr.mxu0 0.0
    %4067 = vmatpush1.xpose.msra.mxu0 0.0
    %4068 = vmatprep.subr.mxu0 0.0
    %4069 = vmatpush1.xpose.msra.mxu0 0.0
    %4070 = vmatprep.subr.mxu0 0.0
    %4071 = vmatpush1.xpose.msra.mxu0 0.0
    %4072 = vmatprep.subr.mxu0 0.0
    %4073 = vmatpush1.xpose.msra.mxu0 0.0
    %4074 = vmatprep.subr.mxu0 0.0
    %4075 = vmatpush1.xpose.msra.mxu0 0.0
    %4076 = vmatprep.subr.mxu0 0.0
    %4077 = vmatpush1.xpose.msra.mxu0 0.0
    %4078 = vmatprep.subr.mxu0 0.0
    %4079 = vmatpush1.xpose.msra.mxu0 0.0
    %4080 = vmatprep.subr.mxu0 0.0
    %4081 = vmatpush1.xpose.msra.mxu0 0.0
    %4082 = vmatprep.subr.mxu0 0.0
    %4083 = vmatpush1.xpose.msra.mxu0 0.0
    %4084 = vmatprep.subr.mxu0 0.0
    %4085 = vmatpush1.xpose.msra.mxu0 0.0
    %4086 = vmatprep.subr.mxu0 0.0
    %4087 = vmatpush1.xpose.msra.mxu0 0.0
    %4088 = vmatprep.subr.mxu0 0.0
    %4089 = vmatpush1.xpose.msra.mxu0 0.0
    %4090 = vmatprep.subr.mxu0 0.0
    %4091 = vmatpush1.xpose.msra.mxu0 0.0
    %4092 = vmatprep.subr.mxu0 0.0
    %4093 = vmatpush1.xpose.msra.mxu0 0.0
    %4094 = vmatprep.subr.mxu0 0.0
    %4095 = vmatpush1.xpose.msra.mxu0 0.0
    %4096 = vmatprep.subr.mxu0 0.0
    %4097 = vmatpush1.xpose.msra.mxu0 0.0
    %4098 = vmatprep.subr.mxu0 0.0
    %4099 = vmatpush1.xpose.msra.mxu0 0.0
    %4100 = vmatprep.subr.mxu0 0.0
    %4101 = vmatpush1.xpose.msra.mxu0 0.0
    %4102 = vmatprep.subr.mxu0 0.0
    %4103 = vmatpush1.xpose.msra.mxu0 0.0
    %4104 = vmatprep.subr.mxu0 0.0
    %4105 = vmatpush1.xpose.msra.mxu0 0.0
    %4106 = vmatprep.mubr.f32.mxu0 0.0
    %4107 = vmatmul.mubr.f32.gmra.mrb[0].mxu0 %v4037
    %v4108 = vpop.f32.mrb[0].mxu0
    %v4109 = vadd.f32 0.0, %v4108
    %v4110 = vpop.f32.mrb[0].mxu0
    %4111 = vdwg.mxu0
    %v4113 = vsel %vm2053, %v1396, 0
    %v4116 = vsel %vm2053, %v1688, 0
    %4118 = vmatprep.subr.mxu0 0.0
    %4119 = vmatpush1.xpose.msra.mxu0 %v4116
    %4120 = vmatprep.subr.mxu0 0.0
    %4121 = vmatpush1.xpose.msra.mxu0 0.0
    %4122 = vmatprep.subr.mxu0 0.0
    %4123 = vmatpush1.xpose.msra.mxu0 0.0
    %4124 = vmatprep.subr.mxu0 0.0
    %4125 = vmatpush1.xpose.msra.mxu0 0.0
    %4126 = vmatprep.subr.mxu0 0.0
    %4127 = vmatpush1.xpose.msra.mxu0 0.0
    %4128 = vmatprep.subr.mxu0 0.0
    %4129 = vmatpush1.xpose.msra.mxu0 0.0
    %4130 = vmatprep.subr.mxu0 0.0
    %4131 = vmatpush1.xpose.msra.mxu0 0.0
    %4132 = vmatprep.subr.mxu0 0.0
    %4133 = vmatpush1.xpose.msra.mxu0 0.0
    %4134 = vmatprep.subr.mxu0 0.0
    %4135 = vmatpush1.xpose.msra.mxu0 0.0
    %4136 = vmatprep.subr.mxu0 0.0
    %4137 = vmatpush1.xpose.msra.mxu0 0.0
    %4138 = vmatprep.subr.mxu0 0.0
    %4139 = vmatpush1.xpose.msra.mxu0 0.0
    %4140 = vmatprep.subr.mxu0 0.0
    %4141 = vmatpush1.xpose.msra.mxu0 0.0
    %4142 = vmatprep.subr.mxu0 0.0
    %4143 = vmatpush1.xpose.msra.mxu0 0.0
    %4144 = vmatprep.subr.mxu0 0.0
    %4145 = vmatpush1.xpose.msra.mxu0 0.0
    %4146 = vmatprep.subr.mxu0 0.0
    %4147 = vmatpush1.xpose.msra.mxu0 0.0
    %4148 = vmatprep.subr.mxu0 0.0
    %4149 = vmatpush1.xpose.msra.mxu0 0.0
    %4150 = vmatprep.subr.mxu0 0.0
    %4151 = vmatpush1.xpose.msra.mxu0 0.0
    %4152 = vmatprep.subr.mxu0 0.0
    %4153 = vmatpush1.xpose.msra.mxu0 0.0
    %4154 = vmatprep.subr.mxu0 0.0
    %4155 = vmatpush1.xpose.msra.mxu0 0.0
    %4156 = vmatprep.subr.mxu0 0.0
    %4157 = vmatpush1.xpose.msra.mxu0 0.0
    %4158 = vmatprep.subr.mxu0 0.0
    %4159 = vmatpush1.xpose.msra.mxu0 0.0
    %4160 = vmatprep.subr.mxu0 0.0
    %4161 = vmatpush1.xpose.msra.mxu0 0.0
    %4162 = vmatprep.subr.mxu0 0.0
    %4163 = vmatpush1.xpose.msra.mxu0 0.0
    %4164 = vmatprep.subr.mxu0 0.0
    %4165 = vmatpush1.xpose.msra.mxu0 0.0
    %4166 = vmatprep.subr.mxu0 0.0
    %4167 = vmatpush1.xpose.msra.mxu0 0.0
    %4168 = vmatprep.subr.mxu0 0.0
    %4169 = vmatpush1.xpose.msra.mxu0 0.0
    %4170 = vmatprep.subr.mxu0 0.0
    %4171 = vmatpush1.xpose.msra.mxu0 0.0
    %4172 = vmatprep.subr.mxu0 0.0
    %4173 = vmatpush1.xpose.msra.mxu0 0.0
    %4174 = vmatprep.subr.mxu0 0.0
    %4175 = vmatpush1.xpose.msra.mxu0 0.0
    %4176 = vmatprep.subr.mxu0 0.0
    %4177 = vmatpush1.xpose.msra.mxu0 0.0
    %4178 = vmatprep.subr.mxu0 0.0
    %4179 = vmatpush1.xpose.msra.mxu0 0.0
    %4180 = vmatprep.subr.mxu0 0.0
    %4181 = vmatpush1.xpose.msra.mxu0 0.0
    %4182 = vmatprep.mubr.f32.mxu0 0.0
    %4183 = vmatmul.mubr.f32.gmra.mrb[0].mxu0 %v4113
    %v4184 = vpop.f32.mrb[0].mxu0
    %v4185 = vadd.f32 0.0, %v4184
    %v4186 = vpop.f32.mrb[0].mxu0
    %4187 = vdwg.mxu0
    %v4189 = vsel %vm2053, %v1464, 0
    %v4192 = vsel %vm2053, %v1756, 0
    %4194 = vmatprep.subr.mxu0 0.0
    %4195 = vmatpush1.xpose.msra.mxu0 %v4192
    %4196 = vmatprep.subr.mxu0 0.0
    %4197 = vmatpush1.xpose.msra.mxu0 0.0
    %4198 = vmatprep.subr.mxu0 0.0
    %4199 = vmatpush1.xpose.msra.mxu0 0.0
    %4200 = vmatprep.subr.mxu0 0.0
    %4201 = vmatpush1.xpose.msra.mxu0 0.0
    %4202 = vmatprep.subr.mxu0 0.0
    %4203 = vmatpush1.xpose.msra.mxu0 0.0
    %4204 = vmatprep.subr.mxu0 0.0
    %4205 = vmatpush1.xpose.msra.mxu0 0.0
    %4206 = vmatprep.subr.mxu0 0.0
    %4207 = vmatpush1.xpose.msra.mxu0 0.0
    %4208 = vmatprep.subr.mxu0 0.0
    %4209 = vmatpush1.xpose.msra.mxu0 0.0
    %4210 = vmatprep.subr.mxu0 0.0
    %4211 = vmatpush1.xpose.msra.mxu0 0.0
    %4212 = vmatprep.subr.mxu0 0.0
    %4213 = vmatpush1.xpose.msra.mxu0 0.0
    %4214 = vmatprep.subr.mxu0 0.0
    %4215 = vmatpush1.xpose.msra.mxu0 0.0
    %4216 = vmatprep.subr.mxu0 0.0
    %4217 = vmatpush1.xpose.msra.mxu0 0.0
    %4218 = vmatprep.subr.mxu0 0.0
    %4219 = vmatpush1.xpose.msra.mxu0 0.0
    %4220 = vmatprep.subr.mxu0 0.0
    %4221 = vmatpush1.xpose.msra.mxu0 0.0
    %4222 = vmatprep.subr.mxu0 0.0
    %4223 = vmatpush1.xpose.msra.mxu0 0.0
    %4224 = vmatprep.subr.mxu0 0.0
    %4225 = vmatpush1.xpose.msra.mxu0 0.0
    %4226 = vmatprep.subr.mxu0 0.0
    %4227 = vmatpush1.xpose.msra.mxu0 0.0
    %4228 = vmatprep.subr.mxu0 0.0
    %4229 = vmatpush1.xpose.msra.mxu0 0.0
    %4230 = vmatprep.subr.mxu0 0.0
    %4231 = vmatpush1.xpose.msra.mxu0 0.0
    %4232 = vmatprep.subr.mxu0 0.0
    %4233 = vmatpush1.xpose.msra.mxu0 0.0
    %4234 = vmatprep.subr.mxu0 0.0
    %4235 = vmatpush1.xpose.msra.mxu0 0.0
    %4236 = vmatprep.subr.mxu0 0.0
    %4237 = vmatpush1.xpose.msra.mxu0 0.0
    %4238 = vmatprep.subr.mxu0 0.0
    %4239 = vmatpush1.xpose.msra.mxu0 0.0
    %4240 = vmatprep.subr.mxu0 0.0
    %4241 = vmatpush1.xpose.msra.mxu0 0.0
    %4242 = vmatprep.subr.mxu0 0.0
    %4243 = vmatpush1.xpose.msra.mxu0 0.0
    %4244 = vmatprep.subr.mxu0 0.0
    %4245 = vmatpush1.xpose.msra.mxu0 0.0
    %4246 = vmatprep.subr.mxu0 0.0
    %4247 = vmatpush1.xpose.msra.mxu0 0.0
    %4248 = vmatprep.subr.mxu0 0.0
    %4249 = vmatpush1.xpose.msra.mxu0 0.0
    %4250 = vmatprep.subr.mxu0 0.0
    %4251 = vmatpush1.xpose.msra.mxu0 0.0
    %4252 = vmatprep.subr.mxu0 0.0
    %4253 = vmatpush1.xpose.msra.mxu0 0.0
    %4254 = vmatprep.subr.mxu0 0.0
    %4255 = vmatpush1.xpose.msra.mxu0 0.0
    %4256 = vmatprep.subr.mxu0 0.0
    %4257 = vmatpush1.xpose.msra.mxu0 0.0
    %4258 = vmatprep.mubr.f32.mxu0 0.0
    %4259 = vmatmul.mubr.f32.gmra.mrb[0].mxu0 %v4189
    %v4260 = vpop.f32.mrb[0].mxu0
    %v4261 = vadd.f32 0.0, %v4260
    %v4262 = vpop.f32.mrb[0].mxu0
    %4263 = vdwg.mxu0
    %v4264 = vmul.f32 %v3729, 0.35355338
    %v4265 = vmul.f32 %v3805, 0.35355338
    %v4266 = vmul.f32 %v3881, 0.35355338
    %v4267 = vmul.f32 %v3957, 0.35355338
    %v4268 = vmul.f32 %v4033, 0.35355338
    %v4269 = vmul.f32 %v4109, 0.35355338
    %v4270 = vmul.f32 %v4185, 0.35355338
    %v4271 = vmul.f32 %v4261, 0.35355338
    %v4272 = vsel %vm145, 1, 0
    %v4273 = vsel %vm146, 1, 0
    %vm4274 = vcmp.eq.s32.totalorder %v4272, 1
    %vm4275 = vcmp.eq.s32.totalorder %v4273, 1
    %v4276 = vsel %vm4274, %v4264, -1000000.0
    %v4277 = vsel %vm4275, %v4265, -1000000.0
    %v4278 = vsel %vm4274, %v4266, -1000000.0
    %v4279 = vsel %vm4275, %v4267, -1000000.0
    %v4280 = vsel %vm4274, %v4268, -1000000.0
    %v4281 = vsel %vm4275, %v4269, -1000000.0
    %v4282 = vsel %vm4274, %v4270, -1000000.0
    %v4283 = vsel %vm4275, %v4271, -1000000.0
    %v4284 = vsel %vm2053, %v4276, -inf
    %4285 = vmax.xlane.f32.xlu0 %v4284
    %v4286 = vpop.xlane.xlu0 %4285
    %v4287 = vsel %vm2053, %v4277, -inf
    %4288 = vmax.xlane.f32.xlu0 %v4287
    %v4289 = vpop.xlane.xlu0 %4288
    %v4290 = vsel %vm2053, %v4278, -inf
    %4291 = vmax.xlane.f32.xlu0 %v4290
    %v4292 = vpop.xlane.xlu0 %4291
    %v4293 = vsel %vm2053, %v4279, -inf
    %4294 = vmax.xlane.f32.xlu0 %v4293
    %v4295 = vpop.xlane.xlu0 %4294
    %v4296 = vsel %vm2053, %v4280, -inf
    %4297 = vmax.xlane.f32.xlu0 %v4296
    %v4298 = vpop.xlane.xlu0 %4297
    %v4299 = vsel %vm2053, %v4281, -inf
    %4300 = vmax.xlane.f32.xlu0 %v4299
    %v4301 = vpop.xlane.xlu0 %4300
    %v4302 = vsel %vm2053, %v4282, -inf
    %4303 = vmax.xlane.f32.xlu0 %v4302
    %v4304 = vpop.xlane.xlu0 %4303
    %v4305 = vsel %vm2053, %v4283, -inf
    %4306 = vmax.xlane.f32.xlu0 %v4305
    %v4307 = vpop.xlane.xlu0 %4306
    %v4308 = vsub.f32 %v4276, %v4286
    %v4309 = vsub.f32 %v4277, %v4289
    %v4310 = vsub.f32 %v4278, %v4292
    %v4311 = vsub.f32 %v4279, %v4295
    %v4312 = vsub.f32 %v4280, %v4298
    %v4313 = vsub.f32 %v4281, %v4301
    %v4314 = vsub.f32 %v4282, %v4304
    %v4315 = vsub.f32 %v4283, %v4307
    %v4316 = vmul.f32 %v4308, 1.442695
    %v4317 = vpow.pop %v4316
    %v4318 = vmul.f32 %v4309, 1.442695
    %v4319 = vpow.pop %v4318
    %v4320 = vmul.f32 %v4310, 1.442695
    %v4321 = vpow.pop %v4320
    %v4322 = vmul.f32 %v4311, 1.442695
    %v4323 = vpow.pop %v4322
    %v4324 = vmul.f32 %v4312, 1.442695
    %v4325 = vpow.pop %v4324
    %v4326 = vmul.f32 %v4313, 1.442695
    %v4327 = vpow.pop %v4326
    %v4328 = vmul.f32 %v4314, 1.442695
    %v4329 = vpow.pop %v4328
    %v4330 = vmul.f32 %v4315, 1.442695
    %v4331 = vpow.pop %v4330
    %v4332 = vsel %vm2053, %v4317, 0.0
    %4333 = vadd.xlane.f32.xlu0 %v4332
    %v4334 = vpop.xlane.xlu0 %4333
    %v4335 = vsel %vm2053, %v4319, 0.0
    %4336 = vadd.xlane.f32.xlu0 %v4335
    %v4337 = vpop.xlane.xlu0 %4336
    %v4338 = vsel %vm2053, %v4321, 0.0
    %4339 = vadd.xlane.f32.xlu0 %v4338
    %v4340 = vpop.xlane.xlu0 %4339
    %v4341 = vsel %vm2053, %v4323, 0.0
    %4342 = vadd.xlane.f32.xlu0 %v4341
    %v4343 = vpop.xlane.xlu0 %4342
    %v4344 = vsel %vm2053, %v4325, 0.0
    %4345 = vadd.xlane.f32.xlu0 %v4344
    %v4346 = vpop.xlane.xlu0 %4345
    %v4347 = vsel %vm2053, %v4327, 0.0
    %4348 = vadd.xlane.f32.xlu0 %v4347
    %v4349 = vpop.xlane.xlu0 %4348
    %v4350 = vsel %vm2053, %v4329, 0.0
    %4351 = vadd.xlane.f32.xlu0 %v4350
    %v4352 = vpop.xlane.xlu0 %4351
    %v4353 = vsel %vm2053, %v4331, 0.0
    %4354 = vadd.xlane.f32.xlu0 %v4353
    %v4355 = vpop.xlane.xlu0 %4354
    %v4356 = vrcp.pop %v4334
    %v4357 = vrcp.pop %v4337
    %v4358 = vrcp.pop %v4340
    %v4359 = vrcp.pop %v4343
    %v4360 = vrcp.pop %v4346
    %v4361 = vrcp.pop %v4349
    %v4362 = vrcp.pop %v4352
    %v4363 = vrcp.pop %v4355
    %v4364 = vmul.f32 %v4317, %v4356
    %v4365 = vmul.f32 %v4319, %v4357
    %v4366 = vmul.f32 %v4321, %v4358
    %v4367 = vmul.f32 %v4323, %v4359
    %v4368 = vmul.f32 %v4325, %v4360
    %v4369 = vmul.f32 %v4327, %v4361
    %v4370 = vmul.f32 %v4329, %v4362
    %v4371 = vmul.f32 %v4331, %v4363
    %v4373 = vsel %vm2053, %v4364, 0
    %4375 = vmatprep.subr.mxu0 0.0
    %4376 = vmatpush1.msra.mxu0 %v1981
    %4377 = vmatprep.subr.mxu0 0.0
    %4378 = vmatpush1.msra.mxu0 0.0
    %4379 = vmatprep.subr.mxu0 0.0
    %4380 = vmatpush1.msra.mxu0 0.0
    %4381 = vmatprep.subr.mxu0 0.0
    %4382 = vmatpush1.msra.mxu0 0.0
    %4383 = vmatprep.subr.mxu0 0.0
    %4384 = vmatpush1.msra.mxu0 0.0
    %4385 = vmatprep.subr.mxu0 0.0
    %4386 = vmatpush1.msra.mxu0 0.0
    %4387 = vmatprep.subr.mxu0 0.0
    %4388 = vmatpush1.msra.mxu0 0.0
    %4389 = vmatprep.subr.mxu0 0.0
    %4390 = vmatpush1.msra.mxu0 0.0
    %4391 = vmatprep.subr.mxu0 0.0
    %4392 = vmatpush1.msra.mxu0 0.0
    %4393 = vmatprep.subr.mxu0 0.0
    %4394 = vmatpush1.msra.mxu0 0.0
    %4395 = vmatprep.subr.mxu0 0.0
    %4396 = vmatpush1.msra.mxu0 0.0
    %4397 = vmatprep.subr.mxu0 0.0
    %4398 = vmatpush1.msra.mxu0 0.0
    %4399 = vmatprep.subr.mxu0 0.0
    %4400 = vmatpush1.msra.mxu0 0.0
    %4401 = vmatprep.subr.mxu0 0.0
    %4402 = vmatpush1.msra.mxu0 0.0
    %4403 = vmatprep.subr.mxu0 0.0
    %4404 = vmatpush1.msra.mxu0 0.0
    %4405 = vmatprep.subr.mxu0 0.0
    %4406 = vmatpush1.msra.mxu0 0.0
    %4407 = vmatprep.subr.mxu0 0.0
    %4408 = vmatpush1.msra.mxu0 0.0
    %4409 = vmatprep.subr.mxu0 0.0
    %4410 = vmatpush1.msra.mxu0 0.0
    %4411 = vmatprep.subr.mxu0 0.0
    %4412 = vmatpush1.msra.mxu0 0.0
    %4413 = vmatprep.subr.mxu0 0.0
    %4414 = vmatpush1.msra.mxu0 0.0
    %4415 = vmatprep.subr.mxu0 0.0
    %4416 = vmatpush1.msra.mxu0 0.0
    %4417 = vmatprep.subr.mxu0 0.0
    %4418 = vmatpush1.msra.mxu0 0.0
    %4419 = vmatprep.subr.mxu0 0.0
    %4420 = vmatpush1.msra.mxu0 0.0
    %4421 = vmatprep.subr.mxu0 0.0
    %4422 = vmatpush1.msra.mxu0 0.0
    %4423 = vmatprep.subr.mxu0 0.0
    %4424 = vmatpush1.msra.mxu0 0.0
    %4425 = vmatprep.subr.mxu0 0.0
    %4426 = vmatpush1.msra.mxu0 0.0
    %4427 = vmatprep.subr.mxu0 0.0
    %4428 = vmatpush1.msra.mxu0 0.0
    %4429 = vmatprep.subr.mxu0 0.0
    %4430 = vmatpush1.msra.mxu0 0.0
    %4431 = vmatprep.subr.mxu0 0.0
    %4432 = vmatpush1.msra.mxu0 0.0
    %4433 = vmatprep.subr.mxu0 0.0
    %4434 = vmatpush1.msra.mxu0 0.0
    %4435 = vmatprep.subr.mxu0 0.0
    %4436 = vmatpush1.msra.mxu0 0.0
    %4437 = vmatprep.subr.mxu0 0.0
    %4438 = vmatpush1.msra.mxu0 0.0
    %4439 = vmatprep.mubr.f32.mxu0 0.0
    %4440 = vmatmul.mubr.f32.gmra.mrb[0].mxu0 %v4373
    %v4441 = vpop.f32.mrb[0].mxu0
    %v4442 = vadd.f32 0.0, %v4441
    %v4443 = vpop.f32.mrb[0].mxu0
    %4444 = vdwg.mxu0
    %v4446 = vsel %vm2053, %v4365, 0
    %4448 = vmatprep.subr.mxu0 0.0
    %4449 = vmatpush1.msra.mxu0 %v2049
    %4450 = vmatprep.subr.mxu0 0.0
    %4451 = vmatpush1.msra.mxu0 0.0
    %4452 = vmatprep.subr.mxu0 0.0
    %4453 = vmatpush1.msra.mxu0 0.0
    %4454 = vmatprep.subr.mxu0 0.0
    %4455 = vmatpush1.msra.mxu0 0.0
    %4456 = vmatprep.subr.mxu0 0.0
    %4457 = vmatpush1.msra.mxu0 0.0
    %4458 = vmatprep.subr.mxu0 0.0
    %4459 = vmatpush1.msra.mxu0 0.0
    %4460 = vmatprep.subr.mxu0 0.0
    %4461 = vmatpush1.msra.mxu0 0.0
    %4462 = vmatprep.subr.mxu0 0.0
    %4463 = vmatpush1.msra.mxu0 0.0
    %4464 = vmatprep.subr.mxu0 0.0
    %4465 = vmatpush1.msra.mxu0 0.0
    %4466 = vmatprep.subr.mxu0 0.0
    %4467 = vmatpush1.msra.mxu0 0.0
    %4468 = vmatprep.subr.mxu0 0.0
    %4469 = vmatpush1.msra.mxu0 0.0
    %4470 = vmatprep.subr.mxu0 0.0
    %4471 = vmatpush1.msra.mxu0 0.0
    %4472 = vmatprep.subr.mxu0 0.0
    %4473 = vmatpush1.msra.mxu0 0.0
    %4474 = vmatprep.subr.mxu0 0.0
    %4475 = vmatpush1.msra.mxu0 0.0
    %4476 = vmatprep.subr.mxu0 0.0
    %4477 = vmatpush1.msra.mxu0 0.0
    %4478 = vmatprep.subr.mxu0 0.0
    %4479 = vmatpush1.msra.mxu0 0.0
    %4480 = vmatprep.subr.mxu0 0.0
    %4481 = vmatpush1.msra.mxu0 0.0
    %4482 = vmatprep.subr.mxu0 0.0
    %4483 = vmatpush1.msra.mxu0 0.0
    %4484 = vmatprep.subr.mxu0 0.0
    %4485 = vmatpush1.msra.mxu0 0.0
    %4486 = vmatprep.subr.mxu0 0.0
    %4487 = vmatpush1.msra.mxu0 0.0
    %4488 = vmatprep.subr.mxu0 0.0
    %4489 = vmatpush1.msra.mxu0 0.0
    %4490 = vmatprep.subr.mxu0 0.0
    %4491 = vmatpush1.msra.mxu0 0.0
    %4492 = vmatprep.subr.mxu0 0.0
    %4493 = vmatpush1.msra.mxu0 0.0
    %4494 = vmatprep.subr.mxu0 0.0
    %4495 = vmatpush1.msra.mxu0 0.0
    %4496 = vmatprep.subr.mxu0 0.0
    %4497 = vmatpush1.msra.mxu0 0.0
    %4498 = vmatprep.subr.mxu0 0.0
    %4499 = vmatpush1.msra.mxu0 0.0
    %4500 = vmatprep.subr.mxu0 0.0
    %4501 = vmatpush1.msra.mxu0 0.0
    %4502 = vmatprep.subr.mxu0 0.0
    %4503 = vmatpush1.msra.mxu0 0.0
    %4504 = vmatprep.subr.mxu0 0.0
    %4505 = vmatpush1.msra.mxu0 0.0
    %4506 = vmatprep.subr.mxu0 0.0
    %4507 = vmatpush1.msra.mxu0 0.0
    %4508 = vmatprep.subr.mxu0 0.0
    %4509 = vmatpush1.msra.mxu0 0.0
    %4510 = vmatprep.subr.mxu0 0.0
    %4511 = vmatpush1.msra.mxu0 0.0
    %4512 = vmatprep.mubr.f32.mxu0 0.0
    %4513 = vmatmul.mubr.f32.gmra.mrb[0].mxu0 %v4446
    %v4514 = vpop.f32.mrb[0].mxu0
    %v4515 = vadd.f32 0.0, %v4514
    %v4516 = vpop.f32.mrb[0].mxu0
    %4517 = vdwg.mxu0
    %v4519 = vsel %vm2053, %v4366, 0
    %4521 = vmatprep.subr.mxu0 0.0
    %4522 = vmatpush1.msra.mxu0 %v1982
    %4523 = vmatprep.subr.mxu0 0.0
    %4524 = vmatpush1.msra.mxu0 0.0
    %4525 = vmatprep.subr.mxu0 0.0
    %4526 = vmatpush1.msra.mxu0 0.0
    %4527 = vmatprep.subr.mxu0 0.0
    %4528 = vmatpush1.msra.mxu0 0.0
    %4529 = vmatprep.subr.mxu0 0.0
    %4530 = vmatpush1.msra.mxu0 0.0
    %4531 = vmatprep.subr.mxu0 0.0
    %4532 = vmatpush1.msra.mxu0 0.0
    %4533 = vmatprep.subr.mxu0 0.0
    %4534 = vmatpush1.msra.mxu0 0.0
    %4535 = vmatprep.subr.mxu0 0.0
    %4536 = vmatpush1.msra.mxu0 0.0
    %4537 = vmatprep.subr.mxu0 0.0
    %4538 = vmatpush1.msra.mxu0 0.0
    %4539 = vmatprep.subr.mxu0 0.0
    %4540 = vmatpush1.msra.mxu0 0.0
    %4541 = vmatprep.subr.mxu0 0.0
    %4542 = vmatpush1.msra.mxu0 0.0
    %4543 = vmatprep.subr.mxu0 0.0
    %4544 = vmatpush1.msra.mxu0 0.0
    %4545 = vmatprep.subr.mxu0 0.0
    %4546 = vmatpush1.msra.mxu0 0.0
    %4547 = vmatprep.subr.mxu0 0.0
    %4548 = vmatpush1.msra.mxu0 0.0
    %4549 = vmatprep.subr.mxu0 0.0
    %4550 = vmatpush1.msra.mxu0 0.0
    %4551 = vmatprep.subr.mxu0 0.0
    %4552 = vmatpush1.msra.mxu0 0.0
    %4553 = vmatprep.subr.mxu0 0.0
    %4554 = vmatpush1.msra.mxu0 0.0
    %4555 = vmatprep.subr.mxu0 0.0
    %4556 = vmatpush1.msra.mxu0 0.0
    %4557 = vmatprep.subr.mxu0 0.0
    %4558 = vmatpush1.msra.mxu0 0.0
    %4559 = vmatprep.subr.mxu0 0.0
    %4560 = vmatpush1.msra.mxu0 0.0
    %4561 = vmatprep.subr.mxu0 0.0
    %4562 = vmatpush1.msra.mxu0 0.0
    %4563 = vmatprep.subr.mxu0 0.0
    %4564 = vmatpush1.msra.mxu0 0.0
    %4565 = vmatprep.subr.mxu0 0.0
    %4566 = vmatpush1.msra.mxu0 0.0
    %4567 = vmatprep.subr.mxu0 0.0
    %4568 = vmatpush1.msra.mxu0 0.0
    %4569 = vmatprep.subr.mxu0 0.0
    %4570 = vmatpush1.msra.mxu0 0.0
    %4571 = vmatprep.subr.mxu0 0.0
    %4572 = vmatpush1.msra.mxu0 0.0
    %4573 = vmatprep.subr.mxu0 0.0
    %4574 = vmatpush1.msra.mxu0 0.0
    %4575 = vmatprep.subr.mxu0 0.0
    %4576 = vmatpush1.msra.mxu0 0.0
    %4577 = vmatprep.subr.mxu0 0.0
    %4578 = vmatpush1.msra.mxu0 0.0
    %4579 = vmatprep.subr.mxu0 0.0
    %4580 = vmatpush1.msra.mxu0 0.0
    %4581 = vmatprep.subr.mxu0 0.0
    %4582 = vmatpush1.msra.mxu0 0.0
    %4583 = vmatprep.subr.mxu0 0.0
    %4584 = vmatpush1.msra.mxu0 0.0
    %4585 = vmatprep.mubr.f32.mxu0 0.0
    %4586 = vmatmul.mubr.f32.gmra.mrb[0].mxu0 %v4519
    %v4587 = vpop.f32.mrb[0].mxu0
    %v4588 = vadd.f32 0.0, %v4587
    %v4589 = vpop.f32.mrb[0].mxu0
    %4590 = vdwg.mxu0
    %v4592 = vsel %vm2053, %v4367, 0
    %4594 = vmatprep.subr.mxu0 0.0
    %4595 = vmatpush1.msra.mxu0 %v2050
    %4596 = vmatprep.subr.mxu0 0.0
    %4597 = vmatpush1.msra.mxu0 0.0
    %4598 = vmatprep.subr.mxu0 0.0
    %4599 = vmatpush1.msra.mxu0 0.0
    %4600 = vmatprep.subr.mxu0 0.0
    %4601 = vmatpush1.msra.mxu0 0.0
    %4602 = vmatprep.subr.mxu0 0.0
    %4603 = vmatpush1.msra.mxu0 0.0
    %4604 = vmatprep.subr.mxu0 0.0
    %4605 = vmatpush1.msra.mxu0 0.0
    %4606 = vmatprep.subr.mxu0 0.0
    %4607 = vmatpush1.msra.mxu0 0.0
    %4608 = vmatprep.subr.mxu0 0.0
    %4609 = vmatpush1.msra.mxu0 0.0
    %4610 = vmatprep.subr.mxu0 0.0
    %4611 = vmatpush1.msra.mxu0 0.0
    %4612 = vmatprep.subr.mxu0 0.0
    %4613 = vmatpush1.msra.mxu0 0.0
    %4614 = vmatprep.subr.mxu0 0.0
    %4615 = vmatpush1.msra.mxu0 0.0
    %4616 = vmatprep.subr.mxu0 0.0
    %4617 = vmatpush1.msra.mxu0 0.0
    %4618 = vmatprep.subr.mxu0 0.0
    %4619 = vmatpush1.msra.mxu0 0.0
    %4620 = vmatprep.subr.mxu0 0.0
    %4621 = vmatpush1.msra.mxu0 0.0
    %4622 = vmatprep.subr.mxu0 0.0
    %4623 = vmatpush1.msra.mxu0 0.0
    %4624 = vmatprep.subr.mxu0 0.0
    %4625 = vmatpush1.msra.mxu0 0.0
    %4626 = vmatprep.subr.mxu0 0.0
    %4627 = vmatpush1.msra.mxu0 0.0
    %4628 = vmatprep.subr.mxu0 0.0
    %4629 = vmatpush1.msra.mxu0 0.0
    %4630 = vmatprep.subr.mxu0 0.0
    %4631 = vmatpush1.msra.mxu0 0.0
    %4632 = vmatprep.subr.mxu0 0.0
    %4633 = vmatpush1.msra.mxu0 0.0
    %4634 = vmatprep.subr.mxu0 0.0
    %4635 = vmatpush1.msra.mxu0 0.0
    %4636 = vmatprep.subr.mxu0 0.0
    %4637 = vmatpush1.msra.mxu0 0.0
    %4638 = vmatprep.subr.mxu0 0.0
    %4639 = vmatpush1.msra.mxu0 0.0
    %4640 = vmatprep.subr.mxu0 0.0
    %4641 = vmatpush1.msra.mxu0 0.0
    %4642 = vmatprep.subr.mxu0 0.0
    %4643 = vmatpush1.msra.mxu0 0.0
    %4644 = vmatprep.subr.mxu0 0.0
    %4645 = vmatpush1.msra.mxu0 0.0
    %4646 = vmatprep.subr.mxu0 0.0
    %4647 = vmatpush1.msra.mxu0 0.0
    %4648 = vmatprep.subr.mxu0 0.0
    %4649 = vmatpush1.msra.mxu0 0.0
    %4650 = vmatprep.subr.mxu0 0.0
    %4651 = vmatpush1.msra.mxu0 0.0
    %4652 = vmatprep.subr.mxu0 0.0
    %4653 = vmatpush1.msra.mxu0 0.0
    %4654 = vmatprep.subr.mxu0 0.0
    %4655 = vmatpush1.msra.mxu0 0.0
    %4656 = vmatprep.subr.mxu0 0.0
    %4657 = vmatpush1.msra.mxu0 0.0
    %4658 = vmatprep.mubr.f32.mxu0 0.0
    %4659 = vmatmul.mubr.f32.gmra.mrb[0].mxu0 %v4592
    %v4660 = vpop.f32.mrb[0].mxu0
    %v4661 = vadd.f32 0.0, %v4660
    %v4662 = vpop.f32.mrb[0].mxu0
    %4663 = vdwg.mxu0
    %v4665 = vsel %vm2053, %v4368, 0
    %4667 = vmatprep.subr.mxu0 0.0
    %4668 = vmatpush1.msra.mxu0 %v1983
    %4669 = vmatprep.subr.mxu0 0.0
    %4670 = vmatpush1.msra.mxu0 0.0
    %4671 = vmatprep.subr.mxu0 0.0
    %4672 = vmatpush1.msra.mxu0 0.0
    %4673 = vmatprep.subr.mxu0 0.0
    %4674 = vmatpush1.msra.mxu0 0.0
    %4675 = vmatprep.subr.mxu0 0.0
    %4676 = vmatpush1.msra.mxu0 0.0
    %4677 = vmatprep.subr.mxu0 0.0
    %4678 = vmatpush1.msra.mxu0 0.0
    %4679 = vmatprep.subr.mxu0 0.0
    %4680 = vmatpush1.msra.mxu0 0.0
    %4681 = vmatprep.subr.mxu0 0.0
    %4682 = vmatpush1.msra.mxu0 0.0
    %4683 = vmatprep.subr.mxu0 0.0
    %4684 = vmatpush1.msra.mxu0 0.0
    %4685 = vmatprep.subr.mxu0 0.0
    %4686 = vmatpush1.msra.mxu0 0.0
    %4687 = vmatprep.subr.mxu0 0.0
    %4688 = vmatpush1.msra.mxu0 0.0
    %4689 = vmatprep.subr.mxu0 0.0
    %4690 = vmatpush1.msra.mxu0 0.0
    %4691 = vmatprep.subr.mxu0 0.0
    %4692 = vmatpush1.msra.mxu0 0.0
    %4693 = vmatprep.subr.mxu0 0.0
    %4694 = vmatpush1.msra.mxu0 0.0
    %4695 = vmatprep.subr.mxu0 0.0
    %4696 = vmatpush1.msra.mxu0 0.0
    %4697 = vmatprep.subr.mxu0 0.0
    %4698 = vmatpush1.msra.mxu0 0.0
    %4699 = vmatprep.subr.mxu0 0.0
    %4700 = vmatpush1.msra.mxu0 0.0
    %4701 = vmatprep.subr.mxu0 0.0
    %4702 = vmatpush1.msra.mxu0 0.0
    %4703 = vmatprep.subr.mxu0 0.0
    %4704 = vmatpush1.msra.mxu0 0.0
    %4705 = vmatprep.subr.mxu0 0.0
    %4706 = vmatpush1.msra.mxu0 0.0
    %4707 = vmatprep.subr.mxu0 0.0
    %4708 = vmatpush1.msra.mxu0 0.0
    %4709 = vmatprep.subr.mxu0 0.0
    %4710 = vmatpush1.msra.mxu0 0.0
    %4711 = vmatprep.subr.mxu0 0.0
    %4712 = vmatpush1.msra.mxu0 0.0
    %4713 = vmatprep.subr.mxu0 0.0
    %4714 = vmatpush1.msra.mxu0 0.0
    %4715 = vmatprep.subr.mxu0 0.0
    %4716 = vmatpush1.msra.mxu0 0.0
    %4717 = vmatprep.subr.mxu0 0.0
    %4718 = vmatpush1.msra.mxu0 0.0
    %4719 = vmatprep.subr.mxu0 0.0
    %4720 = vmatpush1.msra.mxu0 0.0
    %4721 = vmatprep.subr.mxu0 0.0
    %4722 = vmatpush1.msra.mxu0 0.0
    %4723 = vmatprep.subr.mxu0 0.0
    %4724 = vmatpush1.msra.mxu0 0.0
    %4725 = vmatprep.subr.mxu0 0.0
    %4726 = vmatpush1.msra.mxu0 0.0
    %4727 = vmatprep.subr.mxu0 0.0
    %4728 = vmatpush1.msra.mxu0 0.0
    %4729 = vmatprep.subr.mxu0 0.0
    %4730 = vmatpush1.msra.mxu0 0.0
    %4731 = vmatprep.mubr.f32.mxu0 0.0
    %4732 = vmatmul.mubr.f32.gmra.mrb[0].mxu0 %v4665
    %v4733 = vpop.f32.mrb[0].mxu0
    %v4734 = vadd.f32 0.0, %v4733
    %v4735 = vpop.f32.mrb[0].mxu0
    %4736 = vdwg.mxu0
    %v4738 = vsel %vm2053, %v4369, 0
    %4740 = vmatprep.subr.mxu0 0.0
    %4741 = vmatpush1.msra.mxu0 %v2051
    %4742 = vmatprep.subr.mxu0 0.0
    %4743 = vmatpush1.msra.mxu0 0.0
    %4744 = vmatprep.subr.mxu0 0.0
    %4745 = vmatpush1.msra.mxu0 0.0
    %4746 = vmatprep.subr.mxu0 0.0
    %4747 = vmatpush1.msra.mxu0 0.0
    %4748 = vmatprep.subr.mxu0 0.0
    %4749 = vmatpush1.msra.mxu0 0.0
    %4750 = vmatprep.subr.mxu0 0.0
    %4751 = vmatpush1.msra.mxu0 0.0
    %4752 = vmatprep.subr.mxu0 0.0
    %4753 = vmatpush1.msra.mxu0 0.0
    %4754 = vmatprep.subr.mxu0 0.0
    %4755 = vmatpush1.msra.mxu0 0.0
    %4756 = vmatprep.subr.mxu0 0.0
    %4757 = vmatpush1.msra.mxu0 0.0
    %4758 = vmatprep.subr.mxu0 0.0
    %4759 = vmatpush1.msra.mxu0 0.0
    %4760 = vmatprep.subr.mxu0 0.0
    %4761 = vmatpush1.msra.mxu0 0.0
    %4762 = vmatprep.subr.mxu0 0.0
    %4763 = vmatpush1.msra.mxu0 0.0
    %4764 = vmatprep.subr.mxu0 0.0
    %4765 = vmatpush1.msra.mxu0 0.0
    %4766 = vmatprep.subr.mxu0 0.0
    %4767 = vmatpush1.msra.mxu0 0.0
    %4768 = vmatprep.subr.mxu0 0.0
    %4769 = vmatpush1.msra.mxu0 0.0
    %4770 = vmatprep.subr.mxu0 0.0
    %4771 = vmatpush1.msra.mxu0 0.0
    %4772 = vmatprep.subr.mxu0 0.0
    %4773 = vmatpush1.msra.mxu0 0.0
    %4774 = vmatprep.subr.mxu0 0.0
    %4775 = vmatpush1.msra.mxu0 0.0
    %4776 = vmatprep.subr.mxu0 0.0
    %4777 = vmatpush1.msra.mxu0 0.0
    %4778 = vmatprep.subr.mxu0 0.0
    %4779 = vmatpush1.msra.mxu0 0.0
    %4780 = vmatprep.subr.mxu0 0.0
    %4781 = vmatpush1.msra.mxu0 0.0
    %4782 = vmatprep.subr.mxu0 0.0
    %4783 = vmatpush1.msra.mxu0 0.0
    %4784 = vmatprep.subr.mxu0 0.0
    %4785 = vmatpush1.msra.mxu0 0.0
    %4786 = vmatprep.subr.mxu0 0.0
    %4787 = vmatpush1.msra.mxu0 0.0
    %4788 = vmatprep.subr.mxu0 0.0
    %4789 = vmatpush1.msra.mxu0 0.0
    %4790 = vmatprep.subr.mxu0 0.0
    %4791 = vmatpush1.msra.mxu0 0.0
    %4792 = vmatprep.subr.mxu0 0.0
    %4793 = vmatpush1.msra.mxu0 0.0
    %4794 = vmatprep.subr.mxu0 0.0
    %4795 = vmatpush1.msra.mxu0 0.0
    %4796 = vmatprep.subr.mxu0 0.0
    %4797 = vmatpush1.msra.mxu0 0.0
    %4798 = vmatprep.subr.mxu0 0.0
    %4799 = vmatpush1.msra.mxu0 0.0
    %4800 = vmatprep.subr.mxu0 0.0
    %4801 = vmatpush1.msra.mxu0 0.0
    %4802 = vmatprep.subr.mxu0 0.0
    %4803 = vmatpush1.msra.mxu0 0.0
    %4804 = vmatprep.mubr.f32.mxu0 0.0
    %4805 = vmatmul.mubr.f32.gmra.mrb[0].mxu0 %v4738
    %v4806 = vpop.f32.mrb[0].mxu0
    %v4807 = vadd.f32 0.0, %v4806
    %v4808 = vpop.f32.mrb[0].mxu0
    %4809 = vdwg.mxu0
    %v4811 = vsel %vm2053, %v4370, 0
    %4813 = vmatprep.subr.mxu0 0.0
    %4814 = vmatpush1.msra.mxu0 %v1984
    %4815 = vmatprep.subr.mxu0 0.0
    %4816 = vmatpush1.msra.mxu0 0.0
    %4817 = vmatprep.subr.mxu0 0.0
    %4818 = vmatpush1.msra.mxu0 0.0
    %4819 = vmatprep.subr.mxu0 0.0
    %4820 = vmatpush1.msra.mxu0 0.0
    %4821 = vmatprep.subr.mxu0 0.0
    %4822 = vmatpush1.msra.mxu0 0.0
    %4823 = vmatprep.subr.mxu0 0.0
    %4824 = vmatpush1.msra.mxu0 0.0
    %4825 = vmatprep.subr.mxu0 0.0
    %4826 = vmatpush1.msra.mxu0 0.0
    %4827 = vmatprep.subr.mxu0 0.0
    %4828 = vmatpush1.msra.mxu0 0.0
    %4829 = vmatprep.subr.mxu0 0.0
    %4830 = vmatpush1.msra.mxu0 0.0
    %4831 = vmatprep.subr.mxu0 0.0
    %4832 = vmatpush1.msra.mxu0 0.0
    %4833 = vmatprep.subr.mxu0 0.0
    %4834 = vmatpush1.msra.mxu0 0.0
    %4835 = vmatprep.subr.mxu0 0.0
    %4836 = vmatpush1.msra.mxu0 0.0
    %4837 = vmatprep.subr.mxu0 0.0
    %4838 = vmatpush1.msra.mxu0 0.0
    %4839 = vmatprep.subr.mxu0 0.0
    %4840 = vmatpush1.msra.mxu0 0.0
    %4841 = vmatprep.subr.mxu0 0.0
    %4842 = vmatpush1.msra.mxu0 0.0
    %4843 = vmatprep.subr.mxu0 0.0
    %4844 = vmatpush1.msra.mxu0 0.0
    %4845 = vmatprep.subr.mxu0 0.0
    %4846 = vmatpush1.msra.mxu0 0.0
    %4847 = vmatprep.subr.mxu0 0.0
    %4848 = vmatpush1.msra.mxu0 0.0
    %4849 = vmatprep.subr.mxu0 0.0
    %4850 = vmatpush1.msra.mxu0 0.0
    %4851 = vmatprep.subr.mxu0 0.0
    %4852 = vmatpush1.msra.mxu0 0.0
    %4853 = vmatprep.subr.mxu0 0.0
    %4854 = vmatpush1.msra.mxu0 0.0
    %4855 = vmatprep.subr.mxu0 0.0
    %4856 = vmatpush1.msra.mxu0 0.0
    %4857 = vmatprep.subr.mxu0 0.0
    %4858 = vmatpush1.msra.mxu0 0.0
    %4859 = vmatprep.subr.mxu0 0.0
    %4860 = vmatpush1.msra.mxu0 0.0
    %4861 = vmatprep.subr.mxu0 0.0
    %4862 = vmatpush1.msra.mxu0 0.0
    %4863 = vmatprep.subr.mxu0 0.0
    %4864 = vmatpush1.msra.mxu0 0.0
    %4865 = vmatprep.subr.mxu0 0.0
    %4866 = vmatpush1.msra.mxu0 0.0
    %4867 = vmatprep.subr.mxu0 0.0
    %4868 = vmatpush1.msra.mxu0 0.0
    %4869 = vmatprep.subr.mxu0 0.0
    %4870 = vmatpush1.msra.mxu0 0.0
    %4871 = vmatprep.subr.mxu0 0.0
    %4872 = vmatpush1.msra.mxu0 0.0
    %4873 = vmatprep.subr.mxu0 0.0
    %4874 = vmatpush1.msra.mxu0 0.0
    %4875 = vmatprep.subr.mxu0 0.0
    %4876 = vmatpush1.msra.mxu0 0.0
    %4877 = vmatprep.mubr.f32.mxu0 0.0
    %4878 = vmatmul.mubr.f32.gmra.mrb[0].mxu0 %v4811
    %v4879 = vpop.f32.mrb[0].mxu0
    %v4880 = vadd.f32 0.0, %v4879
    %v4881 = vpop.f32.mrb[0].mxu0
    %4882 = vdwg.mxu0
    %v4884 = vsel %vm2053, %v4371, 0
    %4886 = vmatprep.subr.mxu0 0.0
    %4887 = vmatpush1.msra.mxu0 %v2052
    %4888 = vmatprep.subr.mxu0 0.0
    %4889 = vmatpush1.msra.mxu0 0.0
    %4890 = vmatprep.subr.mxu0 0.0
    %4891 = vmatpush1.msra.mxu0 0.0
    %4892 = vmatprep.subr.mxu0 0.0
    %4893 = vmatpush1.msra.mxu0 0.0
    %4894 = vmatprep.subr.mxu0 0.0
    %4895 = vmatpush1.msra.mxu0 0.0
    %4896 = vmatprep.subr.mxu0 0.0
    %4897 = vmatpush1.msra.mxu0 0.0
    %4898 = vmatprep.subr.mxu0 0.0
    %4899 = vmatpush1.msra.mxu0 0.0
    %4900 = vmatprep.subr.mxu0 0.0
    %4901 = vmatpush1.msra.mxu0 0.0
    %4902 = vmatprep.subr.mxu0 0.0
    %4903 = vmatpush1.msra.mxu0 0.0
    %4904 = vmatprep.subr.mxu0 0.0
    %4905 = vmatpush1.msra.mxu0 0.0
    %4906 = vmatprep.subr.mxu0 0.0
    %4907 = vmatpush1.msra.mxu0 0.0
    %4908 = vmatprep.subr.mxu0 0.0
    %4909 = vmatpush1.msra.mxu0 0.0
    %4910 = vmatprep.subr.mxu0 0.0
    %4911 = vmatpush1.msra.mxu0 0.0
    %4912 = vmatprep.subr.mxu0 0.0
    %4913 = vmatpush1.msra.mxu0 0.0
    %4914 = vmatprep.subr.mxu0 0.0
    %4915 = vmatpush1.msra.mxu0 0.0
    %4916 = vmatprep.subr.mxu0 0.0
    %4917 = vmatpush1.msra.mxu0 0.0
    %4918 = vmatprep.subr.mxu0 0.0
    %4919 = vmatpush1.msra.mxu0 0.0
    %4920 = vmatprep.subr.mxu0 0.0
    %4921 = vmatpush1.msra.mxu0 0.0
    %4922 = vmatprep.subr.mxu0 0.0
    %4923 = vmatpush1.msra.mxu0 0.0
    %4924 = vmatprep.subr.mxu0 0.0
    %4925 = vmatpush1.msra.mxu0 0.0
    %4926 = vmatprep.subr.mxu0 0.0
    %4927 = vmatpush1.msra.mxu0 0.0
    %4928 = vmatprep.subr.mxu0 0.0
    %4929 = vmatpush1.msra.mxu0 0.0
    %4930 = vmatprep.subr.mxu0 0.0
    %4931 = vmatpush1.msra.mxu0 0.0
    %4932 = vmatprep.subr.mxu0 0.0
    %4933 = vmatpush1.msra.mxu0 0.0
    %4934 = vmatprep.subr.mxu0 0.0
    %4935 = vmatpush1.msra.mxu0 0.0
    %4936 = vmatprep.subr.mxu0 0.0
    %4937 = vmatpush1.msra.mxu0 0.0
    %4938 = vmatprep.subr.mxu0 0.0
    %4939 = vmatpush1.msra.mxu0 0.0
    %4940 = vmatprep.subr.mxu0 0.0
    %4941 = vmatpush1.msra.mxu0 0.0
    %4942 = vmatprep.subr.mxu0 0.0
    %4943 = vmatpush1.msra.mxu0 0.0
    %4944 = vmatprep.subr.mxu0 0.0
    %4945 = vmatpush1.msra.mxu0 0.0
    %4946 = vmatprep.subr.mxu0 0.0
    %4947 = vmatpush1.msra.mxu0 0.0
    %4948 = vmatprep.subr.mxu0 0.0
    %4949 = vmatpush1.msra.mxu0 0.0
    %4950 = vmatprep.mubr.f32.mxu0 0.0
    %4951 = vmatmul.mubr.f32.gmra.mrb[0].mxu0 %v4884
    %v4952 = vpop.f32.mrb[0].mxu0
    %v4953 = vadd.f32 0.0, %v4952
    %v4954 = vpop.f32.mrb[0].mxu0
    %4955 = vdwg.mxu0
    %v4956 = vcombine.low %v4442, %v4734
    %v4957 = vcombine.high %v4442, %v4734
    %v4959 = vunpack.c.l.s4 1983009808
    %v4960 = vunpack.c.0.s8 %v4959
    %v4961 = vlaneseq
    %v4962 = vshrl.u32 %v4961, 7
    %v4963 = vsub.s32 %v4960, %v4962
    %v4964 = vrot.slane %v4956, %v4963
    %v4966 = vunpack.c.l.s4 1983009808
    %v4967 = vunpack.c.0.s8 %v4966
    %v4968 = vlaneseq
    %v4969 = vshrl.u32 %v4968, 7
    %v4970 = vsub.s32 %v4967, %v4969
    %v4971 = vrot.slane %v4957, %v4970
    %v4972 = vcombine.low %v4588, %v4880
    %v4973 = vcombine.high %v4588, %v4880
    %v4975 = vunpack.c.l.s4 1983009808
    %v4976 = vunpack.c.0.s8 %v4975
    %v4977 = vlaneseq
    %v4978 = vshrl.u32 %v4977, 7
    %v4979 = vsub.s32 %v4976, %v4978
    %v4980 = vrot.slane %v4972, %v4979
    %v4982 = vunpack.c.l.s4 1983009808
    %v4983 = vunpack.c.0.s8 %v4982
    %v4984 = vlaneseq
    %v4985 = vshrl.u32 %v4984, 7
    %v4986 = vsub.s32 %v4983, %v4985
    %v4987 = vrot.slane %v4973, %v4986
    %v4988 = vcombine.low %v4964, %v4980
    %v4989 = vcombine.high %v4964, %v4980
    %v4991 = vunpack.c.l.s4 1934713408
    %v4992 = vunpack.c.0.s8 %v4991
    %v4993 = vlaneseq
    %v4994 = vshrl.u32 %v4993, 7
    %v4995 = vsub.s32 %v4992, %v4994
    %v4996 = vrot.slane %v4988, %v4995
    %v4998 = vunpack.c.l.s4 1934713408
    %v4999 = vunpack.c.0.s8 %v4998
    %v5000 = vlaneseq
    %v5001 = vshrl.u32 %v5000, 7
    %v5002 = vsub.s32 %v4999, %v5001
    %v5003 = vrot.slane %v4989, %v5002
    %v5004 = vcombine.low %v4971, %v4987
    %v5005 = vcombine.high %v4971, %v4987
    %v5007 = vunpack.c.l.s4 1934713408
    %v5008 = vunpack.c.0.s8 %v5007
    %v5009 = vlaneseq
    %v5010 = vshrl.u32 %v5009, 7
    %v5011 = vsub.s32 %v5008, %v5010
    %v5012 = vrot.slane %v5004, %v5011
    %v5014 = vunpack.c.l.s4 1934713408
    %v5015 = vunpack.c.0.s8 %v5014
    %v5016 = vlaneseq
    %v5017 = vshrl.u32 %v5016, 7
    %v5018 = vsub.s32 %v5015, %v5017
    %v5019 = vrot.slane %v5005, %v5018
    %v5020 = vcombine.high %v4996, 0.0
    %v5021 = vcombine.high %v5003, 0.0
    %v5022 = vcombine.high %v5012, 0.0
    %v5023 = vcombine.high %v5019, 0.0
    %v5024 = vcombine.low %v4515, %v4807
    %v5025 = vcombine.high %v4515, %v4807
    %v5027 = vunpack.c.l.s4 1983009808
    %v5028 = vunpack.c.0.s8 %v5027
    %v5029 = vlaneseq
    %v5030 = vshrl.u32 %v5029, 7
    %v5031 = vsub.s32 %v5028, %v5030
    %v5032 = vrot.slane %v5024, %v5031
    %v5034 = vunpack.c.l.s4 1983009808
    %v5035 = vunpack.c.0.s8 %v5034
    %v5036 = vlaneseq
    %v5037 = vshrl.u32 %v5036, 7
    %v5038 = vsub.s32 %v5035, %v5037
    %v5039 = vrot.slane %v5025, %v5038
    %v5040 = vcombine.low %v4661, %v4953
    %v5041 = vcombine.high %v4661, %v4953
    %v5043 = vunpack.c.l.s4 1983009808
    %v5044 = vunpack.c.0.s8 %v5043
    %v5045 = vlaneseq
    %v5046 = vshrl.u32 %v5045, 7
    %v5047 = vsub.s32 %v5044, %v5046
    %v5048 = vrot.slane %v5040, %v5047
    %v5050 = vunpack.c.l.s4 1983009808
    %v5051 = vunpack.c.0.s8 %v5050
    %v5052 = vlaneseq
    %v5053 = vshrl.u32 %v5052, 7
    %v5054 = vsub.s32 %v5051, %v5053
    %v5055 = vrot.slane %v5041, %v5054
    %v5056 = vcombine.low %v5032, %v5048
    %v5057 = vcombine.high %v5032, %v5048
    %v5059 = vunpack.c.l.s4 1934713408
    %v5060 = vunpack.c.0.s8 %v5059
    %v5061 = vlaneseq
    %v5062 = vshrl.u32 %v5061, 7
    %v5063 = vsub.s32 %v5060, %v5062
    %v5064 = vrot.slane %v5056, %v5063
    %v5066 = vunpack.c.l.s4 1934713408
    %v5067 = vunpack.c.0.s8 %v5066
    %v5068 = vlaneseq
    %v5069 = vshrl.u32 %v5068, 7
    %v5070 = vsub.s32 %v5067, %v5069
    %v5071 = vrot.slane %v5057, %v5070
    %v5072 = vcombine.low %v5039, %v5055
    %v5073 = vcombine.high %v5039, %v5055
    %v5075 = vunpack.c.l.s4 1934713408
    %v5076 = vunpack.c.0.s8 %v5075
    %v5077 = vlaneseq
    %v5078 = vshrl.u32 %v5077, 7
    %v5079 = vsub.s32 %v5076, %v5078
    %v5080 = vrot.slane %v5072, %v5079
    %v5082 = vunpack.c.l.s4 1934713408
    %v5083 = vunpack.c.0.s8 %v5082
    %v5084 = vlaneseq
    %v5085 = vshrl.u32 %v5084, 7
    %v5086 = vsub.s32 %v5083, %v5085
    %v5087 = vrot.slane %v5073, %v5086
    %v5088 = vcombine.high %v5064, 0.0
    %v5089 = vcombine.high %v5071, 0.0
    %v5090 = vcombine.high %v5080, 0.0
    %v5091 = vcombine.high %v5087, 0.0
    %v5092 = vcombine.low %v4996, %v5003
    %v5094 = vunpack.c.l.s4 1983009808
    %v5095 = vunpack.c.0.s8 %v5094
    %v5096 = vlaneseq
    %v5097 = vshrl.u32 %v5096, 7
    %v5098 = vsub.s32 %v5095, %v5097
    %v5099 = vrot.slane %v5092, %v5098
    %v5100 = vcombine.low %v5020, %v5021
    %v5102 = vunpack.c.l.s4 1983009808
    %v5103 = vunpack.c.0.s8 %v5102
    %v5104 = vlaneseq
    %v5105 = vshrl.u32 %v5104, 7
    %v5106 = vsub.s32 %v5103, %v5105
    %v5107 = vrot.slane %v5100, %v5106
    %v5108 = vcombine.low %v5012, %v5019
    %v5110 = vunpack.c.l.s4 1983009808
    %v5111 = vunpack.c.0.s8 %v5110
    %v5112 = vlaneseq
    %v5113 = vshrl.u32 %v5112, 7
    %v5114 = vsub.s32 %v5111, %v5113
    %v5115 = vrot.slane %v5108, %v5114
    %v5116 = vcombine.low %v5022, %v5023
    %v5118 = vunpack.c.l.s4 1983009808
    %v5119 = vunpack.c.0.s8 %v5118
    %v5120 = vlaneseq
    %v5121 = vshrl.u32 %v5120, 7
    %v5122 = vsub.s32 %v5119, %v5121
    %v5123 = vrot.slane %v5116, %v5122
    %v5124 = vcombine.low %v5099, %v5107
    %v5125 = vcombine.high %v5099, %v5107
    %v5127 = vunpack.c.l.s4 1934713408
    %v5128 = vunpack.c.0.s8 %v5127
    %v5129 = vlaneseq
    %v5130 = vshrl.u32 %v5129, 7
    %v5131 = vsub.s32 %v5128, %v5130
    %v5132 = vrot.slane %v5124, %v5131
    %v5134 = vunpack.c.l.s4 1934713408
    %v5135 = vunpack.c.0.s8 %v5134
    %v5136 = vlaneseq
    %v5137 = vshrl.u32 %v5136, 7
    %v5138 = vsub.s32 %v5135, %v5137
    %v5139 = vrot.slane %v5125, %v5138
    %v5140 = vcombine.low %v5115, %v5123
    %v5141 = vcombine.high %v5115, %v5123
    %v5143 = vunpack.c.l.s4 1934713408
    %v5144 = vunpack.c.0.s8 %v5143
    %v5145 = vlaneseq
    %v5146 = vshrl.u32 %v5145, 7
    %v5147 = vsub.s32 %v5144, %v5146
    %v5148 = vrot.slane %v5140, %v5147
    %v5150 = vunpack.c.l.s4 1934713408
    %v5151 = vunpack.c.0.s8 %v5150
    %v5152 = vlaneseq
    %v5153 = vshrl.u32 %v5152, 7
    %v5154 = vsub.s32 %v5151, %v5153
    %v5155 = vrot.slane %v5141, %v5154
    %v5156 = vcombine.low %v5132, %v5148
    %v5157 = vcombine.high %v5132, %v5148
    %v5158 = vcombine.low %v5139, %v5155
    %v5159 = vcombine.high %v5139, %v5155
    %v5160 = vcombine.low %v5064, %v5071
    %v5162 = vunpack.c.l.s4 1983009808
    %v5163 = vunpack.c.0.s8 %v5162
    %v5164 = vlaneseq
    %v5165 = vshrl.u32 %v5164, 7
    %v5166 = vsub.s32 %v5163, %v5165
    %v5167 = vrot.slane %v5160, %v5166
    %v5168 = vcombine.low %v5088, %v5089
    %v5170 = vunpack.c.l.s4 1983009808
    %v5171 = vunpack.c.0.s8 %v5170
    %v5172 = vlaneseq
    %v5173 = vshrl.u32 %v5172, 7
    %v5174 = vsub.s32 %v5171, %v5173
    %v5175 = vrot.slane %v5168, %v5174
    %v5176 = vcombine.low %v5080, %v5087
    %v5178 = vunpack.c.l.s4 1983009808
    %v5179 = vunpack.c.0.s8 %v5178
    %v5180 = vlaneseq
    %v5181 = vshrl.u32 %v5180, 7
    %v5182 = vsub.s32 %v5179, %v5181
    %v5183 = vrot.slane %v5176, %v5182
    %v5184 = vcombine.low %v5090, %v5091
    %v5186 = vunpack.c.l.s4 1983009808
    %v5187 = vunpack.c.0.s8 %v5186
    %v5188 = vlaneseq
    %v5189 = vshrl.u32 %v5188, 7
    %v5190 = vsub.s32 %v5187, %v5189
    %v5191 = vrot.slane %v5184, %v5190
    %v5192 = vcombine.low %v5167, %v5175
    %v5193 = vcombine.high %v5167, %v5175
    %v5195 = vunpack.c.l.s4 1934713408
    %v5196 = vunpack.c.0.s8 %v5195
    %v5197 = vlaneseq
    %v5198 = vshrl.u32 %v5197, 7
    %v5199 = vsub.s32 %v5196, %v5198
    %v5200 = vrot.slane %v5192, %v5199
    %v5202 = vunpack.c.l.s4 1934713408
    %v5203 = vunpack.c.0.s8 %v5202
    %v5204 = vlaneseq
    %v5205 = vshrl.u32 %v5204, 7
    %v5206 = vsub.s32 %v5203, %v5205
    %v5207 = vrot.slane %v5193, %v5206
    %v5208 = vcombine.low %v5183, %v5191
    %v5209 = vcombine.high %v5183, %v5191
    %v5211 = vunpack.c.l.s4 1934713408
    %v5212 = vunpack.c.0.s8 %v5211
    %v5213 = vlaneseq
    %v5214 = vshrl.u32 %v5213, 7
    %v5215 = vsub.s32 %v5212, %v5214
    %v5216 = vrot.slane %v5208, %v5215
    %v5218 = vunpack.c.l.s4 1934713408
    %v5219 = vunpack.c.0.s8 %v5218
    %v5220 = vlaneseq
    %v5221 = vshrl.u32 %v5220, 7
    %v5222 = vsub.s32 %v5219, %v5221
    %v5223 = vrot.slane %v5209, %v5222
    %v5224 = vcombine.low %v5200, %v5216
    %v5225 = vcombine.high %v5200, %v5216
    %v5226 = vcombine.low %v5207, %v5223
    %v5227 = vcombine.high %v5207, %v5223
    %5230 = vrot.lane.b32.xlu0 %v5157, 8
    %v5231 = vpop.permute.xlu0 %5230
    %5232 = vrot.lane.b32.xlu0 %v5225, 8
    %v5233 = vpop.permute.xlu0 %5232
    %5238 = vrot.lane.b32.xlu0 %v5158, 16
    %v5239 = vpop.permute.xlu0 %5238
    %5240 = vrot.lane.b32.xlu0 %v5226, 16
    %v5241 = vpop.permute.xlu0 %5240
    %5246 = vrot.lane.b32.xlu0 %v5159, 24
    %v5247 = vpop.permute.xlu0 %5246
    %5248 = vrot.lane.b32.xlu0 %v5227, 24
    %v5249 = vpop.permute.xlu0 %5248
    %v5252 = vsel %vm2053, %v5156, %v5231
    %v5253 = vsel %vm2053, %v5224, %v5233
    %v5254 = vsel %vm3650, %v5252, %v5239
    %v5255 = vsel %vm3650, %v5253, %v5241
    %v5256 = vsel %vm3653, %v5254, %v5247
    %v5257 = vsel %vm3653, %v5255, %v5249
    %v5258 = vpack.c.bf16 %v3655, %v3654
    %v5259 = vld [vmem:[%s7] sm:$0xf]
    %v5260 = vld [vmem:[%s7 + $0x4] sm:$0xf]
    %v5261 = vld [vmem:[%s7 + $0x8] sm:$0xf]
    %v5262 = vld [vmem:[%s7 + $0xc] sm:$0xf]
    %v5263 = vlaneseq
    %v5264 = vshrl.u32 %v5263, 7
    %v5265 = vsub.s32 1, %v5264
    %v5266 = vrot.slane %v147, %v5265
    %v5271 = vunpack.c.l.b16 %v5259
    %v5272 = vunpack.c.l.b16 %v5260
    %v5273 = vunpack.c.l.b16 %v5261
    %v5274 = vunpack.c.l.b16 %v5262
    %v5275 = vpack.c.b16 %v5272, %v5271
    %v5276 = vpack.c.b16 %v5274, %v5273
    %v5280 = vsel %vm173, %v5258, 0
    %5282 = vmatprep.subr.bf16.mxu0 0
    %5283 = vmatpush1.bf16.msra.mxu0 %v5275
    %5284 = vmatprep.subr.bf16.mxu0 0
    %5285 = vmatpush1.bf16.msra.mxu0 %v5276
    %5286 = vmatprep.subr.bf16.mxu0 0
    %5287 = vmatpush1.bf16.msra.mxu0 0
    %5288 = vmatprep.subr.bf16.mxu0 0
    %5289 = vmatpush1.bf16.msra.mxu0 0
    %5290 = vmatprep.subr.bf16.mxu0 0
    %5291 = vmatpush1.bf16.msra.mxu0 0
    %5292 = vmatprep.subr.bf16.mxu0 0
    %5293 = vmatpush1.bf16.msra.mxu0 0
    %5294 = vmatprep.subr.bf16.mxu0 0
    %5295 = vmatpush1.bf16.msra.mxu0 0
    %5296 = vmatprep.subr.bf16.mxu0 0
    %5297 = vmatpush1.bf16.msra.mxu0 0
    %5298 = vmatprep.subr.bf16.mxu0 0
    %5299 = vmatpush1.bf16.msra.mxu0 0
    %5300 = vmatprep.subr.bf16.mxu0 0
    %5301 = vmatpush1.bf16.msra.mxu0 0
    %5302 = vmatprep.subr.bf16.mxu0 0
    %5303 = vmatpush1.bf16.msra.mxu0 0
    %5304 = vmatprep.subr.bf16.mxu0 0
    %5305 = vmatpush1.bf16.msra.mxu0 0
    %5306 = vmatprep.subr.bf16.mxu0 0
    %5307 = vmatpush1.bf16.msra.mxu0 0
    %5308 = vmatprep.subr.bf16.mxu0 0
    %5309 = vmatpush1.bf16.msra.mxu0 0
    %5310 = vmatprep.subr.bf16.mxu0 0
    %5311 = vmatpush1.bf16.msra.mxu0 0
    %5312 = vmatprep.subr.bf16.mxu0 0
    %5313 = vmatpush1.bf16.msra.mxu0 0
    %5314 = vmatprep.mubr.bf16.mxu0 0
    %5315 = vmatmul.mubr.bf16.gmra.mrb[0].mxu0 %v5280
    %v5316 = vpop.f32.mrb[0].mxu0
    %v5317 = vadd.f32 %v5266, %v5316
    %v5318 = vpop.f32.mrb[0].mxu0
    %v5319 = vpop.f32.mrb[0].mxu0
    %v5320 = vadd.f32 %v5266, %v5319
    %v5321 = vpop.f32.mrb[0].mxu0
    %5322 = vdwg.mxu0
    %v5323 = vpack.c.bf16 %v5257, %v5256
    %s5324 = scalar_lea.vmem %s7, 16
    %v5325 = vld [vmem:[%s5324] sm:$0xf]
    %v5326 = vld [vmem:[%s5324 + $0x4] sm:$0xf]
    %v5327 = vld [vmem:[%s5324 + $0x8] sm:$0xf]
    %v5328 = vld [vmem:[%s5324 + $0xc] sm:$0xf]
    %v5329 = vlaneseq
    %v5330 = vshrl.u32 %v5329, 7
    %v5331 = vsub.s32 2, %v5330
    %v5332 = vrot.slane %v147, %v5331
    %v5337 = vunpack.c.l.b16 %v5325
    %v5338 = vunpack.c.l.b16 %v5326
    %v5339 = vunpack.c.l.b16 %v5327
    %v5340 = vunpack.c.l.b16 %v5328
    %v5341 = vpack.c.b16 %v5338, %v5337
    %v5342 = vpack.c.b16 %v5340, %v5339
    %v5346 = vsel %vm173, %v5323, 0
    %5348 = vmatprep.subr.bf16.mxu0 0
    %5349 = vmatpush1.bf16.msra.mxu0 %v5341
    %5350 = vmatprep.subr.bf16.mxu0 0
    %5351 = vmatpush1.bf16.msra.mxu0 %v5342
    %5352 = vmatprep.subr.bf16.mxu0 0
    %5353 = vmatpush1.bf16.msra.mxu0 0
    %5354 = vmatprep.subr.bf16.mxu0 0
    %5355 = vmatpush1.bf16.msra.mxu0 0
    %5356 = vmatprep.subr.bf16.mxu0 0
    %5357 = vmatpush1.bf16.msra.mxu0 0
    %5358 = vmatprep.subr.bf16.mxu0 0
    %5359 = vmatpush1.bf16.msra.mxu0 0
    %5360 = vmatprep.subr.bf16.mxu0 0
    %5361 = vmatpush1.bf16.msra.mxu0 0
    %5362 = vmatprep.subr.bf16.mxu0 0
    %5363 = vmatpush1.bf16.msra.mxu0 0
    %5364 = vmatprep.subr.bf16.mxu0 0
    %5365 = vmatpush1.bf16.msra.mxu0 0
    %5366 = vmatprep.subr.bf16.mxu0 0
    %5367 = vmatpush1.bf16.msra.mxu0 0
    %5368 = vmatprep.subr.bf16.mxu0 0
    %5369 = vmatpush1.bf16.msra.mxu0 0
    %5370 = vmatprep.subr.bf16.mxu0 0
    %5371 = vmatpush1.bf16.msra.mxu0 0
    %5372 = vmatprep.subr.bf16.mxu0 0
    %5373 = vmatpush1.bf16.msra.mxu0 0
    %5374 = vmatprep.subr.bf16.mxu0 0
    %5375 = vmatpush1.bf16.msra.mxu0 0
    %5376 = vmatprep.subr.bf16.mxu0 0
    %5377 = vmatpush1.bf16.msra.mxu0 0
    %5378 = vmatprep.subr.bf16.mxu0 0
    %5379 = vmatpush1.bf16.msra.mxu0 0
    %5380 = vmatprep.mubr.bf16.mxu0 0
    %5381 = vmatmul.mubr.bf16.gmra.mrb[0].mxu0 %v5346
    %v5382 = vpop.f32.mrb[0].mxu0
    %v5383 = vadd.f32 %v5332, %v5382
    %v5384 = vpop.f32.mrb[0].mxu0
    %v5385 = vpop.f32.mrb[0].mxu0
    %v5386 = vadd.f32 %v5332, %v5385
    %v5387 = vpop.f32.mrb[0].mxu0
    %5388 = vdwg.mxu0
    %v5389 = vadd.f32 %v98, %v5317
    %v5390 = vadd.f32 %v99, %v5320
    %v5391 = vsel %vm173, %v5389, 0.0
    %5392 = vadd.xlane.f32.xlu0 %v5391
    %v5393 = vpop.xlane.xlu0 %5392
    %v5394 = vsel %vm173, %v5390, 0.0
    %5395 = vadd.xlane.f32.xlu0 %v5394
    %v5396 = vpop.xlane.xlu0 %5395
    %v5397 = vrcp.pop 32.0
    %v5398 = vmul.f32 %v5393, %v5397
    %v5399 = vmul.f32 %v5396, %v5397
    %v5400 = vsub.f32 %v5389, %v5398
    %v5401 = vsub.f32 %v5390, %v5399
    %v5402 = vmul.f32 %v5400, %v5400
    %v5403 = vmul.f32 %v5401, %v5401
    %v5404 = vsel %vm173, %v5402, 0.0
    %5405 = vadd.xlane.f32.xlu0 %v5404
    %v5406 = vpop.xlane.xlu0 %5405
    %v5407 = vsel %vm173, %v5403, 0.0
    %5408 = vadd.xlane.f32.xlu0 %v5407
    %v5409 = vpop.xlane.xlu0 %5408
    %v5410 = vmul.f32 %v5406, %v5397
    %v5411 = vmul.f32 %v5409, %v5397
    %v5412 = vadd.f32 %v5410, 1e-05
    %v5413 = vadd.f32 %v5411, 1e-05
    %v5414 = vrsqrt.pop %v5412
    %v5415 = vrsqrt.pop %v5413
    %v5416 = vmul.f32 %v5400, %v5414
    %v5417 = vmul.f32 %v5401, %v5415
    %v5418 = vlaneseq
    %v5419 = vshrl.u32 %v5418, 7
    %v5420 = vsub.s32 3, %v5419
    %v5421 = vrot.slane %v147, %v5420
    %v5422 = vmul.f32 %v5416, %v5421
    %v5423 = vmul.f32 %v5417, %v5421
    %v5424 = vlaneseq
    %v5425 = vshrl.u32 %v5424, 7
    %v5426 = vsub.s32 4, %v5425
    %v5427 = vrot.slane %v147, %v5426
    %v5428 = vadd.f32 %v5422, %v5427
    %v5429 = vadd.f32 %v5423, %v5427
    %v5430 = vadd.f32 %v5428, %v5383
    %v5431 = vadd.f32 %v5429, %v5386
    %v5432 = vsel %vm173, %v5430, 0.0
    %5433 = vadd.xlane.f32.xlu0 %v5432
    %v5434 = vpop.xlane.xlu0 %5433
    %v5435 = vsel %vm173, %v5431, 0.0
    %5436 = vadd.xlane.f32.xlu0 %v5435
    %v5437 = vpop.xlane.xlu0 %5436
    %v5438 = vmul.f32 %v5434, %v5397
    %v5439 = vmul.f32 %v5437, %v5397
    %v5440 = vsub.f32 %v5430, %v5438
    %v5441 = vsub.f32 %v5431, %v5439
    %v5442 = vmul.f32 %v5440, %v5440
    %v5443 = vmul.f32 %v5441, %v5441
    %v5444 = vsel %vm173, %v5442, 0.0
    %5445 = vadd.xlane.f32.xlu0 %v5444
    %v5446 = vpop.xlane.xlu0 %5445
    %v5447 = vsel %vm173, %v5443, 0.0
    %5448 = vadd.xlane.f32.xlu0 %v5447
    %v5449 = vpop.xlane.xlu0 %5448
    %v5450 = vmul.f32 %v5446, %v5397
    %v5451 = vmul.f32 %v5449, %v5397
    %v5452 = vadd.f32 %v5450, 1e-05
    %v5453 = vadd.f32 %v5451, 1e-05
    %v5454 = vrsqrt.pop %v5452
    %v5455 = vrsqrt.pop %v5453
    %v5456 = vmul.f32 %v5440, %v5454
    %v5457 = vmul.f32 %v5441, %v5455
    %v5458 = vlaneseq
    %v5459 = vshrl.u32 %v5458, 7
    %v5460 = vsub.s32 5, %v5459
    %v5461 = vrot.slane %v147, %v5460
    %v5462 = vmul.f32 %v5456, %v5461
    %v5463 = vmul.f32 %v5457, %v5461
    %v5464 = vlaneseq
    %v5465 = vshrl.u32 %v5464, 7
    %v5466 = vsub.s32 6, %v5465
    %v5467 = vrot.slane %v147, %v5466
    %v5468 = vadd.f32 %v5462, %v5467
    %v5469 = vadd.f32 %v5463, %v5467
    %v5470 = vpack.c.bf16 %v5469, %v5468
    %v5471 = vld [vmem:[#allocation7] sm:$0xf]
    %v5472 = vld [vmem:[#allocation7 + $0x4] sm:$0xf]
    %v5473 = vld [vmem:[#allocation7 + $0x8] sm:$0xf]
    %v5474 = vld [vmem:[#allocation7 + $0xc] sm:$0xf]
    %v5475 = vld [vmem:[#allocation8] sm:$0x1]
    %v5477 = vlaneseq
    %v5478 = vshrl.u32 %v5477, 7
    %v5479 = vsub.s32 0, %v5478
    %v5480 = vrot.slane %v5475, %v5479
    %v5486 = vunpack.c.l.b16 %v5471
    %v5487 = vunpack.c.l.b16 %v5472
    %v5488 = vunpack.c.l.b16 %v5473
    %v5489 = vunpack.c.l.b16 %v5474
    %v5490 = vpack.c.b16 %v5487, %v5486
    %v5491 = vpack.c.b16 %v5489, %v5488
    %v5495 = vsel %vm173, %v5470, 0
    %5497 = vmatprep.subr.bf16.mxu0 0
    %5498 = vmatpush1.bf16.msra.mxu0 %v5490
    %5499 = vmatprep.subr.bf16.mxu0 0
    %5500 = vmatpush1.bf16.msra.mxu0 %v5491
    %5501 = vmatprep.subr.bf16.mxu0 0
    %5502 = vmatpush1.bf16.msra.mxu0 0
    %5503 = vmatprep.subr.bf16.mxu0 0
    %5504 = vmatpush1.bf16.msra.mxu0 0
    %5505 = vmatprep.subr.bf16.mxu0 0
    %5506 = vmatpush1.bf16.msra.mxu0 0
    %5507 = vmatprep.subr.bf16.mxu0 0
    %5508 = vmatpush1.bf16.msra.mxu0 0
    %5509 = vmatprep.subr.bf16.mxu0 0
    %5510 = vmatpush1.bf16.msra.mxu0 0
    %5511 = vmatprep.subr.bf16.mxu0 0
    %5512 = vmatpush1.bf16.msra.mxu0 0
    %5513 = vmatprep.subr.bf16.mxu0 0
    %5514 = vmatpush1.bf16.msra.mxu0 0
    %5515 = vmatprep.subr.bf16.mxu0 0
    %5516 = vmatpush1.bf16.msra.mxu0 0
    %5517 = vmatprep.subr.bf16.mxu0 0
    %5518 = vmatpush1.bf16.msra.mxu0 0
    %5519 = vmatprep.subr.bf16.mxu0 0
    %5520 = vmatpush1.bf16.msra.mxu0 0
    %5521 = vmatprep.subr.bf16.mxu0 0
    %5522 = vmatpush1.bf16.msra.mxu0 0
    %5523 = vmatprep.subr.bf16.mxu0 0
    %5524 = vmatpush1.bf16.msra.mxu0 0
    %5525 = vmatprep.subr.bf16.mxu0 0
    %5526 = vmatpush1.bf16.msra.mxu0 0
    %5527 = vmatprep.subr.bf16.mxu0 0
    %5528 = vmatpush1.bf16.msra.mxu0 0
    %5529 = vmatprep.mubr.bf16.mxu0 0
    %5530 = vmatmul.mubr.bf16.gmra.mrb[0].mxu0 %v5495
    %v5531 = vpop.f32.mrb[0].mxu0
    %v5532 = vadd.f32 %v5480, %v5531
    %v5533 = vpop.f32.mrb[0].mxu0
    %v5534 = vpop.f32.mrb[0].mxu0
    %v5535 = vadd.f32 %v5480, %v5534
    %v5536 = vpop.f32.mrb[0].mxu0
    %5537 = vdwg.mxu0
    %v5538 = vmax.f32 %v5532, 0.0
    %v5539 = vmax.f32 %v5535, 0.0
    %v5540 = vpack.c.bf16 %v5539, %v5538
    %v5541 = vld [vmem:[%s10] sm:$0xf]
    %v5542 = vld [vmem:[%s10 + $0x4] sm:$0xf]
    %v5543 = vld [vmem:[%s10 + $0x8] sm:$0xf]
    %v5544 = vld [vmem:[%s10 + $0xc] sm:$0xf]
    %v5545 = vld [vmem:[%s10 + $0x10] sm:$0xf]
    %v5546 = vld [vmem:[%s10 + $0x14] sm:$0xf]
    %v5547 = vld [vmem:[%s10 + $0x18] sm:$0xf]
    %v5548 = vld [vmem:[%s10 + $0x1c] sm:$0xf]
    %v5549 = vlaneseq
    %v5550 = vshrl.u32 %v5549, 7
    %v5551 = vsub.s32 0, %v5550
    %v5552 = vrot.slane %v147, %v5551
    %v5561 = vunpack.c.l.b16 %v5541
    %v5562 = vunpack.c.l.b16 %v5542
    %v5563 = vunpack.c.l.b16 %v5543
    %v5564 = vunpack.c.l.b16 %v5544
    %v5565 = vunpack.c.l.b16 %v5545
    %v5566 = vunpack.c.l.b16 %v5546
    %v5567 = vunpack.c.l.b16 %v5547
    %v5568 = vunpack.c.l.b16 %v5548
    %v5569 = vpack.c.b16 %v5562, %v5561
    %v5570 = vpack.c.b16 %v5564, %v5563
    %v5571 = vpack.c.b16 %v5566, %v5565
    %v5572 = vpack.c.b16 %v5568, %v5567
    %vm5577 = vcmask 523264
    %v5579 = vsel %vm5577, %v5540, 0
    %5581 = vmatprep.subr.bf16.mxu0 0
    %5582 = vmatpush1.bf16.msra.mxu0 %v5569
    %5583 = vmatprep.subr.bf16.mxu0 0
    %5584 = vmatpush1.bf16.msra.mxu0 %v5570
    %5585 = vmatprep.subr.bf16.mxu0 0
    %5586 = vmatpush1.bf16.msra.mxu0 %v5571
    %5587 = vmatprep.subr.bf16.mxu0 0
    %5588 = vmatpush1.bf16.msra.mxu0 %v5572
    %5589 = vmatprep.subr.bf16.mxu0 0
    %5590 = vmatpush1.bf16.msra.mxu0 0
    %5591 = vmatprep.subr.bf16.mxu0 0
    %5592 = vmatpush1.bf16.msra.mxu0 0
    %5593 = vmatprep.subr.bf16.mxu0 0
    %5594 = vmatpush1.bf16.msra.mxu0 0
    %5595 = vmatprep.subr.bf16.mxu0 0
    %5596 = vmatpush1.bf16.msra.mxu0 0
    %5597 = vmatprep.subr.bf16.mxu0 0
    %5598 = vmatpush1.bf16.msra.mxu0 0
    %5599 = vmatprep.subr.bf16.mxu0 0
    %5600 = vmatpush1.bf16.msra.mxu0 0
    %5601 = vmatprep.subr.bf16.mxu0 0
    %5602 = vmatpush1.bf16.msra.mxu0 0
    %5603 = vmatprep.subr.bf16.mxu0 0
    %5604 = vmatpush1.bf16.msra.mxu0 0
    %5605 = vmatprep.subr.bf16.mxu0 0
    %5606 = vmatpush1.bf16.msra.mxu0 0
    %5607 = vmatprep.subr.bf16.mxu0 0
    %5608 = vmatpush1.bf16.msra.mxu0 0
    %5609 = vmatprep.subr.bf16.mxu0 0
    %5610 = vmatpush1.bf16.msra.mxu0 0
    %5611 = vmatprep.subr.bf16.mxu0 0
    %5612 = vmatpush1.bf16.msra.mxu0 0
    %5613 = vmatprep.mubr.bf16.mxu0 0
    %5614 = vmatmul.mubr.bf16.gmra.mrb[0].mxu0 %v5579
    %v5615 = vpop.f32.mrb[0].mxu0
    %v5616 = vadd.f32 %v5552, %v5615
    %v5617 = vpop.f32.mrb[0].mxu0
    %v5618 = vpop.f32.mrb[0].mxu0
    %v5619 = vadd.f32 %v5552, %v5618
    %v5620 = vpop.f32.mrb[0].mxu0
    %5621 = vdwg.mxu0
    %v5622 = vadd.f32 %v5468, %v5616
    %v5623 = vadd.f32 %v5469, %v5619
    %v5624 = vsel %vm173, %v5622, 0.0
    %5625 = vadd.xlane.f32.xlu0 %v5624
    %v5626 = vpop.xlane.xlu0 %5625
    %v5627 = vsel %vm173, %v5623, 0.0
    %5628 = vadd.xlane.f32.xlu0 %v5627
    %v5629 = vpop.xlane.xlu0 %5628
    %v5630 = vmul.f32 %v5626, %v5397
    %v5631 = vmul.f32 %v5629, %v5397
    %v5632 = vsub.f32 %v5622, %v5630
    %v5633 = vsub.f32 %v5623, %v5631
    %v5634 = vmul.f32 %v5632, %v5632
    %v5635 = vmul.f32 %v5633, %v5633
    %v5636 = vsel %vm173, %v5634, 0.0
    %5637 = vadd.xlane.f32.xlu0 %v5636
    %v5638 = vpop.xlane.xlu0 %5637
    %v5639 = vsel %vm173, %v5635, 0.0
    %5640 = vadd.xlane.f32.xlu0 %v5639
    %v5641 = vpop.xlane.xlu0 %5640
    %v5642 = vmul.f32 %v5638, %v5397
    %v5643 = vmul.f32 %v5641, %v5397
    %v5644 = vadd.f32 %v5642, 1e-05
    %v5645 = vadd.f32 %v5643, 1e-05
    %v5646 = vrsqrt.pop %v5644
    %v5647 = vrsqrt.pop %v5645
    %v5648 = vmul.f32 %v5632, %v5646
    %v5649 = vmul.f32 %v5633, %v5647
    %v5650 = vlaneseq
    %v5651 = vshrl.u32 %v5650, 7
    %v5652 = vsub.s32 7, %v5651
    %v5653 = vrot.slane %v147, %v5652
    %v5654 = vmul.f32 %v5648, %v5653
    %v5655 = vmul.f32 %v5649, %v5653
    %v5656 = vlaneseq
    %v5657 = vshrl.u32 %v5656, 7
    %v5658 = vsub.s32 0, %v5657
    %v5659 = vrot.slane %v148, %v5658
    %v5660 = vadd.f32 %v5654, %v5659
    %v5661 = vadd.f32 %v5655, %v5659
    %s5662 = scalar_lea.vmem %s11, 16
    %v5663 = vld [vmem:[%s5662] sm:$0xff]
    %v5664 = vld [vmem:[%s5662 + $0x8] sm:$0x1]
    %v5665 = vpack.c.bf16 %v5661, %v5660
    %s5666 = scalar_lea.vmem %s3, 16
    %v5667 = vld [vmem:[%s5666] sm:$0xf]
    %v5668 = vld [vmem:[%s5666 + $0x4] sm:$0xf]
    %v5669 = vld [vmem:[%s5666 + $0x8] sm:$0xf]
    %v5670 = vld [vmem:[%s5666 + $0xc] sm:$0xf]
    %s5671 = scalar_lea.vmem %s4, 1
    %v5672 = vld [vmem:[%s5671] sm:$0x1]
    %v5674 = vlaneseq
    %v5675 = vshrl.u32 %v5674, 7
    %v5676 = vsub.s32 0, %v5675
    %v5677 = vrot.slane %v5672, %v5676
    %v5683 = vunpack.c.l.b16 %v5667
    %v5684 = vunpack.c.l.b16 %v5668
    %v5685 = vunpack.c.l.b16 %v5669
    %v5686 = vunpack.c.l.b16 %v5670
    %v5687 = vpack.c.b16 %v5684, %v5683
    %v5688 = vpack.c.b16 %v5686, %v5685
    %v5692 = vsel %vm173, %v5665, 0
    %5694 = vmatprep.subr.bf16.mxu0 0
    %5695 = vmatpush1.bf16.msra.mxu0 %v5687
    %5696 = vmatprep.subr.bf16.mxu0 0
    %5697 = vmatpush1.bf16.msra.mxu0 %v5688
    %5698 = vmatprep.subr.bf16.mxu0 0
    %5699 = vmatpush1.bf16.msra.mxu0 0
    %5700 = vmatprep.subr.bf16.mxu0 0
    %5701 = vmatpush1.bf16.msra.mxu0 0
    %5702 = vmatprep.subr.bf16.mxu0 0
    %5703 = vmatpush1.bf16.msra.mxu0 0
    %5704 = vmatprep.subr.bf16.mxu0 0
    %5705 = vmatpush1.bf16.msra.mxu0 0
    %5706 = vmatprep.subr.bf16.mxu0 0
    %5707 = vmatpush1.bf16.msra.mxu0 0
    %5708 = vmatprep.subr.bf16.mxu0 0
    %5709 = vmatpush1.bf16.msra.mxu0 0
    %5710 = vmatprep.subr.bf16.mxu0 0
    %5711 = vmatpush1.bf16.msra.mxu0 0
    %5712 = vmatprep.subr.bf16.mxu0 0
    %5713 = vmatpush1.bf16.msra.mxu0 0
    %5714 = vmatprep.subr.bf16.mxu0 0
    %5715 = vmatpush1.bf16.msra.mxu0 0
    %5716 = vmatprep.subr.bf16.mxu0 0
    %5717 = vmatpush1.bf16.msra.mxu0 0
    %5718 = vmatprep.subr.bf16.mxu0 0
    %5719 = vmatpush1.bf16.msra.mxu0 0
    %5720 = vmatprep.subr.bf16.mxu0 0
    %5721 = vmatpush1.bf16.msra.mxu0 0
    %5722 = vmatprep.subr.bf16.mxu0 0
    %5723 = vmatpush1.bf16.msra.mxu0 0
    %5724 = vmatprep.subr.bf16.mxu0 0
    %5725 = vmatpush1.bf16.msra.mxu0 0
    %5726 = vmatprep.mubr.bf16.mxu0 0
    %5727 = vmatmul.mubr.bf16.gmra.mrb[0].mxu0 %v5692
    %v5728 = vpop.f32.mrb[0].mxu0
    %v5729 = vadd.f32 %v5677, %v5728
    %v5730 = vpop.f32.mrb[0].mxu0
    %v5731 = vpop.f32.mrb[0].mxu0
    %v5732 = vadd.f32 %v5677, %v5731
    %v5733 = vpop.f32.mrb[0].mxu0
    %5734 = vdwg.mxu0
    %s5735 = scalar_lea.vmem %s5, 16
    %v5736 = vld [vmem:[%s5735] sm:$0xf]
    %v5737 = vld [vmem:[%s5735 + $0x4] sm:$0xf]
    %v5738 = vld [vmem:[%s5735 + $0x8] sm:$0xf]
    %v5739 = vld [vmem:[%s5735 + $0xc] sm:$0xf]
    %s5740 = scalar_lea.vmem %s6, 1
    %v5741 = vld [vmem:[%s5740] sm:$0x1]
    %v5743 = vlaneseq
    %v5744 = vshrl.u32 %v5743, 7
    %v5745 = vsub.s32 0, %v5744
    %v5746 = vrot.slane %v5741, %v5745
    %v5752 = vunpack.c.l.b16 %v5736
    %v5753 = vunpack.c.l.b16 %v5737
    %v5754 = vunpack.c.l.b16 %v5738
    %v5755 = vunpack.c.l.b16 %v5739
    %v5756 = vpack.c.b16 %v5753, %v5752
    %v5757 = vpack.c.b16 %v5755, %v5754
    %5760 = vmatprep.subr.bf16.mxu0 0
    %5761 = vmatpush1.bf16.msra.mxu0 %v5756
    %5762 = vmatprep.subr.bf16.mxu0 0
    %5763 = vmatpush1.bf16.msra.mxu0 %v5757
    %5764 = vmatprep.subr.bf16.mxu0 0
    %5765 = vmatpush1.bf16.msra.mxu0 0
    %5766 = vmatprep.subr.bf16.mxu0 0
    %5767 = vmatpush1.bf16.msra.mxu0 0
    %5768 = vmatprep.subr.bf16.mxu0 0
    %5769 = vmatpush1.bf16.msra.mxu0 0
    %5770 = vmatprep.subr.bf16.mxu0 0
    %5771 = vmatpush1.bf16.msra.mxu0 0
    %5772 = vmatprep.subr.bf16.mxu0 0
    %5773 = vmatpush1.bf16.msra.mxu0 0
    %5774 = vmatprep.subr.bf16.mxu0 0
    %5775 = vmatpush1.bf16.msra.mxu0 0
    %5776 = vmatprep.subr.bf16.mxu0 0
    %5777 = vmatpush1.bf16.msra.mxu0 0
    %5778 = vmatprep.subr.bf16.mxu0 0
    %5779 = vmatpush1.bf16.msra.mxu0 0
    %5780 = vmatprep.subr.bf16.mxu0 0
    %5781 = vmatpush1.bf16.msra.mxu0 0
    %5782 = vmatprep.subr.bf16.mxu0 0
    %5783 = vmatpush1.bf16.msra.mxu0 0
    %5784 = vmatprep.subr.bf16.mxu0 0
    %5785 = vmatpush1.bf16.msra.mxu0 0
    %5786 = vmatprep.subr.bf16.mxu0 0
    %5787 = vmatpush1.bf16.msra.mxu0 0
    %5788 = vmatprep.subr.bf16.mxu0 0
    %5789 = vmatpush1.bf16.msra.mxu0 0
    %5790 = vmatprep.subr.bf16.mxu0 0
    %5791 = vmatpush1.bf16.msra.mxu0 0
    %5792 = vmatprep.mubr.bf16.mxu0 0
    %5793 = vmatmul.mubr.bf16.gmra.mrb[0].mxu0 %v242
    %v5794 = vpop.f32.mrb[0].mxu0
    %v5795 = vadd.f32 %v5746, %v5794
    %v5796 = vpop.f32.mrb[0].mxu0
    %v5797 = vpop.f32.mrb[0].mxu0
    %v5798 = vadd.f32 %v5746, %v5797
    %v5799 = vpop.f32.mrb[0].mxu0
    %5800 = vdwg.mxu0
    %5803 = vrot.lane.b32.xlu0 %v5729, 120
    %v5804 = vpop.permute.xlu0 %5803
    %5805 = vrot.lane.b32.xlu0 %v5732, 120
    %v5806 = vpop.permute.xlu0 %5805
    %5809 = vrot.lane.b32.xlu0 %v5729, 112
    %v5810 = vpop.permute.xlu0 %5809
    %5811 = vrot.lane.b32.xlu0 %v5732, 112
    %v5812 = vpop.permute.xlu0 %5811
    %5815 = vrot.lane.b32.xlu0 %v5729, 104
    %v5816 = vpop.permute.xlu0 %5815
    %5817 = vrot.lane.b32.xlu0 %v5732, 104
    %v5818 = vpop.permute.xlu0 %5817
    %v5821 = vcombine.low %v5729, %v5810
    %v5822 = vcombine.high %v5729, %v5810
    %v5824 = vunpack.c.l.s4 1983009808
    %v5825 = vunpack.c.0.s8 %v5824
    %v5826 = vlaneseq
    %v5827 = vshrl.u32 %v5826, 7
    %v5828 = vsub.s32 %v5825, %v5827
    %v5829 = vrot.slane %v5821, %v5828
    %v5831 = vunpack.c.l.s4 1983009808
    %v5832 = vunpack.c.0.s8 %v5831
    %v5833 = vlaneseq
    %v5834 = vshrl.u32 %v5833, 7
    %v5835 = vsub.s32 %v5832, %v5834
    %v5836 = vrot.slane %v5822, %v5835
    %v5837 = vcombine.low %v5804, %v5816
    %v5838 = vcombine.high %v5804, %v5816
    %v5840 = vunpack.c.l.s4 1983009808
    %v5841 = vunpack.c.0.s8 %v5840
    %v5842 = vlaneseq
    %v5843 = vshrl.u32 %v5842, 7
    %v5844 = vsub.s32 %v5841, %v5843
    %v5845 = vrot.slane %v5837, %v5844
    %v5847 = vunpack.c.l.s4 1983009808
    %v5848 = vunpack.c.0.s8 %v5847
    %v5849 = vlaneseq
    %v5850 = vshrl.u32 %v5849, 7
    %v5851 = vsub.s32 %v5848, %v5850
    %v5852 = vrot.slane %v5838, %v5851
    %v5853 = vcombine.low %v5829, %v5845
    %v5854 = vcombine.high %v5829, %v5845
    %v5856 = vunpack.c.l.s4 1934713408
    %v5857 = vunpack.c.0.s8 %v5856
    %v5858 = vlaneseq
    %v5859 = vshrl.u32 %v5858, 7
    %v5860 = vsub.s32 %v5857, %v5859
    %v5861 = vrot.slane %v5853, %v5860
    %v5863 = vunpack.c.l.s4 1934713408
    %v5864 = vunpack.c.0.s8 %v5863
    %v5865 = vlaneseq
    %v5866 = vshrl.u32 %v5865, 7
    %v5867 = vsub.s32 %v5864, %v5866
    %v5868 = vrot.slane %v5854, %v5867
    %v5869 = vcombine.low %v5836, %v5852
    %v5870 = vcombine.high %v5836, %v5852
    %v5872 = vunpack.c.l.s4 1934713408
    %v5873 = vunpack.c.0.s8 %v5872
    %v5874 = vlaneseq
    %v5875 = vshrl.u32 %v5874, 7
    %v5876 = vsub.s32 %v5873, %v5875
    %v5877 = vrot.slane %v5869, %v5876
    %v5879 = vunpack.c.l.s4 1934713408
    %v5880 = vunpack.c.0.s8 %v5879
    %v5881 = vlaneseq
    %v5882 = vshrl.u32 %v5881, 7
    %v5883 = vsub.s32 %v5880, %v5882
    %v5884 = vrot.slane %v5870, %v5883
    %v5885 = vcombine.high %v5861, 0.0
    %v5886 = vcombine.high %v5868, 0.0
    %v5887 = vcombine.high %v5877, 0.0
    %v5888 = vcombine.high %v5884, 0.0
    %v5889 = vcombine.low %v5732, %v5812
    %v5890 = vcombine.high %v5732, %v5812
    %v5892 = vunpack.c.l.s4 1983009808
    %v5893 = vunpack.c.0.s8 %v5892
    %v5894 = vlaneseq
    %v5895 = vshrl.u32 %v5894, 7
    %v5896 = vsub.s32 %v5893, %v5895
    %v5897 = vrot.slane %v5889, %v5896
    %v5899 = vunpack.c.l.s4 1983009808
    %v5900 = vunpack.c.0.s8 %v5899
    %v5901 = vlaneseq
    %v5902 = vshrl.u32 %v5901, 7
    %v5903 = vsub.s32 %v5900, %v5902
    %v5904 = vrot.slane %v5890, %v5903
    %v5905 = vcombine.low %v5806, %v5818
    %v5906 = vcombine.high %v5806, %v5818
    %v5908 = vunpack.c.l.s4 1983009808
    %v5909 = vunpack.c.0.s8 %v5908
    %v5910 = vlaneseq
    %v5911 = vshrl.u32 %v5910, 7
    %v5912 = vsub.s32 %v5909, %v5911
    %v5913 = vrot.slane %v5905, %v5912
    %v5915 = vunpack.c.l.s4 1983009808
    %v5916 = vunpack.c.0.s8 %v5915
    %v5917 = vlaneseq
    %v5918 = vshrl.u32 %v5917, 7
    %v5919 = vsub.s32 %v5916, %v5918
    %v5920 = vrot.slane %v5906, %v5919
    %v5921 = vcombine.low %v5897, %v5913
    %v5922 = vcombine.high %v5897, %v5913
    %v5924 = vunpack.c.l.s4 1934713408
    %v5925 = vunpack.c.0.s8 %v5924
    %v5926 = vlaneseq
    %v5927 = vshrl.u32 %v5926, 7
    %v5928 = vsub.s32 %v5925, %v5927
    %v5929 = vrot.slane %v5921, %v5928
    %v5931 = vunpack.c.l.s4 1934713408
    %v5932 = vunpack.c.0.s8 %v5931
    %v5933 = vlaneseq
    %v5934 = vshrl.u32 %v5933, 7
    %v5935 = vsub.s32 %v5932, %v5934
    %v5936 = vrot.slane %v5922, %v5935
    %v5937 = vcombine.low %v5904, %v5920
    %v5938 = vcombine.high %v5904, %v5920
    %v5940 = vunpack.c.l.s4 1934713408
    %v5941 = vunpack.c.0.s8 %v5940
    %v5942 = vlaneseq
    %v5943 = vshrl.u32 %v5942, 7
    %v5944 = vsub.s32 %v5941, %v5943
    %v5945 = vrot.slane %v5937, %v5944
    %v5947 = vunpack.c.l.s4 1934713408
    %v5948 = vunpack.c.0.s8 %v5947
    %v5949 = vlaneseq
    %v5950 = vshrl.u32 %v5949, 7
    %v5951 = vsub.s32 %v5948, %v5950
    %v5952 = vrot.slane %v5938, %v5951
    %v5953 = vcombine.high %v5929, 0.0
    %v5954 = vcombine.high %v5936, 0.0
    %v5955 = vcombine.high %v5945, 0.0
    %v5956 = vcombine.high %v5952, 0.0
    %v5957 = vcombine.low %v5861, %v5868
    %v5959 = vunpack.c.l.s4 1983009808
    %v5960 = vunpack.c.0.s8 %v5959
    %v5961 = vlaneseq
    %v5962 = vshrl.u32 %v5961, 7
    %v5963 = vsub.s32 %v5960, %v5962
    %v5964 = vrot.slane %v5957, %v5963
    %v5965 = vcombine.low %v5885, %v5886
    %v5967 = vunpack.c.l.s4 1983009808
    %v5968 = vunpack.c.0.s8 %v5967
    %v5969 = vlaneseq
    %v5970 = vshrl.u32 %v5969, 7
    %v5971 = vsub.s32 %v5968, %v5970
    %v5972 = vrot.slane %v5965, %v5971
    %v5973 = vcombine.low %v5877, %v5884
    %v5975 = vunpack.c.l.s4 1983009808
    %v5976 = vunpack.c.0.s8 %v5975
    %v5977 = vlaneseq
    %v5978 = vshrl.u32 %v5977, 7
    %v5979 = vsub.s32 %v5976, %v5978
    %v5980 = vrot.slane %v5973, %v5979
    %v5981 = vcombine.low %v5887, %v5888
    %v5983 = vunpack.c.l.s4 1983009808
    %v5984 = vunpack.c.0.s8 %v5983
    %v5985 = vlaneseq
    %v5986 = vshrl.u32 %v5985, 7
    %v5987 = vsub.s32 %v5984, %v5986
    %v5988 = vrot.slane %v5981, %v5987
    %v5989 = vcombine.low %v5964, %v5972
    %v5990 = vcombine.high %v5964, %v5972
    %v5992 = vunpack.c.l.s4 1934713408
    %v5993 = vunpack.c.0.s8 %v5992
    %v5994 = vlaneseq
    %v5995 = vshrl.u32 %v5994, 7
    %v5996 = vsub.s32 %v5993, %v5995
    %v5997 = vrot.slane %v5989, %v5996
    %v5999 = vunpack.c.l.s4 1934713408
    %v6000 = vunpack.c.0.s8 %v5999
    %v6001 = vlaneseq
    %v6002 = vshrl.u32 %v6001, 7
    %v6003 = vsub.s32 %v6000, %v6002
    %v6004 = vrot.slane %v5990, %v6003
    %v6005 = vcombine.low %v5980, %v5988
    %v6006 = vcombine.high %v5980, %v5988
    %v6008 = vunpack.c.l.s4 1934713408
    %v6009 = vunpack.c.0.s8 %v6008
    %v6010 = vlaneseq
    %v6011 = vshrl.u32 %v6010, 7
    %v6012 = vsub.s32 %v6009, %v6011
    %v6013 = vrot.slane %v6005, %v6012
    %v6015 = vunpack.c.l.s4 1934713408
    %v6016 = vunpack.c.0.s8 %v6015
    %v6017 = vlaneseq
    %v6018 = vshrl.u32 %v6017, 7
    %v6019 = vsub.s32 %v6016, %v6018
    %v6020 = vrot.slane %v6006, %v6019
    %v6021 = vcombine.low %v5997, %v6013
    %v6022 = vcombine.high %v5997, %v6013
    %v6023 = vcombine.low %v6004, %v6020
    %v6024 = vcombine.high %v6004, %v6020
    %v6025 = vcombine.low %v5929, %v5936
    %v6027 = vunpack.c.l.s4 1983009808
    %v6028 = vunpack.c.0.s8 %v6027
    %v6029 = vlaneseq
    %v6030 = vshrl.u32 %v6029, 7
    %v6031 = vsub.s32 %v6028, %v6030
    %v6032 = vrot.slane %v6025, %v6031
    %v6033 = vcombine.low %v5953, %v5954
    %v6035 = vunpack.c.l.s4 1983009808
    %v6036 = vunpack.c.0.s8 %v6035
    %v6037 = vlaneseq
    %v6038 = vshrl.u32 %v6037, 7
    %v6039 = vsub.s32 %v6036, %v6038
    %v6040 = vrot.slane %v6033, %v6039
    %v6041 = vcombine.low %v5945, %v5952
    %v6043 = vunpack.c.l.s4 1983009808
    %v6044 = vunpack.c.0.s8 %v6043
    %v6045 = vlaneseq
    %v6046 = vshrl.u32 %v6045, 7
    %v6047 = vsub.s32 %v6044, %v6046
    %v6048 = vrot.slane %v6041, %v6047
    %v6049 = vcombine.low %v5955, %v5956
    %v6051 = vunpack.c.l.s4 1983009808
    %v6052 = vunpack.c.0.s8 %v6051
    %v6053 = vlaneseq
    %v6054 = vshrl.u32 %v6053, 7
    %v6055 = vsub.s32 %v6052, %v6054
    %v6056 = vrot.slane %v6049, %v6055
    %v6057 = vcombine.low %v6032, %v6040
    %v6058 = vcombine.high %v6032, %v6040
    %v6060 = vunpack.c.l.s4 1934713408
    %v6061 = vunpack.c.0.s8 %v6060
    %v6062 = vlaneseq
    %v6063 = vshrl.u32 %v6062, 7
    %v6064 = vsub.s32 %v6061, %v6063
    %v6065 = vrot.slane %v6057, %v6064
    %v6067 = vunpack.c.l.s4 1934713408
    %v6068 = vunpack.c.0.s8 %v6067
    %v6069 = vlaneseq
    %v6070 = vshrl.u32 %v6069, 7
    %v6071 = vsub.s32 %v6068, %v6070
    %v6072 = vrot.slane %v6058, %v6071
    %v6073 = vcombine.low %v6048, %v6056
    %v6074 = vcombine.high %v6048, %v6056
    %v6076 = vunpack.c.l.s4 1934713408
    %v6077 = vunpack.c.0.s8 %v6076
    %v6078 = vlaneseq
    %v6079 = vshrl.u32 %v6078, 7
    %v6080 = vsub.s32 %v6077, %v6079
    %v6081 = vrot.slane %v6073, %v6080
    %v6083 = vunpack.c.l.s4 1934713408
    %v6084 = vunpack.c.0.s8 %v6083
    %v6085 = vlaneseq
    %v6086 = vshrl.u32 %v6085, 7
    %v6087 = vsub.s32 %v6084, %v6086
    %v6088 = vrot.slane %v6074, %v6087
    %v6089 = vcombine.low %v6065, %v6081
    %v6090 = vcombine.high %v6065, %v6081
    %v6091 = vcombine.low %v6072, %v6088
    %v6092 = vcombine.high %v6072, %v6088
    %6093 = vrot.lane.b32.xlu0 %v5729, 96
    %v6094 = vpop.permute.xlu0 %6093
    %6095 = vrot.lane.b32.xlu0 %v5732, 96
    %v6096 = vpop.permute.xlu0 %6095
    %6097 = vrot.lane.b32.xlu0 %v5804, 96
    %v6098 = vpop.permute.xlu0 %6097
    %6099 = vrot.lane.b32.xlu0 %v5806, 96
    %v6100 = vpop.permute.xlu0 %6099
    %6101 = vrot.lane.b32.xlu0 %v5810, 96
    %v6102 = vpop.permute.xlu0 %6101
    %6103 = vrot.lane.b32.xlu0 %v5812, 96
    %v6104 = vpop.permute.xlu0 %6103
    %6105 = vrot.lane.b32.xlu0 %v5816, 96
    %v6106 = vpop.permute.xlu0 %6105
    %6107 = vrot.lane.b32.xlu0 %v5818, 96
    %v6108 = vpop.permute.xlu0 %6107
    %v6117 = vcombine.low %v6094, %v6102
    %v6118 = vcombine.high %v6094, %v6102
    %v6120 = vunpack.c.l.s4 1983009808
    %v6121 = vunpack.c.0.s8 %v6120
    %v6122 = vlaneseq
    %v6123 = vshrl.u32 %v6122, 7
    %v6124 = vsub.s32 %v6121, %v6123
    %v6125 = vrot.slane %v6117, %v6124
    %v6127 = vunpack.c.l.s4 1983009808
    %v6128 = vunpack.c.0.s8 %v6127
    %v6129 = vlaneseq
    %v6130 = vshrl.u32 %v6129, 7
    %v6131 = vsub.s32 %v6128, %v6130
    %v6132 = vrot.slane %v6118, %v6131
    %v6133 = vcombine.low %v6098, %v6106
    %v6134 = vcombine.high %v6098, %v6106
    %v6136 = vunpack.c.l.s4 1983009808
    %v6137 = vunpack.c.0.s8 %v6136
    %v6138 = vlaneseq
    %v6139 = vshrl.u32 %v6138, 7
    %v6140 = vsub.s32 %v6137, %v6139
    %v6141 = vrot.slane %v6133, %v6140
    %v6143 = vunpack.c.l.s4 1983009808
    %v6144 = vunpack.c.0.s8 %v6143
    %v6145 = vlaneseq
    %v6146 = vshrl.u32 %v6145, 7
    %v6147 = vsub.s32 %v6144, %v6146
    %v6148 = vrot.slane %v6134, %v6147
    %v6149 = vcombine.low %v6125, %v6141
    %v6150 = vcombine.high %v6125, %v6141
    %v6152 = vunpack.c.l.s4 1934713408
    %v6153 = vunpack.c.0.s8 %v6152
    %v6154 = vlaneseq
    %v6155 = vshrl.u32 %v6154, 7
    %v6156 = vsub.s32 %v6153, %v6155
    %v6157 = vrot.slane %v6149, %v6156
    %v6159 = vunpack.c.l.s4 1934713408
    %v6160 = vunpack.c.0.s8 %v6159
    %v6161 = vlaneseq
    %v6162 = vshrl.u32 %v6161, 7
    %v6163 = vsub.s32 %v6160, %v6162
    %v6164 = vrot.slane %v6150, %v6163
    %v6165 = vcombine.low %v6132, %v6148
    %v6166 = vcombine.high %v6132, %v6148
    %v6168 = vunpack.c.l.s4 1934713408
    %v6169 = vunpack.c.0.s8 %v6168
    %v6170 = vlaneseq
    %v6171 = vshrl.u32 %v6170, 7
    %v6172 = vsub.s32 %v6169, %v6171
    %v6173 = vrot.slane %v6165, %v6172
    %v6175 = vunpack.c.l.s4 1934713408
    %v6176 = vunpack.c.0.s8 %v6175
    %v6177 = vlaneseq
    %v6178 = vshrl.u32 %v6177, 7
    %v6179 = vsub.s32 %v6176, %v6178
    %v6180 = vrot.slane %v6166, %v6179
    %v6181 = vcombine.high %v6157, 0.0
    %v6182 = vcombine.high %v6164, 0.0
    %v6183 = vcombine.high %v6173, 0.0
    %v6184 = vcombine.high %v6180, 0.0
    %v6185 = vcombine.low %v6096, %v6104
    %v6186 = vcombine.high %v6096, %v6104
    %v6188 = vunpack.c.l.s4 1983009808
    %v6189 = vunpack.c.0.s8 %v6188
    %v6190 = vlaneseq
    %v6191 = vshrl.u32 %v6190, 7
    %v6192 = vsub.s32 %v6189, %v6191
    %v6193 = vrot.slane %v6185, %v6192
    %v6195 = vunpack.c.l.s4 1983009808
    %v6196 = vunpack.c.0.s8 %v6195
    %v6197 = vlaneseq
    %v6198 = vshrl.u32 %v6197, 7
    %v6199 = vsub.s32 %v6196, %v6198
    %v6200 = vrot.slane %v6186, %v6199
    %v6201 = vcombine.low %v6100, %v6108
    %v6202 = vcombine.high %v6100, %v6108
    %v6204 = vunpack.c.l.s4 1983009808
    %v6205 = vunpack.c.0.s8 %v6204
    %v6206 = vlaneseq
    %v6207 = vshrl.u32 %v6206, 7
    %v6208 = vsub.s32 %v6205, %v6207
    %v6209 = vrot.slane %v6201, %v6208
    %v6211 = vunpack.c.l.s4 1983009808
    %v6212 = vunpack.c.0.s8 %v6211
    %v6213 = vlaneseq
    %v6214 = vshrl.u32 %v6213, 7
    %v6215 = vsub.s32 %v6212, %v6214
    %v6216 = vrot.slane %v6202, %v6215
    %v6217 = vcombine.low %v6193, %v6209
    %v6218 = vcombine.high %v6193, %v6209
    %v6220 = vunpack.c.l.s4 1934713408
    %v6221 = vunpack.c.0.s8 %v6220
    %v6222 = vlaneseq
    %v6223 = vshrl.u32 %v6222, 7
    %v6224 = vsub.s32 %v6221, %v6223
    %v6225 = vrot.slane %v6217, %v6224
    %v6227 = vunpack.c.l.s4 1934713408
    %v6228 = vunpack.c.0.s8 %v6227
    %v6229 = vlaneseq
    %v6230 = vshrl.u32 %v6229, 7
    %v6231 = vsub.s32 %v6228, %v6230
    %v6232 = vrot.slane %v6218, %v6231
    %v6233 = vcombine.low %v6200, %v6216
    %v6234 = vcombine.high %v6200, %v6216
    %v6236 = vunpack.c.l.s4 1934713408
    %v6237 = vunpack.c.0.s8 %v6236
    %v6238 = vlaneseq
    %v6239 = vshrl.u32 %v6238, 7
    %v6240 = vsub.s32 %v6237, %v6239
    %v6241 = vrot.slane %v6233, %v6240
    %v6243 = vunpack.c.l.s4 1934713408
    %v6244 = vunpack.c.0.s8 %v6243
    %v6245 = vlaneseq
    %v6246 = vshrl.u32 %v6245, 7
    %v6247 = vsub.s32 %v6244, %v6246
    %v6248 = vrot.slane %v6234, %v6247
    %v6249 = vcombine.high %v6225, 0.0
    %v6250 = vcombine.high %v6232, 0.0
    %v6251 = vcombine.high %v6241, 0.0
    %v6252 = vcombine.high %v6248, 0.0
    %v6253 = vcombine.low %v6157, %v6164
    %v6255 = vunpack.c.l.s4 1983009808
    %v6256 = vunpack.c.0.s8 %v6255
    %v6257 = vlaneseq
    %v6258 = vshrl.u32 %v6257, 7
    %v6259 = vsub.s32 %v6256, %v6258
    %v6260 = vrot.slane %v6253, %v6259
    %v6261 = vcombine.low %v6181, %v6182
    %v6263 = vunpack.c.l.s4 1983009808
    %v6264 = vunpack.c.0.s8 %v6263
    %v6265 = vlaneseq
    %v6266 = vshrl.u32 %v6265, 7
    %v6267 = vsub.s32 %v6264, %v6266
    %v6268 = vrot.slane %v6261, %v6267
    %v6269 = vcombine.low %v6173, %v6180
    %v6271 = vunpack.c.l.s4 1983009808
    %v6272 = vunpack.c.0.s8 %v6271
    %v6273 = vlaneseq
    %v6274 = vshrl.u32 %v6273, 7
    %v6275 = vsub.s32 %v6272, %v6274
    %v6276 = vrot.slane %v6269, %v6275
    %v6277 = vcombine.low %v6183, %v6184
    %v6279 = vunpack.c.l.s4 1983009808
    %v6280 = vunpack.c.0.s8 %v6279
    %v6281 = vlaneseq
    %v6282 = vshrl.u32 %v6281, 7
    %v6283 = vsub.s32 %v6280, %v6282
    %v6284 = vrot.slane %v6277, %v6283
    %v6285 = vcombine.low %v6260, %v6268
    %v6286 = vcombine.high %v6260, %v6268
    %v6288 = vunpack.c.l.s4 1934713408
    %v6289 = vunpack.c.0.s8 %v6288
    %v6290 = vlaneseq
    %v6291 = vshrl.u32 %v6290, 7
    %v6292 = vsub.s32 %v6289, %v6291
    %v6293 = vrot.slane %v6285, %v6292
    %v6295 = vunpack.c.l.s4 1934713408
    %v6296 = vunpack.c.0.s8 %v6295
    %v6297 = vlaneseq
    %v6298 = vshrl.u32 %v6297, 7
    %v6299 = vsub.s32 %v6296, %v6298
    %v6300 = vrot.slane %v6286, %v6299
    %v6301 = vcombine.low %v6276, %v6284
    %v6302 = vcombine.high %v6276, %v6284
    %v6304 = vunpack.c.l.s4 1934713408
    %v6305 = vunpack.c.0.s8 %v6304
    %v6306 = vlaneseq
    %v6307 = vshrl.u32 %v6306, 7
    %v6308 = vsub.s32 %v6305, %v6307
    %v6309 = vrot.slane %v6301, %v6308
    %v6311 = vunpack.c.l.s4 1934713408
    %v6312 = vunpack.c.0.s8 %v6311
    %v6313 = vlaneseq
    %v6314 = vshrl.u32 %v6313, 7
    %v6315 = vsub.s32 %v6312, %v6314
    %v6316 = vrot.slane %v6302, %v6315
    %v6317 = vcombine.low %v6293, %v6309
    %v6318 = vcombine.high %v6293, %v6309
    %v6319 = vcombine.low %v6300, %v6316
    %v6320 = vcombine.high %v6300, %v6316
    %v6321 = vcombine.low %v6225, %v6232
    %v6323 = vunpack.c.l.s4 1983009808
    %v6324 = vunpack.c.0.s8 %v6323
    %v6325 = vlaneseq
    %v6326 = vshrl.u32 %v6325, 7
    %v6327 = vsub.s32 %v6324, %v6326
    %v6328 = vrot.slane %v6321, %v6327
    %v6329 = vcombine.low %v6249, %v6250
    %v6331 = vunpack.c.l.s4 1983009808
    %v6332 = vunpack.c.0.s8 %v6331
    %v6333 = vlaneseq
    %v6334 = vshrl.u32 %v6333, 7
    %v6335 = vsub.s32 %v6332, %v6334
    %v6336 = vrot.slane %v6329, %v6335
    %v6337 = vcombine.low %v6241, %v6248
    %v6339 = vunpack.c.l.s4 1983009808
    %v6340 = vunpack.c.0.s8 %v6339
    %v6341 = vlaneseq
    %v6342 = vshrl.u32 %v6341, 7
    %v6343 = vsub.s32 %v6340, %v6342
    %v6344 = vrot.slane %v6337, %v6343
    %v6345 = vcombine.low %v6251, %v6252
    %v6347 = vunpack.c.l.s4 1983009808
    %v6348 = vunpack.c.0.s8 %v6347
    %v6349 = vlaneseq
    %v6350 = vshrl.u32 %v6349, 7
    %v6351 = vsub.s32 %v6348, %v6350
    %v6352 = vrot.slane %v6345, %v6351
    %v6353 = vcombine.low %v6328, %v6336
    %v6354 = vcombine.high %v6328, %v6336
    %v6356 = vunpack.c.l.s4 1934713408
    %v6357 = vunpack.c.0.s8 %v6356
    %v6358 = vlaneseq
    %v6359 = vshrl.u32 %v6358, 7
    %v6360 = vsub.s32 %v6357, %v6359
    %v6361 = vrot.slane %v6353, %v6360
    %v6363 = vunpack.c.l.s4 1934713408
    %v6364 = vunpack.c.0.s8 %v6363
    %v6365 = vlaneseq
    %v6366 = vshrl.u32 %v6365, 7
    %v6367 = vsub.s32 %v6364, %v6366
    %v6368 = vrot.slane %v6354, %v6367
    %v6369 = vcombine.low %v6344, %v6352
    %v6370 = vcombine.high %v6344, %v6352
    %v6372 = vunpack.c.l.s4 1934713408
    %v6373 = vunpack.c.0.s8 %v6372
    %v6374 = vlaneseq
    %v6375 = vshrl.u32 %v6374, 7
    %v6376 = vsub.s32 %v6373, %v6375
    %v6377 = vrot.slane %v6369, %v6376
    %v6379 = vunpack.c.l.s4 1934713408
    %v6380 = vunpack.c.0.s8 %v6379
    %v6381 = vlaneseq
    %v6382 = vshrl.u32 %v6381, 7
    %v6383 = vsub.s32 %v6380, %v6382
    %v6384 = vrot.slane %v6370, %v6383
    %v6385 = vcombine.low %v6361, %v6377
    %v6386 = vcombine.high %v6361, %v6377
    %v6387 = vcombine.low %v6368, %v6384
    %v6388 = vcombine.high %v6368, %v6384
    %6389 = vrot.lane.b32.xlu0 %v5729, 64
    %v6390 = vpop.permute.xlu0 %6389
    %6391 = vrot.lane.b32.xlu0 %v5732, 64
    %v6392 = vpop.permute.xlu0 %6391
    %6393 = vrot.lane.b32.xlu0 %v5804, 64
    %v6394 = vpop.permute.xlu0 %6393
    %6395 = vrot.lane.b32.xlu0 %v5806, 64
    %v6396 = vpop.permute.xlu0 %6395
    %6397 = vrot.lane.b32.xlu0 %v5810, 64
    %v6398 = vpop.permute.xlu0 %6397
    %6399 = vrot.lane.b32.xlu0 %v5812, 64
    %v6400 = vpop.permute.xlu0 %6399
    %6401 = vrot.lane.b32.xlu0 %v5816, 64
    %v6402 = vpop.permute.xlu0 %6401
    %6403 = vrot.lane.b32.xlu0 %v5818, 64
    %v6404 = vpop.permute.xlu0 %6403
    %v6413 = vcombine.low %v6390, %v6398
    %v6414 = vcombine.high %v6390, %v6398
    %v6416 = vunpack.c.l.s4 1983009808
    %v6417 = vunpack.c.0.s8 %v6416
    %v6418 = vlaneseq
    %v6419 = vshrl.u32 %v6418, 7
    %v6420 = vsub.s32 %v6417, %v6419
    %v6421 = vrot.slane %v6413, %v6420
    %v6423 = vunpack.c.l.s4 1983009808
    %v6424 = vunpack.c.0.s8 %v6423
    %v6425 = vlaneseq
    %v6426 = vshrl.u32 %v6425, 7
    %v6427 = vsub.s32 %v6424, %v6426
    %v6428 = vrot.slane %v6414, %v6427
    %v6429 = vcombine.low %v6394, %v6402
    %v6430 = vcombine.high %v6394, %v6402
    %v6432 = vunpack.c.l.s4 1983009808
    %v6433 = vunpack.c.0.s8 %v6432
    %v6434 = vlaneseq
    %v6435 = vshrl.u32 %v6434, 7
    %v6436 = vsub.s32 %v6433, %v6435
    %v6437 = vrot.slane %v6429, %v6436
    %v6439 = vunpack.c.l.s4 1983009808
    %v6440 = vunpack.c.0.s8 %v6439
    %v6441 = vlaneseq
    %v6442 = vshrl.u32 %v6441, 7
    %v6443 = vsub.s32 %v6440, %v6442
    %v6444 = vrot.slane %v6430, %v6443
    %v6445 = vcombine.low %v6421, %v6437
    %v6446 = vcombine.high %v6421, %v6437
    %v6448 = vunpack.c.l.s4 1934713408
    %v6449 = vunpack.c.0.s8 %v6448
    %v6450 = vlaneseq
    %v6451 = vshrl.u32 %v6450, 7
    %v6452 = vsub.s32 %v6449, %v6451
    %v6453 = vrot.slane %v6445, %v6452
    %v6455 = vunpack.c.l.s4 1934713408
    %v6456 = vunpack.c.0.s8 %v6455
    %v6457 = vlaneseq
    %v6458 = vshrl.u32 %v6457, 7
    %v6459 = vsub.s32 %v6456, %v6458
    %v6460 = vrot.slane %v6446, %v6459
    %v6461 = vcombine.low %v6428, %v6444
    %v6462 = vcombine.high %v6428, %v6444
    %v6464 = vunpack.c.l.s4 1934713408
    %v6465 = vunpack.c.0.s8 %v6464
    %v6466 = vlaneseq
    %v6467 = vshrl.u32 %v6466, 7
    %v6468 = vsub.s32 %v6465, %v6467
    %v6469 = vrot.slane %v6461, %v6468
    %v6471 = vunpack.c.l.s4 1934713408
    %v6472 = vunpack.c.0.s8 %v6471
    %v6473 = vlaneseq
    %v6474 = vshrl.u32 %v6473, 7
    %v6475 = vsub.s32 %v6472, %v6474
    %v6476 = vrot.slane %v6462, %v6475
    %v6477 = vcombine.high %v6453, 0.0
    %v6478 = vcombine.high %v6460, 0.0
    %v6479 = vcombine.high %v6469, 0.0
    %v6480 = vcombine.high %v6476, 0.0
    %v6481 = vcombine.low %v6392, %v6400
    %v6482 = vcombine.high %v6392, %v6400
    %v6484 = vunpack.c.l.s4 1983009808
    %v6485 = vunpack.c.0.s8 %v6484
    %v6486 = vlaneseq
    %v6487 = vshrl.u32 %v6486, 7
    %v6488 = vsub.s32 %v6485, %v6487
    %v6489 = vrot.slane %v6481, %v6488
    %v6491 = vunpack.c.l.s4 1983009808
    %v6492 = vunpack.c.0.s8 %v6491
    %v6493 = vlaneseq
    %v6494 = vshrl.u32 %v6493, 7
    %v6495 = vsub.s32 %v6492, %v6494
    %v6496 = vrot.slane %v6482, %v6495
    %v6497 = vcombine.low %v6396, %v6404
    %v6498 = vcombine.high %v6396, %v6404
    %v6500 = vunpack.c.l.s4 1983009808
    %v6501 = vunpack.c.0.s8 %v6500
    %v6502 = vlaneseq
    %v6503 = vshrl.u32 %v6502, 7
    %v6504 = vsub.s32 %v6501, %v6503
    %v6505 = vrot.slane %v6497, %v6504
    %v6507 = vunpack.c.l.s4 1983009808
    %v6508 = vunpack.c.0.s8 %v6507
    %v6509 = vlaneseq
    %v6510 = vshrl.u32 %v6509, 7
    %v6511 = vsub.s32 %v6508, %v6510
    %v6512 = vrot.slane %v6498, %v6511
    %v6513 = vcombine.low %v6489, %v6505
    %v6514 = vcombine.high %v6489, %v6505
    %v6516 = vunpack.c.l.s4 1934713408
    %v6517 = vunpack.c.0.s8 %v6516
    %v6518 = vlaneseq
    %v6519 = vshrl.u32 %v6518, 7
    %v6520 = vsub.s32 %v6517, %v6519
    %v6521 = vrot.slane %v6513, %v6520
    %v6523 = vunpack.c.l.s4 1934713408
    %v6524 = vunpack.c.0.s8 %v6523
    %v6525 = vlaneseq
    %v6526 = vshrl.u32 %v6525, 7
    %v6527 = vsub.s32 %v6524, %v6526
    %v6528 = vrot.slane %v6514, %v6527
    %v6529 = vcombine.low %v6496, %v6512
    %v6530 = vcombine.high %v6496, %v6512
    %v6532 = vunpack.c.l.s4 1934713408
    %v6533 = vunpack.c.0.s8 %v6532
    %v6534 = vlaneseq
    %v6535 = vshrl.u32 %v6534, 7
    %v6536 = vsub.s32 %v6533, %v6535
    %v6537 = vrot.slane %v6529, %v6536
    %v6539 = vunpack.c.l.s4 1934713408
    %v6540 = vunpack.c.0.s8 %v6539
    %v6541 = vlaneseq
    %v6542 = vshrl.u32 %v6541, 7
    %v6543 = vsub.s32 %v6540, %v6542
    %v6544 = vrot.slane %v6530, %v6543
    %v6545 = vcombine.high %v6521, 0.0
    %v6546 = vcombine.high %v6528, 0.0
    %v6547 = vcombine.high %v6537, 0.0
    %v6548 = vcombine.high %v6544, 0.0
    %v6549 = vcombine.low %v6453, %v6460
    %v6551 = vunpack.c.l.s4 1983009808
    %v6552 = vunpack.c.0.s8 %v6551
    %v6553 = vlaneseq
    %v6554 = vshrl.u32 %v6553, 7
    %v6555 = vsub.s32 %v6552, %v6554
    %v6556 = vrot.slane %v6549, %v6555
    %v6557 = vcombine.low %v6477, %v6478
    %v6559 = vunpack.c.l.s4 1983009808
    %v6560 = vunpack.c.0.s8 %v6559
    %v6561 = vlaneseq
    %v6562 = vshrl.u32 %v6561, 7
    %v6563 = vsub.s32 %v6560, %v6562
    %v6564 = vrot.slane %v6557, %v6563
    %v6565 = vcombine.low %v6469, %v6476
    %v6567 = vunpack.c.l.s4 1983009808
    %v6568 = vunpack.c.0.s8 %v6567
    %v6569 = vlaneseq
    %v6570 = vshrl.u32 %v6569, 7
    %v6571 = vsub.s32 %v6568, %v6570
    %v6572 = vrot.slane %v6565, %v6571
    %v6573 = vcombine.low %v6479, %v6480
    %v6575 = vunpack.c.l.s4 1983009808
    %v6576 = vunpack.c.0.s8 %v6575
    %v6577 = vlaneseq
    %v6578 = vshrl.u32 %v6577, 7
    %v6579 = vsub.s32 %v6576, %v6578
    %v6580 = vrot.slane %v6573, %v6579
    %v6581 = vcombine.low %v6556, %v6564
    %v6582 = vcombine.high %v6556, %v6564
    %v6584 = vunpack.c.l.s4 1934713408
    %v6585 = vunpack.c.0.s8 %v6584
    %v6586 = vlaneseq
    %v6587 = vshrl.u32 %v6586, 7
    %v6588 = vsub.s32 %v6585, %v6587
    %v6589 = vrot.slane %v6581, %v6588
    %v6591 = vunpack.c.l.s4 1934713408
    %v6592 = vunpack.c.0.s8 %v6591
    %v6593 = vlaneseq
    %v6594 = vshrl.u32 %v6593, 7
    %v6595 = vsub.s32 %v6592, %v6594
    %v6596 = vrot.slane %v6582, %v6595
    %v6597 = vcombine.low %v6572, %v6580
    %v6598 = vcombine.high %v6572, %v6580
    %v6600 = vunpack.c.l.s4 1934713408
    %v6601 = vunpack.c.0.s8 %v6600
    %v6602 = vlaneseq
    %v6603 = vshrl.u32 %v6602, 7
    %v6604 = vsub.s32 %v6601, %v6603
    %v6605 = vrot.slane %v6597, %v6604
    %v6607 = vunpack.c.l.s4 1934713408
    %v6608 = vunpack.c.0.s8 %v6607
    %v6609 = vlaneseq
    %v6610 = vshrl.u32 %v6609, 7
    %v6611 = vsub.s32 %v6608, %v6610
    %v6612 = vrot.slane %v6598, %v6611
    %v6613 = vcombine.low %v6589, %v6605
    %v6614 = vcombine.high %v6589, %v6605
    %v6615 = vcombine.low %v6596, %v6612
    %v6616 = vcombine.high %v6596, %v6612
    %v6617 = vcombine.low %v6521, %v6528
    %v6619 = vunpack.c.l.s4 1983009808
    %v6620 = vunpack.c.0.s8 %v6619
    %v6621 = vlaneseq
    %v6622 = vshrl.u32 %v6621, 7
    %v6623 = vsub.s32 %v6620, %v6622
    %v6624 = vrot.slane %v6617, %v6623
    %v6625 = vcombine.low %v6545, %v6546
    %v6627 = vunpack.c.l.s4 1983009808
    %v6628 = vunpack.c.0.s8 %v6627
    %v6629 = vlaneseq
    %v6630 = vshrl.u32 %v6629, 7
    %v6631 = vsub.s32 %v6628, %v6630
    %v6632 = vrot.slane %v6625, %v6631
    %v6633 = vcombine.low %v6537, %v6544
    %v6635 = vunpack.c.l.s4 1983009808
    %v6636 = vunpack.c.0.s8 %v6635
    %v6637 = vlaneseq
    %v6638 = vshrl.u32 %v6637, 7
    %v6639 = vsub.s32 %v6636, %v6638
    %v6640 = vrot.slane %v6633, %v6639
    %v6641 = vcombine.low %v6547, %v6548
    %v6643 = vunpack.c.l.s4 1983009808
    %v6644 = vunpack.c.0.s8 %v6643
    %v6645 = vlaneseq
    %v6646 = vshrl.u32 %v6645, 7
    %v6647 = vsub.s32 %v6644, %v6646
    %v6648 = vrot.slane %v6641, %v6647
    %v6649 = vcombine.low %v6624, %v6632
    %v6650 = vcombine.high %v6624, %v6632
    %v6652 = vunpack.c.l.s4 1934713408
    %v6653 = vunpack.c.0.s8 %v6652
    %v6654 = vlaneseq
    %v6655 = vshrl.u32 %v6654, 7
    %v6656 = vsub.s32 %v6653, %v6655
    %v6657 = vrot.slane %v6649, %v6656
    %v6659 = vunpack.c.l.s4 1934713408
    %v6660 = vunpack.c.0.s8 %v6659
    %v6661 = vlaneseq
    %v6662 = vshrl.u32 %v6661, 7
    %v6663 = vsub.s32 %v6660, %v6662
    %v6664 = vrot.slane %v6650, %v6663
    %v6665 = vcombine.low %v6640, %v6648
    %v6666 = vcombine.high %v6640, %v6648
    %v6668 = vunpack.c.l.s4 1934713408
    %v6669 = vunpack.c.0.s8 %v6668
    %v6670 = vlaneseq
    %v6671 = vshrl.u32 %v6670, 7
    %v6672 = vsub.s32 %v6669, %v6671
    %v6673 = vrot.slane %v6665, %v6672
    %v6675 = vunpack.c.l.s4 1934713408
    %v6676 = vunpack.c.0.s8 %v6675
    %v6677 = vlaneseq
    %v6678 = vshrl.u32 %v6677, 7
    %v6679 = vsub.s32 %v6676, %v6678
    %v6680 = vrot.slane %v6666, %v6679
    %v6681 = vcombine.low %v6657, %v6673
    %v6682 = vcombine.high %v6657, %v6673
    %v6683 = vcombine.low %v6664, %v6680
    %v6684 = vcombine.high %v6664, %v6680
    %6685 = vrot.lane.b32.xlu0 %v5729, 32
    %v6686 = vpop.permute.xlu0 %6685
    %6687 = vrot.lane.b32.xlu0 %v5732, 32
    %v6688 = vpop.permute.xlu0 %6687
    %6689 = vrot.lane.b32.xlu0 %v5804, 32
    %v6690 = vpop.permute.xlu0 %6689
    %6691 = vrot.lane.b32.xlu0 %v5806, 32
    %v6692 = vpop.permute.xlu0 %6691
    %6693 = vrot.lane.b32.xlu0 %v5810, 32
    %v6694 = vpop.permute.xlu0 %6693
    %6695 = vrot.lane.b32.xlu0 %v5812, 32
    %v6696 = vpop.permute.xlu0 %6695
    %6697 = vrot.lane.b32.xlu0 %v5816, 32
    %v6698 = vpop.permute.xlu0 %6697
    %6699 = vrot.lane.b32.xlu0 %v5818, 32
    %v6700 = vpop.permute.xlu0 %6699
    %v6709 = vcombine.low %v6686, %v6694
    %v6710 = vcombine.high %v6686, %v6694
    %v6712 = vunpack.c.l.s4 1983009808
    %v6713 = vunpack.c.0.s8 %v6712
    %v6714 = vlaneseq
    %v6715 = vshrl.u32 %v6714, 7
    %v6716 = vsub.s32 %v6713, %v6715
    %v6717 = vrot.slane %v6709, %v6716
    %v6719 = vunpack.c.l.s4 1983009808
    %v6720 = vunpack.c.0.s8 %v6719
    %v6721 = vlaneseq
    %v6722 = vshrl.u32 %v6721, 7
    %v6723 = vsub.s32 %v6720, %v6722
    %v6724 = vrot.slane %v6710, %v6723
    %v6725 = vcombine.low %v6690, %v6698
    %v6726 = vcombine.high %v6690, %v6698
    %v6728 = vunpack.c.l.s4 1983009808
    %v6729 = vunpack.c.0.s8 %v6728
    %v6730 = vlaneseq
    %v6731 = vshrl.u32 %v6730, 7
    %v6732 = vsub.s32 %v6729, %v6731
    %v6733 = vrot.slane %v6725, %v6732
    %v6735 = vunpack.c.l.s4 1983009808
    %v6736 = vunpack.c.0.s8 %v6735
    %v6737 = vlaneseq
    %v6738 = vshrl.u32 %v6737, 7
    %v6739 = vsub.s32 %v6736, %v6738
    %v6740 = vrot.slane %v6726, %v6739
    %v6741 = vcombine.low %v6717, %v6733
    %v6742 = vcombine.high %v6717, %v6733
    %v6744 = vunpack.c.l.s4 1934713408
    %v6745 = vunpack.c.0.s8 %v6744
    %v6746 = vlaneseq
    %v6747 = vshrl.u32 %v6746, 7
    %v6748 = vsub.s32 %v6745, %v6747
    %v6749 = vrot.slane %v6741, %v6748
    %v6751 = vunpack.c.l.s4 1934713408
    %v6752 = vunpack.c.0.s8 %v6751
    %v6753 = vlaneseq
    %v6754 = vshrl.u32 %v6753, 7
    %v6755 = vsub.s32 %v6752, %v6754
    %v6756 = vrot.slane %v6742, %v6755
    %v6757 = vcombine.low %v6724, %v6740
    %v6758 = vcombine.high %v6724, %v6740
    %v6760 = vunpack.c.l.s4 1934713408
    %v6761 = vunpack.c.0.s8 %v6760
    %v6762 = vlaneseq
    %v6763 = vshrl.u32 %v6762, 7
    %v6764 = vsub.s32 %v6761, %v6763
    %v6765 = vrot.slane %v6757, %v6764
    %v6767 = vunpack.c.l.s4 1934713408
    %v6768 = vunpack.c.0.s8 %v6767
    %v6769 = vlaneseq
    %v6770 = vshrl.u32 %v6769, 7
    %v6771 = vsub.s32 %v6768, %v6770
    %v6772 = vrot.slane %v6758, %v6771
    %v6773 = vcombine.high %v6749, 0.0
    %v6774 = vcombine.high %v6756, 0.0
    %v6775 = vcombine.high %v6765, 0.0
    %v6776 = vcombine.high %v6772, 0.0
    %v6777 = vcombine.low %v6688, %v6696
    %v6778 = vcombine.high %v6688, %v6696
    %v6780 = vunpack.c.l.s4 1983009808
    %v6781 = vunpack.c.0.s8 %v6780
    %v6782 = vlaneseq
    %v6783 = vshrl.u32 %v6782, 7
    %v6784 = vsub.s32 %v6781, %v6783
    %v6785 = vrot.slane %v6777, %v6784
    %v6787 = vunpack.c.l.s4 1983009808
    %v6788 = vunpack.c.0.s8 %v6787
    %v6789 = vlaneseq
    %v6790 = vshrl.u32 %v6789, 7
    %v6791 = vsub.s32 %v6788, %v6790
    %v6792 = vrot.slane %v6778, %v6791
    %v6793 = vcombine.low %v6692, %v6700
    %v6794 = vcombine.high %v6692, %v6700
    %v6796 = vunpack.c.l.s4 1983009808
    %v6797 = vunpack.c.0.s8 %v6796
    %v6798 = vlaneseq
    %v6799 = vshrl.u32 %v6798, 7
    %v6800 = vsub.s32 %v6797, %v6799
    %v6801 = vrot.slane %v6793, %v6800
    %v6803 = vunpack.c.l.s4 1983009808
    %v6804 = vunpack.c.0.s8 %v6803
    %v6805 = vlaneseq
    %v6806 = vshrl.u32 %v6805, 7
    %v6807 = vsub.s32 %v6804, %v6806
    %v6808 = vrot.slane %v6794, %v6807
    %v6809 = vcombine.low %v6785, %v6801
    %v6810 = vcombine.high %v6785, %v6801
    %v6812 = vunpack.c.l.s4 1934713408
    %v6813 = vunpack.c.0.s8 %v6812
    %v6814 = vlaneseq
    %v6815 = vshrl.u32 %v6814, 7
    %v6816 = vsub.s32 %v6813, %v6815
    %v6817 = vrot.slane %v6809, %v6816
    %v6819 = vunpack.c.l.s4 1934713408
    %v6820 = vunpack.c.0.s8 %v6819
    %v6821 = vlaneseq
    %v6822 = vshrl.u32 %v6821, 7
    %v6823 = vsub.s32 %v6820, %v6822
    %v6824 = vrot.slane %v6810, %v6823
    %v6825 = vcombine.low %v6792, %v6808
    %v6826 = vcombine.high %v6792, %v6808
    %v6828 = vunpack.c.l.s4 1934713408
    %v6829 = vunpack.c.0.s8 %v6828
    %v6830 = vlaneseq
    %v6831 = vshrl.u32 %v6830, 7
    %v6832 = vsub.s32 %v6829, %v6831
    %v6833 = vrot.slane %v6825, %v6832
    %v6835 = vunpack.c.l.s4 1934713408
    %v6836 = vunpack.c.0.s8 %v6835
    %v6837 = vlaneseq
    %v6838 = vshrl.u32 %v6837, 7
    %v6839 = vsub.s32 %v6836, %v6838
    %v6840 = vrot.slane %v6826, %v6839
    %v6841 = vcombine.high %v6817, 0.0
    %v6842 = vcombine.high %v6824, 0.0
    %v6843 = vcombine.high %v6833, 0.0
    %v6844 = vcombine.high %v6840, 0.0
    %v6845 = vcombine.low %v6749, %v6756
    %v6847 = vunpack.c.l.s4 1983009808
    %v6848 = vunpack.c.0.s8 %v6847
    %v6849 = vlaneseq
    %v6850 = vshrl.u32 %v6849, 7
    %v6851 = vsub.s32 %v6848, %v6850
    %v6852 = vrot.slane %v6845, %v6851
    %v6853 = vcombine.low %v6773, %v6774
    %v6855 = vunpack.c.l.s4 1983009808
    %v6856 = vunpack.c.0.s8 %v6855
    %v6857 = vlaneseq
    %v6858 = vshrl.u32 %v6857, 7
    %v6859 = vsub.s32 %v6856, %v6858
    %v6860 = vrot.slane %v6853, %v6859
    %v6861 = vcombine.low %v6765, %v6772
    %v6863 = vunpack.c.l.s4 1983009808
    %v6864 = vunpack.c.0.s8 %v6863
    %v6865 = vlaneseq
    %v6866 = vshrl.u32 %v6865, 7
    %v6867 = vsub.s32 %v6864, %v6866
    %v6868 = vrot.slane %v6861, %v6867
    %v6869 = vcombine.low %v6775, %v6776
    %v6871 = vunpack.c.l.s4 1983009808
    %v6872 = vunpack.c.0.s8 %v6871
    %v6873 = vlaneseq
    %v6874 = vshrl.u32 %v6873, 7
    %v6875 = vsub.s32 %v6872, %v6874
    %v6876 = vrot.slane %v6869, %v6875
    %v6877 = vcombine.low %v6852, %v6860
    %v6878 = vcombine.high %v6852, %v6860
    %v6880 = vunpack.c.l.s4 1934713408
    %v6881 = vunpack.c.0.s8 %v6880
    %v6882 = vlaneseq
    %v6883 = vshrl.u32 %v6882, 7
    %v6884 = vsub.s32 %v6881, %v6883
    %v6885 = vrot.slane %v6877, %v6884
    %v6887 = vunpack.c.l.s4 1934713408
    %v6888 = vunpack.c.0.s8 %v6887
    %v6889 = vlaneseq
    %v6890 = vshrl.u32 %v6889, 7
    %v6891 = vsub.s32 %v6888, %v6890
    %v6892 = vrot.slane %v6878, %v6891
    %v6893 = vcombine.low %v6868, %v6876
    %v6894 = vcombine.high %v6868, %v6876
    %v6896 = vunpack.c.l.s4 1934713408
    %v6897 = vunpack.c.0.s8 %v6896
    %v6898 = vlaneseq
    %v6899 = vshrl.u32 %v6898, 7
    %v6900 = vsub.s32 %v6897, %v6899
    %v6901 = vrot.slane %v6893, %v6900
    %v6903 = vunpack.c.l.s4 1934713408
    %v6904 = vunpack.c.0.s8 %v6903
    %v6905 = vlaneseq
    %v6906 = vshrl.u32 %v6905, 7
    %v6907 = vsub.s32 %v6904, %v6906
    %v6908 = vrot.slane %v6894, %v6907
    %v6909 = vcombine.low %v6885, %v6901
    %v6910 = vcombine.high %v6885, %v6901
    %v6911 = vcombine.low %v6892, %v6908
    %v6912 = vcombine.high %v6892, %v6908
    %v6913 = vcombine.low %v6817, %v6824
    %v6915 = vunpack.c.l.s4 1983009808
    %v6916 = vunpack.c.0.s8 %v6915
    %v6917 = vlaneseq
    %v6918 = vshrl.u32 %v6917, 7
    %v6919 = vsub.s32 %v6916, %v6918
    %v6920 = vrot.slane %v6913, %v6919
    %v6921 = vcombine.low %v6841, %v6842
    %v6923 = vunpack.c.l.s4 1983009808
    %v6924 = vunpack.c.0.s8 %v6923
    %v6925 = vlaneseq
    %v6926 = vshrl.u32 %v6925, 7
    %v6927 = vsub.s32 %v6924, %v6926
    %v6928 = vrot.slane %v6921, %v6927
    %v6929 = vcombine.low %v6833, %v6840
    %v6931 = vunpack.c.l.s4 1983009808
    %v6932 = vunpack.c.0.s8 %v6931
    %v6933 = vlaneseq
    %v6934 = vshrl.u32 %v6933, 7
    %v6935 = vsub.s32 %v6932, %v6934
    %v6936 = vrot.slane %v6929, %v6935
    %v6937 = vcombine.low %v6843, %v6844
    %v6939 = vunpack.c.l.s4 1983009808
    %v6940 = vunpack.c.0.s8 %v6939
    %v6941 = vlaneseq
    %v6942 = vshrl.u32 %v6941, 7
    %v6943 = vsub.s32 %v6940, %v6942
    %v6944 = vrot.slane %v6937, %v6943
    %v6945 = vcombine.low %v6920, %v6928
    %v6946 = vcombine.high %v6920, %v6928
    %v6948 = vunpack.c.l.s4 1934713408
    %v6949 = vunpack.c.0.s8 %v6948
    %v6950 = vlaneseq
    %v6951 = vshrl.u32 %v6950, 7
    %v6952 = vsub.s32 %v6949, %v6951
    %v6953 = vrot.slane %v6945, %v6952
    %v6955 = vunpack.c.l.s4 1934713408
    %v6956 = vunpack.c.0.s8 %v6955
    %v6957 = vlaneseq
    %v6958 = vshrl.u32 %v6957, 7
    %v6959 = vsub.s32 %v6956, %v6958
    %v6960 = vrot.slane %v6946, %v6959
    %v6961 = vcombine.low %v6936, %v6944
    %v6962 = vcombine.high %v6936, %v6944
    %v6964 = vunpack.c.l.s4 1934713408
    %v6965 = vunpack.c.0.s8 %v6964
    %v6966 = vlaneseq
    %v6967 = vshrl.u32 %v6966, 7
    %v6968 = vsub.s32 %v6965, %v6967
    %v6969 = vrot.slane %v6961, %v6968
    %v6971 = vunpack.c.l.s4 1934713408
    %v6972 = vunpack.c.0.s8 %v6971
    %v6973 = vlaneseq
    %v6974 = vshrl.u32 %v6973, 7
    %v6975 = vsub.s32 %v6972, %v6974
    %v6976 = vrot.slane %v6962, %v6975
    %v6977 = vcombine.low %v6953, %v6969
    %v6978 = vcombine.high %v6953, %v6969
    %v6979 = vcombine.low %v6960, %v6976
    %v6980 = vcombine.high %v6960, %v6976
    %6983 = vrot.lane.b32.xlu0 %v5795, 120
    %v6984 = vpop.permute.xlu0 %6983
    %6985 = vrot.lane.b32.xlu0 %v5798, 120
    %v6986 = vpop.permute.xlu0 %6985
    %6989 = vrot.lane.b32.xlu0 %v5795, 112
    %v6990 = vpop.permute.xlu0 %6989
    %6991 = vrot.lane.b32.xlu0 %v5798, 112
    %v6992 = vpop.permute.xlu0 %6991
    %6995 = vrot.lane.b32.xlu0 %v5795, 104
    %v6996 = vpop.permute.xlu0 %6995
    %6997 = vrot.lane.b32.xlu0 %v5798, 104
    %v6998 = vpop.permute.xlu0 %6997
    %v7001 = vcombine.low %v5795, %v6990
    %v7002 = vcombine.high %v5795, %v6990
    %v7004 = vunpack.c.l.s4 1983009808
    %v7005 = vunpack.c.0.s8 %v7004
    %v7006 = vlaneseq
    %v7007 = vshrl.u32 %v7006, 7
    %v7008 = vsub.s32 %v7005, %v7007
    %v7009 = vrot.slane %v7001, %v7008
    %v7011 = vunpack.c.l.s4 1983009808
    %v7012 = vunpack.c.0.s8 %v7011
    %v7013 = vlaneseq
    %v7014 = vshrl.u32 %v7013, 7
    %v7015 = vsub.s32 %v7012, %v7014
    %v7016 = vrot.slane %v7002, %v7015
    %v7017 = vcombine.low %v6984, %v6996
    %v7018 = vcombine.high %v6984, %v6996
    %v7020 = vunpack.c.l.s4 1983009808
    %v7021 = vunpack.c.0.s8 %v7020
    %v7022 = vlaneseq
    %v7023 = vshrl.u32 %v7022, 7
    %v7024 = vsub.s32 %v7021, %v7023
    %v7025 = vrot.slane %v7017, %v7024
    %v7027 = vunpack.c.l.s4 1983009808
    %v7028 = vunpack.c.0.s8 %v7027
    %v7029 = vlaneseq
    %v7030 = vshrl.u32 %v7029, 7
    %v7031 = vsub.s32 %v7028, %v7030
    %v7032 = vrot.slane %v7018, %v7031
    %v7033 = vcombine.low %v7009, %v7025
    %v7034 = vcombine.high %v7009, %v7025
    %v7036 = vunpack.c.l.s4 1934713408
    %v7037 = vunpack.c.0.s8 %v7036
    %v7038 = vlaneseq
    %v7039 = vshrl.u32 %v7038, 7
    %v7040 = vsub.s32 %v7037, %v7039
    %v7041 = vrot.slane %v7033, %v7040
    %v7043 = vunpack.c.l.s4 1934713408
    %v7044 = vunpack.c.0.s8 %v7043
    %v7045 = vlaneseq
    %v7046 = vshrl.u32 %v7045, 7
    %v7047 = vsub.s32 %v7044, %v7046
    %v7048 = vrot.slane %v7034, %v7047
    %v7049 = vcombine.low %v7016, %v7032
    %v7050 = vcombine.high %v7016, %v7032
    %v7052 = vunpack.c.l.s4 1934713408
    %v7053 = vunpack.c.0.s8 %v7052
    %v7054 = vlaneseq
    %v7055 = vshrl.u32 %v7054, 7
    %v7056 = vsub.s32 %v7053, %v7055
    %v7057 = vrot.slane %v7049, %v7056
    %v7059 = vunpack.c.l.s4 1934713408
    %v7060 = vunpack.c.0.s8 %v7059
    %v7061 = vlaneseq
    %v7062 = vshrl.u32 %v7061, 7
    %v7063 = vsub.s32 %v7060, %v7062
    %v7064 = vrot.slane %v7050, %v7063
    %v7065 = vcombine.high %v7041, 0.0
    %v7066 = vcombine.high %v7048, 0.0
    %v7067 = vcombine.high %v7057, 0.0
    %v7068 = vcombine.high %v7064, 0.0
    %v7069 = vcombine.low %v5798, %v6992
    %v7070 = vcombine.high %v5798, %v6992
    %v7072 = vunpack.c.l.s4 1983009808
    %v7073 = vunpack.c.0.s8 %v7072
    %v7074 = vlaneseq
    %v7075 = vshrl.u32 %v7074, 7
    %v7076 = vsub.s32 %v7073, %v7075
    %v7077 = vrot.slane %v7069, %v7076
    %v7079 = vunpack.c.l.s4 1983009808
    %v7080 = vunpack.c.0.s8 %v7079
    %v7081 = vlaneseq
    %v7082 = vshrl.u32 %v7081, 7
    %v7083 = vsub.s32 %v7080, %v7082
    %v7084 = vrot.slane %v7070, %v7083
    %v7085 = vcombine.low %v6986, %v6998
    %v7086 = vcombine.high %v6986, %v6998
    %v7088 = vunpack.c.l.s4 1983009808
    %v7089 = vunpack.c.0.s8 %v7088
    %v7090 = vlaneseq
    %v7091 = vshrl.u32 %v7090, 7
    %v7092 = vsub.s32 %v7089, %v7091
    %v7093 = vrot.slane %v7085, %v7092
    %v7095 = vunpack.c.l.s4 1983009808
    %v7096 = vunpack.c.0.s8 %v7095
    %v7097 = vlaneseq
    %v7098 = vshrl.u32 %v7097, 7
    %v7099 = vsub.s32 %v7096, %v7098
    %v7100 = vrot.slane %v7086, %v7099
    %v7101 = vcombine.low %v7077, %v7093
    %v7102 = vcombine.high %v7077, %v7093
    %v7104 = vunpack.c.l.s4 1934713408
    %v7105 = vunpack.c.0.s8 %v7104
    %v7106 = vlaneseq
    %v7107 = vshrl.u32 %v7106, 7
    %v7108 = vsub.s32 %v7105, %v7107
    %v7109 = vrot.slane %v7101, %v7108
    %v7111 = vunpack.c.l.s4 1934713408
    %v7112 = vunpack.c.0.s8 %v7111
    %v7113 = vlaneseq
    %v7114 = vshrl.u32 %v7113, 7
    %v7115 = vsub.s32 %v7112, %v7114
    %v7116 = vrot.slane %v7102, %v7115
    %v7117 = vcombine.low %v7084, %v7100
    %v7118 = vcombine.high %v7084, %v7100
    %v7120 = vunpack.c.l.s4 1934713408
    %v7121 = vunpack.c.0.s8 %v7120
    %v7122 = vlaneseq
    %v7123 = vshrl.u32 %v7122, 7
    %v7124 = vsub.s32 %v7121, %v7123
    %v7125 = vrot.slane %v7117, %v7124
    %v7127 = vunpack.c.l.s4 1934713408
    %v7128 = vunpack.c.0.s8 %v7127
    %v7129 = vlaneseq
    %v7130 = vshrl.u32 %v7129, 7
    %v7131 = vsub.s32 %v7128, %v7130
    %v7132 = vrot.slane %v7118, %v7131
    %v7133 = vcombine.high %v7109, 0.0
    %v7134 = vcombine.high %v7116, 0.0
    %v7135 = vcombine.high %v7125, 0.0
    %v7136 = vcombine.high %v7132, 0.0
    %v7137 = vcombine.low %v7041, %v7048
    %v7139 = vunpack.c.l.s4 1983009808
    %v7140 = vunpack.c.0.s8 %v7139
    %v7141 = vlaneseq
    %v7142 = vshrl.u32 %v7141, 7
    %v7143 = vsub.s32 %v7140, %v7142
    %v7144 = vrot.slane %v7137, %v7143
    %v7145 = vcombine.low %v7065, %v7066
    %v7147 = vunpack.c.l.s4 1983009808
    %v7148 = vunpack.c.0.s8 %v7147
    %v7149 = vlaneseq
    %v7150 = vshrl.u32 %v7149, 7
    %v7151 = vsub.s32 %v7148, %v7150
    %v7152 = vrot.slane %v7145, %v7151
    %v7153 = vcombine.low %v7057, %v7064
    %v7155 = vunpack.c.l.s4 1983009808
    %v7156 = vunpack.c.0.s8 %v7155
    %v7157 = vlaneseq
    %v7158 = vshrl.u32 %v7157, 7
    %v7159 = vsub.s32 %v7156, %v7158
    %v7160 = vrot.slane %v7153, %v7159
    %v7161 = vcombine.low %v7067, %v7068
    %v7163 = vunpack.c.l.s4 1983009808
    %v7164 = vunpack.c.0.s8 %v7163
    %v7165 = vlaneseq
    %v7166 = vshrl.u32 %v7165, 7
    %v7167 = vsub.s32 %v7164, %v7166
    %v7168 = vrot.slane %v7161, %v7167
    %v7169 = vcombine.low %v7144, %v7152
    %v7170 = vcombine.high %v7144, %v7152
    %v7172 = vunpack.c.l.s4 1934713408
    %v7173 = vunpack.c.0.s8 %v7172
    %v7174 = vlaneseq
    %v7175 = vshrl.u32 %v7174, 7
    %v7176 = vsub.s32 %v7173, %v7175
    %v7177 = vrot.slane %v7169, %v7176
    %v7179 = vunpack.c.l.s4 1934713408
    %v7180 = vunpack.c.0.s8 %v7179
    %v7181 = vlaneseq
    %v7182 = vshrl.u32 %v7181, 7
    %v7183 = vsub.s32 %v7180, %v7182
    %v7184 = vrot.slane %v7170, %v7183
    %v7185 = vcombine.low %v7160, %v7168
    %v7186 = vcombine.high %v7160, %v7168
    %v7188 = vunpack.c.l.s4 1934713408
    %v7189 = vunpack.c.0.s8 %v7188
    %v7190 = vlaneseq
    %v7191 = vshrl.u32 %v7190, 7
    %v7192 = vsub.s32 %v7189, %v7191
    %v7193 = vrot.slane %v7185, %v7192
    %v7195 = vunpack.c.l.s4 1934713408
    %v7196 = vunpack.c.0.s8 %v7195
    %v7197 = vlaneseq
    %v7198 = vshrl.u32 %v7197, 7
    %v7199 = vsub.s32 %v7196, %v7198
    %v7200 = vrot.slane %v7186, %v7199
    %v7201 = vcombine.low %v7177, %v7193
    %v7202 = vcombine.high %v7177, %v7193
    %v7203 = vcombine.low %v7184, %v7200
    %v7204 = vcombine.high %v7184, %v7200
    %v7205 = vcombine.low %v7109, %v7116
    %v7207 = vunpack.c.l.s4 1983009808
    %v7208 = vunpack.c.0.s8 %v7207
    %v7209 = vlaneseq
    %v7210 = vshrl.u32 %v7209, 7
    %v7211 = vsub.s32 %v7208, %v7210
    %v7212 = vrot.slane %v7205, %v7211
    %v7213 = vcombine.low %v7133, %v7134
    %v7215 = vunpack.c.l.s4 1983009808
    %v7216 = vunpack.c.0.s8 %v7215
    %v7217 = vlaneseq
    %v7218 = vshrl.u32 %v7217, 7
    %v7219 = vsub.s32 %v7216, %v7218
    %v7220 = vrot.slane %v7213, %v7219
    %v7221 = vcombine.low %v7125, %v7132
    %v7223 = vunpack.c.l.s4 1983009808
    %v7224 = vunpack.c.0.s8 %v7223
    %v7225 = vlaneseq
    %v7226 = vshrl.u32 %v7225, 7
    %v7227 = vsub.s32 %v7224, %v7226
    %v7228 = vrot.slane %v7221, %v7227
    %v7229 = vcombine.low %v7135, %v7136
    %v7231 = vunpack.c.l.s4 1983009808
    %v7232 = vunpack.c.0.s8 %v7231
    %v7233 = vlaneseq
    %v7234 = vshrl.u32 %v7233, 7
    %v7235 = vsub.s32 %v7232, %v7234
    %v7236 = vrot.slane %v7229, %v7235
    %v7237 = vcombine.low %v7212, %v7220
    %v7238 = vcombine.high %v7212, %v7220
    %v7240 = vunpack.c.l.s4 1934713408
    %v7241 = vunpack.c.0.s8 %v7240
    %v7242 = vlaneseq
    %v7243 = vshrl.u32 %v7242, 7
    %v7244 = vsub.s32 %v7241, %v7243
    %v7245 = vrot.slane %v7237, %v7244
    %v7247 = vunpack.c.l.s4 1934713408
    %v7248 = vunpack.c.0.s8 %v7247
    %v7249 = vlaneseq
    %v7250 = vshrl.u32 %v7249, 7
    %v7251 = vsub.s32 %v7248, %v7250
    %v7252 = vrot.slane %v7238, %v7251
    %v7253 = vcombine.low %v7228, %v7236
    %v7254 = vcombine.high %v7228, %v7236
    %v7256 = vunpack.c.l.s4 1934713408
    %v7257 = vunpack.c.0.s8 %v7256
    %v7258 = vlaneseq
    %v7259 = vshrl.u32 %v7258, 7
    %v7260 = vsub.s32 %v7257, %v7259
    %v7261 = vrot.slane %v7253, %v7260
    %v7263 = vunpack.c.l.s4 1934713408
    %v7264 = vunpack.c.0.s8 %v7263
    %v7265 = vlaneseq
    %v7266 = vshrl.u32 %v7265, 7
    %v7267 = vsub.s32 %v7264, %v7266
    %v7268 = vrot.slane %v7254, %v7267
    %v7269 = vcombine.low %v7245, %v7261
    %v7270 = vcombine.high %v7245, %v7261
    %v7271 = vcombine.low %v7252, %v7268
    %v7272 = vcombine.high %v7252, %v7268
    %7273 = vrot.lane.b32.xlu0 %v5795, 96
    %v7274 = vpop.permute.xlu0 %7273
    %7275 = vrot.lane.b32.xlu0 %v5798, 96
    %v7276 = vpop.permute.xlu0 %7275
    %7277 = vrot.lane.b32.xlu0 %v6984, 96
    %v7278 = vpop.permute.xlu0 %7277
    %7279 = vrot.lane.b32.xlu0 %v6986, 96
    %v7280 = vpop.permute.xlu0 %7279
    %7281 = vrot.lane.b32.xlu0 %v6990, 96
    %v7282 = vpop.permute.xlu0 %7281
    %7283 = vrot.lane.b32.xlu0 %v6992, 96
    %v7284 = vpop.permute.xlu0 %7283
    %7285 = vrot.lane.b32.xlu0 %v6996, 96
    %v7286 = vpop.permute.xlu0 %7285
    %7287 = vrot.lane.b32.xlu0 %v6998, 96
    %v7288 = vpop.permute.xlu0 %7287
    %v7297 = vcombine.low %v7274, %v7282
    %v7298 = vcombine.high %v7274, %v7282
    %v7300 = vunpack.c.l.s4 1983009808
    %v7301 = vunpack.c.0.s8 %v7300
    %v7302 = vlaneseq
    %v7303 = vshrl.u32 %v7302, 7
    %v7304 = vsub.s32 %v7301, %v7303
    %v7305 = vrot.slane %v7297, %v7304
    %v7307 = vunpack.c.l.s4 1983009808
    %v7308 = vunpack.c.0.s8 %v7307
    %v7309 = vlaneseq
    %v7310 = vshrl.u32 %v7309, 7
    %v7311 = vsub.s32 %v7308, %v7310
    %v7312 = vrot.slane %v7298, %v7311
    %v7313 = vcombine.low %v7278, %v7286
    %v7314 = vcombine.high %v7278, %v7286
    %v7316 = vunpack.c.l.s4 1983009808
    %v7317 = vunpack.c.0.s8 %v7316
    %v7318 = vlaneseq
    %v7319 = vshrl.u32 %v7318, 7
    %v7320 = vsub.s32 %v7317, %v7319
    %v7321 = vrot.slane %v7313, %v7320
    %v7323 = vunpack.c.l.s4 1983009808
    %v7324 = vunpack.c.0.s8 %v7323
    %v7325 = vlaneseq
    %v7326 = vshrl.u32 %v7325, 7
    %v7327 = vsub.s32 %v7324, %v7326
    %v7328 = vrot.slane %v7314, %v7327
    %v7329 = vcombine.low %v7305, %v7321
    %v7330 = vcombine.high %v7305, %v7321
    %v7332 = vunpack.c.l.s4 1934713408
    %v7333 = vunpack.c.0.s8 %v7332
    %v7334 = vlaneseq
    %v7335 = vshrl.u32 %v7334, 7
    %v7336 = vsub.s32 %v7333, %v7335
    %v7337 = vrot.slane %v7329, %v7336
    %v7339 = vunpack.c.l.s4 1934713408
    %v7340 = vunpack.c.0.s8 %v7339
    %v7341 = vlaneseq
    %v7342 = vshrl.u32 %v7341, 7
    %v7343 = vsub.s32 %v7340, %v7342
    %v7344 = vrot.slane %v7330, %v7343
    %v7345 = vcombine.low %v7312, %v7328
    %v7346 = vcombine.high %v7312, %v7328
    %v7348 = vunpack.c.l.s4 1934713408
    %v7349 = vunpack.c.0.s8 %v7348
    %v7350 = vlaneseq
    %v7351 = vshrl.u32 %v7350, 7
    %v7352 = vsub.s32 %v7349, %v7351
    %v7353 = vrot.slane %v7345, %v7352
    %v7355 = vunpack.c.l.s4 1934713408
    %v7356 = vunpack.c.0.s8 %v7355
    %v7357 = vlaneseq
    %v7358 = vshrl.u32 %v7357, 7
    %v7359 = vsub.s32 %v7356, %v7358
    %v7360 = vrot.slane %v7346, %v7359
    %v7361 = vcombine.high %v7337, 0.0
    %v7362 = vcombine.high %v7344, 0.0
    %v7363 = vcombine.high %v7353, 0.0
    %v7364 = vcombine.high %v7360, 0.0
    %v7365 = vcombine.low %v7276, %v7284
    %v7366 = vcombine.high %v7276, %v7284
    %v7368 = vunpack.c.l.s4 1983009808
    %v7369 = vunpack.c.0.s8 %v7368
    %v7370 = vlaneseq
    %v7371 = vshrl.u32 %v7370, 7
    %v7372 = vsub.s32 %v7369, %v7371
    %v7373 = vrot.slane %v7365, %v7372
    %v7375 = vunpack.c.l.s4 1983009808
    %v7376 = vunpack.c.0.s8 %v7375
    %v7377 = vlaneseq
    %v7378 = vshrl.u32 %v7377, 7
    %v7379 = vsub.s32 %v7376, %v7378
    %v7380 = vrot.slane %v7366, %v7379
    %v7381 = vcombine.low %v7280, %v7288
    %v7382 = vcombine.high %v7280, %v7288
    %v7384 = vunpack.c.l.s4 1983009808
    %v7385 = vunpack.c.0.s8 %v7384
    %v7386 = vlaneseq
    %v7387 = vshrl.u32 %v7386, 7
    %v7388 = vsub.s32 %v7385, %v7387
    %v7389 = vrot.slane %v7381, %v7388
    %v7391 = vunpack.c.l.s4 1983009808
    %v7392 = vunpack.c.0.s8 %v7391
    %v7393 = vlaneseq
    %v7394 = vshrl.u32 %v7393, 7
    %v7395 = vsub.s32 %v7392, %v7394
    %v7396 = vrot.slane %v7382, %v7395
    %v7397 = vcombine.low %v7373, %v7389
    %v7398 = vcombine.high %v7373, %v7389
    %v7400 = vunpack.c.l.s4 1934713408
    %v7401 = vunpack.c.0.s8 %v7400
    %v7402 = vlaneseq
    %v7403 = vshrl.u32 %v7402, 7
    %v7404 = vsub.s32 %v7401, %v7403
    %v7405 = vrot.slane %v7397, %v7404
    %v7407 = vunpack.c.l.s4 1934713408
    %v7408 = vunpack.c.0.s8 %v7407
    %v7409 = vlaneseq
    %v7410 = vshrl.u32 %v7409, 7
    %v7411 = vsub.s32 %v7408, %v7410
    %v7412 = vrot.slane %v7398, %v7411
    %v7413 = vcombine.low %v7380, %v7396
    %v7414 = vcombine.high %v7380, %v7396
    %v7416 = vunpack.c.l.s4 1934713408
    %v7417 = vunpack.c.0.s8 %v7416
    %v7418 = vlaneseq
    %v7419 = vshrl.u32 %v7418, 7
    %v7420 = vsub.s32 %v7417, %v7419
    %v7421 = vrot.slane %v7413, %v7420
    %v7423 = vunpack.c.l.s4 1934713408
    %v7424 = vunpack.c.0.s8 %v7423
    %v7425 = vlaneseq
    %v7426 = vshrl.u32 %v7425, 7
    %v7427 = vsub.s32 %v7424, %v7426
    %v7428 = vrot.slane %v7414, %v7427
    %v7429 = vcombine.high %v7405, 0.0
    %v7430 = vcombine.high %v7412, 0.0
    %v7431 = vcombine.high %v7421, 0.0
    %v7432 = vcombine.high %v7428, 0.0
    %v7433 = vcombine.low %v7337, %v7344
    %v7435 = vunpack.c.l.s4 1983009808
    %v7436 = vunpack.c.0.s8 %v7435
    %v7437 = vlaneseq
    %v7438 = vshrl.u32 %v7437, 7
    %v7439 = vsub.s32 %v7436, %v7438
    %v7440 = vrot.slane %v7433, %v7439
    %v7441 = vcombine.low %v7361, %v7362
    %v7443 = vunpack.c.l.s4 1983009808
    %v7444 = vunpack.c.0.s8 %v7443
    %v7445 = vlaneseq
    %v7446 = vshrl.u32 %v7445, 7
    %v7447 = vsub.s32 %v7444, %v7446
    %v7448 = vrot.slane %v7441, %v7447
    %v7449 = vcombine.low %v7353, %v7360
    %v7451 = vunpack.c.l.s4 1983009808
    %v7452 = vunpack.c.0.s8 %v7451
    %v7453 = vlaneseq
    %v7454 = vshrl.u32 %v7453, 7
    %v7455 = vsub.s32 %v7452, %v7454
    %v7456 = vrot.slane %v7449, %v7455
    %v7457 = vcombine.low %v7363, %v7364
    %v7459 = vunpack.c.l.s4 1983009808
    %v7460 = vunpack.c.0.s8 %v7459
    %v7461 = vlaneseq
    %v7462 = vshrl.u32 %v7461, 7
    %v7463 = vsub.s32 %v7460, %v7462
    %v7464 = vrot.slane %v7457, %v7463
    %v7465 = vcombine.low %v7440, %v7448
    %v7466 = vcombine.high %v7440, %v7448
    %v7468 = vunpack.c.l.s4 1934713408
    %v7469 = vunpack.c.0.s8 %v7468
    %v7470 = vlaneseq
    %v7471 = vshrl.u32 %v7470, 7
    %v7472 = vsub.s32 %v7469, %v7471
    %v7473 = vrot.slane %v7465, %v7472
    %v7475 = vunpack.c.l.s4 1934713408
    %v7476 = vunpack.c.0.s8 %v7475
    %v7477 = vlaneseq
    %v7478 = vshrl.u32 %v7477, 7
    %v7479 = vsub.s32 %v7476, %v7478
    %v7480 = vrot.slane %v7466, %v7479
    %v7481 = vcombine.low %v7456, %v7464
    %v7482 = vcombine.high %v7456, %v7464
    %v7484 = vunpack.c.l.s4 1934713408
    %v7485 = vunpack.c.0.s8 %v7484
    %v7486 = vlaneseq
    %v7487 = vshrl.u32 %v7486, 7
    %v7488 = vsub.s32 %v7485, %v7487
    %v7489 = vrot.slane %v7481, %v7488
    %v7491 = vunpack.c.l.s4 1934713408
    %v7492 = vunpack.c.0.s8 %v7491
    %v7493 = vlaneseq
    %v7494 = vshrl.u32 %v7493, 7
    %v7495 = vsub.s32 %v7492, %v7494
    %v7496 = vrot.slane %v7482, %v7495
    %v7497 = vcombine.low %v7473, %v7489
    %v7498 = vcombine.high %v7473, %v7489
    %v7499 = vcombine.low %v7480, %v7496
    %v7500 = vcombine.high %v7480, %v7496
    %v7501 = vcombine.low %v7405, %v7412
    %v7503 = vunpack.c.l.s4 1983009808
    %v7504 = vunpack.c.0.s8 %v7503
    %v7505 = vlaneseq
    %v7506 = vshrl.u32 %v7505, 7
    %v7507 = vsub.s32 %v7504, %v7506
    %v7508 = vrot.slane %v7501, %v7507
    %v7509 = vcombine.low %v7429, %v7430
    %v7511 = vunpack.c.l.s4 1983009808
    %v7512 = vunpack.c.0.s8 %v7511
    %v7513 = vlaneseq
    %v7514 = vshrl.u32 %v7513, 7
    %v7515 = vsub.s32 %v7512, %v7514
    %v7516 = vrot.slane %v7509, %v7515
    %v7517 = vcombine.low %v7421, %v7428
    %v7519 = vunpack.c.l.s4 1983009808
    %v7520 = vunpack.c.0.s8 %v7519
    %v7521 = vlaneseq
    %v7522 = vshrl.u32 %v7521, 7
    %v7523 = vsub.s32 %v7520, %v7522
    %v7524 = vrot.slane %v7517, %v7523
    %v7525 = vcombine.low %v7431, %v7432
    %v7527 = vunpack.c.l.s4 1983009808
    %v7528 = vunpack.c.0.s8 %v7527
    %v7529 = vlaneseq
    %v7530 = vshrl.u32 %v7529, 7
    %v7531 = vsub.s32 %v7528, %v7530
    %v7532 = vrot.slane %v7525, %v7531
    %v7533 = vcombine.low %v7508, %v7516
    %v7534 = vcombine.high %v7508, %v7516
    %v7536 = vunpack.c.l.s4 1934713408
    %v7537 = vunpack.c.0.s8 %v7536
    %v7538 = vlaneseq
    %v7539 = vshrl.u32 %v7538, 7
    %v7540 = vsub.s32 %v7537, %v7539
    %v7541 = vrot.slane %v7533, %v7540
    %v7543 = vunpack.c.l.s4 1934713408
    %v7544 = vunpack.c.0.s8 %v7543
    %v7545 = vlaneseq
    %v7546 = vshrl.u32 %v7545, 7
    %v7547 = vsub.s32 %v7544, %v7546
    %v7548 = vrot.slane %v7534, %v7547
    %v7549 = vcombine.low %v7524, %v7532
    %v7550 = vcombine.high %v7524, %v7532
    %v7552 = vunpack.c.l.s4 1934713408
    %v7553 = vunpack.c.0.s8 %v7552
    %v7554 = vlaneseq
    %v7555 = vshrl.u32 %v7554, 7
    %v7556 = vsub.s32 %v7553, %v7555
    %v7557 = vrot.slane %v7549, %v7556
    %v7559 = vunpack.c.l.s4 1934713408
    %v7560 = vunpack.c.0.s8 %v7559
    %v7561 = vlaneseq
    %v7562 = vshrl.u32 %v7561, 7
    %v7563 = vsub.s32 %v7560, %v7562
    %v7564 = vrot.slane %v7550, %v7563
    %v7565 = vcombine.low %v7541, %v7557
    %v7566 = vcombine.high %v7541, %v7557
    %v7567 = vcombine.low %v7548, %v7564
    %v7568 = vcombine.high %v7548, %v7564
    %v7570 = vsel %vm2053, %v6021, 0
    %v7573 = vsel %vm2053, %v6317, 0
    %7575 = vmatprep.subr.mxu0 0.0
    %7576 = vmatpush1.xpose.msra.mxu0 %v7573
    %7577 = vmatprep.subr.mxu0 0.0
    %7578 = vmatpush1.xpose.msra.mxu0 0.0
    %7579 = vmatprep.subr.mxu0 0.0
    %7580 = vmatpush1.xpose.msra.mxu0 0.0
    %7581 = vmatprep.subr.mxu0 0.0
    %7582 = vmatpush1.xpose.msra.mxu0 0.0
    %7583 = vmatprep.subr.mxu0 0.0
    %7584 = vmatpush1.xpose.msra.mxu0 0.0
    %7585 = vmatprep.subr.mxu0 0.0
    %7586 = vmatpush1.xpose.msra.mxu0 0.0
    %7587 = vmatprep.subr.mxu0 0.0
    %7588 = vmatpush1.xpose.msra.mxu0 0.0
    %7589 = vmatprep.subr.mxu0 0.0
    %7590 = vmatpush1.xpose.msra.mxu0 0.0
    %7591 = vmatprep.subr.mxu0 0.0
    %7592 = vmatpush1.xpose.msra.mxu0 0.0
    %7593 = vmatprep.subr.mxu0 0.0
    %7594 = vmatpush1.xpose.msra.mxu0 0.0
    %7595 = vmatprep.subr.mxu0 0.0
    %7596 = vmatpush1.xpose.msra.mxu0 0.0
    %7597 = vmatprep.subr.mxu0 0.0
    %7598 = vmatpush1.xpose.msra.mxu0 0.0
    %7599 = vmatprep.subr.mxu0 0.0
    %7600 = vmatpush1.xpose.msra.mxu0 0.0
    %7601 = vmatprep.subr.mxu0 0.0
    %7602 = vmatpush1.xpose.msra.mxu0 0.0
    %7603 = vmatprep.subr.mxu0 0.0
    %7604 = vmatpush1.xpose.msra.mxu0 0.0
    %7605 = vmatprep.subr.mxu0 0.0
    %7606 = vmatpush1.xpose.msra.mxu0 0.0
    %7607 = vmatprep.subr.mxu0 0.0
    %7608 = vmatpush1.xpose.msra.mxu0 0.0
    %7609 = vmatprep.subr.mxu0 0.0
    %7610 = vmatpush1.xpose.msra.mxu0 0.0
    %7611 = vmatprep.subr.mxu0 0.0
    %7612 = vmatpush1.xpose.msra.mxu0 0.0
    %7613 = vmatprep.subr.mxu0 0.0
    %7614 = vmatpush1.xpose.msra.mxu0 0.0
    %7615 = vmatprep.subr.mxu0 0.0
    %7616 = vmatpush1.xpose.msra.mxu0 0.0
    %7617 = vmatprep.subr.mxu0 0.0
    %7618 = vmatpush1.xpose.msra.mxu0 0.0
    %7619 = vmatprep.subr.mxu0 0.0
    %7620 = vmatpush1.xpose.msra.mxu0 0.0
    %7621 = vmatprep.subr.mxu0 0.0
    %7622 = vmatpush1.xpose.msra.mxu0 0.0
    %7623 = vmatprep.subr.mxu0 0.0
    %7624 = vmatpush1.xpose.msra.mxu0 0.0
    %7625 = vmatprep.subr.mxu0 0.0
    %7626 = vmatpush1.xpose.msra.mxu0 0.0
    %7627 = vmatprep.subr.mxu0 0.0
    %7628 = vmatpush1.xpose.msra.mxu0 0.0
    %7629 = vmatprep.subr.mxu0 0.0
    %7630 = vmatpush1.xpose.msra.mxu0 0.0
    %7631 = vmatprep.subr.mxu0 0.0
    %7632 = vmatpush1.xpose.msra.mxu0 0.0
    %7633 = vmatprep.subr.mxu0 0.0
    %7634 = vmatpush1.xpose.msra.mxu0 0.0
    %7635 = vmatprep.subr.mxu0 0.0
    %7636 = vmatpush1.xpose.msra.mxu0 0.0
    %7637 = vmatprep.subr.mxu0 0.0
    %7638 = vmatpush1.xpose.msra.mxu0 0.0
    %7639 = vmatprep.mubr.f32.mxu0 0.0
    %7640 = vmatmul.mubr.f32.gmra.mrb[0].mxu0 %v7570
    %v7641 = vpop.f32.mrb[0].mxu0
    %v7642 = vadd.f32 0.0, %v7641
    %v7643 = vpop.f32.mrb[0].mxu0
    %7644 = vdwg.mxu0
    %v7646 = vsel %vm2053, %v6089, 0
    %v7649 = vsel %vm2053, %v6385, 0
    %7651 = vmatprep.subr.mxu0 0.0
    %7652 = vmatpush1.xpose.msra.mxu0 %v7649
    %7653 = vmatprep.subr.mxu0 0.0
    %7654 = vmatpush1.xpose.msra.mxu0 0.0
    %7655 = vmatprep.subr.mxu0 0.0
    %7656 = vmatpush1.xpose.msra.mxu0 0.0
    %7657 = vmatprep.subr.mxu0 0.0
    %7658 = vmatpush1.xpose.msra.mxu0 0.0
    %7659 = vmatprep.subr.mxu0 0.0
    %7660 = vmatpush1.xpose.msra.mxu0 0.0
    %7661 = vmatprep.subr.mxu0 0.0
    %7662 = vmatpush1.xpose.msra.mxu0 0.0
    %7663 = vmatprep.subr.mxu0 0.0
    %7664 = vmatpush1.xpose.msra.mxu0 0.0
    %7665 = vmatprep.subr.mxu0 0.0
    %7666 = vmatpush1.xpose.msra.mxu0 0.0
    %7667 = vmatprep.subr.mxu0 0.0
    %7668 = vmatpush1.xpose.msra.mxu0 0.0
    %7669 = vmatprep.subr.mxu0 0.0
    %7670 = vmatpush1.xpose.msra.mxu0 0.0
    %7671 = vmatprep.subr.mxu0 0.0
    %7672 = vmatpush1.xpose.msra.mxu0 0.0
    %7673 = vmatprep.subr.mxu0 0.0
    %7674 = vmatpush1.xpose.msra.mxu0 0.0
    %7675 = vmatprep.subr.mxu0 0.0
    %7676 = vmatpush1.xpose.msra.mxu0 0.0
    %7677 = vmatprep.subr.mxu0 0.0
    %7678 = vmatpush1.xpose.msra.mxu0 0.0
    %7679 = vmatprep.subr.mxu0 0.0
    %7680 = vmatpush1.xpose.msra.mxu0 0.0
    %7681 = vmatprep.subr.mxu0 0.0
    %7682 = vmatpush1.xpose.msra.mxu0 0.0
    %7683 = vmatprep.subr.mxu0 0.0
    %7684 = vmatpush1.xpose.msra.mxu0 0.0
    %7685 = vmatprep.subr.mxu0 0.0
    %7686 = vmatpush1.xpose.msra.mxu0 0.0
    %7687 = vmatprep.subr.mxu0 0.0
    %7688 = vmatpush1.xpose.msra.mxu0 0.0
    %7689 = vmatprep.subr.mxu0 0.0
    %7690 = vmatpush1.xpose.msra.mxu0 0.0
    %7691 = vmatprep.subr.mxu0 0.0
    %7692 = vmatpush1.xpose.msra.mxu0 0.0
    %7693 = vmatprep.subr.mxu0 0.0
    %7694 = vmatpush1.xpose.msra.mxu0 0.0
    %7695 = vmatprep.subr.mxu0 0.0
    %7696 = vmatpush1.xpose.msra.mxu0 0.0
    %7697 = vmatprep.subr.mxu0 0.0
    %7698 = vmatpush1.xpose.msra.mxu0 0.0
    %7699 = vmatprep.subr.mxu0 0.0
    %7700 = vmatpush1.xpose.msra.mxu0 0.0
    %7701 = vmatprep.subr.mxu0 0.0
    %7702 = vmatpush1.xpose.msra.mxu0 0.0
    %7703 = vmatprep.subr.mxu0 0.0
    %7704 = vmatpush1.xpose.msra.mxu0 0.0
    %7705 = vmatprep.subr.mxu0 0.0
    %7706 = vmatpush1.xpose.msra.mxu0 0.0
    %7707 = vmatprep.subr.mxu0 0.0
    %7708 = vmatpush1.xpose.msra.mxu0 0.0
    %7709 = vmatprep.subr.mxu0 0.0
    %7710 = vmatpush1.xpose.msra.mxu0 0.0
    %7711 = vmatprep.subr.mxu0 0.0
    %7712 = vmatpush1.xpose.msra.mxu0 0.0
    %7713 = vmatprep.subr.mxu0 0.0
    %7714 = vmatpush1.xpose.msra.mxu0 0.0
    %7715 = vmatprep.mubr.f32.mxu0 0.0
    %7716 = vmatmul.mubr.f32.gmra.mrb[0].mxu0 %v7646
    %v7717 = vpop.f32.mrb[0].mxu0
    %v7718 = vadd.f32 0.0, %v7717
    %v7719 = vpop.f32.mrb[0].mxu0
    %7720 = vdwg.mxu0
    %v7722 = vsel %vm2053, %v6022, 0
    %v7725 = vsel %vm2053, %v6318, 0
    %7727 = vmatprep.subr.mxu0 0.0
    %7728 = vmatpush1.xpose.msra.mxu0 %v7725
    %7729 = vmatprep.subr.mxu0 0.0
    %7730 = vmatpush1.xpose.msra.mxu0 0.0
    %7731 = vmatprep.subr.mxu0 0.0
    %7732 = vmatpush1.xpose.msra.mxu0 0.0
    %7733 = vmatprep.subr.mxu0 0.0
    %7734 = vmatpush1.xpose.msra.mxu0 0.0
    %7735 = vmatprep.subr.mxu0 0.0
    %7736 = vmatpush1.xpose.msra.mxu0 0.0
    %7737 = vmatprep.subr.mxu0 0.0
    %7738 = vmatpush1.xpose.msra.mxu0 0.0
    %7739 = vmatprep.subr.mxu0 0.0
    %7740 = vmatpush1.xpose.msra.mxu0 0.0
    %7741 = vmatprep.subr.mxu0 0.0
    %7742 = vmatpush1.xpose.msra.mxu0 0.0
    %7743 = vmatprep.subr.mxu0 0.0
    %7744 = vmatpush1.xpose.msra.mxu0 0.0
    %7745 = vmatprep.subr.mxu0 0.0
    %7746 = vmatpush1.xpose.msra.mxu0 0.0
    %7747 = vmatprep.subr.mxu0 0.0
    %7748 = vmatpush1.xpose.msra.mxu0 0.0
    %7749 = vmatprep.subr.mxu0 0.0
    %7750 = vmatpush1.xpose.msra.mxu0 0.0
    %7751 = vmatprep.subr.mxu0 0.0
    %7752 = vmatpush1.xpose.msra.mxu0 0.0
    %7753 = vmatprep.subr.mxu0 0.0
    %7754 = vmatpush1.xpose.msra.mxu0 0.0
    %7755 = vmatprep.subr.mxu0 0.0
    %7756 = vmatpush1.xpose.msra.mxu0 0.0
    %7757 = vmatprep.subr.mxu0 0.0
    %7758 = vmatpush1.xpose.msra.mxu0 0.0
    %7759 = vmatprep.subr.mxu0 0.0
    %7760 = vmatpush1.xpose.msra.mxu0 0.0
    %7761 = vmatprep.subr.mxu0 0.0
    %7762 = vmatpush1.xpose.msra.mxu0 0.0
    %7763 = vmatprep.subr.mxu0 0.0
    %7764 = vmatpush1.xpose.msra.mxu0 0.0
    %7765 = vmatprep.subr.mxu0 0.0
    %7766 = vmatpush1.xpose.msra.mxu0 0.0
    %7767 = vmatprep.subr.mxu0 0.0
    %7768 = vmatpush1.xpose.msra.mxu0 0.0
    %7769 = vmatprep.subr.mxu0 0.0
    %7770 = vmatpush1.xpose.msra.mxu0 0.0
    %7771 = vmatprep.subr.mxu0 0.0
    %7772 = vmatpush1.xpose.msra.mxu0 0.0
    %7773 = vmatprep.subr.mxu0 0.0
    %7774 = vmatpush1.xpose.msra.mxu0 0.0
    %7775 = vmatprep.subr.mxu0 0.0
    %7776 = vmatpush1.xpose.msra.mxu0 0.0
    %7777 = vmatprep.subr.mxu0 0.0
    %7778 = vmatpush1.xpose.msra.mxu0 0.0
    %7779 = vmatprep.subr.mxu0 0.0
    %7780 = vmatpush1.xpose.msra.mxu0 0.0
    %7781 = vmatprep.subr.mxu0 0.0
    %7782 = vmatpush1.xpose.msra.mxu0 0.0
    %7783 = vmatprep.subr.mxu0 0.0
    %7784 = vmatpush1.xpose.msra.mxu0 0.0
    %7785 = vmatprep.subr.mxu0 0.0
    %7786 = vmatpush1.xpose.msra.mxu0 0.0
    %7787 = vmatprep.subr.mxu0 0.0
    %7788 = vmatpush1.xpose.msra.mxu0 0.0
    %7789 = vmatprep.subr.mxu0 0.0
    %7790 = vmatpush1.xpose.msra.mxu0 0.0
    %7791 = vmatprep.mubr.f32.mxu0 0.0
    %7792 = vmatmul.mubr.f32.gmra.mrb[0].mxu0 %v7722
    %v7793 = vpop.f32.mrb[0].mxu0
    %v7794 = vadd.f32 0.0, %v7793
    %v7795 = vpop.f32.mrb[0].mxu0
    %7796 = vdwg.mxu0
    %v7798 = vsel %vm2053, %v6090, 0
    %v7801 = vsel %vm2053, %v6386, 0
    %7803 = vmatprep.subr.mxu0 0.0
    %7804 = vmatpush1.xpose.msra.mxu0 %v7801
    %7805 = vmatprep.subr.mxu0 0.0
    %7806 = vmatpush1.xpose.msra.mxu0 0.0
    %7807 = vmatprep.subr.mxu0 0.0
    %7808 = vmatpush1.xpose.msra.mxu0 0.0
    %7809 = vmatprep.subr.mxu0 0.0
    %7810 = vmatpush1.xpose.msra.mxu0 0.0
    %7811 = vmatprep.subr.mxu0 0.0
    %7812 = vmatpush1.xpose.msra.mxu0 0.0
    %7813 = vmatprep.subr.mxu0 0.0
    %7814 = vmatpush1.xpose.msra.mxu0 0.0
    %7815 = vmatprep.subr.mxu0 0.0
    %7816 = vmatpush1.xpose.msra.mxu0 0.0
    %7817 = vmatprep.subr.mxu0 0.0
    %7818 = vmatpush1.xpose.msra.mxu0 0.0
    %7819 = vmatprep.subr.mxu0 0.0
    %7820 = vmatpush1.xpose.msra.mxu0 0.0
    %7821 = vmatprep.subr.mxu0 0.0
    %7822 = vmatpush1.xpose.msra.mxu0 0.0
    %7823 = vmatprep.subr.mxu0 0.0
    %7824 = vmatpush1.xpose.msra.mxu0 0.0
    %7825 = vmatprep.subr.mxu0 0.0
    %7826 = vmatpush1.xpose.msra.mxu0 0.0
    %7827 = vmatprep.subr.mxu0 0.0
    %7828 = vmatpush1.xpose.msra.mxu0 0.0
    %7829 = vmatprep.subr.mxu0 0.0
    %7830 = vmatpush1.xpose.msra.mxu0 0.0
    %7831 = vmatprep.subr.mxu0 0.0
    %7832 = vmatpush1.xpose.msra.mxu0 0.0
    %7833 = vmatprep.subr.mxu0 0.0
    %7834 = vmatpush1.xpose.msra.mxu0 0.0
    %7835 = vmatprep.subr.mxu0 0.0
    %7836 = vmatpush1.xpose.msra.mxu0 0.0
    %7837 = vmatprep.subr.mxu0 0.0
    %7838 = vmatpush1.xpose.msra.mxu0 0.0
    %7839 = vmatprep.subr.mxu0 0.0
    %7840 = vmatpush1.xpose.msra.mxu0 0.0
    %7841 = vmatprep.subr.mxu0 0.0
    %7842 = vmatpush1.xpose.msra.mxu0 0.0
    %7843 = vmatprep.subr.mxu0 0.0
    %7844 = vmatpush1.xpose.msra.mxu0 0.0
    %7845 = vmatprep.subr.mxu0 0.0
    %7846 = vmatpush1.xpose.msra.mxu0 0.0
    %7847 = vmatprep.subr.mxu0 0.0
    %7848 = vmatpush1.xpose.msra.mxu0 0.0
    %7849 = vmatprep.subr.mxu0 0.0
    %7850 = vmatpush1.xpose.msra.mxu0 0.0
    %7851 = vmatprep.subr.mxu0 0.0
    %7852 = vmatpush1.xpose.msra.mxu0 0.0
    %7853 = vmatprep.subr.mxu0 0.0
    %7854 = vmatpush1.xpose.msra.mxu0 0.0
    %7855 = vmatprep.subr.mxu0 0.0
    %7856 = vmatpush1.xpose.msra.mxu0 0.0
    %7857 = vmatprep.subr.mxu0 0.0
    %7858 = vmatpush1.xpose.msra.mxu0 0.0
    %7859 = vmatprep.subr.mxu0 0.0
    %7860 = vmatpush1.xpose.msra.mxu0 0.0
    %7861 = vmatprep.subr.mxu0 0.0
    %7862 = vmatpush1.xpose.msra.mxu0 0.0
    %7863 = vmatprep.subr.mxu0 0.0
    %7864 = vmatpush1.xpose.msra.mxu0 0.0
    %7865 = vmatprep.subr.mxu0 0.0
    %7866 = vmatpush1.xpose.msra.mxu0 0.0
    %7867 = vmatprep.mubr.f32.mxu0 0.0
    %7868 = vmatmul.mubr.f32.gmra.mrb[0].mxu0 %v7798
    %v7869 = vpop.f32.mrb[0].mxu0
    %v7870 = vadd.f32 0.0, %v7869
    %v7871 = vpop.f32.mrb[0].mxu0
    %7872 = vdwg.mxu0
    %v7874 = vsel %vm2053, %v6023, 0
    %v7877 = vsel %vm2053, %v6319, 0
    %7879 = vmatprep.subr.mxu0 0.0
    %7880 = vmatpush1.xpose.msra.mxu0 %v7877
    %7881 = vmatprep.subr.mxu0 0.0
    %7882 = vmatpush1.xpose.msra.mxu0 0.0
    %7883 = vmatprep.subr.mxu0 0.0
    %7884 = vmatpush1.xpose.msra.mxu0 0.0
    %7885 = vmatprep.subr.mxu0 0.0
    %7886 = vmatpush1.xpose.msra.mxu0 0.0
    %7887 = vmatprep.subr.mxu0 0.0
    %7888 = vmatpush1.xpose.msra.mxu0 0.0
    %7889 = vmatprep.subr.mxu0 0.0
    %7890 = vmatpush1.xpose.msra.mxu0 0.0
    %7891 = vmatprep.subr.mxu0 0.0
    %7892 = vmatpush1.xpose.msra.mxu0 0.0
    %7893 = vmatprep.subr.mxu0 0.0
    %7894 = vmatpush1.xpose.msra.mxu0 0.0
    %7895 = vmatprep.subr.mxu0 0.0
    %7896 = vmatpush1.xpose.msra.mxu0 0.0
    %7897 = vmatprep.subr.mxu0 0.0
    %7898 = vmatpush1.xpose.msra.mxu0 0.0
    %7899 = vmatprep.subr.mxu0 0.0
    %7900 = vmatpush1.xpose.msra.mxu0 0.0
    %7901 = vmatprep.subr.mxu0 0.0
    %7902 = vmatpush1.xpose.msra.mxu0 0.0
    %7903 = vmatprep.subr.mxu0 0.0
    %7904 = vmatpush1.xpose.msra.mxu0 0.0
    %7905 = vmatprep.subr.mxu0 0.0
    %7906 = vmatpush1.xpose.msra.mxu0 0.0
    %7907 = vmatprep.subr.mxu0 0.0
    %7908 = vmatpush1.xpose.msra.mxu0 0.0
    %7909 = vmatprep.subr.mxu0 0.0
    %7910 = vmatpush1.xpose.msra.mxu0 0.0
    %7911 = vmatprep.subr.mxu0 0.0
    %7912 = vmatpush1.xpose.msra.mxu0 0.0
    %7913 = vmatprep.subr.mxu0 0.0
    %7914 = vmatpush1.xpose.msra.mxu0 0.0
    %7915 = vmatprep.subr.mxu0 0.0
    %7916 = vmatpush1.xpose.msra.mxu0 0.0
    %7917 = vmatprep.subr.mxu0 0.0
    %7918 = vmatpush1.xpose.msra.mxu0 0.0
    %7919 = vmatprep.subr.mxu0 0.0
    %7920 = vmatpush1.xpose.msra.mxu0 0.0
    %7921 = vmatprep.subr.mxu0 0.0
    %7922 = vmatpush1.xpose.msra.mxu0 0.0
    %7923 = vmatprep.subr.mxu0 0.0
    %7924 = vmatpush1.xpose.msra.mxu0 0.0
    %7925 = vmatprep.subr.mxu0 0.0
    %7926 = vmatpush1.xpose.msra.mxu0 0.0
    %7927 = vmatprep.subr.mxu0 0.0
    %7928 = vmatpush1.xpose.msra.mxu0 0.0
    %7929 = vmatprep.subr.mxu0 0.0
    %7930 = vmatpush1.xpose.msra.mxu0 0.0
    %7931 = vmatprep.subr.mxu0 0.0
    %7932 = vmatpush1.xpose.msra.mxu0 0.0
    %7933 = vmatprep.subr.mxu0 0.0
    %7934 = vmatpush1.xpose.msra.mxu0 0.0
    %7935 = vmatprep.subr.mxu0 0.0
    %7936 = vmatpush1.xpose.msra.mxu0 0.0
    %7937 = vmatprep.subr.mxu0 0.0
    %7938 = vmatpush1.xpose.msra.mxu0 0.0
    %7939 = vmatprep.subr.mxu0 0.0
    %7940 = vmatpush1.xpose.msra.mxu0 0.0
    %7941 = vmatprep.subr.mxu0 0.0
    %7942 = vmatpush1.xpose.msra.mxu0 0.0
    %7943 = vmatprep.mubr.f32.mxu0 0.0
    %7944 = vmatmul.mubr.f32.gmra.mrb[0].mxu0 %v7874
    %v7945 = vpop.f32.mrb[0].mxu0
    %v7946 = vadd.f32 0.0, %v7945
    %v7947 = vpop.f32.mrb[0].mxu0
    %7948 = vdwg.mxu0
    %v7950 = vsel %vm2053, %v6091, 0
    %v7953 = vsel %vm2053, %v6387, 0
    %7955 = vmatprep.subr.mxu0 0.0
    %7956 = vmatpush1.xpose.msra.mxu0 %v7953
    %7957 = vmatprep.subr.mxu0 0.0
    %7958 = vmatpush1.xpose.msra.mxu0 0.0
    %7959 = vmatprep.subr.mxu0 0.0
    %7960 = vmatpush1.xpose.msra.mxu0 0.0
    %7961 = vmatprep.subr.mxu0 0.0
    %7962 = vmatpush1.xpose.msra.mxu0 0.0
    %7963 = vmatprep.subr.mxu0 0.0
    %7964 = vmatpush1.xpose.msra.mxu0 0.0
    %7965 = vmatprep.subr.mxu0 0.0
    %7966 = vmatpush1.xpose.msra.mxu0 0.0
    %7967 = vmatprep.subr.mxu0 0.0
    %7968 = vmatpush1.xpose.msra.mxu0 0.0
    %7969 = vmatprep.subr.mxu0 0.0
    %7970 = vmatpush1.xpose.msra.mxu0 0.0
    %7971 = vmatprep.subr.mxu0 0.0
    %7972 = vmatpush1.xpose.msra.mxu0 0.0
    %7973 = vmatprep.subr.mxu0 0.0
    %7974 = vmatpush1.xpose.msra.mxu0 0.0
    %7975 = vmatprep.subr.mxu0 0.0
    %7976 = vmatpush1.xpose.msra.mxu0 0.0
    %7977 = vmatprep.subr.mxu0 0.0
    %7978 = vmatpush1.xpose.msra.mxu0 0.0
    %7979 = vmatprep.subr.mxu0 0.0
    %7980 = vmatpush1.xpose.msra.mxu0 0.0
    %7981 = vmatprep.subr.mxu0 0.0
    %7982 = vmatpush1.xpose.msra.mxu0 0.0
    %7983 = vmatprep.subr.mxu0 0.0
    %7984 = vmatpush1.xpose.msra.mxu0 0.0
    %7985 = vmatprep.subr.mxu0 0.0
    %7986 = vmatpush1.xpose.msra.mxu0 0.0
    %7987 = vmatprep.subr.mxu0 0.0
    %7988 = vmatpush1.xpose.msra.mxu0 0.0
    %7989 = vmatprep.subr.mxu0 0.0
    %7990 = vmatpush1.xpose.msra.mxu0 0.0
    %7991 = vmatprep.subr.mxu0 0.0
    %7992 = vmatpush1.xpose.msra.mxu0 0.0
    %7993 = vmatprep.subr.mxu0 0.0
    %7994 = vmatpush1.xpose.msra.mxu0 0.0
    %7995 = vmatprep.subr.mxu0 0.0
    %7996 = vmatpush1.xpose.msra.mxu0 0.0
    %7997 = vmatprep.subr.mxu0 0.0
    %7998 = vmatpush1.xpose.msra.mxu0 0.0
    %7999 = vmatprep.subr.mxu0 0.0
    %8000 = vmatpush1.xpose.msra.mxu0 0.0
    %8001 = vmatprep.subr.mxu0 0.0
    %8002 = vmatpush1.xpose.msra.mxu0 0.0
    %8003 = vmatprep.subr.mxu0 0.0
    %8004 = vmatpush1.xpose.msra.mxu0 0.0
    %8005 = vmatprep.subr.mxu0 0.0
    %8006 = vmatpush1.xpose.msra.mxu0 0.0
    %8007 = vmatprep.subr.mxu0 0.0
    %8008 = vmatpush1.xpose.msra.mxu0 0.0
    %8009 = vmatprep.subr.mxu0 0.0
    %8010 = vmatpush1.xpose.msra.mxu0 0.0
    %8011 = vmatprep.subr.mxu0 0.0
    %8012 = vmatpush1.xpose.msra.mxu0 0.0
    %8013 = vmatprep.subr.mxu0 0.0
    %8014 = vmatpush1.xpose.msra.mxu0 0.0
    %8015 = vmatprep.subr.mxu0 0.0
    %8016 = vmatpush1.xpose.msra.mxu0 0.0
    %8017 = vmatprep.subr.mxu0 0.0
    %8018 = vmatpush1.xpose.msra.mxu0 0.0
    %8019 = vmatprep.mubr.f32.mxu0 0.0
    %8020 = vmatmul.mubr.f32.gmra.mrb[0].mxu0 %v7950
    %v8021 = vpop.f32.mrb[0].mxu0
    %v8022 = vadd.f32 0.0, %v8021
    %v8023 = vpop.f32.mrb[0].mxu0
    %8024 = vdwg.mxu0
    %v8026 = vsel %vm2053, %v6024, 0
    %v8029 = vsel %vm2053, %v6320, 0
    %8031 = vmatprep.subr.mxu0 0.0
    %8032 = vmatpush1.xpose.msra.mxu0 %v8029
    %8033 = vmatprep.subr.mxu0 0.0
    %8034 = vmatpush1.xpose.msra.mxu0 0.0
    %8035 = vmatprep.subr.mxu0 0.0
    %8036 = vmatpush1.xpose.msra.mxu0 0.0
    %8037 = vmatprep.subr.mxu0 0.0
    %8038 = vmatpush1.xpose.msra.mxu0 0.0
    %8039 = vmatprep.subr.mxu0 0.0
    %8040 = vmatpush1.xpose.msra.mxu0 0.0
    %8041 = vmatprep.subr.mxu0 0.0
    %8042 = vmatpush1.xpose.msra.mxu0 0.0
    %8043 = vmatprep.subr.mxu0 0.0
    %8044 = vmatpush1.xpose.msra.mxu0 0.0
    %8045 = vmatprep.subr.mxu0 0.0
    %8046 = vmatpush1.xpose.msra.mxu0 0.0
    %8047 = vmatprep.subr.mxu0 0.0
    %8048 = vmatpush1.xpose.msra.mxu0 0.0
    %8049 = vmatprep.subr.mxu0 0.0
    %8050 = vmatpush1.xpose.msra.mxu0 0.0
    %8051 = vmatprep.subr.mxu0 0.0
    %8052 = vmatpush1.xpose.msra.mxu0 0.0
    %8053 = vmatprep.subr.mxu0 0.0
    %8054 = vmatpush1.xpose.msra.mxu0 0.0
    %8055 = vmatprep.subr.mxu0 0.0
    %8056 = vmatpush1.xpose.msra.mxu0 0.0
    %8057 = vmatprep.subr.mxu0 0.0
    %8058 = vmatpush1.xpose.msra.mxu0 0.0
    %8059 = vmatprep.subr.mxu0 0.0
    %8060 = vmatpush1.xpose.msra.mxu0 0.0
    %8061 = vmatprep.subr.mxu0 0.0
    %8062 = vmatpush1.xpose.msra.mxu0 0.0
    %8063 = vmatprep.subr.mxu0 0.0
    %8064 = vmatpush1.xpose.msra.mxu0 0.0
    %8065 = vmatprep.subr.mxu0 0.0
    %8066 = vmatpush1.xpose.msra.mxu0 0.0
    %8067 = vmatprep.subr.mxu0 0.0
    %8068 = vmatpush1.xpose.msra.mxu0 0.0
    %8069 = vmatprep.subr.mxu0 0.0
    %8070 = vmatpush1.xpose.msra.mxu0 0.0
    %8071 = vmatprep.subr.mxu0 0.0
    %8072 = vmatpush1.xpose.msra.mxu0 0.0
    %8073 = vmatprep.subr.mxu0 0.0
    %8074 = vmatpush1.xpose.msra.mxu0 0.0
    %8075 = vmatprep.subr.mxu0 0.0
    %8076 = vmatpush1.xpose.msra.mxu0 0.0
    %8077 = vmatprep.subr.mxu0 0.0
    %8078 = vmatpush1.xpose.msra.mxu0 0.0
    %8079 = vmatprep.subr.mxu0 0.0
    %8080 = vmatpush1.xpose.msra.mxu0 0.0
    %8081 = vmatprep.subr.mxu0 0.0
    %8082 = vmatpush1.xpose.msra.mxu0 0.0
    %8083 = vmatprep.subr.mxu0 0.0
    %8084 = vmatpush1.xpose.msra.mxu0 0.0
    %8085 = vmatprep.subr.mxu0 0.0
    %8086 = vmatpush1.xpose.msra.mxu0 0.0
    %8087 = vmatprep.subr.mxu0 0.0
    %8088 = vmatpush1.xpose.msra.mxu0 0.0
    %8089 = vmatprep.subr.mxu0 0.0
    %8090 = vmatpush1.xpose.msra.mxu0 0.0
    %8091 = vmatprep.subr.mxu0 0.0
    %8092 = vmatpush1.xpose.msra.mxu0 0.0
    %8093 = vmatprep.subr.mxu0 0.0
    %8094 = vmatpush1.xpose.msra.mxu0 0.0
    %8095 = vmatprep.mubr.f32.mxu0 0.0
    %8096 = vmatmul.mubr.f32.gmra.mrb[0].mxu0 %v8026
    %v8097 = vpop.f32.mrb[0].mxu0
    %v8098 = vadd.f32 0.0, %v8097
    %v8099 = vpop.f32.mrb[0].mxu0
    %8100 = vdwg.mxu0
    %v8102 = vsel %vm2053, %v6092, 0
    %v8105 = vsel %vm2053, %v6388, 0
    %8107 = vmatprep.subr.mxu0 0.0
    %8108 = vmatpush1.xpose.msra.mxu0 %v8105
    %8109 = vmatprep.subr.mxu0 0.0
    %8110 = vmatpush1.xpose.msra.mxu0 0.0
    %8111 = vmatprep.subr.mxu0 0.0
    %8112 = vmatpush1.xpose.msra.mxu0 0.0
    %8113 = vmatprep.subr.mxu0 0.0
    %8114 = vmatpush1.xpose.msra.mxu0 0.0
    %8115 = vmatprep.subr.mxu0 0.0
    %8116 = vmatpush1.xpose.msra.mxu0 0.0
    %8117 = vmatprep.subr.mxu0 0.0
    %8118 = vmatpush1.xpose.msra.mxu0 0.0
    %8119 = vmatprep.subr.mxu0 0.0
    %8120 = vmatpush1.xpose.msra.mxu0 0.0
    %8121 = vmatprep.subr.mxu0 0.0
    %8122 = vmatpush1.xpose.msra.mxu0 0.0
    %8123 = vmatprep.subr.mxu0 0.0
    %8124 = vmatpush1.xpose.msra.mxu0 0.0
    %8125 = vmatprep.subr.mxu0 0.0
    %8126 = vmatpush1.xpose.msra.mxu0 0.0
    %8127 = vmatprep.subr.mxu0 0.0
    %8128 = vmatpush1.xpose.msra.mxu0 0.0
    %8129 = vmatprep.subr.mxu0 0.0
    %8130 = vmatpush1.xpose.msra.mxu0 0.0
    %8131 = vmatprep.subr.mxu0 0.0
    %8132 = vmatpush1.xpose.msra.mxu0 0.0
    %8133 = vmatprep.subr.mxu0 0.0
    %8134 = vmatpush1.xpose.msra.mxu0 0.0
    %8135 = vmatprep.subr.mxu0 0.0
    %8136 = vmatpush1.xpose.msra.mxu0 0.0
    %8137 = vmatprep.subr.mxu0 0.0
    %8138 = vmatpush1.xpose.msra.mxu0 0.0
    %8139 = vmatprep.subr.mxu0 0.0
    %8140 = vmatpush1.xpose.msra.mxu0 0.0
    %8141 = vmatprep.subr.mxu0 0.0
    %8142 = vmatpush1.xpose.msra.mxu0 0.0
    %8143 = vmatprep.subr.mxu0 0.0
    %8144 = vmatpush1.xpose.msra.mxu0 0.0
    %8145 = vmatprep.subr.mxu0 0.0
    %8146 = vmatpush1.xpose.msra.mxu0 0.0
    %8147 = vmatprep.subr.mxu0 0.0
    %8148 = vmatpush1.xpose.msra.mxu0 0.0
    %8149 = vmatprep.subr.mxu0 0.0
    %8150 = vmatpush1.xpose.msra.mxu0 0.0
    %8151 = vmatprep.subr.mxu0 0.0
    %8152 = vmatpush1.xpose.msra.mxu0 0.0
    %8153 = vmatprep.subr.mxu0 0.0
    %8154 = vmatpush1.xpose.msra.mxu0 0.0
    %8155 = vmatprep.subr.mxu0 0.0
    %8156 = vmatpush1.xpose.msra.mxu0 0.0
    %8157 = vmatprep.subr.mxu0 0.0
    %8158 = vmatpush1.xpose.msra.mxu0 0.0
    %8159 = vmatprep.subr.mxu0 0.0
    %8160 = vmatpush1.xpose.msra.mxu0 0.0
    %8161 = vmatprep.subr.mxu0 0.0
    %8162 = vmatpush1.xpose.msra.mxu0 0.0
    %8163 = vmatprep.subr.mxu0 0.0
    %8164 = vmatpush1.xpose.msra.mxu0 0.0
    %8165 = vmatprep.subr.mxu0 0.0
    %8166 = vmatpush1.xpose.msra.mxu0 0.0
    %8167 = vmatprep.subr.mxu0 0.0
    %8168 = vmatpush1.xpose.msra.mxu0 0.0
    %8169 = vmatprep.subr.mxu0 0.0
    %8170 = vmatpush1.xpose.msra.mxu0 0.0
    %8171 = vmatprep.mubr.f32.mxu0 0.0
    %8172 = vmatmul.mubr.f32.gmra.mrb[0].mxu0 %v8102
    %v8173 = vpop.f32.mrb[0].mxu0
    %v8174 = vadd.f32 0.0, %v8173
    %v8175 = vpop.f32.mrb[0].mxu0
    %8176 = vdwg.mxu0
    %v8177 = vmul.f32 %v7642, 0.35355338
    %v8178 = vmul.f32 %v7718, 0.35355338
    %v8179 = vmul.f32 %v7794, 0.35355338
    %v8180 = vmul.f32 %v7870, 0.35355338
    %v8181 = vmul.f32 %v7946, 0.35355338
    %v8182 = vmul.f32 %v8022, 0.35355338
    %v8183 = vmul.f32 %v8098, 0.35355338
    %v8184 = vmul.f32 %v8174, 0.35355338
    %v8185 = vsel %vm2671, %v8177, -1000000.0
    %v8186 = vsel %vm2671, %v8178, -1000000.0
    %v8187 = vsel %vm2671, %v8179, -1000000.0
    %v8188 = vsel %vm2671, %v8180, -1000000.0
    %v8189 = vsel %vm2671, %v8181, -1000000.0
    %v8190 = vsel %vm2671, %v8182, -1000000.0
    %v8191 = vsel %vm2671, %v8183, -1000000.0
    %v8192 = vsel %vm2671, %v8184, -1000000.0
    %v8193 = vsel %vm2053, %v8185, -inf
    %8194 = vmax.xlane.f32.xlu0 %v8193
    %v8195 = vpop.xlane.xlu0 %8194
    %v8196 = vsel %vm2053, %v8186, -inf
    %8197 = vmax.xlane.f32.xlu0 %v8196
    %v8198 = vpop.xlane.xlu0 %8197
    %v8199 = vsel %vm2053, %v8187, -inf
    %8200 = vmax.xlane.f32.xlu0 %v8199
    %v8201 = vpop.xlane.xlu0 %8200
    %v8202 = vsel %vm2053, %v8188, -inf
    %8203 = vmax.xlane.f32.xlu0 %v8202
    %v8204 = vpop.xlane.xlu0 %8203
    %v8205 = vsel %vm2053, %v8189, -inf
    %8206 = vmax.xlane.f32.xlu0 %v8205
    %v8207 = vpop.xlane.xlu0 %8206
    %v8208 = vsel %vm2053, %v8190, -inf
    %8209 = vmax.xlane.f32.xlu0 %v8208
    %v8210 = vpop.xlane.xlu0 %8209
    %v8211 = vsel %vm2053, %v8191, -inf
    %8212 = vmax.xlane.f32.xlu0 %v8211
    %v8213 = vpop.xlane.xlu0 %8212
    %v8214 = vsel %vm2053, %v8192, -inf
    %8215 = vmax.xlane.f32.xlu0 %v8214
    %v8216 = vpop.xlane.xlu0 %8215
    %v8217 = vsub.f32 %v8185, %v8195
    %v8218 = vsub.f32 %v8186, %v8198
    %v8219 = vsub.f32 %v8187, %v8201
    %v8220 = vsub.f32 %v8188, %v8204
    %v8221 = vsub.f32 %v8189, %v8207
    %v8222 = vsub.f32 %v8190, %v8210
    %v8223 = vsub.f32 %v8191, %v8213
    %v8224 = vsub.f32 %v8192, %v8216
    %v8225 = vmul.f32 %v8217, 1.442695
    %v8226 = vpow.pop %v8225
    %v8227 = vmul.f32 %v8218, 1.442695
    %v8228 = vpow.pop %v8227
    %v8229 = vmul.f32 %v8219, 1.442695
    %v8230 = vpow.pop %v8229
    %v8231 = vmul.f32 %v8220, 1.442695
    %v8232 = vpow.pop %v8231
    %v8233 = vmul.f32 %v8221, 1.442695
    %v8234 = vpow.pop %v8233
    %v8235 = vmul.f32 %v8222, 1.442695
    %v8236 = vpow.pop %v8235
    %v8237 = vmul.f32 %v8223, 1.442695
    %v8238 = vpow.pop %v8237
    %v8239 = vmul.f32 %v8224, 1.442695
    %v8240 = vpow.pop %v8239
    %v8241 = vsel %vm2053, %v8226, 0.0
    %8242 = vadd.xlane.f32.xlu0 %v8241
    %v8243 = vpop.xlane.xlu0 %8242
    %v8244 = vsel %vm2053, %v8228, 0.0
    %8245 = vadd.xlane.f32.xlu0 %v8244
    %v8246 = vpop.xlane.xlu0 %8245
    %v8247 = vsel %vm2053, %v8230, 0.0
    %8248 = vadd.xlane.f32.xlu0 %v8247
    %v8249 = vpop.xlane.xlu0 %8248
    %v8250 = vsel %vm2053, %v8232, 0.0
    %8251 = vadd.xlane.f32.xlu0 %v8250
    %v8252 = vpop.xlane.xlu0 %8251
    %v8253 = vsel %vm2053, %v8234, 0.0
    %8254 = vadd.xlane.f32.xlu0 %v8253
    %v8255 = vpop.xlane.xlu0 %8254
    %v8256 = vsel %vm2053, %v8236, 0.0
    %8257 = vadd.xlane.f32.xlu0 %v8256
    %v8258 = vpop.xlane.xlu0 %8257
    %v8259 = vsel %vm2053, %v8238, 0.0
    %8260 = vadd.xlane.f32.xlu0 %v8259
    %v8261 = vpop.xlane.xlu0 %8260
    %v8262 = vsel %vm2053, %v8240, 0.0
    %8263 = vadd.xlane.f32.xlu0 %v8262
    %v8264 = vpop.xlane.xlu0 %8263
    %v8265 = vrcp.pop %v8243
    %v8266 = vrcp.pop %v8246
    %v8267 = vrcp.pop %v8249
    %v8268 = vrcp.pop %v8252
    %v8269 = vrcp.pop %v8255
    %v8270 = vrcp.pop %v8258
    %v8271 = vrcp.pop %v8261
    %v8272 = vrcp.pop %v8264
    %v8273 = vmul.f32 %v8226, %v8265
    %v8274 = vmul.f32 %v8228, %v8266
    %v8275 = vmul.f32 %v8230, %v8267
    %v8276 = vmul.f32 %v8232, %v8268
    %v8277 = vmul.f32 %v8234, %v8269
    %v8278 = vmul.f32 %v8236, %v8270
    %v8279 = vmul.f32 %v8238, %v8271
    %v8280 = vmul.f32 %v8240, %v8272
    %v8282 = vsel %vm2053, %v8273, 0
    %8284 = vmatprep.subr.mxu0 0.0
    %8285 = vmatpush1.msra.mxu0 %v6613
    %8286 = vmatprep.subr.mxu0 0.0
    %8287 = vmatpush1.msra.mxu0 0.0
    %8288 = vmatprep.subr.mxu0 0.0
    %8289 = vmatpush1.msra.mxu0 0.0
    %8290 = vmatprep.subr.mxu0 0.0
    %8291 = vmatpush1.msra.mxu0 0.0
    %8292 = vmatprep.subr.mxu0 0.0
    %8293 = vmatpush1.msra.mxu0 0.0
    %8294 = vmatprep.subr.mxu0 0.0
    %8295 = vmatpush1.msra.mxu0 0.0
    %8296 = vmatprep.subr.mxu0 0.0
    %8297 = vmatpush1.msra.mxu0 0.0
    %8298 = vmatprep.subr.mxu0 0.0
    %8299 = vmatpush1.msra.mxu0 0.0
    %8300 = vmatprep.subr.mxu0 0.0
    %8301 = vmatpush1.msra.mxu0 0.0
    %8302 = vmatprep.subr.mxu0 0.0
    %8303 = vmatpush1.msra.mxu0 0.0
    %8304 = vmatprep.subr.mxu0 0.0
    %8305 = vmatpush1.msra.mxu0 0.0
    %8306 = vmatprep.subr.mxu0 0.0
    %8307 = vmatpush1.msra.mxu0 0.0
    %8308 = vmatprep.subr.mxu0 0.0
    %8309 = vmatpush1.msra.mxu0 0.0
    %8310 = vmatprep.subr.mxu0 0.0
    %8311 = vmatpush1.msra.mxu0 0.0
    %8312 = vmatprep.subr.mxu0 0.0
    %8313 = vmatpush1.msra.mxu0 0.0
    %8314 = vmatprep.subr.mxu0 0.0
    %8315 = vmatpush1.msra.mxu0 0.0
    %8316 = vmatprep.subr.mxu0 0.0
    %8317 = vmatpush1.msra.mxu0 0.0
    %8318 = vmatprep.subr.mxu0 0.0
    %8319 = vmatpush1.msra.mxu0 0.0
    %8320 = vmatprep.subr.mxu0 0.0
    %8321 = vmatpush1.msra.mxu0 0.0
    %8322 = vmatprep.subr.mxu0 0.0
    %8323 = vmatpush1.msra.mxu0 0.0
    %8324 = vmatprep.subr.mxu0 0.0
    %8325 = vmatpush1.msra.mxu0 0.0
    %8326 = vmatprep.subr.mxu0 0.0
    %8327 = vmatpush1.msra.mxu0 0.0
    %8328 = vmatprep.subr.mxu0 0.0
    %8329 = vmatpush1.msra.mxu0 0.0
    %8330 = vmatprep.subr.mxu0 0.0
    %8331 = vmatpush1.msra.mxu0 0.0
    %8332 = vmatprep.subr.mxu0 0.0
    %8333 = vmatpush1.msra.mxu0 0.0
    %8334 = vmatprep.subr.mxu0 0.0
    %8335 = vmatpush1.msra.mxu0 0.0
    %8336 = vmatprep.subr.mxu0 0.0
    %8337 = vmatpush1.msra.mxu0 0.0
    %8338 = vmatprep.subr.mxu0 0.0
    %8339 = vmatpush1.msra.mxu0 0.0
    %8340 = vmatprep.subr.mxu0 0.0
    %8341 = vmatpush1.msra.mxu0 0.0
    %8342 = vmatprep.subr.mxu0 0.0
    %8343 = vmatpush1.msra.mxu0 0.0
    %8344 = vmatprep.subr.mxu0 0.0
    %8345 = vmatpush1.msra.mxu0 0.0
    %8346 = vmatprep.subr.mxu0 0.0
    %8347 = vmatpush1.msra.mxu0 0.0
    %8348 = vmatprep.mubr.f32.mxu0 0.0
    %8349 = vmatmul.mubr.f32.gmra.mrb[0].mxu0 %v8282
    %v8350 = vpop.f32.mrb[0].mxu0
    %v8351 = vadd.f32 0.0, %v8350
    %v8352 = vpop.f32.mrb[0].mxu0
    %8353 = vdwg.mxu0
    %v8355 = vsel %vm2053, %v8274, 0
    %8357 = vmatprep.subr.mxu0 0.0
    %8358 = vmatpush1.msra.mxu0 %v6681
    %8359 = vmatprep.subr.mxu0 0.0
    %8360 = vmatpush1.msra.mxu0 0.0
    %8361 = vmatprep.subr.mxu0 0.0
    %8362 = vmatpush1.msra.mxu0 0.0
    %8363 = vmatprep.subr.mxu0 0.0
    %8364 = vmatpush1.msra.mxu0 0.0
    %8365 = vmatprep.subr.mxu0 0.0
    %8366 = vmatpush1.msra.mxu0 0.0
    %8367 = vmatprep.subr.mxu0 0.0
    %8368 = vmatpush1.msra.mxu0 0.0
    %8369 = vmatprep.subr.mxu0 0.0
    %8370 = vmatpush1.msra.mxu0 0.0
    %8371 = vmatprep.subr.mxu0 0.0
    %8372 = vmatpush1.msra.mxu0 0.0
    %8373 = vmatprep.subr.mxu0 0.0
    %8374 = vmatpush1.msra.mxu0 0.0
    %8375 = vmatprep.subr.mxu0 0.0
    %8376 = vmatpush1.msra.mxu0 0.0
    %8377 = vmatprep.subr.mxu0 0.0
    %8378 = vmatpush1.msra.mxu0 0.0
    %8379 = vmatprep.subr.mxu0 0.0
    %8380 = vmatpush1.msra.mxu0 0.0
    %8381 = vmatprep.subr.mxu0 0.0
    %8382 = vmatpush1.msra.mxu0 0.0
    %8383 = vmatprep.subr.mxu0 0.0
    %8384 = vmatpush1.msra.mxu0 0.0
    %8385 = vmatprep.subr.mxu0 0.0
    %8386 = vmatpush1.msra.mxu0 0.0
    %8387 = vmatprep.subr.mxu0 0.0
    %8388 = vmatpush1.msra.mxu0 0.0
    %8389 = vmatprep.subr.mxu0 0.0
    %8390 = vmatpush1.msra.mxu0 0.0
    %8391 = vmatprep.subr.mxu0 0.0
    %8392 = vmatpush1.msra.mxu0 0.0
    %8393 = vmatprep.subr.mxu0 0.0
    %8394 = vmatpush1.msra.mxu0 0.0
    %8395 = vmatprep.subr.mxu0 0.0
    %8396 = vmatpush1.msra.mxu0 0.0
    %8397 = vmatprep.subr.mxu0 0.0
    %8398 = vmatpush1.msra.mxu0 0.0
    %8399 = vmatprep.subr.mxu0 0.0
    %8400 = vmatpush1.msra.mxu0 0.0
    %8401 = vmatprep.subr.mxu0 0.0
    %8402 = vmatpush1.msra.mxu0 0.0
    %8403 = vmatprep.subr.mxu0 0.0
    %8404 = vmatpush1.msra.mxu0 0.0
    %8405 = vmatprep.subr.mxu0 0.0
    %8406 = vmatpush1.msra.mxu0 0.0
    %8407 = vmatprep.subr.mxu0 0.0
    %8408 = vmatpush1.msra.mxu0 0.0
    %8409 = vmatprep.subr.mxu0 0.0
    %8410 = vmatpush1.msra.mxu0 0.0
    %8411 = vmatprep.subr.mxu0 0.0
    %8412 = vmatpush1.msra.mxu0 0.0
    %8413 = vmatprep.subr.mxu0 0.0
    %8414 = vmatpush1.msra.mxu0 0.0
    %8415 = vmatprep.subr.mxu0 0.0
    %8416 = vmatpush1.msra.mxu0 0.0
    %8417 = vmatprep.subr.mxu0 0.0
    %8418 = vmatpush1.msra.mxu0 0.0
    %8419 = vmatprep.subr.mxu0 0.0
    %8420 = vmatpush1.msra.mxu0 0.0
    %8421 = vmatprep.mubr.f32.mxu0 0.0
    %8422 = vmatmul.mubr.f32.gmra.mrb[0].mxu0 %v8355
    %v8423 = vpop.f32.mrb[0].mxu0
    %v8424 = vadd.f32 0.0, %v8423
    %v8425 = vpop.f32.mrb[0].mxu0
    %8426 = vdwg.mxu0
    %v8428 = vsel %vm2053, %v8275, 0
    %8430 = vmatprep.subr.mxu0 0.0
    %8431 = vmatpush1.msra.mxu0 %v6614
    %8432 = vmatprep.subr.mxu0 0.0
    %8433 = vmatpush1.msra.mxu0 0.0
    %8434 = vmatprep.subr.mxu0 0.0
    %8435 = vmatpush1.msra.mxu0 0.0
    %8436 = vmatprep.subr.mxu0 0.0
    %8437 = vmatpush1.msra.mxu0 0.0
    %8438 = vmatprep.subr.mxu0 0.0
    %8439 = vmatpush1.msra.mxu0 0.0
    %8440 = vmatprep.subr.mxu0 0.0
    %8441 = vmatpush1.msra.mxu0 0.0
    %8442 = vmatprep.subr.mxu0 0.0
    %8443 = vmatpush1.msra.mxu0 0.0
    %8444 = vmatprep.subr.mxu0 0.0
    %8445 = vmatpush1.msra.mxu0 0.0
    %8446 = vmatprep.subr.mxu0 0.0
    %8447 = vmatpush1.msra.mxu0 0.0
    %8448 = vmatprep.subr.mxu0 0.0
    %8449 = vmatpush1.msra.mxu0 0.0
    %8450 = vmatprep.subr.mxu0 0.0
    %8451 = vmatpush1.msra.mxu0 0.0
    %8452 = vmatprep.subr.mxu0 0.0
    %8453 = vmatpush1.msra.mxu0 0.0
    %8454 = vmatprep.subr.mxu0 0.0
    %8455 = vmatpush1.msra.mxu0 0.0
    %8456 = vmatprep.subr.mxu0 0.0
    %8457 = vmatpush1.msra.mxu0 0.0
    %8458 = vmatprep.subr.mxu0 0.0
    %8459 = vmatpush1.msra.mxu0 0.0
    %8460 = vmatprep.subr.mxu0 0.0
    %8461 = vmatpush1.msra.mxu0 0.0
    %8462 = vmatprep.subr.mxu0 0.0
    %8463 = vmatpush1.msra.mxu0 0.0
    %8464 = vmatprep.subr.mxu0 0.0
    %8465 = vmatpush1.msra.mxu0 0.0
    %8466 = vmatprep.subr.mxu0 0.0
    %8467 = vmatpush1.msra.mxu0 0.0
    %8468 = vmatprep.subr.mxu0 0.0
    %8469 = vmatpush1.msra.mxu0 0.0
    %8470 = vmatprep.subr.mxu0 0.0
    %8471 = vmatpush1.msra.mxu0 0.0
    %8472 = vmatprep.subr.mxu0 0.0
    %8473 = vmatpush1.msra.mxu0 0.0
    %8474 = vmatprep.subr.mxu0 0.0
    %8475 = vmatpush1.msra.mxu0 0.0
    %8476 = vmatprep.subr.mxu0 0.0
    %8477 = vmatpush1.msra.mxu0 0.0
    %8478 = vmatprep.subr.mxu0 0.0
    %8479 = vmatpush1.msra.mxu0 0.0
    %8480 = vmatprep.subr.mxu0 0.0
    %8481 = vmatpush1.msra.mxu0 0.0
    %8482 = vmatprep.subr.mxu0 0.0
    %8483 = vmatpush1.msra.mxu0 0.0
    %8484 = vmatprep.subr.mxu0 0.0
    %8485 = vmatpush1.msra.mxu0 0.0
    %8486 = vmatprep.subr.mxu0 0.0
    %8487 = vmatpush1.msra.mxu0 0.0
    %8488 = vmatprep.subr.mxu0 0.0
    %8489 = vmatpush1.msra.mxu0 0.0
    %8490 = vmatprep.subr.mxu0 0.0
    %8491 = vmatpush1.msra.mxu0 0.0
    %8492 = vmatprep.subr.mxu0 0.0
    %8493 = vmatpush1.msra.mxu0 0.0
    %8494 = vmatprep.mubr.f32.mxu0 0.0
    %8495 = vmatmul.mubr.f32.gmra.mrb[0].mxu0 %v8428
    %v8496 = vpop.f32.mrb[0].mxu0
    %v8497 = vadd.f32 0.0, %v8496
    %v8498 = vpop.f32.mrb[0].mxu0
    %8499 = vdwg.mxu0
    %v8501 = vsel %vm2053, %v8276, 0
    %8503 = vmatprep.subr.mxu0 0.0
    %8504 = vmatpush1.msra.mxu0 %v6682
    %8505 = vmatprep.subr.mxu0 0.0
    %8506 = vmatpush1.msra.mxu0 0.0
    %8507 = vmatprep.subr.mxu0 0.0
    %8508 = vmatpush1.msra.mxu0 0.0
    %8509 = vmatprep.subr.mxu0 0.0
    %8510 = vmatpush1.msra.mxu0 0.0
    %8511 = vmatprep.subr.mxu0 0.0
    %8512 = vmatpush1.msra.mxu0 0.0
    %8513 = vmatprep.subr.mxu0 0.0
    %8514 = vmatpush1.msra.mxu0 0.0
    %8515 = vmatprep.subr.mxu0 0.0
    %8516 = vmatpush1.msra.mxu0 0.0
    %8517 = vmatprep.subr.mxu0 0.0
    %8518 = vmatpush1.msra.mxu0 0.0
    %8519 = vmatprep.subr.mxu0 0.0
    %8520 = vmatpush1.msra.mxu0 0.0
    %8521 = vmatprep.subr.mxu0 0.0
    %8522 = vmatpush1.msra.mxu0 0.0
    %8523 = vmatprep.subr.mxu0 0.0
    %8524 = vmatpush1.msra.mxu0 0.0
    %8525 = vmatprep.subr.mxu0 0.0
    %8526 = vmatpush1.msra.mxu0 0.0
    %8527 = vmatprep.subr.mxu0 0.0
    %8528 = vmatpush1.msra.mxu0 0.0
    %8529 = vmatprep.subr.mxu0 0.0
    %8530 = vmatpush1.msra.mxu0 0.0
    %8531 = vmatprep.subr.mxu0 0.0
    %8532 = vmatpush1.msra.mxu0 0.0
    %8533 = vmatprep.subr.mxu0 0.0
    %8534 = vmatpush1.msra.mxu0 0.0
    %8535 = vmatprep.subr.mxu0 0.0
    %8536 = vmatpush1.msra.mxu0 0.0
    %8537 = vmatprep.subr.mxu0 0.0
    %8538 = vmatpush1.msra.mxu0 0.0
    %8539 = vmatprep.subr.mxu0 0.0
    %8540 = vmatpush1.msra.mxu0 0.0
    %8541 = vmatprep.subr.mxu0 0.0
    %8542 = vmatpush1.msra.mxu0 0.0
    %8543 = vmatprep.subr.mxu0 0.0
    %8544 = vmatpush1.msra.mxu0 0.0
    %8545 = vmatprep.subr.mxu0 0.0
    %8546 = vmatpush1.msra.mxu0 0.0
    %8547 = vmatprep.subr.mxu0 0.0
    %8548 = vmatpush1.msra.mxu0 0.0
    %8549 = vmatprep.subr.mxu0 0.0
    %8550 = vmatpush1.msra.mxu0 0.0
    %8551 = vmatprep.subr.mxu0 0.0
    %8552 = vmatpush1.msra.mxu0 0.0
    %8553 = vmatprep.subr.mxu0 0.0
    %8554 = vmatpush1.msra.mxu0 0.0
    %8555 = vmatprep.subr.mxu0 0.0
    %8556 = vmatpush1.msra.mxu0 0.0
    %8557 = vmatprep.subr.mxu0 0.0
    %8558 = vmatpush1.msra.mxu0 0.0
    %8559 = vmatprep.subr.mxu0 0.0
    %8560 = vmatpush1.msra.mxu0 0.0
    %8561 = vmatprep.subr.mxu0 0.0
    %8562 = vmatpush1.msra.mxu0 0.0
    %8563 = vmatprep.subr.mxu0 0.0
    %8564 = vmatpush1.msra.mxu0 0.0
    %8565 = vmatprep.subr.mxu0 0.0
    %8566 = vmatpush1.msra.mxu0 0.0
    %8567 = vmatprep.mubr.f32.mxu0 0.0
    %8568 = vmatmul.mubr.f32.gmra.mrb[0].mxu0 %v8501
    %v8569 = vpop.f32.mrb[0].mxu0
    %v8570 = vadd.f32 0.0, %v8569
    %v8571 = vpop.f32.mrb[0].mxu0
    %8572 = vdwg.mxu0
    %v8574 = vsel %vm2053, %v8277, 0
    %8576 = vmatprep.subr.mxu0 0.0
    %8577 = vmatpush1.msra.mxu0 %v6615
    %8578 = vmatprep.subr.mxu0 0.0
    %8579 = vmatpush1.msra.mxu0 0.0
    %8580 = vmatprep.subr.mxu0 0.0
    %8581 = vmatpush1.msra.mxu0 0.0
    %8582 = vmatprep.subr.mxu0 0.0
    %8583 = vmatpush1.msra.mxu0 0.0
    %8584 = vmatprep.subr.mxu0 0.0
    %8585 = vmatpush1.msra.mxu0 0.0
    %8586 = vmatprep.subr.mxu0 0.0
    %8587 = vmatpush1.msra.mxu0 0.0
    %8588 = vmatprep.subr.mxu0 0.0
    %8589 = vmatpush1.msra.mxu0 0.0
    %8590 = vmatprep.subr.mxu0 0.0
    %8591 = vmatpush1.msra.mxu0 0.0
    %8592 = vmatprep.subr.mxu0 0.0
    %8593 = vmatpush1.msra.mxu0 0.0
    %8594 = vmatprep.subr.mxu0 0.0
    %8595 = vmatpush1.msra.mxu0 0.0
    %8596 = vmatprep.subr.mxu0 0.0
    %8597 = vmatpush1.msra.mxu0 0.0
    %8598 = vmatprep.subr.mxu0 0.0
    %8599 = vmatpush1.msra.mxu0 0.0
    %8600 = vmatprep.subr.mxu0 0.0
    %8601 = vmatpush1.msra.mxu0 0.0
    %8602 = vmatprep.subr.mxu0 0.0
    %8603 = vmatpush1.msra.mxu0 0.0
    %8604 = vmatprep.subr.mxu0 0.0
    %8605 = vmatpush1.msra.mxu0 0.0
    %8606 = vmatprep.subr.mxu0 0.0
    %8607 = vmatpush1.msra.mxu0 0.0
    %8608 = vmatprep.subr.mxu0 0.0
    %8609 = vmatpush1.msra.mxu0 0.0
    %8610 = vmatprep.subr.mxu0 0.0
    %8611 = vmatpush1.msra.mxu0 0.0
    %8612 = vmatprep.subr.mxu0 0.0
    %8613 = vmatpush1.msra.mxu0 0.0
    %8614 = vmatprep.subr.mxu0 0.0
    %8615 = vmatpush1.msra.mxu0 0.0
    %8616 = vmatprep.subr.mxu0 0.0
    %8617 = vmatpush1.msra.mxu0 0.0
    %8618 = vmatprep.subr.mxu0 0.0
    %8619 = vmatpush1.msra.mxu0 0.0
    %8620 = vmatprep.subr.mxu0 0.0
    %8621 = vmatpush1.msra.mxu0 0.0
    %8622 = vmatprep.subr.mxu0 0.0
    %8623 = vmatpush1.msra.mxu0 0.0
    %8624 = vmatprep.subr.mxu0 0.0
    %8625 = vmatpush1.msra.mxu0 0.0
    %8626 = vmatprep.subr.mxu0 0.0
    %8627 = vmatpush1.msra.mxu0 0.0
    %8628 = vmatprep.subr.mxu0 0.0
    %8629 = vmatpush1.msra.mxu0 0.0
    %8630 = vmatprep.subr.mxu0 0.0
    %8631 = vmatpush1.msra.mxu0 0.0
    %8632 = vmatprep.subr.mxu0 0.0
    %8633 = vmatpush1.msra.mxu0 0.0
    %8634 = vmatprep.subr.mxu0 0.0
    %8635 = vmatpush1.msra.mxu0 0.0
    %8636 = vmatprep.subr.mxu0 0.0
    %8637 = vmatpush1.msra.mxu0 0.0
    %8638 = vmatprep.subr.mxu0 0.0
    %8639 = vmatpush1.msra.mxu0 0.0
    %8640 = vmatprep.mubr.f32.mxu0 0.0
    %8641 = vmatmul.mubr.f32.gmra.mrb[0].mxu0 %v8574
    %v8642 = vpop.f32.mrb[0].mxu0
    %v8643 = vadd.f32 0.0, %v8642
    %v8644 = vpop.f32.mrb[0].mxu0
    %8645 = vdwg.mxu0
    %v8647 = vsel %vm2053, %v8278, 0
    %8649 = vmatprep.subr.mxu0 0.0
    %8650 = vmatpush1.msra.mxu0 %v6683
    %8651 = vmatprep.subr.mxu0 0.0
    %8652 = vmatpush1.msra.mxu0 0.0
    %8653 = vmatprep.subr.mxu0 0.0
    %8654 = vmatpush1.msra.mxu0 0.0
    %8655 = vmatprep.subr.mxu0 0.0
    %8656 = vmatpush1.msra.mxu0 0.0
    %8657 = vmatprep.subr.mxu0 0.0
    %8658 = vmatpush1.msra.mxu0 0.0
    %8659 = vmatprep.subr.mxu0 0.0
    %8660 = vmatpush1.msra.mxu0 0.0
    %8661 = vmatprep.subr.mxu0 0.0
    %8662 = vmatpush1.msra.mxu0 0.0
    %8663 = vmatprep.subr.mxu0 0.0
    %8664 = vmatpush1.msra.mxu0 0.0
    %8665 = vmatprep.subr.mxu0 0.0
    %8666 = vmatpush1.msra.mxu0 0.0
    %8667 = vmatprep.subr.mxu0 0.0
    %8668 = vmatpush1.msra.mxu0 0.0
    %8669 = vmatprep.subr.mxu0 0.0
    %8670 = vmatpush1.msra.mxu0 0.0
    %8671 = vmatprep.subr.mxu0 0.0
    %8672 = vmatpush1.msra.mxu0 0.0
    %8673 = vmatprep.subr.mxu0 0.0
    %8674 = vmatpush1.msra.mxu0 0.0
    %8675 = vmatprep.subr.mxu0 0.0
    %8676 = vmatpush1.msra.mxu0 0.0
    %8677 = vmatprep.subr.mxu0 0.0
    %8678 = vmatpush1.msra.mxu0 0.0
    %8679 = vmatprep.subr.mxu0 0.0
    %8680 = vmatpush1.msra.mxu0 0.0
    %8681 = vmatprep.subr.mxu0 0.0
    %8682 = vmatpush1.msra.mxu0 0.0
    %8683 = vmatprep.subr.mxu0 0.0
    %8684 = vmatpush1.msra.mxu0 0.0
    %8685 = vmatprep.subr.mxu0 0.0
    %8686 = vmatpush1.msra.mxu0 0.0
    %8687 = vmatprep.subr.mxu0 0.0
    %8688 = vmatpush1.msra.mxu0 0.0
    %8689 = vmatprep.subr.mxu0 0.0
    %8690 = vmatpush1.msra.mxu0 0.0
    %8691 = vmatprep.subr.mxu0 0.0
    %8692 = vmatpush1.msra.mxu0 0.0
    %8693 = vmatprep.subr.mxu0 0.0
    %8694 = vmatpush1.msra.mxu0 0.0
    %8695 = vmatprep.subr.mxu0 0.0
    %8696 = vmatpush1.msra.mxu0 0.0
    %8697 = vmatprep.subr.mxu0 0.0
    %8698 = vmatpush1.msra.mxu0 0.0
    %8699 = vmatprep.subr.mxu0 0.0
    %8700 = vmatpush1.msra.mxu0 0.0
    %8701 = vmatprep.subr.mxu0 0.0
    %8702 = vmatpush1.msra.mxu0 0.0
    %8703 = vmatprep.subr.mxu0 0.0
    %8704 = vmatpush1.msra.mxu0 0.0
    %8705 = vmatprep.subr.mxu0 0.0
    %8706 = vmatpush1.msra.mxu0 0.0
    %8707 = vmatprep.subr.mxu0 0.0
    %8708 = vmatpush1.msra.mxu0 0.0
    %8709 = vmatprep.subr.mxu0 0.0
    %8710 = vmatpush1.msra.mxu0 0.0
    %8711 = vmatprep.subr.mxu0 0.0
    %8712 = vmatpush1.msra.mxu0 0.0
    %8713 = vmatprep.mubr.f32.mxu0 0.0
    %8714 = vmatmul.mubr.f32.gmra.mrb[0].mxu0 %v8647
    %v8715 = vpop.f32.mrb[0].mxu0
    %v8716 = vadd.f32 0.0, %v8715
    %v8717 = vpop.f32.mrb[0].mxu0
    %8718 = vdwg.mxu0
    %v8720 = vsel %vm2053, %v8279, 0
    %8722 = vmatprep.subr.mxu0 0.0
    %8723 = vmatpush1.msra.mxu0 %v6616
    %8724 = vmatprep.subr.mxu0 0.0
    %8725 = vmatpush1.msra.mxu0 0.0
    %8726 = vmatprep.subr.mxu0 0.0
    %8727 = vmatpush1.msra.mxu0 0.0
    %8728 = vmatprep.subr.mxu0 0.0
    %8729 = vmatpush1.msra.mxu0 0.0
    %8730 = vmatprep.subr.mxu0 0.0
    %8731 = vmatpush1.msra.mxu0 0.0
    %8732 = vmatprep.subr.mxu0 0.0
    %8733 = vmatpush1.msra.mxu0 0.0
    %8734 = vmatprep.subr.mxu0 0.0
    %8735 = vmatpush1.msra.mxu0 0.0
    %8736 = vmatprep.subr.mxu0 0.0
    %8737 = vmatpush1.msra.mxu0 0.0
    %8738 = vmatprep.subr.mxu0 0.0
    %8739 = vmatpush1.msra.mxu0 0.0
    %8740 = vmatprep.subr.mxu0 0.0
    %8741 = vmatpush1.msra.mxu0 0.0
    %8742 = vmatprep.subr.mxu0 0.0
    %8743 = vmatpush1.msra.mxu0 0.0
    %8744 = vmatprep.subr.mxu0 0.0
    %8745 = vmatpush1.msra.mxu0 0.0
    %8746 = vmatprep.subr.mxu0 0.0
    %8747 = vmatpush1.msra.mxu0 0.0
    %8748 = vmatprep.subr.mxu0 0.0
    %8749 = vmatpush1.msra.mxu0 0.0
    %8750 = vmatprep.subr.mxu0 0.0
    %8751 = vmatpush1.msra.mxu0 0.0
    %8752 = vmatprep.subr.mxu0 0.0
    %8753 = vmatpush1.msra.mxu0 0.0
    %8754 = vmatprep.subr.mxu0 0.0
    %8755 = vmatpush1.msra.mxu0 0.0
    %8756 = vmatprep.subr.mxu0 0.0
    %8757 = vmatpush1.msra.mxu0 0.0
    %8758 = vmatprep.subr.mxu0 0.0
    %8759 = vmatpush1.msra.mxu0 0.0
    %8760 = vmatprep.subr.mxu0 0.0
    %8761 = vmatpush1.msra.mxu0 0.0
    %8762 = vmatprep.subr.mxu0 0.0
    %8763 = vmatpush1.msra.mxu0 0.0
    %8764 = vmatprep.subr.mxu0 0.0
    %8765 = vmatpush1.msra.mxu0 0.0
    %8766 = vmatprep.subr.mxu0 0.0
    %8767 = vmatpush1.msra.mxu0 0.0
    %8768 = vmatprep.subr.mxu0 0.0
    %8769 = vmatpush1.msra.mxu0 0.0
    %8770 = vmatprep.subr.mxu0 0.0
    %8771 = vmatpush1.msra.mxu0 0.0
    %8772 = vmatprep.subr.mxu0 0.0
    %8773 = vmatpush1.msra.mxu0 0.0
    %8774 = vmatprep.subr.mxu0 0.0
    %8775 = vmatpush1.msra.mxu0 0.0
    %8776 = vmatprep.subr.mxu0 0.0
    %8777 = vmatpush1.msra.mxu0 0.0
    %8778 = vmatprep.subr.mxu0 0.0
    %8779 = vmatpush1.msra.mxu0 0.0
    %8780 = vmatprep.subr.mxu0 0.0
    %8781 = vmatpush1.msra.mxu0 0.0
    %8782 = vmatprep.subr.mxu0 0.0
    %8783 = vmatpush1.msra.mxu0 0.0
    %8784 = vmatprep.subr.mxu0 0.0
    %8785 = vmatpush1.msra.mxu0 0.0
    %8786 = vmatprep.mubr.f32.mxu0 0.0
    %8787 = vmatmul.mubr.f32.gmra.mrb[0].mxu0 %v8720
    %v8788 = vpop.f32.mrb[0].mxu0
    %v8789 = vadd.f32 0.0, %v8788
    %v8790 = vpop.f32.mrb[0].mxu0
    %8791 = vdwg.mxu0
    %v8793 = vsel %vm2053, %v8280, 0
    %8795 = vmatprep.subr.mxu0 0.0
    %8796 = vmatpush1.msra.mxu0 %v6684
    %8797 = vmatprep.subr.mxu0 0.0
    %8798 = vmatpush1.msra.mxu0 0.0
    %8799 = vmatprep.subr.mxu0 0.0
    %8800 = vmatpush1.msra.mxu0 0.0
    %8801 = vmatprep.subr.mxu0 0.0
    %8802 = vmatpush1.msra.mxu0 0.0
    %8803 = vmatprep.subr.mxu0 0.0
    %8804 = vmatpush1.msra.mxu0 0.0
    %8805 = vmatprep.subr.mxu0 0.0
    %8806 = vmatpush1.msra.mxu0 0.0
    %8807 = vmatprep.subr.mxu0 0.0
    %8808 = vmatpush1.msra.mxu0 0.0
    %8809 = vmatprep.subr.mxu0 0.0
    %8810 = vmatpush1.msra.mxu0 0.0
    %8811 = vmatprep.subr.mxu0 0.0
    %8812 = vmatpush1.msra.mxu0 0.0
    %8813 = vmatprep.subr.mxu0 0.0
    %8814 = vmatpush1.msra.mxu0 0.0
    %8815 = vmatprep.subr.mxu0 0.0
    %8816 = vmatpush1.msra.mxu0 0.0
    %8817 = vmatprep.subr.mxu0 0.0
    %8818 = vmatpush1.msra.mxu0 0.0
    %8819 = vmatprep.subr.mxu0 0.0
    %8820 = vmatpush1.msra.mxu0 0.0
    %8821 = vmatprep.subr.mxu0 0.0
    %8822 = vmatpush1.msra.mxu0 0.0
    %8823 = vmatprep.subr.mxu0 0.0
    %8824 = vmatpush1.msra.mxu0 0.0
    %8825 = vmatprep.subr.mxu0 0.0
    %8826 = vmatpush1.msra.mxu0 0.0
    %8827 = vmatprep.subr.mxu0 0.0
    %8828 = vmatpush1.msra.mxu0 0.0
    %8829 = vmatprep.subr.mxu0 0.0
    %8830 = vmatpush1.msra.mxu0 0.0
    %8831 = vmatprep.subr.mxu0 0.0
    %8832 = vmatpush1.msra.mxu0 0.0
    %8833 = vmatprep.subr.mxu0 0.0
    %8834 = vmatpush1.msra.mxu0 0.0
    %8835 = vmatprep.subr.mxu0 0.0
    %8836 = vmatpush1.msra.mxu0 0.0
    %8837 = vmatprep.subr.mxu0 0.0
    %8838 = vmatpush1.msra.mxu0 0.0
    %8839 = vmatprep.subr.mxu0 0.0
    %8840 = vmatpush1.msra.mxu0 0.0
    %8841 = vmatprep.subr.mxu0 0.0
    %8842 = vmatpush1.msra.mxu0 0.0
    %8843 = vmatprep.subr.mxu0 0.0
    %8844 = vmatpush1.msra.mxu0 0.0
    %8845 = vmatprep.subr.mxu0 0.0
    %8846 = vmatpush1.msra.mxu0 0.0
    %8847 = vmatprep.subr.mxu0 0.0
    %8848 = vmatpush1.msra.mxu0 0.0
    %8849 = vmatprep.subr.mxu0 0.0
    %8850 = vmatpush1.msra.mxu0 0.0
    %8851 = vmatprep.subr.mxu0 0.0
    %8852 = vmatpush1.msra.mxu0 0.0
    %8853 = vmatprep.subr.mxu0 0.0
    %8854 = vmatpush1.msra.mxu0 0.0
    %8855 = vmatprep.subr.mxu0 0.0
    %8856 = vmatpush1.msra.mxu0 0.0
    %8857 = vmatprep.subr.mxu0 0.0
    %8858 = vmatpush1.msra.mxu0 0.0
    %8859 = vmatprep.mubr.f32.mxu0 0.0
    %8860 = vmatmul.mubr.f32.gmra.mrb[0].mxu0 %v8793
    %v8861 = vpop.f32.mrb[0].mxu0
    %v8862 = vadd.f32 0.0, %v8861
    %v8863 = vpop.f32.mrb[0].mxu0
    %8864 = vdwg.mxu0
    %v8865 = vcombine.low %v8351, %v8643
    %v8866 = vcombine.high %v8351, %v8643
    %v8868 = vunpack.c.l.s4 1983009808
    %v8869 = vunpack.c.0.s8 %v8868
    %v8870 = vlaneseq
    %v8871 = vshrl.u32 %v8870, 7
    %v8872 = vsub.s32 %v8869, %v8871
    %v8873 = vrot.slane %v8865, %v8872
    %v8875 = vunpack.c.l.s4 1983009808
    %v8876 = vunpack.c.0.s8 %v8875
    %v8877 = vlaneseq
    %v8878 = vshrl.u32 %v8877, 7
    %v8879 = vsub.s32 %v8876, %v8878
    %v8880 = vrot.slane %v8866, %v8879
    %v8881 = vcombine.low %v8497, %v8789
    %v8882 = vcombine.high %v8497, %v8789
    %v8884 = vunpack.c.l.s4 1983009808
    %v8885 = vunpack.c.0.s8 %v8884
    %v8886 = vlaneseq
    %v8887 = vshrl.u32 %v8886, 7
    %v8888 = vsub.s32 %v8885, %v8887
    %v8889 = vrot.slane %v8881, %v8888
    %v8891 = vunpack.c.l.s4 1983009808
    %v8892 = vunpack.c.0.s8 %v8891
    %v8893 = vlaneseq
    %v8894 = vshrl.u32 %v8893, 7
    %v8895 = vsub.s32 %v8892, %v8894
    %v8896 = vrot.slane %v8882, %v8895
    %v8897 = vcombine.low %v8873, %v8889
    %v8898 = vcombine.high %v8873, %v8889
    %v8900 = vunpack.c.l.s4 1934713408
    %v8901 = vunpack.c.0.s8 %v8900
    %v8902 = vlaneseq
    %v8903 = vshrl.u32 %v8902, 7
    %v8904 = vsub.s32 %v8901, %v8903
    %v8905 = vrot.slane %v8897, %v8904
    %v8907 = vunpack.c.l.s4 1934713408
    %v8908 = vunpack.c.0.s8 %v8907
    %v8909 = vlaneseq
    %v8910 = vshrl.u32 %v8909, 7
    %v8911 = vsub.s32 %v8908, %v8910
    %v8912 = vrot.slane %v8898, %v8911
    %v8913 = vcombine.low %v8880, %v8896
    %v8914 = vcombine.high %v8880, %v8896
    %v8916 = vunpack.c.l.s4 1934713408
    %v8917 = vunpack.c.0.s8 %v8916
    %v8918 = vlaneseq
    %v8919 = vshrl.u32 %v8918, 7
    %v8920 = vsub.s32 %v8917, %v8919
    %v8921 = vrot.slane %v8913, %v8920
    %v8923 = vunpack.c.l.s4 1934713408
    %v8924 = vunpack.c.0.s8 %v8923
    %v8925 = vlaneseq
    %v8926 = vshrl.u32 %v8925, 7
    %v8927 = vsub.s32 %v8924, %v8926
    %v8928 = vrot.slane %v8914, %v8927
    %v8929 = vcombine.high %v8905, 0.0
    %v8930 = vcombine.high %v8912, 0.0
    %v8931 = vcombine.high %v8921, 0.0
    %v8932 = vcombine.high %v8928, 0.0
    %v8933 = vcombine.low %v8424, %v8716
    %v8934 = vcombine.high %v8424, %v8716
    %v8936 = vunpack.c.l.s4 1983009808
    %v8937 = vunpack.c.0.s8 %v8936
    %v8938 = vlaneseq
    %v8939 = vshrl.u32 %v8938, 7
    %v8940 = vsub.s32 %v8937, %v8939
    %v8941 = vrot.slane %v8933, %v8940
    %v8943 = vunpack.c.l.s4 1983009808
    %v8944 = vunpack.c.0.s8 %v8943
    %v8945 = vlaneseq
    %v8946 = vshrl.u32 %v8945, 7
    %v8947 = vsub.s32 %v8944, %v8946
    %v8948 = vrot.slane %v8934, %v8947
    %v8949 = vcombine.low %v8570, %v8862
    %v8950 = vcombine.high %v8570, %v8862
    %v8952 = vunpack.c.l.s4 1983009808
    %v8953 = vunpack.c.0.s8 %v8952
    %v8954 = vlaneseq
    %v8955 = vshrl.u32 %v8954, 7
    %v8956 = vsub.s32 %v8953, %v8955
    %v8957 = vrot.slane %v8949, %v8956
    %v8959 = vunpack.c.l.s4 1983009808
    %v8960 = vunpack.c.0.s8 %v8959
    %v8961 = vlaneseq
    %v8962 = vshrl.u32 %v8961, 7
    %v8963 = vsub.s32 %v8960, %v8962
    %v8964 = vrot.slane %v8950, %v8963
    %v8965 = vcombine.low %v8941, %v8957
    %v8966 = vcombine.high %v8941, %v8957
    %v8968 = vunpack.c.l.s4 1934713408
    %v8969 = vunpack.c.0.s8 %v8968
    %v8970 = vlaneseq
    %v8971 = vshrl.u32 %v8970, 7
    %v8972 = vsub.s32 %v8969, %v8971
    %v8973 = vrot.slane %v8965, %v8972
    %v8975 = vunpack.c.l.s4 1934713408
    %v8976 = vunpack.c.0.s8 %v8975
    %v8977 = vlaneseq
    %v8978 = vshrl.u32 %v8977, 7
    %v8979 = vsub.s32 %v8976, %v8978
    %v8980 = vrot.slane %v8966, %v8979
    %v8981 = vcombine.low %v8948, %v8964
    %v8982 = vcombine.high %v8948, %v8964
    %v8984 = vunpack.c.l.s4 1934713408
    %v8985 = vunpack.c.0.s8 %v8984
    %v8986 = vlaneseq
    %v8987 = vshrl.u32 %v8986, 7
    %v8988 = vsub.s32 %v8985, %v8987
    %v8989 = vrot.slane %v8981, %v8988
    %v8991 = vunpack.c.l.s4 1934713408
    %v8992 = vunpack.c.0.s8 %v8991
    %v8993 = vlaneseq
    %v8994 = vshrl.u32 %v8993, 7
    %v8995 = vsub.s32 %v8992, %v8994
    %v8996 = vrot.slane %v8982, %v8995
    %v8997 = vcombine.high %v8973, 0.0
    %v8998 = vcombine.high %v8980, 0.0
    %v8999 = vcombine.high %v8989, 0.0
    %v9000 = vcombine.high %v8996, 0.0
    %v9001 = vcombine.low %v8905, %v8912
    %v9003 = vunpack.c.l.s4 1983009808
    %v9004 = vunpack.c.0.s8 %v9003
    %v9005 = vlaneseq
    %v9006 = vshrl.u32 %v9005, 7
    %v9007 = vsub.s32 %v9004, %v9006
    %v9008 = vrot.slane %v9001, %v9007
    %v9009 = vcombine.low %v8929, %v8930
    %v9011 = vunpack.c.l.s4 1983009808
    %v9012 = vunpack.c.0.s8 %v9011
    %v9013 = vlaneseq
    %v9014 = vshrl.u32 %v9013, 7
    %v9015 = vsub.s32 %v9012, %v9014
    %v9016 = vrot.slane %v9009, %v9015
    %v9017 = vcombine.low %v8921, %v8928
    %v9019 = vunpack.c.l.s4 1983009808
    %v9020 = vunpack.c.0.s8 %v9019
    %v9021 = vlaneseq
    %v9022 = vshrl.u32 %v9021, 7
    %v9023 = vsub.s32 %v9020, %v9022
    %v9024 = vrot.slane %v9017, %v9023
    %v9025 = vcombine.low %v8931, %v8932
    %v9027 = vunpack.c.l.s4 1983009808
    %v9028 = vunpack.c.0.s8 %v9027
    %v9029 = vlaneseq
    %v9030 = vshrl.u32 %v9029, 7
    %v9031 = vsub.s32 %v9028, %v9030
    %v9032 = vrot.slane %v9025, %v9031
    %v9033 = vcombine.low %v9008, %v9016
    %v9034 = vcombine.high %v9008, %v9016
    %v9036 = vunpack.c.l.s4 1934713408
    %v9037 = vunpack.c.0.s8 %v9036
    %v9038 = vlaneseq
    %v9039 = vshrl.u32 %v9038, 7
    %v9040 = vsub.s32 %v9037, %v9039
    %v9041 = vrot.slane %v9033, %v9040
    %v9043 = vunpack.c.l.s4 1934713408
    %v9044 = vunpack.c.0.s8 %v9043
    %v9045 = vlaneseq
    %v9046 = vshrl.u32 %v9045, 7
    %v9047 = vsub.s32 %v9044, %v9046
    %v9048 = vrot.slane %v9034, %v9047
    %v9049 = vcombine.low %v9024, %v9032
    %v9050 = vcombine.high %v9024, %v9032
    %v9052 = vunpack.c.l.s4 1934713408
    %v9053 = vunpack.c.0.s8 %v9052
    %v9054 = vlaneseq
    %v9055 = vshrl.u32 %v9054, 7
    %v9056 = vsub.s32 %v9053, %v9055
    %v9057 = vrot.slane %v9049, %v9056
    %v9059 = vunpack.c.l.s4 1934713408
    %v9060 = vunpack.c.0.s8 %v9059
    %v9061 = vlaneseq
    %v9062 = vshrl.u32 %v9061, 7
    %v9063 = vsub.s32 %v9060, %v9062
    %v9064 = vrot.slane %v9050, %v9063
    %v9065 = vcombine.low %v9041, %v9057
    %v9066 = vcombine.high %v9041, %v9057
    %v9067 = vcombine.low %v9048, %v9064
    %v9068 = vcombine.high %v9048, %v9064
    %v9069 = vcombine.low %v8973, %v8980
    %v9071 = vunpack.c.l.s4 1983009808
    %v9072 = vunpack.c.0.s8 %v9071
    %v9073 = vlaneseq
    %v9074 = vshrl.u32 %v9073, 7
    %v9075 = vsub.s32 %v9072, %v9074
    %v9076 = vrot.slane %v9069, %v9075
    %v9077 = vcombine.low %v8997, %v8998
    %v9079 = vunpack.c.l.s4 1983009808
    %v9080 = vunpack.c.0.s8 %v9079
    %v9081 = vlaneseq
    %v9082 = vshrl.u32 %v9081, 7
    %v9083 = vsub.s32 %v9080, %v9082
    %v9084 = vrot.slane %v9077, %v9083
    %v9085 = vcombine.low %v8989, %v8996
    %v9087 = vunpack.c.l.s4 1983009808
    %v9088 = vunpack.c.0.s8 %v9087
    %v9089 = vlaneseq
    %v9090 = vshrl.u32 %v9089, 7
    %v9091 = vsub.s32 %v9088, %v9090
    %v9092 = vrot.slane %v9085, %v9091
    %v9093 = vcombine.low %v8999, %v9000
    %v9095 = vunpack.c.l.s4 1983009808
    %v9096 = vunpack.c.0.s8 %v9095
    %v9097 = vlaneseq
    %v9098 = vshrl.u32 %v9097, 7
    %v9099 = vsub.s32 %v9096, %v9098
    %v9100 = vrot.slane %v9093, %v9099
    %v9101 = vcombine.low %v9076, %v9084
    %v9102 = vcombine.high %v9076, %v9084
    %v9104 = vunpack.c.l.s4 1934713408
    %v9105 = vunpack.c.0.s8 %v9104
    %v9106 = vlaneseq
    %v9107 = vshrl.u32 %v9106, 7
    %v9108 = vsub.s32 %v9105, %v9107
    %v9109 = vrot.slane %v9101, %v9108
    %v9111 = vunpack.c.l.s4 1934713408
    %v9112 = vunpack.c.0.s8 %v9111
    %v9113 = vlaneseq
    %v9114 = vshrl.u32 %v9113, 7
    %v9115 = vsub.s32 %v9112, %v9114
    %v9116 = vrot.slane %v9102, %v9115
    %v9117 = vcombine.low %v9092, %v9100
    %v9118 = vcombine.high %v9092, %v9100
    %v9120 = vunpack.c.l.s4 1934713408
    %v9121 = vunpack.c.0.s8 %v9120
    %v9122 = vlaneseq
    %v9123 = vshrl.u32 %v9122, 7
    %v9124 = vsub.s32 %v9121, %v9123
    %v9125 = vrot.slane %v9117, %v9124
    %v9127 = vunpack.c.l.s4 1934713408
    %v9128 = vunpack.c.0.s8 %v9127
    %v9129 = vlaneseq
    %v9130 = vshrl.u32 %v9129, 7
    %v9131 = vsub.s32 %v9128, %v9130
    %v9132 = vrot.slane %v9118, %v9131
    %v9133 = vcombine.low %v9109, %v9125
    %v9134 = vcombine.high %v9109, %v9125
    %v9135 = vcombine.low %v9116, %v9132
    %v9136 = vcombine.high %v9116, %v9132
    %9139 = vrot.lane.b32.xlu0 %v9066, 8
    %v9140 = vpop.permute.xlu0 %9139
    %9141 = vrot.lane.b32.xlu0 %v9134, 8
    %v9142 = vpop.permute.xlu0 %9141
    %9147 = vrot.lane.b32.xlu0 %v9067, 16
    %v9148 = vpop.permute.xlu0 %9147
    %9149 = vrot.lane.b32.xlu0 %v9135, 16
    %v9150 = vpop.permute.xlu0 %9149
    %9155 = vrot.lane.b32.xlu0 %v9068, 24
    %v9156 = vpop.permute.xlu0 %9155
    %9157 = vrot.lane.b32.xlu0 %v9136, 24
    %v9158 = vpop.permute.xlu0 %9157
    %v9161 = vsel %vm2053, %v9065, %v9140
    %v9162 = vsel %vm2053, %v9133, %v9142
    %v9163 = vsel %vm3650, %v9161, %v9148
    %v9164 = vsel %vm3650, %v9162, %v9150
    %v9165 = vsel %vm3653, %v9163, %v9156
    %v9166 = vsel %vm3653, %v9164, %v9158
    %v9168 = vsel %vm2053, %v6909, 0
    %v9171 = vsel %vm2053, %v7201, 0
    %9173 = vmatprep.subr.mxu0 0.0
    %9174 = vmatpush1.xpose.msra.mxu0 %v9171
    %9175 = vmatprep.subr.mxu0 0.0
    %9176 = vmatpush1.xpose.msra.mxu0 0.0
    %9177 = vmatprep.subr.mxu0 0.0
    %9178 = vmatpush1.xpose.msra.mxu0 0.0
    %9179 = vmatprep.subr.mxu0 0.0
    %9180 = vmatpush1.xpose.msra.mxu0 0.0
    %9181 = vmatprep.subr.mxu0 0.0
    %9182 = vmatpush1.xpose.msra.mxu0 0.0
    %9183 = vmatprep.subr.mxu0 0.0
    %9184 = vmatpush1.xpose.msra.mxu0 0.0
    %9185 = vmatprep.subr.mxu0 0.0
    %9186 = vmatpush1.xpose.msra.mxu0 0.0
    %9187 = vmatprep.subr.mxu0 0.0
    %9188 = vmatpush1.xpose.msra.mxu0 0.0
    %9189 = vmatprep.subr.mxu0 0.0
    %9190 = vmatpush1.xpose.msra.mxu0 0.0
    %9191 = vmatprep.subr.mxu0 0.0
    %9192 = vmatpush1.xpose.msra.mxu0 0.0
    %9193 = vmatprep.subr.mxu0 0.0
    %9194 = vmatpush1.xpose.msra.mxu0 0.0
    %9195 = vmatprep.subr.mxu0 0.0
    %9196 = vmatpush1.xpose.msra.mxu0 0.0
    %9197 = vmatprep.subr.mxu0 0.0
    %9198 = vmatpush1.xpose.msra.mxu0 0.0
    %9199 = vmatprep.subr.mxu0 0.0
    %9200 = vmatpush1.xpose.msra.mxu0 0.0
    %9201 = vmatprep.subr.mxu0 0.0
    %9202 = vmatpush1.xpose.msra.mxu0 0.0
    %9203 = vmatprep.subr.mxu0 0.0
    %9204 = vmatpush1.xpose.msra.mxu0 0.0
    %9205 = vmatprep.subr.mxu0 0.0
    %9206 = vmatpush1.xpose.msra.mxu0 0.0
    %9207 = vmatprep.subr.mxu0 0.0
    %9208 = vmatpush1.xpose.msra.mxu0 0.0
    %9209 = vmatprep.subr.mxu0 0.0
    %9210 = vmatpush1.xpose.msra.mxu0 0.0
    %9211 = vmatprep.subr.mxu0 0.0
    %9212 = vmatpush1.xpose.msra.mxu0 0.0
    %9213 = vmatprep.subr.mxu0 0.0
    %9214 = vmatpush1.xpose.msra.mxu0 0.0
    %9215 = vmatprep.subr.mxu0 0.0
    %9216 = vmatpush1.xpose.msra.mxu0 0.0
    %9217 = vmatprep.subr.mxu0 0.0
    %9218 = vmatpush1.xpose.msra.mxu0 0.0
    %9219 = vmatprep.subr.mxu0 0.0
    %9220 = vmatpush1.xpose.msra.mxu0 0.0
    %9221 = vmatprep.subr.mxu0 0.0
    %9222 = vmatpush1.xpose.msra.mxu0 0.0
    %9223 = vmatprep.subr.mxu0 0.0
    %9224 = vmatpush1.xpose.msra.mxu0 0.0
    %9225 = vmatprep.subr.mxu0 0.0
    %9226 = vmatpush1.xpose.msra.mxu0 0.0
    %9227 = vmatprep.subr.mxu0 0.0
    %9228 = vmatpush1.xpose.msra.mxu0 0.0
    %9229 = vmatprep.subr.mxu0 0.0
    %9230 = vmatpush1.xpose.msra.mxu0 0.0
    %9231 = vmatprep.subr.mxu0 0.0
    %9232 = vmatpush1.xpose.msra.mxu0 0.0
    %9233 = vmatprep.subr.mxu0 0.0
    %9234 = vmatpush1.xpose.msra.mxu0 0.0
    %9235 = vmatprep.subr.mxu0 0.0
    %9236 = vmatpush1.xpose.msra.mxu0 0.0
    %9237 = vmatprep.mubr.f32.mxu0 0.0
    %9238 = vmatmul.mubr.f32.gmra.mrb[0].mxu0 %v9168
    %v9239 = vpop.f32.mrb[0].mxu0
    %v9240 = vadd.f32 0.0, %v9239
    %v9241 = vpop.f32.mrb[0].mxu0
    %9242 = vdwg.mxu0
    %v9244 = vsel %vm2053, %v6977, 0
    %v9247 = vsel %vm2053, %v7269, 0
    %9249 = vmatprep.subr.mxu0 0.0
    %9250 = vmatpush1.xpose.msra.mxu0 %v9247
    %9251 = vmatprep.subr.mxu0 0.0
    %9252 = vmatpush1.xpose.msra.mxu0 0.0
    %9253 = vmatprep.subr.mxu0 0.0
    %9254 = vmatpush1.xpose.msra.mxu0 0.0
    %9255 = vmatprep.subr.mxu0 0.0
    %9256 = vmatpush1.xpose.msra.mxu0 0.0
    %9257 = vmatprep.subr.mxu0 0.0
    %9258 = vmatpush1.xpose.msra.mxu0 0.0
    %9259 = vmatprep.subr.mxu0 0.0
    %9260 = vmatpush1.xpose.msra.mxu0 0.0
    %9261 = vmatprep.subr.mxu0 0.0
    %9262 = vmatpush1.xpose.msra.mxu0 0.0
    %9263 = vmatprep.subr.mxu0 0.0
    %9264 = vmatpush1.xpose.msra.mxu0 0.0
    %9265 = vmatprep.subr.mxu0 0.0
    %9266 = vmatpush1.xpose.msra.mxu0 0.0
    %9267 = vmatprep.subr.mxu0 0.0
    %9268 = vmatpush1.xpose.msra.mxu0 0.0
    %9269 = vmatprep.subr.mxu0 0.0
    %9270 = vmatpush1.xpose.msra.mxu0 0.0
    %9271 = vmatprep.subr.mxu0 0.0
    %9272 = vmatpush1.xpose.msra.mxu0 0.0
    %9273 = vmatprep.subr.mxu0 0.0
    %9274 = vmatpush1.xpose.msra.mxu0 0.0
    %9275 = vmatprep.subr.mxu0 0.0
    %9276 = vmatpush1.xpose.msra.mxu0 0.0
    %9277 = vmatprep.subr.mxu0 0.0
    %9278 = vmatpush1.xpose.msra.mxu0 0.0
    %9279 = vmatprep.subr.mxu0 0.0
    %9280 = vmatpush1.xpose.msra.mxu0 0.0
    %9281 = vmatprep.subr.mxu0 0.0
    %9282 = vmatpush1.xpose.msra.mxu0 0.0
    %9283 = vmatprep.subr.mxu0 0.0
    %9284 = vmatpush1.xpose.msra.mxu0 0.0
    %9285 = vmatprep.subr.mxu0 0.0
    %9286 = vmatpush1.xpose.msra.mxu0 0.0
    %9287 = vmatprep.subr.mxu0 0.0
    %9288 = vmatpush1.xpose.msra.mxu0 0.0
    %9289 = vmatprep.subr.mxu0 0.0
    %9290 = vmatpush1.xpose.msra.mxu0 0.0
    %9291 = vmatprep.subr.mxu0 0.0
    %9292 = vmatpush1.xpose.msra.mxu0 0.0
    %9293 = vmatprep.subr.mxu0 0.0
    %9294 = vmatpush1.xpose.msra.mxu0 0.0
    %9295 = vmatprep.subr.mxu0 0.0
    %9296 = vmatpush1.xpose.msra.mxu0 0.0
    %9297 = vmatprep.subr.mxu0 0.0
    %9298 = vmatpush1.xpose.msra.mxu0 0.0
    %9299 = vmatprep.subr.mxu0 0.0
    %9300 = vmatpush1.xpose.msra.mxu0 0.0
    %9301 = vmatprep.subr.mxu0 0.0
    %9302 = vmatpush1.xpose.msra.mxu0 0.0
    %9303 = vmatprep.subr.mxu0 0.0
    %9304 = vmatpush1.xpose.msra.mxu0 0.0
    %9305 = vmatprep.subr.mxu0 0.0
    %9306 = vmatpush1.xpose.msra.mxu0 0.0
    %9307 = vmatprep.subr.mxu0 0.0
    %9308 = vmatpush1.xpose.msra.mxu0 0.0
    %9309 = vmatprep.subr.mxu0 0.0
    %9310 = vmatpush1.xpose.msra.mxu0 0.0
    %9311 = vmatprep.subr.mxu0 0.0
    %9312 = vmatpush1.xpose.msra.mxu0 0.0
    %9313 = vmatprep.mubr.f32.mxu0 0.0
    %9314 = vmatmul.mubr.f32.gmra.mrb[0].mxu0 %v9244
    %v9315 = vpop.f32.mrb[0].mxu0
    %v9316 = vadd.f32 0.0, %v9315
    %v9317 = vpop.f32.mrb[0].mxu0
    %9318 = vdwg.mxu0
    %v9320 = vsel %vm2053, %v6910, 0
    %v9323 = vsel %vm2053, %v7202, 0
    %9325 = vmatprep.subr.mxu0 0.0
    %9326 = vmatpush1.xpose.msra.mxu0 %v9323
    %9327 = vmatprep.subr.mxu0 0.0
    %9328 = vmatpush1.xpose.msra.mxu0 0.0
    %9329 = vmatprep.subr.mxu0 0.0
    %9330 = vmatpush1.xpose.msra.mxu0 0.0
    %9331 = vmatprep.subr.mxu0 0.0
    %9332 = vmatpush1.xpose.msra.mxu0 0.0
    %9333 = vmatprep.subr.mxu0 0.0
    %9334 = vmatpush1.xpose.msra.mxu0 0.0
    %9335 = vmatprep.subr.mxu0 0.0
    %9336 = vmatpush1.xpose.msra.mxu0 0.0
    %9337 = vmatprep.subr.mxu0 0.0
    %9338 = vmatpush1.xpose.msra.mxu0 0.0
    %9339 = vmatprep.subr.mxu0 0.0
    %9340 = vmatpush1.xpose.msra.mxu0 0.0
    %9341 = vmatprep.subr.mxu0 0.0
    %9342 = vmatpush1.xpose.msra.mxu0 0.0
    %9343 = vmatprep.subr.mxu0 0.0
    %9344 = vmatpush1.xpose.msra.mxu0 0.0
    %9345 = vmatprep.subr.mxu0 0.0
    %9346 = vmatpush1.xpose.msra.mxu0 0.0
    %9347 = vmatprep.subr.mxu0 0.0
    %9348 = vmatpush1.xpose.msra.mxu0 0.0
    %9349 = vmatprep.subr.mxu0 0.0
    %9350 = vmatpush1.xpose.msra.mxu0 0.0
    %9351 = vmatprep.subr.mxu0 0.0
    %9352 = vmatpush1.xpose.msra.mxu0 0.0
    %9353 = vmatprep.subr.mxu0 0.0
    %9354 = vmatpush1.xpose.msra.mxu0 0.0
    %9355 = vmatprep.subr.mxu0 0.0
    %9356 = vmatpush1.xpose.msra.mxu0 0.0
    %9357 = vmatprep.subr.mxu0 0.0
    %9358 = vmatpush1.xpose.msra.mxu0 0.0
    %9359 = vmatprep.subr.mxu0 0.0
    %9360 = vmatpush1.xpose.msra.mxu0 0.0
    %9361 = vmatprep.subr.mxu0 0.0
    %9362 = vmatpush1.xpose.msra.mxu0 0.0
    %9363 = vmatprep.subr.mxu0 0.0
    %9364 = vmatpush1.xpose.msra.mxu0 0.0
    %9365 = vmatprep.subr.mxu0 0.0
    %9366 = vmatpush1.xpose.msra.mxu0 0.0
    %9367 = vmatprep.subr.mxu0 0.0
    %9368 = vmatpush1.xpose.msra.mxu0 0.0
    %9369 = vmatprep.subr.mxu0 0.0
    %9370 = vmatpush1.xpose.msra.mxu0 0.0
    %9371 = vmatprep.subr.mxu0 0.0
    %9372 = vmatpush1.xpose.msra.mxu0 0.0
    %9373 = vmatprep.subr.mxu0 0.0
    %9374 = vmatpush1.xpose.msra.mxu0 0.0
    %9375 = vmatprep.subr.mxu0 0.0
    %9376 = vmatpush1.xpose.msra.mxu0 0.0
    %9377 = vmatprep.subr.mxu0 0.0
    %9378 = vmatpush1.xpose.msra.mxu0 0.0
    %9379 = vmatprep.subr.mxu0 0.0
    %9380 = vmatpush1.xpose.msra.mxu0 0.0
    %9381 = vmatprep.subr.mxu0 0.0
    %9382 = vmatpush1.xpose.msra.mxu0 0.0
    %9383 = vmatprep.subr.mxu0 0.0
    %9384 = vmatpush1.xpose.msra.mxu0 0.0
    %9385 = vmatprep.subr.mxu0 0.0
    %9386 = vmatpush1.xpose.msra.mxu0 0.0
    %9387 = vmatprep.subr.mxu0 0.0
    %9388 = vmatpush1.xpose.msra.mxu0 0.0
    %9389 = vmatprep.mubr.f32.mxu0 0.0
    %9390 = vmatmul.mubr.f32.gmra.mrb[0].mxu0 %v9320
    %v9391 = vpop.f32.mrb[0].mxu0
    %v9392 = vadd.f32 0.0, %v9391
    %v9393 = vpop.f32.mrb[0].mxu0
    %9394 = vdwg.mxu0
    %v9396 = vsel %vm2053, %v6978, 0
    %v9399 = vsel %vm2053, %v7270, 0
    %9401 = vmatprep.subr.mxu0 0.0
    %9402 = vmatpush1.xpose.msra.mxu0 %v9399
    %9403 = vmatprep.subr.mxu0 0.0
    %9404 = vmatpush1.xpose.msra.mxu0 0.0
    %9405 = vmatprep.subr.mxu0 0.0
    %9406 = vmatpush1.xpose.msra.mxu0 0.0
    %9407 = vmatprep.subr.mxu0 0.0
    %9408 = vmatpush1.xpose.msra.mxu0 0.0
    %9409 = vmatprep.subr.mxu0 0.0
    %9410 = vmatpush1.xpose.msra.mxu0 0.0
    %9411 = vmatprep.subr.mxu0 0.0
    %9412 = vmatpush1.xpose.msra.mxu0 0.0
    %9413 = vmatprep.subr.mxu0 0.0
    %9414 = vmatpush1.xpose.msra.mxu0 0.0
    %9415 = vmatprep.subr.mxu0 0.0
    %9416 = vmatpush1.xpose.msra.mxu0 0.0
    %9417 = vmatprep.subr.mxu0 0.0
    %9418 = vmatpush1.xpose.msra.mxu0 0.0
    %9419 = vmatprep.subr.mxu0 0.0
    %9420 = vmatpush1.xpose.msra.mxu0 0.0
    %9421 = vmatprep.subr.mxu0 0.0
    %9422 = vmatpush1.xpose.msra.mxu0 0.0
    %9423 = vmatprep.subr.mxu0 0.0
    %9424 = vmatpush1.xpose.msra.mxu0 0.0
    %9425 = vmatprep.subr.mxu0 0.0
    %9426 = vmatpush1.xpose.msra.mxu0 0.0
    %9427 = vmatprep.subr.mxu0 0.0
    %9428 = vmatpush1.xpose.msra.mxu0 0.0
    %9429 = vmatprep.subr.mxu0 0.0
    %9430 = vmatpush1.xpose.msra.mxu0 0.0
    %9431 = vmatprep.subr.mxu0 0.0
    %9432 = vmatpush1.xpose.msra.mxu0 0.0
    %9433 = vmatprep.subr.mxu0 0.0
    %9434 = vmatpush1.xpose.msra.mxu0 0.0
    %9435 = vmatprep.subr.mxu0 0.0
    %9436 = vmatpush1.xpose.msra.mxu0 0.0
    %9437 = vmatprep.subr.mxu0 0.0
    %9438 = vmatpush1.xpose.msra.mxu0 0.0
    %9439 = vmatprep.subr.mxu0 0.0
    %9440 = vmatpush1.xpose.msra.mxu0 0.0
    %9441 = vmatprep.subr.mxu0 0.0
    %9442 = vmatpush1.xpose.msra.mxu0 0.0
    %9443 = vmatprep.subr.mxu0 0.0
    %9444 = vmatpush1.xpose.msra.mxu0 0.0
    %9445 = vmatprep.subr.mxu0 0.0
    %9446 = vmatpush1.xpose.msra.mxu0 0.0
    %9447 = vmatprep.subr.mxu0 0.0
    %9448 = vmatpush1.xpose.msra.mxu0 0.0
    %9449 = vmatprep.subr.mxu0 0.0
    %9450 = vmatpush1.xpose.msra.mxu0 0.0
    %9451 = vmatprep.subr.mxu0 0.0
    %9452 = vmatpush1.xpose.msra.mxu0 0.0
    %9453 = vmatprep.subr.mxu0 0.0
    %9454 = vmatpush1.xpose.msra.mxu0 0.0
    %9455 = vmatprep.subr.mxu0 0.0
    %9456 = vmatpush1.xpose.msra.mxu0 0.0
    %9457 = vmatprep.subr.mxu0 0.0
    %9458 = vmatpush1.xpose.msra.mxu0 0.0
    %9459 = vmatprep.subr.mxu0 0.0
    %9460 = vmatpush1.xpose.msra.mxu0 0.0
    %9461 = vmatprep.subr.mxu0 0.0
    %9462 = vmatpush1.xpose.msra.mxu0 0.0
    %9463 = vmatprep.subr.mxu0 0.0
    %9464 = vmatpush1.xpose.msra.mxu0 0.0
    %9465 = vmatprep.mubr.f32.mxu0 0.0
    %9466 = vmatmul.mubr.f32.gmra.mrb[0].mxu0 %v9396
    %v9467 = vpop.f32.mrb[0].mxu0
    %v9468 = vadd.f32 0.0, %v9467
    %v9469 = vpop.f32.mrb[0].mxu0
    %9470 = vdwg.mxu0
    %v9472 = vsel %vm2053, %v6911, 0
    %v9475 = vsel %vm2053, %v7203, 0
    %9477 = vmatprep.subr.mxu0 0.0
    %9478 = vmatpush1.xpose.msra.mxu0 %v9475
    %9479 = vmatprep.subr.mxu0 0.0
    %9480 = vmatpush1.xpose.msra.mxu0 0.0
    %9481 = vmatprep.subr.mxu0 0.0
    %9482 = vmatpush1.xpose.msra.mxu0 0.0
    %9483 = vmatprep.subr.mxu0 0.0
    %9484 = vmatpush1.xpose.msra.mxu0 0.0
    %9485 = vmatprep.subr.mxu0 0.0
    %9486 = vmatpush1.xpose.msra.mxu0 0.0
    %9487 = vmatprep.subr.mxu0 0.0
    %9488 = vmatpush1.xpose.msra.mxu0 0.0
    %9489 = vmatprep.subr.mxu0 0.0
    %9490 = vmatpush1.xpose.msra.mxu0 0.0
    %9491 = vmatprep.subr.mxu0 0.0
    %9492 = vmatpush1.xpose.msra.mxu0 0.0
    %9493 = vmatprep.subr.mxu0 0.0
    %9494 = vmatpush1.xpose.msra.mxu0 0.0
    %9495 = vmatprep.subr.mxu0 0.0
    %9496 = vmatpush1.xpose.msra.mxu0 0.0
    %9497 = vmatprep.subr.mxu0 0.0
    %9498 = vmatpush1.xpose.msra.mxu0 0.0
    %9499 = vmatprep.subr.mxu0 0.0
    %9500 = vmatpush1.xpose.msra.mxu0 0.0
    %9501 = vmatprep.subr.mxu0 0.0
    %9502 = vmatpush1.xpose.msra.mxu0 0.0
    %9503 = vmatprep.subr.mxu0 0.0
    %9504 = vmatpush1.xpose.msra.mxu0 0.0
    %9505 = vmatprep.subr.mxu0 0.0
    %9506 = vmatpush1.xpose.msra.mxu0 0.0
    %9507 = vmatprep.subr.mxu0 0.0
    %9508 = vmatpush1.xpose.msra.mxu0 0.0
    %9509 = vmatprep.subr.mxu0 0.0
    %9510 = vmatpush1.xpose.msra.mxu0 0.0
    %9511 = vmatprep.subr.mxu0 0.0
    %9512 = vmatpush1.xpose.msra.mxu0 0.0
    %9513 = vmatprep.subr.mxu0 0.0
    %9514 = vmatpush1.xpose.msra.mxu0 0.0
    %9515 = vmatprep.subr.mxu0 0.0
    %9516 = vmatpush1.xpose.msra.mxu0 0.0
    %9517 = vmatprep.subr.mxu0 0.0
    %9518 = vmatpush1.xpose.msra.mxu0 0.0
    %9519 = vmatprep.subr.mxu0 0.0
    %9520 = vmatpush1.xpose.msra.mxu0 0.0
    %9521 = vmatprep.subr.mxu0 0.0
    %9522 = vmatpush1.xpose.msra.mxu0 0.0
    %9523 = vmatprep.subr.mxu0 0.0
    %9524 = vmatpush1.xpose.msra.mxu0 0.0
    %9525 = vmatprep.subr.mxu0 0.0
    %9526 = vmatpush1.xpose.msra.mxu0 0.0
    %9527 = vmatprep.subr.mxu0 0.0
    %9528 = vmatpush1.xpose.msra.mxu0 0.0
    %9529 = vmatprep.subr.mxu0 0.0
    %9530 = vmatpush1.xpose.msra.mxu0 0.0
    %9531 = vmatprep.subr.mxu0 0.0
    %9532 = vmatpush1.xpose.msra.mxu0 0.0
    %9533 = vmatprep.subr.mxu0 0.0
    %9534 = vmatpush1.xpose.msra.mxu0 0.0
    %9535 = vmatprep.subr.mxu0 0.0
    %9536 = vmatpush1.xpose.msra.mxu0 0.0
    %9537 = vmatprep.subr.mxu0 0.0
    %9538 = vmatpush1.xpose.msra.mxu0 0.0
    %9539 = vmatprep.subr.mxu0 0.0
    %9540 = vmatpush1.xpose.msra.mxu0 0.0
    %9541 = vmatprep.mubr.f32.mxu0 0.0
    %9542 = vmatmul.mubr.f32.gmra.mrb[0].mxu0 %v9472
    %v9543 = vpop.f32.mrb[0].mxu0
    %v9544 = vadd.f32 0.0, %v9543
    %v9545 = vpop.f32.mrb[0].mxu0
    %9546 = vdwg.mxu0
    %v9548 = vsel %vm2053, %v6979, 0
    %v9551 = vsel %vm2053, %v7271, 0
    %9553 = vmatprep.subr.mxu0 0.0
    %9554 = vmatpush1.xpose.msra.mxu0 %v9551
    %9555 = vmatprep.subr.mxu0 0.0
    %9556 = vmatpush1.xpose.msra.mxu0 0.0
    %9557 = vmatprep.subr.mxu0 0.0
    %9558 = vmatpush1.xpose.msra.mxu0 0.0
    %9559 = vmatprep.subr.mxu0 0.0
    %9560 = vmatpush1.xpose.msra.mxu0 0.0
    %9561 = vmatprep.subr.mxu0 0.0
    %9562 = vmatpush1.xpose.msra.mxu0 0.0
    %9563 = vmatprep.subr.mxu0 0.0
    %9564 = vmatpush1.xpose.msra.mxu0 0.0
    %9565 = vmatprep.subr.mxu0 0.0
    %9566 = vmatpush1.xpose.msra.mxu0 0.0
    %9567 = vmatprep.subr.mxu0 0.0
    %9568 = vmatpush1.xpose.msra.mxu0 0.0
    %9569 = vmatprep.subr.mxu0 0.0
    %9570 = vmatpush1.xpose.msra.mxu0 0.0
    %9571 = vmatprep.subr.mxu0 0.0
    %9572 = vmatpush1.xpose.msra.mxu0 0.0
    %9573 = vmatprep.subr.mxu0 0.0
    %9574 = vmatpush1.xpose.msra.mxu0 0.0
    %9575 = vmatprep.subr.mxu0 0.0
    %9576 = vmatpush1.xpose.msra.mxu0 0.0
    %9577 = vmatprep.subr.mxu0 0.0
    %9578 = vmatpush1.xpose.msra.mxu0 0.0
    %9579 = vmatprep.subr.mxu0 0.0
    %9580 = vmatpush1.xpose.msra.mxu0 0.0
    %9581 = vmatprep.subr.mxu0 0.0
    %9582 = vmatpush1.xpose.msra.mxu0 0.0
    %9583 = vmatprep.subr.mxu0 0.0
    %9584 = vmatpush1.xpose.msra.mxu0 0.0
    %9585 = vmatprep.subr.mxu0 0.0
    %9586 = vmatpush1.xpose.msra.mxu0 0.0
    %9587 = vmatprep.subr.mxu0 0.0
    %9588 = vmatpush1.xpose.msra.mxu0 0.0
    %9589 = vmatprep.subr.mxu0 0.0
    %9590 = vmatpush1.xpose.msra.mxu0 0.0
    %9591 = vmatprep.subr.mxu0 0.0
    %9592 = vmatpush1.xpose.msra.mxu0 0.0
    %9593 = vmatprep.subr.mxu0 0.0
    %9594 = vmatpush1.xpose.msra.mxu0 0.0
    %9595 = vmatprep.subr.mxu0 0.0
    %9596 = vmatpush1.xpose.msra.mxu0 0.0
    %9597 = vmatprep.subr.mxu0 0.0
    %9598 = vmatpush1.xpose.msra.mxu0 0.0
    %9599 = vmatprep.subr.mxu0 0.0
    %9600 = vmatpush1.xpose.msra.mxu0 0.0
    %9601 = vmatprep.subr.mxu0 0.0
    %9602 = vmatpush1.xpose.msra.mxu0 0.0
    %9603 = vmatprep.subr.mxu0 0.0
    %9604 = vmatpush1.xpose.msra.mxu0 0.0
    %9605 = vmatprep.subr.mxu0 0.0
    %9606 = vmatpush1.xpose.msra.mxu0 0.0
    %9607 = vmatprep.subr.mxu0 0.0
    %9608 = vmatpush1.xpose.msra.mxu0 0.0
    %9609 = vmatprep.subr.mxu0 0.0
    %9610 = vmatpush1.xpose.msra.mxu0 0.0
    %9611 = vmatprep.subr.mxu0 0.0
    %9612 = vmatpush1.xpose.msra.mxu0 0.0
    %9613 = vmatprep.subr.mxu0 0.0
    %9614 = vmatpush1.xpose.msra.mxu0 0.0
    %9615 = vmatprep.subr.mxu0 0.0
    %9616 = vmatpush1.xpose.msra.mxu0 0.0
    %9617 = vmatprep.mubr.f32.mxu0 0.0
    %9618 = vmatmul.mubr.f32.gmra.mrb[0].mxu0 %v9548
    %v9619 = vpop.f32.mrb[0].mxu0
    %v9620 = vadd.f32 0.0, %v9619
    %v9621 = vpop.f32.mrb[0].mxu0
    %9622 = vdwg.mxu0
    %v9624 = vsel %vm2053, %v6912, 0
    %v9627 = vsel %vm2053, %v7204, 0
    %9629 = vmatprep.subr.mxu0 0.0
    %9630 = vmatpush1.xpose.msra.mxu0 %v9627
    %9631 = vmatprep.subr.mxu0 0.0
    %9632 = vmatpush1.xpose.msra.mxu0 0.0
    %9633 = vmatprep.subr.mxu0 0.0
    %9634 = vmatpush1.xpose.msra.mxu0 0.0
    %9635 = vmatprep.subr.mxu0 0.0
    %9636 = vmatpush1.xpose.msra.mxu0 0.0
    %9637 = vmatprep.subr.mxu0 0.0
    %9638 = vmatpush1.xpose.msra.mxu0 0.0
    %9639 = vmatprep.subr.mxu0 0.0
    %9640 = vmatpush1.xpose.msra.mxu0 0.0
    %9641 = vmatprep.subr.mxu0 0.0
    %9642 = vmatpush1.xpose.msra.mxu0 0.0
    %9643 = vmatprep.subr.mxu0 0.0
    %9644 = vmatpush1.xpose.msra.mxu0 0.0
    %9645 = vmatprep.subr.mxu0 0.0
    %9646 = vmatpush1.xpose.msra.mxu0 0.0
    %9647 = vmatprep.subr.mxu0 0.0
    %9648 = vmatpush1.xpose.msra.mxu0 0.0
    %9649 = vmatprep.subr.mxu0 0.0
    %9650 = vmatpush1.xpose.msra.mxu0 0.0
    %9651 = vmatprep.subr.mxu0 0.0
    %9652 = vmatpush1.xpose.msra.mxu0 0.0
    %9653 = vmatprep.subr.mxu0 0.0
    %9654 = vmatpush1.xpose.msra.mxu0 0.0
    %9655 = vmatprep.subr.mxu0 0.0
    %9656 = vmatpush1.xpose.msra.mxu0 0.0
    %9657 = vmatprep.subr.mxu0 0.0
    %9658 = vmatpush1.xpose.msra.mxu0 0.0
    %9659 = vmatprep.subr.mxu0 0.0
    %9660 = vmatpush1.xpose.msra.mxu0 0.0
    %9661 = vmatprep.subr.mxu0 0.0
    %9662 = vmatpush1.xpose.msra.mxu0 0.0
    %9663 = vmatprep.subr.mxu0 0.0
    %9664 = vmatpush1.xpose.msra.mxu0 0.0
    %9665 = vmatprep.subr.mxu0 0.0
    %9666 = vmatpush1.xpose.msra.mxu0 0.0
    %9667 = vmatprep.subr.mxu0 0.0
    %9668 = vmatpush1.xpose.msra.mxu0 0.0
    %9669 = vmatprep.subr.mxu0 0.0
    %9670 = vmatpush1.xpose.msra.mxu0 0.0
    %9671 = vmatprep.subr.mxu0 0.0
    %9672 = vmatpush1.xpose.msra.mxu0 0.0
    %9673 = vmatprep.subr.mxu0 0.0
    %9674 = vmatpush1.xpose.msra.mxu0 0.0
    %9675 = vmatprep.subr.mxu0 0.0
    %9676 = vmatpush1.xpose.msra.mxu0 0.0
    %9677 = vmatprep.subr.mxu0 0.0
    %9678 = vmatpush1.xpose.msra.mxu0 0.0
    %9679 = vmatprep.subr.mxu0 0.0
    %9680 = vmatpush1.xpose.msra.mxu0 0.0
    %9681 = vmatprep.subr.mxu0 0.0
    %9682 = vmatpush1.xpose.msra.mxu0 0.0
    %9683 = vmatprep.subr.mxu0 0.0
    %9684 = vmatpush1.xpose.msra.mxu0 0.0
    %9685 = vmatprep.subr.mxu0 0.0
    %9686 = vmatpush1.xpose.msra.mxu0 0.0
    %9687 = vmatprep.subr.mxu0 0.0
    %9688 = vmatpush1.xpose.msra.mxu0 0.0
    %9689 = vmatprep.subr.mxu0 0.0
    %9690 = vmatpush1.xpose.msra.mxu0 0.0
    %9691 = vmatprep.subr.mxu0 0.0
    %9692 = vmatpush1.xpose.msra.mxu0 0.0
    %9693 = vmatprep.mubr.f32.mxu0 0.0
    %9694 = vmatmul.mubr.f32.gmra.mrb[0].mxu0 %v9624
    %v9695 = vpop.f32.mrb[0].mxu0
    %v9696 = vadd.f32 0.0, %v9695
    %v9697 = vpop.f32.mrb[0].mxu0
    %9698 = vdwg.mxu0
    %v9700 = vsel %vm2053, %v6980, 0
    %v9703 = vsel %vm2053, %v7272, 0
    %9705 = vmatprep.subr.mxu0 0.0
    %9706 = vmatpush1.xpose.msra.mxu0 %v9703
    %9707 = vmatprep.subr.mxu0 0.0
    %9708 = vmatpush1.xpose.msra.mxu0 0.0
    %9709 = vmatprep.subr.mxu0 0.0
    %9710 = vmatpush1.xpose.msra.mxu0 0.0
    %9711 = vmatprep.subr.mxu0 0.0
    %9712 = vmatpush1.xpose.msra.mxu0 0.0
    %9713 = vmatprep.subr.mxu0 0.0
    %9714 = vmatpush1.xpose.msra.mxu0 0.0
    %9715 = vmatprep.subr.mxu0 0.0
    %9716 = vmatpush1.xpose.msra.mxu0 0.0
    %9717 = vmatprep.subr.mxu0 0.0
    %9718 = vmatpush1.xpose.msra.mxu0 0.0
    %9719 = vmatprep.subr.mxu0 0.0
    %9720 = vmatpush1.xpose.msra.mxu0 0.0
    %9721 = vmatprep.subr.mxu0 0.0
    %9722 = vmatpush1.xpose.msra.mxu0 0.0
    %9723 = vmatprep.subr.mxu0 0.0
    %9724 = vmatpush1.xpose.msra.mxu0 0.0
    %9725 = vmatprep.subr.mxu0 0.0
    %9726 = vmatpush1.xpose.msra.mxu0 0.0
    %9727 = vmatprep.subr.mxu0 0.0
    %9728 = vmatpush1.xpose.msra.mxu0 0.0
    %9729 = vmatprep.subr.mxu0 0.0
    %9730 = vmatpush1.xpose.msra.mxu0 0.0
    %9731 = vmatprep.subr.mxu0 0.0
    %9732 = vmatpush1.xpose.msra.mxu0 0.0
    %9733 = vmatprep.subr.mxu0 0.0
    %9734 = vmatpush1.xpose.msra.mxu0 0.0
    %9735 = vmatprep.subr.mxu0 0.0
    %9736 = vmatpush1.xpose.msra.mxu0 0.0
    %9737 = vmatprep.subr.mxu0 0.0
    %9738 = vmatpush1.xpose.msra.mxu0 0.0
    %9739 = vmatprep.subr.mxu0 0.0
    %9740 = vmatpush1.xpose.msra.mxu0 0.0
    %9741 = vmatprep.subr.mxu0 0.0
    %9742 = vmatpush1.xpose.msra.mxu0 0.0
    %9743 = vmatprep.subr.mxu0 0.0
    %9744 = vmatpush1.xpose.msra.mxu0 0.0
    %9745 = vmatprep.subr.mxu0 0.0
    %9746 = vmatpush1.xpose.msra.mxu0 0.0
    %9747 = vmatprep.subr.mxu0 0.0
    %9748 = vmatpush1.xpose.msra.mxu0 0.0
    %9749 = vmatprep.subr.mxu0 0.0
    %9750 = vmatpush1.xpose.msra.mxu0 0.0
    %9751 = vmatprep.subr.mxu0 0.0
    %9752 = vmatpush1.xpose.msra.mxu0 0.0
    %9753 = vmatprep.subr.mxu0 0.0
    %9754 = vmatpush1.xpose.msra.mxu0 0.0
    %9755 = vmatprep.subr.mxu0 0.0
    %9756 = vmatpush1.xpose.msra.mxu0 0.0
    %9757 = vmatprep.subr.mxu0 0.0
    %9758 = vmatpush1.xpose.msra.mxu0 0.0
    %9759 = vmatprep.subr.mxu0 0.0
    %9760 = vmatpush1.xpose.msra.mxu0 0.0
    %9761 = vmatprep.subr.mxu0 0.0
    %9762 = vmatpush1.xpose.msra.mxu0 0.0
    %9763 = vmatprep.subr.mxu0 0.0
    %9764 = vmatpush1.xpose.msra.mxu0 0.0
    %9765 = vmatprep.subr.mxu0 0.0
    %9766 = vmatpush1.xpose.msra.mxu0 0.0
    %9767 = vmatprep.subr.mxu0 0.0
    %9768 = vmatpush1.xpose.msra.mxu0 0.0
    %9769 = vmatprep.mubr.f32.mxu0 0.0
    %9770 = vmatmul.mubr.f32.gmra.mrb[0].mxu0 %v9700
    %v9771 = vpop.f32.mrb[0].mxu0
    %v9772 = vadd.f32 0.0, %v9771
    %v9773 = vpop.f32.mrb[0].mxu0
    %9774 = vdwg.mxu0
    %v9775 = vmul.f32 %v9240, 0.35355338
    %v9776 = vmul.f32 %v9316, 0.35355338
    %v9777 = vmul.f32 %v9392, 0.35355338
    %v9778 = vmul.f32 %v9468, 0.35355338
    %v9779 = vmul.f32 %v9544, 0.35355338
    %v9780 = vmul.f32 %v9620, 0.35355338
    %v9781 = vmul.f32 %v9696, 0.35355338
    %v9782 = vmul.f32 %v9772, 0.35355338
    %v9783 = vsel %vm4274, %v9775, -1000000.0
    %v9784 = vsel %vm4275, %v9776, -1000000.0
    %v9785 = vsel %vm4274, %v9777, -1000000.0
    %v9786 = vsel %vm4275, %v9778, -1000000.0
    %v9787 = vsel %vm4274, %v9779, -1000000.0
    %v9788 = vsel %vm4275, %v9780, -1000000.0
    %v9789 = vsel %vm4274, %v9781, -1000000.0
    %v9790 = vsel %vm4275, %v9782, -1000000.0
    %v9791 = vsel %vm2053, %v9783, -inf
    %9792 = vmax.xlane.f32.xlu0 %v9791
    %v9793 = vpop.xlane.xlu0 %9792
    %v9794 = vsel %vm2053, %v9784, -inf
    %9795 = vmax.xlane.f32.xlu0 %v9794
    %v9796 = vpop.xlane.xlu0 %9795
    %v9797 = vsel %vm2053, %v9785, -inf
    %9798 = vmax.xlane.f32.xlu0 %v9797
    %v9799 = vpop.xlane.xlu0 %9798
    %v9800 = vsel %vm2053, %v9786, -inf
    %9801 = vmax.xlane.f32.xlu0 %v9800
    %v9802 = vpop.xlane.xlu0 %9801
    %v9803 = vsel %vm2053, %v9787, -inf
    %9804 = vmax.xlane.f32.xlu0 %v9803
    %v9805 = vpop.xlane.xlu0 %9804
    %v9806 = vsel %vm2053, %v9788, -inf
    %9807 = vmax.xlane.f32.xlu0 %v9806
    %v9808 = vpop.xlane.xlu0 %9807
    %v9809 = vsel %vm2053, %v9789, -inf
    %9810 = vmax.xlane.f32.xlu0 %v9809
    %v9811 = vpop.xlane.xlu0 %9810
    %v9812 = vsel %vm2053, %v9790, -inf
    %9813 = vmax.xlane.f32.xlu0 %v9812
    %v9814 = vpop.xlane.xlu0 %9813
    %v9815 = vsub.f32 %v9783, %v9793
    %v9816 = vsub.f32 %v9784, %v9796
    %v9817 = vsub.f32 %v9785, %v9799
    %v9818 = vsub.f32 %v9786, %v9802
    %v9819 = vsub.f32 %v9787, %v9805
    %v9820 = vsub.f32 %v9788, %v9808
    %v9821 = vsub.f32 %v9789, %v9811
    %v9822 = vsub.f32 %v9790, %v9814
    %v9823 = vmul.f32 %v9815, 1.442695
    %v9824 = vpow.pop %v9823
    %v9825 = vmul.f32 %v9816, 1.442695
    %v9826 = vpow.pop %v9825
    %v9827 = vmul.f32 %v9817, 1.442695
    %v9828 = vpow.pop %v9827
    %v9829 = vmul.f32 %v9818, 1.442695
    %v9830 = vpow.pop %v9829
    %v9831 = vmul.f32 %v9819, 1.442695
    %v9832 = vpow.pop %v9831
    %v9833 = vmul.f32 %v9820, 1.442695
    %v9834 = vpow.pop %v9833
    %v9835 = vmul.f32 %v9821, 1.442695
    %v9836 = vpow.pop %v9835
    %v9837 = vmul.f32 %v9822, 1.442695
    %v9838 = vpow.pop %v9837
    %v9839 = vsel %vm2053, %v9824, 0.0
    %9840 = vadd.xlane.f32.xlu0 %v9839
    %v9841 = vpop.xlane.xlu0 %9840
    %v9842 = vsel %vm2053, %v9826, 0.0
    %9843 = vadd.xlane.f32.xlu0 %v9842
    %v9844 = vpop.xlane.xlu0 %9843
    %v9845 = vsel %vm2053, %v9828, 0.0
    %9846 = vadd.xlane.f32.xlu0 %v9845
    %v9847 = vpop.xlane.xlu0 %9846
    %v9848 = vsel %vm2053, %v9830, 0.0
    %9849 = vadd.xlane.f32.xlu0 %v9848
    %v9850 = vpop.xlane.xlu0 %9849
    %v9851 = vsel %vm2053, %v9832, 0.0
    %9852 = vadd.xlane.f32.xlu0 %v9851
    %v9853 = vpop.xlane.xlu0 %9852
    %v9854 = vsel %vm2053, %v9834, 0.0
    %9855 = vadd.xlane.f32.xlu0 %v9854
    %v9856 = vpop.xlane.xlu0 %9855
    %v9857 = vsel %vm2053, %v9836, 0.0
    %9858 = vadd.xlane.f32.xlu0 %v9857
    %v9859 = vpop.xlane.xlu0 %9858
    %v9860 = vsel %vm2053, %v9838, 0.0
    %9861 = vadd.xlane.f32.xlu0 %v9860
    %v9862 = vpop.xlane.xlu0 %9861
    %v9863 = vrcp.pop %v9841
    %v9864 = vrcp.pop %v9844
    %v9865 = vrcp.pop %v9847
    %v9866 = vrcp.pop %v9850
    %v9867 = vrcp.pop %v9853
    %v9868 = vrcp.pop %v9856
    %v9869 = vrcp.pop %v9859
    %v9870 = vrcp.pop %v9862
    %v9871 = vmul.f32 %v9824, %v9863
    %v9872 = vmul.f32 %v9826, %v9864
    %v9873 = vmul.f32 %v9828, %v9865
    %v9874 = vmul.f32 %v9830, %v9866
    %v9875 = vmul.f32 %v9832, %v9867
    %v9876 = vmul.f32 %v9834, %v9868
    %v9877 = vmul.f32 %v9836, %v9869
    %v9878 = vmul.f32 %v9838, %v9870
    %v9880 = vsel %vm2053, %v9871, 0
    %9882 = vmatprep.subr.mxu0 0.0
    %9883 = vmatpush1.msra.mxu0 %v7497
    %9884 = vmatprep.subr.mxu0 0.0
    %9885 = vmatpush1.msra.mxu0 0.0
    %9886 = vmatprep.subr.mxu0 0.0
    %9887 = vmatpush1.msra.mxu0 0.0
    %9888 = vmatprep.subr.mxu0 0.0
    %9889 = vmatpush1.msra.mxu0 0.0
    %9890 = vmatprep.subr.mxu0 0.0
    %9891 = vmatpush1.msra.mxu0 0.0
    %9892 = vmatprep.subr.mxu0 0.0
    %9893 = vmatpush1.msra.mxu0 0.0
    %9894 = vmatprep.subr.mxu0 0.0
    %9895 = vmatpush1.msra.mxu0 0.0
    %9896 = vmatprep.subr.mxu0 0.0
    %9897 = vmatpush1.msra.mxu0 0.0
    %9898 = vmatprep.subr.mxu0 0.0
    %9899 = vmatpush1.msra.mxu0 0.0
    %9900 = vmatprep.subr.mxu0 0.0
    %9901 = vmatpush1.msra.mxu0 0.0
    %9902 = vmatprep.subr.mxu0 0.0
    %9903 = vmatpush1.msra.mxu0 0.0
    %9904 = vmatprep.subr.mxu0 0.0
    %9905 = vmatpush1.msra.mxu0 0.0
    %9906 = vmatprep.subr.mxu0 0.0
    %9907 = vmatpush1.msra.mxu0 0.0
    %9908 = vmatprep.subr.mxu0 0.0
    %9909 = vmatpush1.msra.mxu0 0.0
    %9910 = vmatprep.subr.mxu0 0.0
    %9911 = vmatpush1.msra.mxu0 0.0
    %9912 = vmatprep.subr.mxu0 0.0
    %9913 = vmatpush1.msra.mxu0 0.0
    %9914 = vmatprep.subr.mxu0 0.0
    %9915 = vmatpush1.msra.mxu0 0.0
    %9916 = vmatprep.subr.mxu0 0.0
    %9917 = vmatpush1.msra.mxu0 0.0
    %9918 = vmatprep.subr.mxu0 0.0
    %9919 = vmatpush1.msra.mxu0 0.0
    %9920 = vmatprep.subr.mxu0 0.0
    %9921 = vmatpush1.msra.mxu0 0.0
    %9922 = vmatprep.subr.mxu0 0.0
    %9923 = vmatpush1.msra.mxu0 0.0
    %9924 = vmatprep.subr.mxu0 0.0
    %9925 = vmatpush1.msra.mxu0 0.0
    %9926 = vmatprep.subr.mxu0 0.0
    %9927 = vmatpush1.msra.mxu0 0.0
    %9928 = vmatprep.subr.mxu0 0.0
    %9929 = vmatpush1.msra.mxu0 0.0
    %9930 = vmatprep.subr.mxu0 0.0
    %9931 = vmatpush1.msra.mxu0 0.0
    %9932 = vmatprep.subr.mxu0 0.0
    %9933 = vmatpush1.msra.mxu0 0.0
    %9934 = vmatprep.subr.mxu0 0.0
    %9935 = vmatpush1.msra.mxu0 0.0
    %9936 = vmatprep.subr.mxu0 0.0
    %9937 = vmatpush1.msra.mxu0 0.0
    %9938 = vmatprep.subr.mxu0 0.0
    %9939 = vmatpush1.msra.mxu0 0.0
    %9940 = vmatprep.subr.mxu0 0.0
    %9941 = vmatpush1.msra.mxu0 0.0
    %9942 = vmatprep.subr.mxu0 0.0
    %9943 = vmatpush1.msra.mxu0 0.0
    %9944 = vmatprep.subr.mxu0 0.0
    %9945 = vmatpush1.msra.mxu0 0.0
    %9946 = vmatprep.mubr.f32.mxu0 0.0
    %9947 = vmatmul.mubr.f32.gmra.mrb[0].mxu0 %v9880
    %v9948 = vpop.f32.mrb[0].mxu0
    %v9949 = vadd.f32 0.0, %v9948
    %v9950 = vpop.f32.mrb[0].mxu0
    %9951 = vdwg.mxu0
    %v9953 = vsel %vm2053, %v9872, 0
    %9955 = vmatprep.subr.mxu0 0.0
    %9956 = vmatpush1.msra.mxu0 %v7565
    %9957 = vmatprep.subr.mxu0 0.0
    %9958 = vmatpush1.msra.mxu0 0.0
    %9959 = vmatprep.subr.mxu0 0.0
    %9960 = vmatpush1.msra.mxu0 0.0
    %9961 = vmatprep.subr.mxu0 0.0
    %9962 = vmatpush1.msra.mxu0 0.0
    %9963 = vmatprep.subr.mxu0 0.0
    %9964 = vmatpush1.msra.mxu0 0.0
    %9965 = vmatprep.subr.mxu0 0.0
    %9966 = vmatpush1.msra.mxu0 0.0
    %9967 = vmatprep.subr.mxu0 0.0
    %9968 = vmatpush1.msra.mxu0 0.0
    %9969 = vmatprep.subr.mxu0 0.0
    %9970 = vmatpush1.msra.mxu0 0.0
    %9971 = vmatprep.subr.mxu0 0.0
    %9972 = vmatpush1.msra.mxu0 0.0
    %9973 = vmatprep.subr.mxu0 0.0
    %9974 = vmatpush1.msra.mxu0 0.0
    %9975 = vmatprep.subr.mxu0 0.0
    %9976 = vmatpush1.msra.mxu0 0.0
    %9977 = vmatprep.subr.mxu0 0.0
    %9978 = vmatpush1.msra.mxu0 0.0
    %9979 = vmatprep.subr.mxu0 0.0
    %9980 = vmatpush1.msra.mxu0 0.0
    %9981 = vmatprep.subr.mxu0 0.0
    %9982 = vmatpush1.msra.mxu0 0.0
    %9983 = vmatprep.subr.mxu0 0.0
    %9984 = vmatpush1.msra.mxu0 0.0
    %9985 = vmatprep.subr.mxu0 0.0
    %9986 = vmatpush1.msra.mxu0 0.0
    %9987 = vmatprep.subr.mxu0 0.0
    %9988 = vmatpush1.msra.mxu0 0.0
    %9989 = vmatprep.subr.mxu0 0.0
    %9990 = vmatpush1.msra.mxu0 0.0
    %9991 = vmatprep.subr.mxu0 0.0
    %9992 = vmatpush1.msra.mxu0 0.0
    %9993 = vmatprep.subr.mxu0 0.0
    %9994 = vmatpush1.msra.mxu0 0.0
    %9995 = vmatprep.subr.mxu0 0.0
    %9996 = vmatpush1.msra.mxu0 0.0
    %9997 = vmatprep.subr.mxu0 0.0
    %9998 = vmatpush1.msra.mxu0 0.0
    %9999 = vmatprep.subr.mxu0 0.0
    %10000 = vmatpush1.msra.mxu0 0.0
    %10001 = vmatprep.subr.mxu0 0.0
    %10002 = vmatpush1.msra.mxu0 0.0
    %10003 = vmatprep.subr.mxu0 0.0
    %10004 = vmatpush1.msra.mxu0 0.0
    %10005 = vmatprep.subr.mxu0 0.0
    %10006 = vmatpush1.msra.mxu0 0.0
    %10007 = vmatprep.subr.mxu0 0.0
    %10008 = vmatpush1.msra.mxu0 0.0
    %10009 = vmatprep.subr.mxu0 0.0
    %10010 = vmatpush1.msra.mxu0 0.0
    %10011 = vmatprep.subr.mxu0 0.0
    %10012 = vmatpush1.msra.mxu0 0.0
    %10013 = vmatprep.subr.mxu0 0.0
    %10014 = vmatpush1.msra.mxu0 0.0
    %10015 = vmatprep.subr.mxu0 0.0
    %10016 = vmatpush1.msra.mxu0 0.0
    %10017 = vmatprep.subr.mxu0 0.0
    %10018 = vmatpush1.msra.mxu0 0.0
    %10019 = vmatprep.mubr.f32.mxu0 0.0
    %10020 = vmatmul.mubr.f32.gmra.mrb[0].mxu0 %v9953
    %v10021 = vpop.f32.mrb[0].mxu0
    %v10022 = vadd.f32 0.0, %v10021
    %v10023 = vpop.f32.mrb[0].mxu0
    %10024 = vdwg.mxu0
    %v10026 = vsel %vm2053, %v9873, 0
    %10028 = vmatprep.subr.mxu0 0.0
    %10029 = vmatpush1.msra.mxu0 %v7498
    %10030 = vmatprep.subr.mxu0 0.0
    %10031 = vmatpush1.msra.mxu0 0.0
    %10032 = vmatprep.subr.mxu0 0.0
    %10033 = vmatpush1.msra.mxu0 0.0
    %10034 = vmatprep.subr.mxu0 0.0
    %10035 = vmatpush1.msra.mxu0 0.0
    %10036 = vmatprep.subr.mxu0 0.0
    %10037 = vmatpush1.msra.mxu0 0.0
    %10038 = vmatprep.subr.mxu0 0.0
    %10039 = vmatpush1.msra.mxu0 0.0
    %10040 = vmatprep.subr.mxu0 0.0
    %10041 = vmatpush1.msra.mxu0 0.0
    %10042 = vmatprep.subr.mxu0 0.0
    %10043 = vmatpush1.msra.mxu0 0.0
    %10044 = vmatprep.subr.mxu0 0.0
    %10045 = vmatpush1.msra.mxu0 0.0
    %10046 = vmatprep.subr.mxu0 0.0
    %10047 = vmatpush1.msra.mxu0 0.0
    %10048 = vmatprep.subr.mxu0 0.0
    %10049 = vmatpush1.msra.mxu0 0.0
    %10050 = vmatprep.subr.mxu0 0.0
    %10051 = vmatpush1.msra.mxu0 0.0
    %10052 = vmatprep.subr.mxu0 0.0
    %10053 = vmatpush1.msra.mxu0 0.0
    %10054 = vmatprep.subr.mxu0 0.0
    %10055 = vmatpush1.msra.mxu0 0.0
    %10056 = vmatprep.subr.mxu0 0.0
    %10057 = vmatpush1.msra.mxu0 0.0
    %10058 = vmatprep.subr.mxu0 0.0
    %10059 = vmatpush1.msra.mxu0 0.0
    %10060 = vmatprep.subr.mxu0 0.0
    %10061 = vmatpush1.msra.mxu0 0.0
    %10062 = vmatprep.subr.mxu0 0.0
    %10063 = vmatpush1.msra.mxu0 0.0
    %10064 = vmatprep.subr.mxu0 0.0
    %10065 = vmatpush1.msra.mxu0 0.0
    %10066 = vmatprep.subr.mxu0 0.0
    %10067 = vmatpush1.msra.mxu0 0.0
    %10068 = vmatprep.subr.mxu0 0.0
    %10069 = vmatpush1.msra.mxu0 0.0
    %10070 = vmatprep.subr.mxu0 0.0
    %10071 = vmatpush1.msra.mxu0 0.0
    %10072 = vmatprep.subr.mxu0 0.0
    %10073 = vmatpush1.msra.mxu0 0.0
    %10074 = vmatprep.subr.mxu0 0.0
    %10075 = vmatpush1.msra.mxu0 0.0
    %10076 = vmatprep.subr.mxu0 0.0
    %10077 = vmatpush1.msra.mxu0 0.0
    %10078 = vmatprep.subr.mxu0 0.0
    %10079 = vmatpush1.msra.mxu0 0.0
    %10080 = vmatprep.subr.mxu0 0.0
    %10081 = vmatpush1.msra.mxu0 0.0
    %10082 = vmatprep.subr.mxu0 0.0
    %10083 = vmatpush1.msra.mxu0 0.0
    %10084 = vmatprep.subr.mxu0 0.0
    %10085 = vmatpush1.msra.mxu0 0.0
    %10086 = vmatprep.subr.mxu0 0.0
    %10087 = vmatpush1.msra.mxu0 0.0
    %10088 = vmatprep.subr.mxu0 0.0
    %10089 = vmatpush1.msra.mxu0 0.0
    %10090 = vmatprep.subr.mxu0 0.0
    %10091 = vmatpush1.msra.mxu0 0.0
    %10092 = vmatprep.mubr.f32.mxu0 0.0
    %10093 = vmatmul.mubr.f32.gmra.mrb[0].mxu0 %v10026
    %v10094 = vpop.f32.mrb[0].mxu0
    %v10095 = vadd.f32 0.0, %v10094
    %v10096 = vpop.f32.mrb[0].mxu0
    %10097 = vdwg.mxu0
    %v10099 = vsel %vm2053, %v9874, 0
    %10101 = vmatprep.subr.mxu0 0.0
    %10102 = vmatpush1.msra.mxu0 %v7566
    %10103 = vmatprep.subr.mxu0 0.0
    %10104 = vmatpush1.msra.mxu0 0.0
    %10105 = vmatprep.subr.mxu0 0.0
    %10106 = vmatpush1.msra.mxu0 0.0
    %10107 = vmatprep.subr.mxu0 0.0
    %10108 = vmatpush1.msra.mxu0 0.0
    %10109 = vmatprep.subr.mxu0 0.0
    %10110 = vmatpush1.msra.mxu0 0.0
    %10111 = vmatprep.subr.mxu0 0.0
    %10112 = vmatpush1.msra.mxu0 0.0
    %10113 = vmatprep.subr.mxu0 0.0
    %10114 = vmatpush1.msra.mxu0 0.0
    %10115 = vmatprep.subr.mxu0 0.0
    %10116 = vmatpush1.msra.mxu0 0.0
    %10117 = vmatprep.subr.mxu0 0.0
    %10118 = vmatpush1.msra.mxu0 0.0
    %10119 = vmatprep.subr.mxu0 0.0
    %10120 = vmatpush1.msra.mxu0 0.0
    %10121 = vmatprep.subr.mxu0 0.0
    %10122 = vmatpush1.msra.mxu0 0.0
    %10123 = vmatprep.subr.mxu0 0.0
    %10124 = vmatpush1.msra.mxu0 0.0
    %10125 = vmatprep.subr.mxu0 0.0
    %10126 = vmatpush1.msra.mxu0 0.0
    %10127 = vmatprep.subr.mxu0 0.0
    %10128 = vmatpush1.msra.mxu0 0.0
    %10129 = vmatprep.subr.mxu0 0.0
    %10130 = vmatpush1.msra.mxu0 0.0
    %10131 = vmatprep.subr.mxu0 0.0
    %10132 = vmatpush1.msra.mxu0 0.0
    %10133 = vmatprep.subr.mxu0 0.0
    %10134 = vmatpush1.msra.mxu0 0.0
    %10135 = vmatprep.subr.mxu0 0.0
    %10136 = vmatpush1.msra.mxu0 0.0
    %10137 = vmatprep.subr.mxu0 0.0
    %10138 = vmatpush1.msra.mxu0 0.0
    %10139 = vmatprep.subr.mxu0 0.0
    %10140 = vmatpush1.msra.mxu0 0.0
    %10141 = vmatprep.subr.mxu0 0.0
    %10142 = vmatpush1.msra.mxu0 0.0
    %10143 = vmatprep.subr.mxu0 0.0
    %10144 = vmatpush1.msra.mxu0 0.0
    %10145 = vmatprep.subr.mxu0 0.0
    %10146 = vmatpush1.msra.mxu0 0.0
    %10147 = vmatprep.subr.mxu0 0.0
    %10148 = vmatpush1.msra.mxu0 0.0
    %10149 = vmatprep.subr.mxu0 0.0
    %10150 = vmatpush1.msra.mxu0 0.0
    %10151 = vmatprep.subr.mxu0 0.0
    %10152 = vmatpush1.msra.mxu0 0.0
    %10153 = vmatprep.subr.mxu0 0.0
    %10154 = vmatpush1.msra.mxu0 0.0
    %10155 = vmatprep.subr.mxu0 0.0
    %10156 = vmatpush1.msra.mxu0 0.0
    %10157 = vmatprep.subr.mxu0 0.0
    %10158 = vmatpush1.msra.mxu0 0.0
    %10159 = vmatprep.subr.mxu0 0.0
    %10160 = vmatpush1.msra.mxu0 0.0
    %10161 = vmatprep.subr.mxu0 0.0
    %10162 = vmatpush1.msra.mxu0 0.0
    %10163 = vmatprep.subr.mxu0 0.0
    %10164 = vmatpush1.msra.mxu0 0.0
    %10165 = vmatprep.mubr.f32.mxu0 0.0
    %10166 = vmatmul.mubr.f32.gmra.mrb[0].mxu0 %v10099
    %v10167 = vpop.f32.mrb[0].mxu0
    %v10168 = vadd.f32 0.0, %v10167
    %v10169 = vpop.f32.mrb[0].mxu0
    %10170 = vdwg.mxu0
    %v10172 = vsel %vm2053, %v9875, 0
    %10174 = vmatprep.subr.mxu0 0.0
    %10175 = vmatpush1.msra.mxu0 %v7499
    %10176 = vmatprep.subr.mxu0 0.0
    %10177 = vmatpush1.msra.mxu0 0.0
    %10178 = vmatprep.subr.mxu0 0.0
    %10179 = vmatpush1.msra.mxu0 0.0
    %10180 = vmatprep.subr.mxu0 0.0
    %10181 = vmatpush1.msra.mxu0 0.0
    %10182 = vmatprep.subr.mxu0 0.0
    %10183 = vmatpush1.msra.mxu0 0.0
    %10184 = vmatprep.subr.mxu0 0.0
    %10185 = vmatpush1.msra.mxu0 0.0
    %10186 = vmatprep.subr.mxu0 0.0
    %10187 = vmatpush1.msra.mxu0 0.0
    %10188 = vmatprep.subr.mxu0 0.0
    %10189 = vmatpush1.msra.mxu0 0.0
    %10190 = vmatprep.subr.mxu0 0.0
    %10191 = vmatpush1.msra.mxu0 0.0
    %10192 = vmatprep.subr.mxu0 0.0
    %10193 = vmatpush1.msra.mxu0 0.0
    %10194 = vmatprep.subr.mxu0 0.0
    %10195 = vmatpush1.msra.mxu0 0.0
    %10196 = vmatprep.subr.mxu0 0.0
    %10197 = vmatpush1.msra.mxu0 0.0
    %10198 = vmatprep.subr.mxu0 0.0
    %10199 = vmatpush1.msra.mxu0 0.0
    %10200 = vmatprep.subr.mxu0 0.0
    %10201 = vmatpush1.msra.mxu0 0.0
    %10202 = vmatprep.subr.mxu0 0.0
    %10203 = vmatpush1.msra.mxu0 0.0
    %10204 = vmatprep.subr.mxu0 0.0
    %10205 = vmatpush1.msra.mxu0 0.0
    %10206 = vmatprep.subr.mxu0 0.0
    %10207 = vmatpush1.msra.mxu0 0.0
    %10208 = vmatprep.subr.mxu0 0.0
    %10209 = vmatpush1.msra.mxu0 0.0
    %10210 = vmatprep.subr.mxu0 0.0
    %10211 = vmatpush1.msra.mxu0 0.0
    %10212 = vmatprep.subr.mxu0 0.0
    %10213 = vmatpush1.msra.mxu0 0.0
    %10214 = vmatprep.subr.mxu0 0.0
    %10215 = vmatpush1.msra.mxu0 0.0
    %10216 = vmatprep.subr.mxu0 0.0
    %10217 = vmatpush1.msra.mxu0 0.0
    %10218 = vmatprep.subr.mxu0 0.0
    %10219 = vmatpush1.msra.mxu0 0.0
    %10220 = vmatprep.subr.mxu0 0.0
    %10221 = vmatpush1.msra.mxu0 0.0
    %10222 = vmatprep.subr.mxu0 0.0
    %10223 = vmatpush1.msra.mxu0 0.0
    %10224 = vmatprep.subr.mxu0 0.0
    %10225 = vmatpush1.msra.mxu0 0.0
    %10226 = vmatprep.subr.mxu0 0.0
    %10227 = vmatpush1.msra.mxu0 0.0
    %10228 = vmatprep.subr.mxu0 0.0
    %10229 = vmatpush1.msra.mxu0 0.0
    %10230 = vmatprep.subr.mxu0 0.0
    %10231 = vmatpush1.msra.mxu0 0.0
    %10232 = vmatprep.subr.mxu0 0.0
    %10233 = vmatpush1.msra.mxu0 0.0
    %10234 = vmatprep.subr.mxu0 0.0
    %10235 = vmatpush1.msra.mxu0 0.0
    %10236 = vmatprep.subr.mxu0 0.0
    %10237 = vmatpush1.msra.mxu0 0.0
    %10238 = vmatprep.mubr.f32.mxu0 0.0
    %10239 = vmatmul.mubr.f32.gmra.mrb[0].mxu0 %v10172
    %v10240 = vpop.f32.mrb[0].mxu0
    %v10241 = vadd.f32 0.0, %v10240
    %v10242 = vpop.f32.mrb[0].mxu0
    %10243 = vdwg.mxu0
    %v10245 = vsel %vm2053, %v9876, 0
    %10247 = vmatprep.subr.mxu0 0.0
    %10248 = vmatpush1.msra.mxu0 %v7567
    %10249 = vmatprep.subr.mxu0 0.0
    %10250 = vmatpush1.msra.mxu0 0.0
    %10251 = vmatprep.subr.mxu0 0.0
    %10252 = vmatpush1.msra.mxu0 0.0
    %10253 = vmatprep.subr.mxu0 0.0
    %10254 = vmatpush1.msra.mxu0 0.0
    %10255 = vmatprep.subr.mxu0 0.0
    %10256 = vmatpush1.msra.mxu0 0.0
    %10257 = vmatprep.subr.mxu0 0.0
    %10258 = vmatpush1.msra.mxu0 0.0
    %10259 = vmatprep.subr.mxu0 0.0
    %10260 = vmatpush1.msra.mxu0 0.0
    %10261 = vmatprep.subr.mxu0 0.0
    %10262 = vmatpush1.msra.mxu0 0.0
    %10263 = vmatprep.subr.mxu0 0.0
    %10264 = vmatpush1.msra.mxu0 0.0
    %10265 = vmatprep.subr.mxu0 0.0
    %10266 = vmatpush1.msra.mxu0 0.0
    %10267 = vmatprep.subr.mxu0 0.0
    %10268 = vmatpush1.msra.mxu0 0.0
    %10269 = vmatprep.subr.mxu0 0.0
    %10270 = vmatpush1.msra.mxu0 0.0
    %10271 = vmatprep.subr.mxu0 0.0
    %10272 = vmatpush1.msra.mxu0 0.0
    %10273 = vmatprep.subr.mxu0 0.0
    %10274 = vmatpush1.msra.mxu0 0.0
    %10275 = vmatprep.subr.mxu0 0.0
    %10276 = vmatpush1.msra.mxu0 0.0
    %10277 = vmatprep.subr.mxu0 0.0
    %10278 = vmatpush1.msra.mxu0 0.0
    %10279 = vmatprep.subr.mxu0 0.0
    %10280 = vmatpush1.msra.mxu0 0.0
    %10281 = vmatprep.subr.mxu0 0.0
    %10282 = vmatpush1.msra.mxu0 0.0
    %10283 = vmatprep.subr.mxu0 0.0
    %10284 = vmatpush1.msra.mxu0 0.0
    %10285 = vmatprep.subr.mxu0 0.0
    %10286 = vmatpush1.msra.mxu0 0.0
    %10287 = vmatprep.subr.mxu0 0.0
    %10288 = vmatpush1.msra.mxu0 0.0
    %10289 = vmatprep.subr.mxu0 0.0
    %10290 = vmatpush1.msra.mxu0 0.0
    %10291 = vmatprep.subr.mxu0 0.0
    %10292 = vmatpush1.msra.mxu0 0.0
    %10293 = vmatprep.subr.mxu0 0.0
    %10294 = vmatpush1.msra.mxu0 0.0
    %10295 = vmatprep.subr.mxu0 0.0
    %10296 = vmatpush1.msra.mxu0 0.0
    %10297 = vmatprep.subr.mxu0 0.0
    %10298 = vmatpush1.msra.mxu0 0.0
    %10299 = vmatprep.subr.mxu0 0.0
    %10300 = vmatpush1.msra.mxu0 0.0
    %10301 = vmatprep.subr.mxu0 0.0
    %10302 = vmatpush1.msra.mxu0 0.0
    %10303 = vmatprep.subr.mxu0 0.0
    %10304 = vmatpush1.msra.mxu0 0.0
    %10305 = vmatprep.subr.mxu0 0.0
    %10306 = vmatpush1.msra.mxu0 0.0
    %10307 = vmatprep.subr.mxu0 0.0
    %10308 = vmatpush1.msra.mxu0 0.0
    %10309 = vmatprep.subr.mxu0 0.0
    %10310 = vmatpush1.msra.mxu0 0.0
    %10311 = vmatprep.mubr.f32.mxu0 0.0
    %10312 = vmatmul.mubr.f32.gmra.mrb[0].mxu0 %v10245
    %v10313 = vpop.f32.mrb[0].mxu0
    %v10314 = vadd.f32 0.0, %v10313
    %v10315 = vpop.f32.mrb[0].mxu0
    %10316 = vdwg.mxu0
    %v10318 = vsel %vm2053, %v9877, 0
    %10320 = vmatprep.subr.mxu0 0.0
    %10321 = vmatpush1.msra.mxu0 %v7500
    %10322 = vmatprep.subr.mxu0 0.0
    %10323 = vmatpush1.msra.mxu0 0.0
    %10324 = vmatprep.subr.mxu0 0.0
    %10325 = vmatpush1.msra.mxu0 0.0
    %10326 = vmatprep.subr.mxu0 0.0
    %10327 = vmatpush1.msra.mxu0 0.0
    %10328 = vmatprep.subr.mxu0 0.0
    %10329 = vmatpush1.msra.mxu0 0.0
    %10330 = vmatprep.subr.mxu0 0.0
    %10331 = vmatpush1.msra.mxu0 0.0
    %10332 = vmatprep.subr.mxu0 0.0
    %10333 = vmatpush1.msra.mxu0 0.0
    %10334 = vmatprep.subr.mxu0 0.0
    %10335 = vmatpush1.msra.mxu0 0.0
    %10336 = vmatprep.subr.mxu0 0.0
    %10337 = vmatpush1.msra.mxu0 0.0
    %10338 = vmatprep.subr.mxu0 0.0
    %10339 = vmatpush1.msra.mxu0 0.0
    %10340 = vmatprep.subr.mxu0 0.0
    %10341 = vmatpush1.msra.mxu0 0.0
    %10342 = vmatprep.subr.mxu0 0.0
    %10343 = vmatpush1.msra.mxu0 0.0
    %10344 = vmatprep.subr.mxu0 0.0
    %10345 = vmatpush1.msra.mxu0 0.0
    %10346 = vmatprep.subr.mxu0 0.0
    %10347 = vmatpush1.msra.mxu0 0.0
    %10348 = vmatprep.subr.mxu0 0.0
    %10349 = vmatpush1.msra.mxu0 0.0
    %10350 = vmatprep.subr.mxu0 0.0
    %10351 = vmatpush1.msra.mxu0 0.0
    %10352 = vmatprep.subr.mxu0 0.0
    %10353 = vmatpush1.msra.mxu0 0.0
    %10354 = vmatprep.subr.mxu0 0.0
    %10355 = vmatpush1.msra.mxu0 0.0
    %10356 = vmatprep.subr.mxu0 0.0
    %10357 = vmatpush1.msra.mxu0 0.0
    %10358 = vmatprep.subr.mxu0 0.0
    %10359 = vmatpush1.msra.mxu0 0.0
    %10360 = vmatprep.subr.mxu0 0.0
    %10361 = vmatpush1.msra.mxu0 0.0
    %10362 = vmatprep.subr.mxu0 0.0
    %10363 = vmatpush1.msra.mxu0 0.0
    %10364 = vmatprep.subr.mxu0 0.0
    %10365 = vmatpush1.msra.mxu0 0.0
    %10366 = vmatprep.subr.mxu0 0.0
    %10367 = vmatpush1.msra.mxu0 0.0
    %10368 = vmatprep.subr.mxu0 0.0
    %10369 = vmatpush1.msra.mxu0 0.0
    %10370 = vmatprep.subr.mxu0 0.0
    %10371 = vmatpush1.msra.mxu0 0.0
    %10372 = vmatprep.subr.mxu0 0.0
    %10373 = vmatpush1.msra.mxu0 0.0
    %10374 = vmatprep.subr.mxu0 0.0
    %10375 = vmatpush1.msra.mxu0 0.0
    %10376 = vmatprep.subr.mxu0 0.0
    %10377 = vmatpush1.msra.mxu0 0.0
    %10378 = vmatprep.subr.mxu0 0.0
    %10379 = vmatpush1.msra.mxu0 0.0
    %10380 = vmatprep.subr.mxu0 0.0
    %10381 = vmatpush1.msra.mxu0 0.0
    %10382 = vmatprep.subr.mxu0 0.0
    %10383 = vmatpush1.msra.mxu0 0.0
    %10384 = vmatprep.mubr.f32.mxu0 0.0
    %10385 = vmatmul.mubr.f32.gmra.mrb[0].mxu0 %v10318
    %v10386 = vpop.f32.mrb[0].mxu0
    %v10387 = vadd.f32 0.0, %v10386
    %v10388 = vpop.f32.mrb[0].mxu0
    %10389 = vdwg.mxu0
    %v10391 = vsel %vm2053, %v9878, 0
    %10393 = vmatprep.subr.mxu0 0.0
    %10394 = vmatpush1.msra.mxu0 %v7568
    %10395 = vmatprep.subr.mxu0 0.0
    %10396 = vmatpush1.msra.mxu0 0.0
    %10397 = vmatprep.subr.mxu0 0.0
    %10398 = vmatpush1.msra.mxu0 0.0
    %10399 = vmatprep.subr.mxu0 0.0
    %10400 = vmatpush1.msra.mxu0 0.0
    %10401 = vmatprep.subr.mxu0 0.0
    %10402 = vmatpush1.msra.mxu0 0.0
    %10403 = vmatprep.subr.mxu0 0.0
    %10404 = vmatpush1.msra.mxu0 0.0
    %10405 = vmatprep.subr.mxu0 0.0
    %10406 = vmatpush1.msra.mxu0 0.0
    %10407 = vmatprep.subr.mxu0 0.0
    %10408 = vmatpush1.msra.mxu0 0.0
    %10409 = vmatprep.subr.mxu0 0.0
    %10410 = vmatpush1.msra.mxu0 0.0
    %10411 = vmatprep.subr.mxu0 0.0
    %10412 = vmatpush1.msra.mxu0 0.0
    %10413 = vmatprep.subr.mxu0 0.0
    %10414 = vmatpush1.msra.mxu0 0.0
    %10415 = vmatprep.subr.mxu0 0.0
    %10416 = vmatpush1.msra.mxu0 0.0
    %10417 = vmatprep.subr.mxu0 0.0
    %10418 = vmatpush1.msra.mxu0 0.0
    %10419 = vmatprep.subr.mxu0 0.0
    %10420 = vmatpush1.msra.mxu0 0.0
    %10421 = vmatprep.subr.mxu0 0.0
    %10422 = vmatpush1.msra.mxu0 0.0
    %10423 = vmatprep.subr.mxu0 0.0
    %10424 = vmatpush1.msra.mxu0 0.0
    %10425 = vmatprep.subr.mxu0 0.0
    %10426 = vmatpush1.msra.mxu0 0.0
    %10427 = vmatprep.subr.mxu0 0.0
    %10428 = vmatpush1.msra.mxu0 0.0
    %10429 = vmatprep.subr.mxu0 0.0
    %10430 = vmatpush1.msra.mxu0 0.0
    %10431 = vmatprep.subr.mxu0 0.0
    %10432 = vmatpush1.msra.mxu0 0.0
    %10433 = vmatprep.subr.mxu0 0.0
    %10434 = vmatpush1.msra.mxu0 0.0
    %10435 = vmatprep.subr.mxu0 0.0
    %10436 = vmatpush1.msra.mxu0 0.0
    %10437 = vmatprep.subr.mxu0 0.0
    %10438 = vmatpush1.msra.mxu0 0.0
    %10439 = vmatprep.subr.mxu0 0.0
    %10440 = vmatpush1.msra.mxu0 0.0
    %10441 = vmatprep.subr.mxu0 0.0
    %10442 = vmatpush1.msra.mxu0 0.0
    %10443 = vmatprep.subr.mxu0 0.0
    %10444 = vmatpush1.msra.mxu0 0.0
    %10445 = vmatprep.subr.mxu0 0.0
    %10446 = vmatpush1.msra.mxu0 0.0
    %10447 = vmatprep.subr.mxu0 0.0
    %10448 = vmatpush1.msra.mxu0 0.0
    %10449 = vmatprep.subr.mxu0 0.0
    %10450 = vmatpush1.msra.mxu0 0.0
    %10451 = vmatprep.subr.mxu0 0.0
    %10452 = vmatpush1.msra.mxu0 0.0
    %10453 = vmatprep.subr.mxu0 0.0
    %10454 = vmatpush1.msra.mxu0 0.0
    %10455 = vmatprep.subr.mxu0 0.0
    %10456 = vmatpush1.msra.mxu0 0.0
    %10457 = vmatprep.mubr.f32.mxu0 0.0
    %10458 = vmatmul.mubr.f32.gmra.mrb[0].mxu0 %v10391
    %v10459 = vpop.f32.mrb[0].mxu0
    %v10460 = vadd.f32 0.0, %v10459
    %v10461 = vpop.f32.mrb[0].mxu0
    %10462 = vdwg.mxu0
    %v10463 = vcombine.low %v9949, %v10241
    %v10464 = vcombine.high %v9949, %v10241
    %v10466 = vunpack.c.l.s4 1983009808
    %v10467 = vunpack.c.0.s8 %v10466
    %v10468 = vlaneseq
    %v10469 = vshrl.u32 %v10468, 7
    %v10470 = vsub.s32 %v10467, %v10469
    %v10471 = vrot.slane %v10463, %v10470
    %v10473 = vunpack.c.l.s4 1983009808
    %v10474 = vunpack.c.0.s8 %v10473
    %v10475 = vlaneseq
    %v10476 = vshrl.u32 %v10475, 7
    %v10477 = vsub.s32 %v10474, %v10476
    %v10478 = vrot.slane %v10464, %v10477
    %v10479 = vcombine.low %v10095, %v10387
    %v10480 = vcombine.high %v10095, %v10387
    %v10482 = vunpack.c.l.s4 1983009808
    %v10483 = vunpack.c.0.s8 %v10482
    %v10484 = vlaneseq
    %v10485 = vshrl.u32 %v10484, 7
    %v10486 = vsub.s32 %v10483, %v10485
    %v10487 = vrot.slane %v10479, %v10486
    %v10489 = vunpack.c.l.s4 1983009808
    %v10490 = vunpack.c.0.s8 %v10489
    %v10491 = vlaneseq
    %v10492 = vshrl.u32 %v10491, 7
    %v10493 = vsub.s32 %v10490, %v10492
    %v10494 = vrot.slane %v10480, %v10493
    %v10495 = vcombine.low %v10471, %v10487
    %v10496 = vcombine.high %v10471, %v10487
    %v10498 = vunpack.c.l.s4 1934713408
    %v10499 = vunpack.c.0.s8 %v10498
    %v10500 = vlaneseq
    %v10501 = vshrl.u32 %v10500, 7
    %v10502 = vsub.s32 %v10499, %v10501
    %v10503 = vrot.slane %v10495, %v10502
    %v10505 = vunpack.c.l.s4 1934713408
    %v10506 = vunpack.c.0.s8 %v10505
    %v10507 = vlaneseq
    %v10508 = vshrl.u32 %v10507, 7
    %v10509 = vsub.s32 %v10506, %v10508
    %v10510 = vrot.slane %v10496, %v10509
    %v10511 = vcombine.low %v10478, %v10494
    %v10512 = vcombine.high %v10478, %v10494
    %v10514 = vunpack.c.l.s4 1934713408
    %v10515 = vunpack.c.0.s8 %v10514
    %v10516 = vlaneseq
    %v10517 = vshrl.u32 %v10516, 7
    %v10518 = vsub.s32 %v10515, %v10517
    %v10519 = vrot.slane %v10511, %v10518
    %v10521 = vunpack.c.l.s4 1934713408
    %v10522 = vunpack.c.0.s8 %v10521
    %v10523 = vlaneseq
    %v10524 = vshrl.u32 %v10523, 7
    %v10525 = vsub.s32 %v10522, %v10524
    %v10526 = vrot.slane %v10512, %v10525
    %v10527 = vcombine.high %v10503, 0.0
    %v10528 = vcombine.high %v10510, 0.0
    %v10529 = vcombine.high %v10519, 0.0
    %v10530 = vcombine.high %v10526, 0.0
    %v10531 = vcombine.low %v10022, %v10314
    %v10532 = vcombine.high %v10022, %v10314
    %v10534 = vunpack.c.l.s4 1983009808
    %v10535 = vunpack.c.0.s8 %v10534
    %v10536 = vlaneseq
    %v10537 = vshrl.u32 %v10536, 7
    %v10538 = vsub.s32 %v10535, %v10537
    %v10539 = vrot.slane %v10531, %v10538
    %v10541 = vunpack.c.l.s4 1983009808
    %v10542 = vunpack.c.0.s8 %v10541
    %v10543 = vlaneseq
    %v10544 = vshrl.u32 %v10543, 7
    %v10545 = vsub.s32 %v10542, %v10544
    %v10546 = vrot.slane %v10532, %v10545
    %v10547 = vcombine.low %v10168, %v10460
    %v10548 = vcombine.high %v10168, %v10460
    %v10550 = vunpack.c.l.s4 1983009808
    %v10551 = vunpack.c.0.s8 %v10550
    %v10552 = vlaneseq
    %v10553 = vshrl.u32 %v10552, 7
    %v10554 = vsub.s32 %v10551, %v10553
    %v10555 = vrot.slane %v10547, %v10554
    %v10557 = vunpack.c.l.s4 1983009808
    %v10558 = vunpack.c.0.s8 %v10557
    %v10559 = vlaneseq
    %v10560 = vshrl.u32 %v10559, 7
    %v10561 = vsub.s32 %v10558, %v10560
    %v10562 = vrot.slane %v10548, %v10561
    %v10563 = vcombine.low %v10539, %v10555
    %v10564 = vcombine.high %v10539, %v10555
    %v10566 = vunpack.c.l.s4 1934713408
    %v10567 = vunpack.c.0.s8 %v10566
    %v10568 = vlaneseq
    %v10569 = vshrl.u32 %v10568, 7
    %v10570 = vsub.s32 %v10567, %v10569
    %v10571 = vrot.slane %v10563, %v10570
    %v10573 = vunpack.c.l.s4 1934713408
    %v10574 = vunpack.c.0.s8 %v10573
    %v10575 = vlaneseq
    %v10576 = vshrl.u32 %v10575, 7
    %v10577 = vsub.s32 %v10574, %v10576
    %v10578 = vrot.slane %v10564, %v10577
    %v10579 = vcombine.low %v10546, %v10562
    %v10580 = vcombine.high %v10546, %v10562
    %v10582 = vunpack.c.l.s4 1934713408
    %v10583 = vunpack.c.0.s8 %v10582
    %v10584 = vlaneseq
    %v10585 = vshrl.u32 %v10584, 7
    %v10586 = vsub.s32 %v10583, %v10585
    %v10587 = vrot.slane %v10579, %v10586
    %v10589 = vunpack.c.l.s4 1934713408
    %v10590 = vunpack.c.0.s8 %v10589
    %v10591 = vlaneseq
    %v10592 = vshrl.u32 %v10591, 7
    %v10593 = vsub.s32 %v10590, %v10592
    %v10594 = vrot.slane %v10580, %v10593
    %v10595 = vcombine.high %v10571, 0.0
    %v10596 = vcombine.high %v10578, 0.0
    %v10597 = vcombine.high %v10587, 0.0
    %v10598 = vcombine.high %v10594, 0.0
    %v10599 = vcombine.low %v10503, %v10510
    %v10601 = vunpack.c.l.s4 1983009808
    %v10602 = vunpack.c.0.s8 %v10601
    %v10603 = vlaneseq
    %v10604 = vshrl.u32 %v10603, 7
    %v10605 = vsub.s32 %v10602, %v10604
    %v10606 = vrot.slane %v10599, %v10605
    %v10607 = vcombine.low %v10527, %v10528
    %v10609 = vunpack.c.l.s4 1983009808
    %v10610 = vunpack.c.0.s8 %v10609
    %v10611 = vlaneseq
    %v10612 = vshrl.u32 %v10611, 7
    %v10613 = vsub.s32 %v10610, %v10612
    %v10614 = vrot.slane %v10607, %v10613
    %v10615 = vcombine.low %v10519, %v10526
    %v10617 = vunpack.c.l.s4 1983009808
    %v10618 = vunpack.c.0.s8 %v10617
    %v10619 = vlaneseq
    %v10620 = vshrl.u32 %v10619, 7
    %v10621 = vsub.s32 %v10618, %v10620
    %v10622 = vrot.slane %v10615, %v10621
    %v10623 = vcombine.low %v10529, %v10530
    %v10625 = vunpack.c.l.s4 1983009808
    %v10626 = vunpack.c.0.s8 %v10625
    %v10627 = vlaneseq
    %v10628 = vshrl.u32 %v10627, 7
    %v10629 = vsub.s32 %v10626, %v10628
    %v10630 = vrot.slane %v10623, %v10629
    %v10631 = vcombine.low %v10606, %v10614
    %v10632 = vcombine.high %v10606, %v10614
    %v10634 = vunpack.c.l.s4 1934713408
    %v10635 = vunpack.c.0.s8 %v10634
    %v10636 = vlaneseq
    %v10637 = vshrl.u32 %v10636, 7
    %v10638 = vsub.s32 %v10635, %v10637
    %v10639 = vrot.slane %v10631, %v10638
    %v10641 = vunpack.c.l.s4 1934713408
    %v10642 = vunpack.c.0.s8 %v10641
    %v10643 = vlaneseq
    %v10644 = vshrl.u32 %v10643, 7
    %v10645 = vsub.s32 %v10642, %v10644
    %v10646 = vrot.slane %v10632, %v10645
    %v10647 = vcombine.low %v10622, %v10630
    %v10648 = vcombine.high %v10622, %v10630
    %v10650 = vunpack.c.l.s4 1934713408
    %v10651 = vunpack.c.0.s8 %v10650
    %v10652 = vlaneseq
    %v10653 = vshrl.u32 %v10652, 7
    %v10654 = vsub.s32 %v10651, %v10653
    %v10655 = vrot.slane %v10647, %v10654
    %v10657 = vunpack.c.l.s4 1934713408
    %v10658 = vunpack.c.0.s8 %v10657
    %v10659 = vlaneseq
    %v10660 = vshrl.u32 %v10659, 7
    %v10661 = vsub.s32 %v10658, %v10660
    %v10662 = vrot.slane %v10648, %v10661
    %v10663 = vcombine.low %v10639, %v10655
    %v10664 = vcombine.high %v10639, %v10655
    %v10665 = vcombine.low %v10646, %v10662
    %v10666 = vcombine.high %v10646, %v10662
    %v10667 = vcombine.low %v10571, %v10578
    %v10669 = vunpack.c.l.s4 1983009808
    %v10670 = vunpack.c.0.s8 %v10669
    %v10671 = vlaneseq
    %v10672 = vshrl.u32 %v10671, 7
    %v10673 = vsub.s32 %v10670, %v10672
    %v10674 = vrot.slane %v10667, %v10673
    %v10675 = vcombine.low %v10595, %v10596
    %v10677 = vunpack.c.l.s4 1983009808
    %v10678 = vunpack.c.0.s8 %v10677
    %v10679 = vlaneseq
    %v10680 = vshrl.u32 %v10679, 7
    %v10681 = vsub.s32 %v10678, %v10680
    %v10682 = vrot.slane %v10675, %v10681
    %v10683 = vcombine.low %v10587, %v10594
    %v10685 = vunpack.c.l.s4 1983009808
    %v10686 = vunpack.c.0.s8 %v10685
    %v10687 = vlaneseq
    %v10688 = vshrl.u32 %v10687, 7
    %v10689 = vsub.s32 %v10686, %v10688
    %v10690 = vrot.slane %v10683, %v10689
    %v10691 = vcombine.low %v10597, %v10598
    %v10693 = vunpack.c.l.s4 1983009808
    %v10694 = vunpack.c.0.s8 %v10693
    %v10695 = vlaneseq
    %v10696 = vshrl.u32 %v10695, 7
    %v10697 = vsub.s32 %v10694, %v10696
    %v10698 = vrot.slane %v10691, %v10697
    %v10699 = vcombine.low %v10674, %v10682
    %v10700 = vcombine.high %v10674, %v10682
    %v10702 = vunpack.c.l.s4 1934713408
    %v10703 = vunpack.c.0.s8 %v10702
    %v10704 = vlaneseq
    %v10705 = vshrl.u32 %v10704, 7
    %v10706 = vsub.s32 %v10703, %v10705
    %v10707 = vrot.slane %v10699, %v10706
    %v10709 = vunpack.c.l.s4 1934713408
    %v10710 = vunpack.c.0.s8 %v10709
    %v10711 = vlaneseq
    %v10712 = vshrl.u32 %v10711, 7
    %v10713 = vsub.s32 %v10710, %v10712
    %v10714 = vrot.slane %v10700, %v10713
    %v10715 = vcombine.low %v10690, %v10698
    %v10716 = vcombine.high %v10690, %v10698
    %v10718 = vunpack.c.l.s4 1934713408
    %v10719 = vunpack.c.0.s8 %v10718
    %v10720 = vlaneseq
    %v10721 = vshrl.u32 %v10720, 7
    %v10722 = vsub.s32 %v10719, %v10721
    %v10723 = vrot.slane %v10715, %v10722
    %v10725 = vunpack.c.l.s4 1934713408
    %v10726 = vunpack.c.0.s8 %v10725
    %v10727 = vlaneseq
    %v10728 = vshrl.u32 %v10727, 7
    %v10729 = vsub.s32 %v10726, %v10728
    %v10730 = vrot.slane %v10716, %v10729
    %v10731 = vcombine.low %v10707, %v10723
    %v10732 = vcombine.high %v10707, %v10723
    %v10733 = vcombine.low %v10714, %v10730
    %v10734 = vcombine.high %v10714, %v10730
    %10737 = vrot.lane.b32.xlu0 %v10664, 8
    %v10738 = vpop.permute.xlu0 %10737
    %10739 = vrot.lane.b32.xlu0 %v10732, 8
    %v10740 = vpop.permute.xlu0 %10739
    %10745 = vrot.lane.b32.xlu0 %v10665, 16
    %v10746 = vpop.permute.xlu0 %10745
    %10747 = vrot.lane.b32.xlu0 %v10733, 16
    %v10748 = vpop.permute.xlu0 %10747
    %10753 = vrot.lane.b32.xlu0 %v10666, 24
    %v10754 = vpop.permute.xlu0 %10753
    %10755 = vrot.lane.b32.xlu0 %v10734, 24
    %v10756 = vpop.permute.xlu0 %10755
    %v10759 = vsel %vm2053, %v10663, %v10738
    %v10760 = vsel %vm2053, %v10731, %v10740
    %v10761 = vsel %vm3650, %v10759, %v10746
    %v10762 = vsel %vm3650, %v10760, %v10748
    %v10763 = vsel %vm3653, %v10761, %v10754
    %v10764 = vsel %vm3653, %v10762, %v10756
    %v10765 = vpack.c.bf16 %v9166, %v9165
    %s10766 = scalar_lea.vmem %s7, 32
    %v10767 = vld [vmem:[%s10766] sm:$0xf]
    %v10768 = vld [vmem:[%s10766 + $0x4] sm:$0xf]
    %v10769 = vld [vmem:[%s10766 + $0x8] sm:$0xf]
    %v10770 = vld [vmem:[%s10766 + $0xc] sm:$0xf]
    %v10771 = vlaneseq
    %v10772 = vshrl.u32 %v10771, 7
    %v10773 = vsub.s32 1, %v10772
    %v10774 = vrot.slane %v5663, %v10773
    %v10779 = vunpack.c.l.b16 %v10767
    %v10780 = vunpack.c.l.b16 %v10768
    %v10781 = vunpack.c.l.b16 %v10769
    %v10782 = vunpack.c.l.b16 %v10770
    %v10783 = vpack.c.b16 %v10780, %v10779
    %v10784 = vpack.c.b16 %v10782, %v10781
    %v10788 = vsel %vm173, %v10765, 0
    %10790 = vmatprep.subr.bf16.mxu0 0
    %10791 = vmatpush1.bf16.msra.mxu0 %v10783
    %10792 = vmatprep.subr.bf16.mxu0 0
    %10793 = vmatpush1.bf16.msra.mxu0 %v10784
    %10794 = vmatprep.subr.bf16.mxu0 0
    %10795 = vmatpush1.bf16.msra.mxu0 0
    %10796 = vmatprep.subr.bf16.mxu0 0
    %10797 = vmatpush1.bf16.msra.mxu0 0
    %10798 = vmatprep.subr.bf16.mxu0 0
    %10799 = vmatpush1.bf16.msra.mxu0 0
    %10800 = vmatprep.subr.bf16.mxu0 0
    %10801 = vmatpush1.bf16.msra.mxu0 0
    %10802 = vmatprep.subr.bf16.mxu0 0
    %10803 = vmatpush1.bf16.msra.mxu0 0
    %10804 = vmatprep.subr.bf16.mxu0 0
    %10805 = vmatpush1.bf16.msra.mxu0 0
    %10806 = vmatprep.subr.bf16.mxu0 0
    %10807 = vmatpush1.bf16.msra.mxu0 0
    %10808 = vmatprep.subr.bf16.mxu0 0
    %10809 = vmatpush1.bf16.msra.mxu0 0
    %10810 = vmatprep.subr.bf16.mxu0 0
    %10811 = vmatpush1.bf16.msra.mxu0 0
    %10812 = vmatprep.subr.bf16.mxu0 0
    %10813 = vmatpush1.bf16.msra.mxu0 0
    %10814 = vmatprep.subr.bf16.mxu0 0
    %10815 = vmatpush1.bf16.msra.mxu0 0
    %10816 = vmatprep.subr.bf16.mxu0 0
    %10817 = vmatpush1.bf16.msra.mxu0 0
    %10818 = vmatprep.subr.bf16.mxu0 0
    %10819 = vmatpush1.bf16.msra.mxu0 0
    %10820 = vmatprep.subr.bf16.mxu0 0
    %10821 = vmatpush1.bf16.msra.mxu0 0
    %10822 = vmatprep.mubr.bf16.mxu0 0
    %10823 = vmatmul.mubr.bf16.gmra.mrb[0].mxu0 %v10788
    %v10824 = vpop.f32.mrb[0].mxu0
    %v10825 = vadd.f32 %v10774, %v10824
    %v10826 = vpop.f32.mrb[0].mxu0
    %v10827 = vpop.f32.mrb[0].mxu0
    %v10828 = vadd.f32 %v10774, %v10827
    %v10829 = vpop.f32.mrb[0].mxu0
    %10830 = vdwg.mxu0
    %v10831 = vpack.c.bf16 %v10764, %v10763
    %s10832 = scalar_lea.vmem %s7, 48
    %v10833 = vld [vmem:[%s10832] sm:$0xf]
    %v10834 = vld [vmem:[%s10832 + $0x4] sm:$0xf]
    %v10835 = vld [vmem:[%s10832 + $0x8] sm:$0xf]
    %v10836 = vld [vmem:[%s10832 + $0xc] sm:$0xf]
    %v10837 = vlaneseq
    %v10838 = vshrl.u32 %v10837, 7
    %v10839 = vsub.s32 2, %v10838
    %v10840 = vrot.slane %v5663, %v10839
    %v10845 = vunpack.c.l.b16 %v10833
    %v10846 = vunpack.c.l.b16 %v10834
    %v10847 = vunpack.c.l.b16 %v10835
    %v10848 = vunpack.c.l.b16 %v10836
    %v10849 = vpack.c.b16 %v10846, %v10845
    %v10850 = vpack.c.b16 %v10848, %v10847
    %v10854 = vsel %vm173, %v10831, 0
    %10856 = vmatprep.subr.bf16.mxu0 0
    %10857 = vmatpush1.bf16.msra.mxu0 %v10849
    %10858 = vmatprep.subr.bf16.mxu0 0
    %10859 = vmatpush1.bf16.msra.mxu0 %v10850
    %10860 = vmatprep.subr.bf16.mxu0 0
    %10861 = vmatpush1.bf16.msra.mxu0 0
    %10862 = vmatprep.subr.bf16.mxu0 0
    %10863 = vmatpush1.bf16.msra.mxu0 0
    %10864 = vmatprep.subr.bf16.mxu0 0
    %10865 = vmatpush1.bf16.msra.mxu0 0
    %10866 = vmatprep.subr.bf16.mxu0 0
    %10867 = vmatpush1.bf16.msra.mxu0 0
    %10868 = vmatprep.subr.bf16.mxu0 0
    %10869 = vmatpush1.bf16.msra.mxu0 0
    %10870 = vmatprep.subr.bf16.mxu0 0
    %10871 = vmatpush1.bf16.msra.mxu0 0
    %10872 = vmatprep.subr.bf16.mxu0 0
    %10873 = vmatpush1.bf16.msra.mxu0 0
    %10874 = vmatprep.subr.bf16.mxu0 0
    %10875 = vmatpush1.bf16.msra.mxu0 0
    %10876 = vmatprep.subr.bf16.mxu0 0
    %10877 = vmatpush1.bf16.msra.mxu0 0
    %10878 = vmatprep.subr.bf16.mxu0 0
    %10879 = vmatpush1.bf16.msra.mxu0 0
    %10880 = vmatprep.subr.bf16.mxu0 0
    %10881 = vmatpush1.bf16.msra.mxu0 0
    %10882 = vmatprep.subr.bf16.mxu0 0
    %10883 = vmatpush1.bf16.msra.mxu0 0
    %10884 = vmatprep.subr.bf16.mxu0 0
    %10885 = vmatpush1.bf16.msra.mxu0 0
    %10886 = vmatprep.subr.bf16.mxu0 0
    %10887 = vmatpush1.bf16.msra.mxu0 0
    %10888 = vmatprep.mubr.bf16.mxu0 0
    %10889 = vmatmul.mubr.bf16.gmra.mrb[0].mxu0 %v10854
    %v10890 = vpop.f32.mrb[0].mxu0
    %v10891 = vadd.f32 %v10840, %v10890
    %v10892 = vpop.f32.mrb[0].mxu0
    %v10893 = vpop.f32.mrb[0].mxu0
    %v10894 = vadd.f32 %v10840, %v10893
    %v10895 = vpop.f32.mrb[0].mxu0
    %10896 = vdwg.mxu0
    %v10897 = vadd.f32 %v5660, %v10825
    %v10898 = vadd.f32 %v5661, %v10828
    %v10899 = vsel %vm173, %v10897, 0.0
    %10900 = vadd.xlane.f32.xlu0 %v10899
    %v10901 = vpop.xlane.xlu0 %10900
    %v10902 = vsel %vm173, %v10898, 0.0
    %10903 = vadd.xlane.f32.xlu0 %v10902
    %v10904 = vpop.xlane.xlu0 %10903
    %v10905 = vmul.f32 %v10901, %v5397
    %v10906 = vmul.f32 %v10904, %v5397
    %v10907 = vsub.f32 %v10897, %v10905
    %v10908 = vsub.f32 %v10898, %v10906
    %v10909 = vmul.f32 %v10907, %v10907
    %v10910 = vmul.f32 %v10908, %v10908
    %v10911 = vsel %vm173, %v10909, 0.0
    %10912 = vadd.xlane.f32.xlu0 %v10911
    %v10913 = vpop.xlane.xlu0 %10912
    %v10914 = vsel %vm173, %v10910, 0.0
    %10915 = vadd.xlane.f32.xlu0 %v10914
    %v10916 = vpop.xlane.xlu0 %10915
    %v10917 = vmul.f32 %v10913, %v5397
    %v10918 = vmul.f32 %v10916, %v5397
    %v10919 = vadd.f32 %v10917, 1e-05
    %v10920 = vadd.f32 %v10918, 1e-05
    %v10921 = vrsqrt.pop %v10919
    %v10922 = vrsqrt.pop %v10920
    %v10923 = vmul.f32 %v10907, %v10921
    %v10924 = vmul.f32 %v10908, %v10922
    %v10925 = vlaneseq
    %v10926 = vshrl.u32 %v10925, 7
    %v10927 = vsub.s32 3, %v10926
    %v10928 = vrot.slane %v5663, %v10927
    %v10929 = vmul.f32 %v10923, %v10928
    %v10930 = vmul.f32 %v10924, %v10928
    %v10931 = vlaneseq
    %v10932 = vshrl.u32 %v10931, 7
    %v10933 = vsub.s32 4, %v10932
    %v10934 = vrot.slane %v5663, %v10933
    %v10935 = vadd.f32 %v10929, %v10934
    %v10936 = vadd.f32 %v10930, %v10934
    %v10937 = vadd.f32 %v10935, %v10891
    %v10938 = vadd.f32 %v10936, %v10894
    %v10939 = vsel %vm173, %v10937, 0.0
    %10940 = vadd.xlane.f32.xlu0 %v10939
    %v10941 = vpop.xlane.xlu0 %10940
    %v10942 = vsel %vm173, %v10938, 0.0
    %10943 = vadd.xlane.f32.xlu0 %v10942
    %v10944 = vpop.xlane.xlu0 %10943
    %v10945 = vmul.f32 %v10941, %v5397
    %v10946 = vmul.f32 %v10944, %v5397
    %v10947 = vsub.f32 %v10937, %v10945
    %v10948 = vsub.f32 %v10938, %v10946
    %v10949 = vmul.f32 %v10947, %v10947
    %v10950 = vmul.f32 %v10948, %v10948
    %v10951 = vsel %vm173, %v10949, 0.0
    %10952 = vadd.xlane.f32.xlu0 %v10951
    %v10953 = vpop.xlane.xlu0 %10952
    %v10954 = vsel %vm173, %v10950, 0.0
    %10955 = vadd.xlane.f32.xlu0 %v10954
    %v10956 = vpop.xlane.xlu0 %10955
    %v10957 = vmul.f32 %v10953, %v5397
    %v10958 = vmul.f32 %v10956, %v5397
    %v10959 = vadd.f32 %v10957, 1e-05
    %v10960 = vadd.f32 %v10958, 1e-05
    %v10961 = vrsqrt.pop %v10959
    %v10962 = vrsqrt.pop %v10960
    %v10963 = vmul.f32 %v10947, %v10961
    %v10964 = vmul.f32 %v10948, %v10962
    %v10965 = vlaneseq
    %v10966 = vshrl.u32 %v10965, 7
    %v10967 = vsub.s32 5, %v10966
    %v10968 = vrot.slane %v5663, %v10967
    %v10969 = vmul.f32 %v10963, %v10968
    %v10970 = vmul.f32 %v10964, %v10968
    %v10971 = vlaneseq
    %v10972 = vshrl.u32 %v10971, 7
    %v10973 = vsub.s32 6, %v10972
    %v10974 = vrot.slane %v5663, %v10973
    %v10975 = vadd.f32 %v10969, %v10974
    %v10976 = vadd.f32 %v10970, %v10974
    %v10977 = vpack.c.bf16 %v10976, %v10975
    %s10978 = scalar_lea.vmem [#allocation7], 16
    %v10979 = vld [vmem:[%s10978] sm:$0xf]
    %v10980 = vld [vmem:[%s10978 + $0x4] sm:$0xf]
    %v10981 = vld [vmem:[%s10978 + $0x8] sm:$0xf]
    %v10982 = vld [vmem:[%s10978 + $0xc] sm:$0xf]
    %s10983 = scalar_lea.vmem [#allocation8], 1
    %v10984 = vld [vmem:[%s10983] sm:$0x1]
    %v10986 = vlaneseq
    %v10987 = vshrl.u32 %v10986, 7
    %v10988 = vsub.s32 0, %v10987
    %v10989 = vrot.slane %v10984, %v10988
    %v10995 = vunpack.c.l.b16 %v10979
    %v10996 = vunpack.c.l.b16 %v10980
    %v10997 = vunpack.c.l.b16 %v10981
    %v10998 = vunpack.c.l.b16 %v10982
    %v10999 = vpack.c.b16 %v10996, %v10995
    %v11000 = vpack.c.b16 %v10998, %v10997
    %v11004 = vsel %vm173, %v10977, 0
    %11006 = vmatprep.subr.bf16.mxu0 0
    %11007 = vmatpush1.bf16.msra.mxu0 %v10999
    %11008 = vmatprep.subr.bf16.mxu0 0
    %11009 = vmatpush1.bf16.msra.mxu0 %v11000
    %11010 = vmatprep.subr.bf16.mxu0 0
    %11011 = vmatpush1.bf16.msra.mxu0 0
    %11012 = vmatprep.subr.bf16.mxu0 0
    %11013 = vmatpush1.bf16.msra.mxu0 0
    %11014 = vmatprep.subr.bf16.mxu0 0
    %11015 = vmatpush1.bf16.msra.mxu0 0
    %11016 = vmatprep.subr.bf16.mxu0 0
    %11017 = vmatpush1.bf16.msra.mxu0 0
    %11018 = vmatprep.subr.bf16.mxu0 0
    %11019 = vmatpush1.bf16.msra.mxu0 0
    %11020 = vmatprep.subr.bf16.mxu0 0
    %11021 = vmatpush1.bf16.msra.mxu0 0
    %11022 = vmatprep.subr.bf16.mxu0 0
    %11023 = vmatpush1.bf16.msra.mxu0 0
    %11024 = vmatprep.subr.bf16.mxu0 0
    %11025 = vmatpush1.bf16.msra.mxu0 0
    %11026 = vmatprep.subr.bf16.mxu0 0
    %11027 = vmatpush1.bf16.msra.mxu0 0
    %11028 = vmatprep.subr.bf16.mxu0 0
    %11029 = vmatpush1.bf16.msra.mxu0 0
    %11030 = vmatprep.subr.bf16.mxu0 0
    %11031 = vmatpush1.bf16.msra.mxu0 0
    %11032 = vmatprep.subr.bf16.mxu0 0
    %11033 = vmatpush1.bf16.msra.mxu0 0
    %11034 = vmatprep.subr.bf16.mxu0 0
    %11035 = vmatpush1.bf16.msra.mxu0 0
    %11036 = vmatprep.subr.bf16.mxu0 0
    %11037 = vmatpush1.bf16.msra.mxu0 0
    %11038 = vmatprep.mubr.bf16.mxu0 0
    %11039 = vmatmul.mubr.bf16.gmra.mrb[0].mxu0 %v11004
    %v11040 = vpop.f32.mrb[0].mxu0
    %v11041 = vadd.f32 %v10989, %v11040
    %v11042 = vpop.f32.mrb[0].mxu0
    %v11043 = vpop.f32.mrb[0].mxu0
    %v11044 = vadd.f32 %v10989, %v11043
    %v11045 = vpop.f32.mrb[0].mxu0
    %11046 = vdwg.mxu0
    %v11047 = vmax.f32 %v11041, 0.0
    %v11048 = vmax.f32 %v11044, 0.0
    %v11049 = vpack.c.bf16 %v11048, %v11047
    %s11050 = scalar_lea.vmem %s10, 32
    %v11051 = vld [vmem:[%s11050] sm:$0xf]
    %v11052 = vld [vmem:[%s11050 + $0x4] sm:$0xf]
    %v11053 = vld [vmem:[%s11050 + $0x8] sm:$0xf]
    %v11054 = vld [vmem:[%s11050 + $0xc] sm:$0xf]
    %v11055 = vld [vmem:[%s11050 + $0x10] sm:$0xf]
    %v11056 = vld [vmem:[%s11050 + $0x14] sm:$0xf]
    %v11057 = vld [vmem:[%s11050 + $0x18] sm:$0xf]
    %v11058 = vld [vmem:[%s11050 + $0x1c] sm:$0xf]
    %v11059 = vlaneseq
    %v11060 = vshrl.u32 %v11059, 7
    %v11061 = vsub.s32 0, %v11060
    %v11062 = vrot.slane %v5663, %v11061
    %v11071 = vunpack.c.l.b16 %v11051
    %v11072 = vunpack.c.l.b16 %v11052
    %v11073 = vunpack.c.l.b16 %v11053
    %v11074 = vunpack.c.l.b16 %v11054
    %v11075 = vunpack.c.l.b16 %v11055
    %v11076 = vunpack.c.l.b16 %v11056
    %v11077 = vunpack.c.l.b16 %v11057
    %v11078 = vunpack.c.l.b16 %v11058
    %v11079 = vpack.c.b16 %v11072, %v11071
    %v11080 = vpack.c.b16 %v11074, %v11073
    %v11081 = vpack.c.b16 %v11076, %v11075
    %v11082 = vpack.c.b16 %v11078, %v11077
    %v11088 = vsel %vm5577, %v11049, 0
    %11090 = vmatprep.subr.bf16.mxu0 0
    %11091 = vmatpush1.bf16.msra.mxu0 %v11079
    %11092 = vmatprep.subr.bf16.mxu0 0
    %11093 = vmatpush1.bf16.msra.mxu0 %v11080
    %11094 = vmatprep.subr.bf16.mxu0 0
    %11095 = vmatpush1.bf16.msra.mxu0 %v11081
    %11096 = vmatprep.subr.bf16.mxu0 0
    %11097 = vmatpush1.bf16.msra.mxu0 %v11082
    %11098 = vmatprep.subr.bf16.mxu0 0
    %11099 = vmatpush1.bf16.msra.mxu0 0
    %11100 = vmatprep.subr.bf16.mxu0 0
    %11101 = vmatpush1.bf16.msra.mxu0 0
    %11102 = vmatprep.subr.bf16.mxu0 0
    %11103 = vmatpush1.bf16.msra.mxu0 0
    %11104 = vmatprep.subr.bf16.mxu0 0
    %11105 = vmatpush1.bf16.msra.mxu0 0
    %11106 = vmatprep.subr.bf16.mxu0 0
    %11107 = vmatpush1.bf16.msra.mxu0 0
    %11108 = vmatprep.subr.bf16.mxu0 0
    %11109 = vmatpush1.bf16.msra.mxu0 0
    %11110 = vmatprep.subr.bf16.mxu0 0
    %11111 = vmatpush1.bf16.msra.mxu0 0
    %11112 = vmatprep.subr.bf16.mxu0 0
    %11113 = vmatpush1.bf16.msra.mxu0 0
    %11114 = vmatprep.subr.bf16.mxu0 0
    %11115 = vmatpush1.bf16.msra.mxu0 0
    %11116 = vmatprep.subr.bf16.mxu0 0
    %11117 = vmatpush1.bf16.msra.mxu0 0
    %11118 = vmatprep.subr.bf16.mxu0 0
    %11119 = vmatpush1.bf16.msra.mxu0 0
    %11120 = vmatprep.subr.bf16.mxu0 0
    %11121 = vmatpush1.bf16.msra.mxu0 0
    %11122 = vmatprep.mubr.bf16.mxu0 0
    %11123 = vmatmul.mubr.bf16.gmra.mrb[0].mxu0 %v11088
    %v11124 = vpop.f32.mrb[0].mxu0
    %v11125 = vadd.f32 %v11062, %v11124
    %v11126 = vpop.f32.mrb[0].mxu0
    %v11127 = vpop.f32.mrb[0].mxu0
    %v11128 = vadd.f32 %v11062, %v11127
    %v11129 = vpop.f32.mrb[0].mxu0
    %11130 = vdwg.mxu0
    %v11131 = vadd.f32 %v10975, %v11125
    %v11132 = vadd.f32 %v10976, %v11128
    %v11133 = vsel %vm173, %v11131, 0.0
    %11134 = vadd.xlane.f32.xlu0 %v11133
    %v11135 = vpop.xlane.xlu0 %11134
    %v11136 = vsel %vm173, %v11132, 0.0
    %11137 = vadd.xlane.f32.xlu0 %v11136
    %v11138 = vpop.xlane.xlu0 %11137
    %v11139 = vmul.f32 %v11135, %v5397
    %v11140 = vmul.f32 %v11138, %v5397
    %v11141 = vsub.f32 %v11131, %v11139
    %v11142 = vsub.f32 %v11132, %v11140
    %v11143 = vmul.f32 %v11141, %v11141
    %v11144 = vmul.f32 %v11142, %v11142
    %v11145 = vsel %vm173, %v11143, 0.0
    %11146 = vadd.xlane.f32.xlu0 %v11145
    %v11147 = vpop.xlane.xlu0 %11146
    %v11148 = vsel %vm173, %v11144, 0.0
    %11149 = vadd.xlane.f32.xlu0 %v11148
    %v11150 = vpop.xlane.xlu0 %11149
    %v11151 = vmul.f32 %v11147, %v5397
    %v11152 = vmul.f32 %v11150, %v5397
    %v11153 = vadd.f32 %v11151, 1e-05
    %v11154 = vadd.f32 %v11152, 1e-05
    %v11155 = vrsqrt.pop %v11153
    %v11156 = vrsqrt.pop %v11154
    %v11157 = vmul.f32 %v11141, %v11155
    %v11158 = vmul.f32 %v11142, %v11156
    %v11159 = vlaneseq
    %v11160 = vshrl.u32 %v11159, 7
    %v11161 = vsub.s32 7, %v11160
    %v11162 = vrot.slane %v5663, %v11161
    %v11163 = vmul.f32 %v11157, %v11162
    %v11164 = vmul.f32 %v11158, %v11162
    %v11165 = vlaneseq
    %v11166 = vshrl.u32 %v11165, 7
    %v11167 = vsub.s32 0, %v11166
    %v11168 = vrot.slane %v5664, %v11167
    %v11169 = vadd.f32 %v11163, %v11168
    %v11170 = vadd.f32 %v11164, %v11168
    %11171 = vst.msk [vmem:[#allocation10] sm:$0xff] %vm173, %v11169
    %11172 = vst.msk [vmem:[#allocation10 + $0x8] sm:$0xff] %vm173, %v11170
    // Predicated region
    $region66: #{tpu_custom_call.1} parent=1 // pred_check
      _
    $region67: #{tpu_custom_call.1} parent=1 // pred_check_branch
      %11174 = sbr.rel (0) target = $region69
    $region68: #{tpu_custom_call.1} parent=1 // pred_region
      %s11176 = ssub.s32 256, 256
      %11177 = vsyncadd [#allocation4], %s11176
      %s11178 = sshll.u32 [#allocation10], 4
      %s11179 = int_to_ptr.vmem [resolvable:$true] %s11178
      %11184 = dma.vmem_to_hbm [thread:$0]  %s11179, 256, %s12, [#allocation4], 128, 128, 8
    $region69: #{tpu_custom_call.1} parent=1 // pred_fallthru
      _
    // Predicated region
    $region70: #{tpu_custom_call.1} parent=1 // pred_check
      _
    $region71: #{tpu_custom_call.1} parent=1 // pred_check_branch
      %11186 = sbr.rel (0) target = $region73
    $region72: #{tpu_custom_call.1} parent=1 // pred_region
      %11187 = dma.done [#allocation4], 256
    $region73: #{tpu_custom_call.1} parent=1 // pred_fallthru
      _
    %11188 = vsyncpa [#allocation3], 1
    %11189 = vsyncpa [#allocation6], 1
    %11190 = vsyncpa [#allocation9], 1
    %11191 = vsyncpa [#allocation4], 1

</llo_original>
